<compile_context>
chip_gen: v5e
topology: v5e:2x2
jax: 0.10.0
libtpu: 0.0.40
codegen_flags: <defaults>
</compile_context>

<pallas_src>
import functools

import jax
import jax.numpy as jnp
from jax.experimental import pallas as pl
from jax.experimental.pallas import tpu as pltpu

NUM_FEAT = 64
SQUEEZE = 16              # squeeze channels = 64 // 16 = 4
NUM_UNITS = 3
NUM_BLOCKS = 6


# ---------------------------------------------------------------------------
# In-kernel helpers: zero-filled row shifts of a (rows, C) tile.
# The zero block is padded to a multiple of 8 rows so the concatenate stays
# sublane-tile aligned; the final slice handles the exact shift amount.
# ---------------------------------------------------------------------------
def _shift_rows_down(v, k):
    """y[p] = v[p - k] for p >= k, zero elsewhere (static k > 0)."""
    n, c = v.shape
    pad = ((k + 7) // 8) * 8
    z = jnp.concatenate([jnp.zeros((pad, c), v.dtype), v], axis=0)
    return z[pad - k:pad - k + n, :]


def _shift_rows_up(v, k):
    """y[p] = v[p + k] for p < n - k, zero elsewhere (static k > 0)."""
    n, c = v.shape
    pad = ((k + 7) // 8) * 8
    z = jnp.concatenate([v, jnp.zeros((pad, c), v.dtype)], axis=0)
    return z[k:k + n, :]


# ---------------------------------------------------------------------------
# Fused RIR1 kernel
# ---------------------------------------------------------------------------
def _rir1_kernel(x_ref, w1_ref, b1_ref, w2_ref, b2_ref,
                 caw1_ref, cab1_ref, caw2_ref, cab2_ref,
                 o_ref,
                 act_ref, unit_ref, cols_ref,
                 *, H, W, C, blocks_per_unit, n_block_steps):
    HW = H * W
    s = pl.program_id(1)

    # Column index of every flattened spatial position; gates the horizontal taps
    # (this replaces the zero 'same' padding along W).
    col = jax.lax.broadcasted_iota(jnp.int32, (HW, 1), 0) % W
    m_left = (col > 0).astype(jnp.float32)          # left-neighbour tap valid
    m_right = (col < W - 1).astype(jnp.float32)     # right-neighbour tap valid

    def conv3x3(x, w_ref, b_ref, relu):
        """3x3 'same' conv of x:(HW, C) f32 with w_ref:(1, 3, 3C, C) (per-dx, dy-stacked)."""
        # im2col over the vertical taps -> (HW, 3C); the +/-W row shifts are
        # sublane-aligned zero-filled copies (= zero padding along H).
        cols_ref[:, 0:C] = _shift_rows_down(x, W)         # input row h-1
        cols_ref[:, C:2 * C] = x                          # input row h
        cols_ref[:, 2 * C:3 * C] = _shift_rows_up(x, W)   # input row h+1
        # One fat-K (K = 3C = 192) MXU matmul per horizontal tap.
        n_l = jnp.dot(cols_ref[...], w_ref[0, 0], preferred_element_type=jnp.float32)
        n_c = jnp.dot(cols_ref[...], w_ref[0, 1], preferred_element_type=jnp.float32)
        n_r = jnp.dot(cols_ref[...], w_ref[0, 2], preferred_element_type=jnp.float32)
        # Horizontal taps via shifted accumulation + border masks (zero padding along W).
        # (The +/-1 row shifts could also use pltpu.roll on the otherwise-idle XLU.)
        y = (n_c
             + m_left * _shift_rows_down(n_l, 1)
             + m_right * _shift_rows_up(n_r, 1)
             + b_ref[0])
        if relu:
            y = jnp.maximum(y, 0.0)
        return y

    @pl.when(s == 0)
    def _init():
        xv = x_ref[0].astype(jnp.float32)
        act_ref[...] = xv
        unit_ref[...] = xv

    @pl.when(s < n_block_steps)
    def _basic_block():
        a = act_ref[...]
        z = conv3x3(a, w1_ref, b1_ref, relu=True)
        z = conv3x3(z, w2_ref, b2_ref, relu=False)
        # Channel attention (RCAN): global avg pool -> squeeze -> ReLU -> excite -> sigmoid.
        pooled = jnp.sum(z, axis=0, keepdims=True) * (1.0 / HW)                       # (1, C)
        h = jnp.dot(pooled, caw1_ref[0], preferred_element_type=jnp.float32) + cab1_ref[0]
        h = jnp.maximum(h, 0.0)                                                       # (1, C/sq)
        g = jnp.dot(h, caw2_ref[0], preferred_element_type=jnp.float32) + cab2_ref[0]
        g = jax.nn.sigmoid(g)                                                         # (1, C)
        act_ref[...] = a + z * g                                                      # Basicbl skip

        # BasicU long skip at the end of every group of `blocks_per_unit` blocks.
        @pl.when(s % blocks_per_unit == blocks_per_unit - 1)
        def _unit_skip():
            merged = unit_ref[...] + act_ref[...]
            act_ref[...] = merged
            unit_ref[...] = merged

    @pl.when(s == n_block_steps)
    def _final():
        # Trunk conv (its weights ride in the conv1 slot of the last step) + outer skip.
        res = conv3x3(act_ref[...], w1_ref, b1_ref, relu=False)
        o_ref[0] = (res + x_ref[0].astype(jnp.float32)).astype(o_ref.dtype)


# ---------------------------------------------------------------------------
# Wrapper
# ---------------------------------------------------------------------------
def rir1_pallas(x, packed):
    """x: (N, H, W, C) NHWC activations; packed: per-step stacked parameters."""
    N, H, W, C = x.shape
    HW = H * W
    CS = packed["ca_w1"].shape[-1]
    S = packed["conv1_w"].shape[0]          # 18 Basicbl steps + 1 trunk conv = 19
    xf = x.reshape(N, HW, C)

    kernel = functools.partial(
        _rir1_kernel, H=H, W=W, C=C,
        blocks_per_unit=NUM_BLOCKS, n_block_steps=S - 1)

    per_image = lambda n, s: (n, 0, 0)
    per_step3 = lambda n, s: (s, 0, 0)
    per_step4 = lambda n, s: (s, 0, 0, 0)

    out = pl.pallas_call(
        kernel,
        out_shape=jax.ShapeDtypeStruct((N, HW, C), x.dtype),
        grid=(N, S),
        in_specs=[
            pl.BlockSpec((1, HW, C), per_image),            # x (fetched once per image)
            pl.BlockSpec((1, 3, 3 * C, C), per_step4),      # conv1 weights (per step)
            pl.BlockSpec((1, 1, C), per_step3),             # conv1 bias
            pl.BlockSpec((1, 3, 3 * C, C), per_step4),      # conv2 weights
            pl.BlockSpec((1, 1, C), per_step3),             # conv2 bias
            pl.BlockSpec((1, C, CS), per_step3),            # CA squeeze weight
            pl.BlockSpec((1, 1, CS), per_step3),            # CA squeeze bias
            pl.BlockSpec((1, CS, C), per_step3),            # CA excite weight
            pl.BlockSpec((1, 1, C), per_step3),             # CA excite bias
        ],
        out_specs=pl.BlockSpec((1, HW, C), per_image),
        scratch_shapes=[
            pltpu.VMEM((HW, C), jnp.float32),          # running activation (resident)
            pltpu.VMEM((HW, C), jnp.float32),          # BasicU unit input
            pltpu.VMEM((HW, 3 * C), jnp.float32),      # im2col (K = 3C) buffer
        ],
        compiler_params=pltpu.CompilerParams(
            dimension_semantics=("parallel", "arbitrary")),
    )(xf, packed["conv1_w"], packed["conv1_b"], packed["conv2_w"], packed["conv2_b"],
      packed["ca_w1"], packed["ca_b1"], packed["ca_w2"], packed["ca_b2"])
    return out.reshape(N, H, W, C)


rir1_forward = jax.jit(rir1_pallas)


# ---------------------------------------------------------------------------
# Parameter init / packing
# ---------------------------------------------------------------------------
def init_params(key):
    keys = iter(jax.random.split(key, 256))
    cs = NUM_FEAT // SQUEEZE

    def conv_w(cin, cout):
        return jax.random.normal(next(keys), (3, 3, cin, cout), jnp.float32) * 0.05

    def lin_w(cin, cout):
        return jax.random.normal(next(keys), (cin, cout), jnp.float32) * 0.1

    def bias(c):
        return jax.random.normal(next(keys), (c,), jnp.float32) * 0.01

    units = []
    for _ in range(NUM_UNITS):
        blocks = []
        for _ in range(NUM_BLOCKS):
            blocks.append({
                "conv1_w": conv_w(NUM_FEAT, NUM_FEAT), "conv1_b": bias(NUM_FEAT),
                "conv2_w": conv_w(NUM_FEAT, NUM_FEAT), "conv2_b": bias(NUM_FEAT),
                "ca_w1": lin_w(NUM_FEAT, cs), "ca_b1": bias(cs),
                "ca_w2": lin_w(cs, NUM_FEAT), "ca_b2": bias(NUM_FEAT),
            })
        units.append(blocks)
    return {"units": units,
            "conv_w": conv_w(NUM_FEAT, NUM_FEAT),
            "conv_b": bias(NUM_FEAT)}


def pack_params(params):
    """Stack per-block weights along a leading 'step' dim (18 blocks + trunk conv)."""
    C = NUM_FEAT
    CS = NUM_FEAT // SQUEEZE

    def prep_conv_w(w):
        # HWIO (3, 3, Cin, Cout) -> (3 [dx], 3*Cin [dy-major], Cout) for fat-K matmuls.
        return jnp.transpose(w, (1, 0, 2, 3)).reshape(3, 3 * w.shape[2], w.shape[3])

    packed = {k: [] for k in ("conv1_w", "conv1_b", "conv2_w", "conv2_b",
                              "ca_w1", "ca_b1", "ca_w2", "ca_b2")}
    for unit in params["units"]:
        for p in unit:
            packed["conv1_w"].append(prep_conv_w(p["conv1_w"]))
            packed["conv1_b"].append(p["conv1_b"].reshape(1, C))
            packed["conv2_w"].append(prep_conv_w(p["conv2_w"]))
            packed["conv2_b"].append(p["conv2_b"].reshape(1, C))
            packed["ca_w1"].append(p["ca_w1"])
            packed["ca_b1"].append(p["ca_b1"].reshape(1, CS))
            packed["ca_w2"].append(p["ca_w2"])
            packed["ca_b2"].append(p["ca_b2"].reshape(1, C))
    # The final trunk conv rides in the conv1 slot of the last step; the unused
    # conv2 / CA slots of that step are zero-filled and never read.
    packed["conv1_w"].append(prep_conv_w(params["conv_w"]))
    packed["conv1_b"].append(params["conv_b"].reshape(1, C))
    packed["conv2_w"].append(jnp.zeros_like(packed["conv2_w"][0]))
    packed["conv2_b"].append(jnp.zeros_like(packed["conv2_b"][0]))
    packed["ca_w1"].append(jnp.zeros_like(packed["ca_w1"][0]))
    packed["ca_b1"].append(jnp.zeros_like(packed["ca_b1"][0]))
    packed["ca_w2"].append(jnp.zeros_like(packed["ca_w2"][0]))
    packed["ca_b2"].append(jnp.zeros_like(packed["ca_b2"][0]))
    return {k: jnp.stack(v) for k, v in packed.items()}


# ---------------------------------------------------------------------------
# Pure-JAX reference (for a structural correctness check)
# ---------------------------------------------------------------------------
def _ref_conv3x3(x, w, b):
    y = jax.lax.conv_general_dilated(
        x, w, window_strides=(1, 1), padding="SAME",
        dimension_numbers=("NHWC", "HWIO", "NHWC"))
    return y + b.reshape(1, 1, 1, -1)


def _ref_basicbl(x, p):
    z = jax.nn.relu(_ref_conv3x3(x, p["conv1_w"], p["conv1_b"]))
    z = _ref_conv3x3(z, p["conv2_w"], p["conv2_b"])
    pooled = jnp.mean(z, axis=(1, 2))                                   # (N, C)
    h = jax.nn.relu(pooled @ p["ca_w1"] + p["ca_b1"])
    g = jax.nn.sigmoid(h @ p["ca_w2"] + p["ca_b2"])                     # (N, C)
    return x + z * g[:, None, None, :]


def rir1_reference(x, params):
    y = x
    for unit in params["units"]:
        u_in = y
        for blk in unit:
            y = _ref_basicbl(y, blk)
        y = u_in + y
    return _ref_conv3x3(y, params["conv_w"], params["conv_b"]) + x


# ---------------------------------------------------------------------------
if __name__ == "__main__":
    root = jax.random.PRNGKey(0)
    k_params, k_x = jax.random.split(root)
    params = init_params(k_params)
    packed = pack_params(params)

    # NHWC input; corresponds to the PyTorch NCHW shape (2, 64, 16, 16).
    x = jax.random.normal(k_x, (2, 16, 16, 64), jnp.float32)

    out = rir1_forward(x, packed)
    jax.block_until_ready(out)
    assert out.shape == x.shape and out.dtype == x.dtype

    # Structural sanity check against a pure-JAX/XLA reference.  Loose tolerance:
    # both paths use the TPU's default (reduced-precision) f32 matmul mode over a
    # 37-conv chain, while real bugs (wrong taps / shifts / skips) give O(1) errors.
    ref = jax.jit(rir1_reference)(x, params)
    num = float(jnp.sqrt(jnp.sum((out - ref) ** 2)))
    den = float(jnp.sqrt(jnp.sum(ref ** 2))) + 1e-6
    assert num / den < 3e-2, f"kernel/reference mismatch: rel_l2={num / den:.3e}"

    print("KERNEL_OK")
</pallas_src>

<mosaic_0001>
module attributes {stable_mosaic.version = 11 : i64} {
  func.func @_rir1_kernel(%arg0: i32, %arg1: i32, %arg2: memref<1x256x64xf32, #tpu.memory_space<vmem>>, %arg3: memref<1x3x192x64xf32, #tpu.memory_space<vmem>>, %arg4: memref<1x1x64xf32, #tpu.memory_space<vmem>>, %arg5: memref<1x3x192x64xf32, #tpu.memory_space<vmem>>, %arg6: memref<1x1x64xf32, #tpu.memory_space<vmem>>, %arg7: memref<1x64x4xf32, #tpu.memory_space<vmem>>, %arg8: memref<1x1x4xf32, #tpu.memory_space<vmem>>, %arg9: memref<1x4x64xf32, #tpu.memory_space<vmem>>, %arg10: memref<1x1x64xf32, #tpu.memory_space<vmem>>, %arg11: memref<1x256x64xf32, #tpu.memory_space<vmem>>, %arg12: memref<256x64xf32, #tpu.memory_space<vmem>>, %arg13: memref<256x64xf32, #tpu.memory_space<vmem>>, %arg14: memref<256x192xf32, #tpu.memory_space<vmem>>) attributes {dimension_semantics = [#tpu.dimension_semantics<parallel>, #tpu.dimension_semantics<arbitrary>], iteration_bounds = array<i64: 2, 19>, scalar_prefetch = 0 : i64, scratch_operands = 3 : i64, tpu.core_type = #tpu.core_type<tc>, window_params = [{transform_indices = @transform_0, window_bounds = array<i64: 1, 256, 64>}, {transform_indices = @transform_1, window_bounds = array<i64: 1, 3, 192, 64>}, {transform_indices = @transform_2, window_bounds = array<i64: 1, 1, 64>}, {transform_indices = @transform_3, window_bounds = array<i64: 1, 3, 192, 64>}, {transform_indices = @transform_4, window_bounds = array<i64: 1, 1, 64>}, {transform_indices = @transform_5, window_bounds = array<i64: 1, 64, 4>}, {transform_indices = @transform_6, window_bounds = array<i64: 1, 1, 4>}, {transform_indices = @transform_7, window_bounds = array<i64: 1, 4, 64>}, {transform_indices = @transform_8, window_bounds = array<i64: 1, 1, 64>}, {transform_indices = @transform_9, window_bounds = array<i64: 1, 256, 64>}]} {
    %0 = tpu.iota {dimensions = array<i32: 0>} : vector<256x1xi32>
    %c16_i32 = arith.constant 16 : i32
    %c0_i32 = arith.constant 0 : i32
    %1 = arith.cmpi eq, %c16_i32, %c0_i32 : i32
    %c1_i32 = arith.constant 1 : i32
    %2 = arith.select %1, %c1_i32, %c16_i32 : i32
    %3 = vector.broadcast %2 : i32 to vector<256x1xi32>
    %4 = arith.remsi %0, %3 : vector<256x1xi32>
    %c0_i32_0 = arith.constant 0 : i32
    %5 = vector.broadcast %c0_i32_0 : i32 to vector<256x1xi32>
    %6 = arith.cmpi ne, %4, %5 : vector<256x1xi32>
    %c0_i32_1 = arith.constant 0 : i32
    %7 = vector.broadcast %c0_i32_1 : i32 to vector<256x1xi32>
    %8 = arith.cmpi slt, %4, %7 : vector<256x1xi32>
    %c0_i32_2 = arith.constant 0 : i32
    %9 = arith.cmpi slt, %2, %c0_i32_2 : i32
    %10 = vector.broadcast %9 : i1 to vector<256x1xi1>
    %11 = vector.broadcast %10 : vector<256x1xi1> to vector<256x1xi1>
    %12 = arith.xori %8, %11 : vector<256x1xi1>
    %13 = arith.andi %12, %6 : vector<256x1xi1>
    %14 = vector.broadcast %2 : i32 to vector<256x1xi32>
    %15 = arith.addi %4, %14 : vector<256x1xi32>
    %16 = arith.select %13, %15, %4 : vector<256x1xi1>, vector<256x1xi32>
    %c0_i32_3 = arith.constant 0 : i32
    %17 = vector.broadcast %c0_i32_3 : i32 to vector<256x1xi32>
    %18 = arith.cmpi sgt, %16, %17 : vector<256x1xi32>
    %19 = arith.extui %18 : vector<256x1xi1> to vector<256x1xi32>
    %20 = arith.sitofp %19 : vector<256x1xi32> to vector<256x1xf32>
    %c15_i32 = arith.constant 15 : i32
    %21 = vector.broadcast %c15_i32 : i32 to vector<256x1xi32>
    %22 = arith.cmpi slt, %16, %21 : vector<256x1xi32>
    %23 = arith.extui %22 : vector<256x1xi1> to vector<256x1xi32>
    %24 = arith.sitofp %23 : vector<256x1xi32> to vector<256x1xf32>
    %c0_i32_4 = arith.constant 0 : i32
    %25 = arith.cmpi eq, %arg1, %c0_i32_4 : i32
    %26 = arith.extui %25 : i1 to i32
    %c0_i32_5 = arith.constant 0 : i32
    %27 = arith.cmpi ne, %26, %c0_i32_5 : i32
    scf.if %27 {
      %c0 = arith.constant 0 : index
      %c0_9 = arith.constant 0 : index
      %c0_10 = arith.constant 0 : index
      %34 = vector.load %arg2[%c0, %c0_9, %c0_10] : memref<1x256x64xf32, #tpu.memory_space<vmem>>, vector<1x256x64xf32>
      %35 = vector.shape_cast %34 : vector<1x256x64xf32> to vector<256x64xf32>
      %c0_11 = arith.constant 0 : index
      %c0_12 = arith.constant 0 : index
      %36 = vector.load %arg12[%c0_11, %c0_12] : memref<256x64xf32, #tpu.memory_space<vmem>>, vector<256x64xf32>
      tpu.vector_store %arg12[%c0_11, %c0_12], %35 {strides = array<i32>} : memref<256x64xf32, #tpu.memory_space<vmem>>, vector<256x64xf32>,
      %c0_13 = arith.constant 0 : index
      %c0_14 = arith.constant 0 : index
      %37 = vector.load %arg13[%c0_13, %c0_14] : memref<256x64xf32, #tpu.memory_space<vmem>>, vector<256x64xf32>
      tpu.vector_store %arg13[%c0_13, %c0_14], %35 {strides = array<i32>} : memref<256x64xf32, #tpu.memory_space<vmem>>, vector<256x64xf32>,
    } else {
    }
    %c18_i32 = arith.constant 18 : i32
    %28 = arith.cmpi slt, %arg1, %c18_i32 : i32
    %29 = arith.extui %28 : i1 to i32
    %c0_i32_6 = arith.constant 0 : i32
    %30 = arith.cmpi ne, %29, %c0_i32_6 : i32
    scf.if %30 {
      %c0 = arith.constant 0 : index
      %c0_9 = arith.constant 0 : index
      %34 = vector.load %arg12[%c0, %c0_9] : memref<256x64xf32, #tpu.memory_space<vmem>>, vector<256x64xf32>
      %cst = arith.constant 0.000000e+00 : f32
      %35 = vector.broadcast %cst : f32 to vector<16x64xf32>
      %36 = tpu.concatenate %35, %34 in 0 : vector<16x64xf32>, vector<256x64xf32> -> vector<272x64xf32>
      %37 = vector.extract_strided_slice %36 {offsets = [0, 0], sizes = [256, 64], strides = [1, 1]} : vector<272x64xf32> to vector<256x64xf32>
      %c0_10 = arith.constant 0 : index
      %c0_11 = arith.constant 0 : index
      %38 = vector.load %arg14[%c0_10, %c0_11] : memref<256x192xf32, #tpu.memory_space<vmem>>, vector<256x64xf32>
      tpu.vector_store %arg14[%c0_10, %c0_11], %37 {strides = array<i32>} : memref<256x192xf32, #tpu.memory_space<vmem>>, vector<256x64xf32>,
      %c0_12 = arith.constant 0 : index
      %c64 = arith.constant 64 : index
      %39 = vector.load %arg14[%c0_12, %c64] : memref<256x192xf32, #tpu.memory_space<vmem>>, vector<256x64xf32>
      tpu.vector_store %arg14[%c0_12, %c64], %34 {strides = array<i32>} : memref<256x192xf32, #tpu.memory_space<vmem>>, vector<256x64xf32>,
      %cst_13 = arith.constant 0.000000e+00 : f32
      %40 = vector.broadcast %cst_13 : f32 to vector<16x64xf32>
      %41 = tpu.concatenate %34, %40 in 0 : vector<256x64xf32>, vector<16x64xf32> -> vector<272x64xf32>
      %42 = vector.extract_strided_slice %41 {offsets = [16, 0], sizes = [256, 64], strides = [1, 1]} : vector<272x64xf32> to vector<256x64xf32>
      %c0_14 = arith.constant 0 : index
      %c128 = arith.constant 128 : index
      %43 = vector.load %arg14[%c0_14, %c128] : memref<256x192xf32, #tpu.memory_space<vmem>>, vector<256x64xf32>
      tpu.vector_store %arg14[%c0_14, %c128], %42 {strides = array<i32>} : memref<256x192xf32, #tpu.memory_space<vmem>>, vector<256x64xf32>,
      %c0_15 = arith.constant 0 : index
      %c0_16 = arith.constant 0 : index
      %44 = vector.load %arg14[%c0_15, %c0_16] : memref<256x192xf32, #tpu.memory_space<vmem>>, vector<256x192xf32>
      %c0_17 = arith.constant 0 : index
      %c0_18 = arith.constant 0 : index
      %c0_19 = arith.constant 0 : index
      %c0_20 = arith.constant 0 : index
      %45 = vector.load %arg3[%c0_17, %c0_18, %c0_19, %c0_20] : memref<1x3x192x64xf32, #tpu.memory_space<vmem>>, vector<1x1x192x64xf32>
      %46 = vector.shape_cast %45 : vector<1x1x192x64xf32> to vector<192x64xf32>
      %cst_21 = arith.constant dense<0.000000e+00> : vector<256x64xf32>
      %47 = tpu.matmul %44, %46, %cst_21 {dimension_numbers = #tpu.dot_dimension_numbers<[1], [0], [0], [1], [0, 0, 1, 1], [], []>} : vector<256x192xf32>, vector<192x64xf32>, vector<256x64xf32> -> vector<256x64xf32>
      %c0_22 = arith.constant 0 : index
      %c0_23 = arith.constant 0 : index
      %48 = vector.load %arg14[%c0_22, %c0_23] : memref<256x192xf32, #tpu.memory_space<vmem>>, vector<256x192xf32>
      %c0_24 = arith.constant 0 : index
      %c1 = arith.constant 1 : index
      %c0_25 = arith.constant 0 : index
      %c0_26 = arith.constant 0 : index
      %49 = vector.load %arg3[%c0_24, %c1, %c0_25, %c0_26] : memref<1x3x192x64xf32, #tpu.memory_space<vmem>>, vector<1x1x192x64xf32>
      %50 = vector.shape_cast %49 : vector<1x1x192x64xf32> to vector<192x64xf32>
      %cst_27 = arith.constant dense<0.000000e+00> : vector<256x64xf32>
      %51 = tpu.matmul %48, %50, %cst_27 {dimension_numbers = #tpu.dot_dimension_numbers<[1], [0], [0], [1], [0, 0, 1, 1], [], []>} : vector<256x192xf32>, vector<192x64xf32>, vector<256x64xf32> -> vector<256x64xf32>
      %c0_28 = arith.constant 0 : index
      %c0_29 = arith.constant 0 : index
      %52 = vector.load %arg14[%c0_28, %c0_29] : memref<256x192xf32, #tpu.memory_space<vmem>>, vector<256x192xf32>
      %c0_30 = arith.constant 0 : index
      %c2 = arith.constant 2 : index
      %c0_31 = arith.constant 0 : index
      %c0_32 = arith.constant 0 : index
      %53 = vector.load %arg3[%c0_30, %c2, %c0_31, %c0_32] : memref<1x3x192x64xf32, #tpu.memory_space<vmem>>, vector<1x1x192x64xf32>
      %54 = vector.shape_cast %53 : vector<1x1x192x64xf32> to vector<192x64xf32>
      %cst_33 = arith.constant dense<0.000000e+00> : vector<256x64xf32>
      %55 = tpu.matmul %52, %54, %cst_33 {dimension_numbers = #tpu.dot_dimension_numbers<[1], [0], [0], [1], [0, 0, 1, 1], [], []>} : vector<256x192xf32>, vector<192x64xf32>, vector<256x64xf32> -> vector<256x64xf32>
      %cst_34 = arith.constant 0.000000e+00 : f32
      %56 = vector.broadcast %cst_34 : f32 to vector<8x64xf32>
      %57 = tpu.concatenate %56, %47 in 0 : vector<8x64xf32>, vector<256x64xf32> -> vector<264x64xf32>
      %58 = vector.extract_strided_slice %57 {offsets = [7, 0], sizes = [256, 64], strides = [1, 1]} : vector<264x64xf32> to vector<256x64xf32>
      %59 = vector.broadcast %20 : vector<256x1xf32> to vector<256x64xf32>
      %60 = arith.mulf %59, %58 : vector<256x64xf32>
      %61 = arith.addf %51, %60 : vector<256x64xf32>
      %cst_35 = arith.constant 0.000000e+00 : f32
      %62 = vector.broadcast %cst_35 : f32 to vector<8x64xf32>
      %63 = tpu.concatenate %55, %62 in 0 : vector<256x64xf32>, vector<8x64xf32> -> vector<264x64xf32>
      %64 = vector.extract_strided_slice %63 {offsets = [1, 0], sizes = [256, 64], strides = [1, 1]} : vector<264x64xf32> to vector<256x64xf32>
      %65 = vector.broadcast %24 : vector<256x1xf32> to vector<256x64xf32>
      %66 = arith.mulf %65, %64 : vector<256x64xf32>
      %67 = arith.addf %61, %66 : vector<256x64xf32>
      %c0_36 = arith.constant 0 : index
      %c0_37 = arith.constant 0 : index
      %c0_38 = arith.constant 0 : index
      %68 = vector.load %arg4[%c0_36, %c0_37, %c0_38] : memref<1x1x64xf32, #tpu.memory_space<vmem>>, vector<1x1x64xf32>
      %69 = vector.shape_cast %68 : vector<1x1x64xf32> to vector<1x64xf32>
      %70 = vector.broadcast %69 : vector<1x64xf32> to vector<256x64xf32>
      %71 = arith.addf %67, %70 : vector<256x64xf32>
      %cst_39 = arith.constant 0.000000e+00 : f32
      %72 = vector.broadcast %cst_39 : f32 to vector<256x64xf32>
      %73 = arith.maximumf %71, %72 : vector<256x64xf32>
      %cst_40 = arith.constant 0.000000e+00 : f32
      %74 = vector.broadcast %cst_40 : f32 to vector<16x64xf32>
      %75 = tpu.concatenate %74, %73 in 0 : vector<16x64xf32>, vector<256x64xf32> -> vector<272x64xf32>
      %76 = vector.extract_strided_slice %75 {offsets = [0, 0], sizes = [256, 64], strides = [1, 1]} : vector<272x64xf32> to vector<256x64xf32>
      %c0_41 = arith.constant 0 : index
      %c0_42 = arith.constant 0 : index
      %77 = vector.load %arg14[%c0_41, %c0_42] : memref<256x192xf32, #tpu.memory_space<vmem>>, vector<256x64xf32>
      tpu.vector_store %arg14[%c0_41, %c0_42], %76 {strides = array<i32>} : memref<256x192xf32, #tpu.memory_space<vmem>>, vector<256x64xf32>,
      %c0_43 = arith.constant 0 : index
      %c64_44 = arith.constant 64 : index
      %78 = vector.load %arg14[%c0_43, %c64_44] : memref<256x192xf32, #tpu.memory_space<vmem>>, vector<256x64xf32>
      tpu.vector_store %arg14[%c0_43, %c64_44], %73 {strides = array<i32>} : memref<256x192xf32, #tpu.memory_space<vmem>>, vector<256x64xf32>,
      %cst_45 = arith.constant 0.000000e+00 : f32
      %79 = vector.broadcast %cst_45 : f32 to vector<16x64xf32>
      %80 = tpu.concatenate %73, %79 in 0 : vector<256x64xf32>, vector<16x64xf32> -> vector<272x64xf32>
      %81 = vector.extract_strided_slice %80 {offsets = [16, 0], sizes = [256, 64], strides = [1, 1]} : vector<272x64xf32> to vector<256x64xf32>
      %c0_46 = arith.constant 0 : index
      %c128_47 = arith.constant 128 : index
      %82 = vector.load %arg14[%c0_46, %c128_47] : memref<256x192xf32, #tpu.memory_space<vmem>>, vector<256x64xf32>
      tpu.vector_store %arg14[%c0_46, %c128_47], %81 {strides = array<i32>} : memref<256x192xf32, #tpu.memory_space<vmem>>, vector<256x64xf32>,
      %c0_48 = arith.constant 0 : index
      %c0_49 = arith.constant 0 : index
      %83 = vector.load %arg14[%c0_48, %c0_49] : memref<256x192xf32, #tpu.memory_space<vmem>>, vector<256x192xf32>
      %c0_50 = arith.constant 0 : index
      %c0_51 = arith.constant 0 : index
      %c0_52 = arith.constant 0 : index
      %c0_53 = arith.constant 0 : index
      %84 = vector.load %arg5[%c0_50, %c0_51, %c0_52, %c0_53] : memref<1x3x192x64xf32, #tpu.memory_space<vmem>>, vector<1x1x192x64xf32>
      %85 = vector.shape_cast %84 : vector<1x1x192x64xf32> to vector<192x64xf32>
      %cst_54 = arith.constant dense<0.000000e+00> : vector<256x64xf32>
      %86 = tpu.matmul %83, %85, %cst_54 {dimension_numbers = #tpu.dot_dimension_numbers<[1], [0], [0], [1], [0, 0, 1, 1], [], []>} : vector<256x192xf32>, vector<192x64xf32>, vector<256x64xf32> -> vector<256x64xf32>
      %c0_55 = arith.constant 0 : index
      %c0_56 = arith.constant 0 : index
      %87 = vector.load %arg14[%c0_55, %c0_56] : memref<256x192xf32, #tpu.memory_space<vmem>>, vector<256x192xf32>
      %c0_57 = arith.constant 0 : index
      %c1_58 = arith.constant 1 : index
      %c0_59 = arith.constant 0 : index
      %c0_60 = arith.constant 0 : index
      %88 = vector.load %arg5[%c0_57, %c1_58, %c0_59, %c0_60] : memref<1x3x192x64xf32, #tpu.memory_space<vmem>>, vector<1x1x192x64xf32>
      %89 = vector.shape_cast %88 : vector<1x1x192x64xf32> to vector<192x64xf32>
      %cst_61 = arith.constant dense<0.000000e+00> : vector<256x64xf32>
      %90 = tpu.matmul %87, %89, %cst_61 {dimension_numbers = #tpu.dot_dimension_numbers<[1], [0], [0], [1], [0, 0, 1, 1], [], []>} : vector<256x192xf32>, vector<192x64xf32>, vector<256x64xf32> -> vector<256x64xf32>
      %c0_62 = arith.constant 0 : index
      %c0_63 = arith.constant 0 : index
      %91 = vector.load %arg14[%c0_62, %c0_63] : memref<256x192xf32, #tpu.memory_space<vmem>>, vector<256x192xf32>
      %c0_64 = arith.constant 0 : index
      %c2_65 = arith.constant 2 : index
      %c0_66 = arith.constant 0 : index
      %c0_67 = arith.constant 0 : index
      %92 = vector.load %arg5[%c0_64, %c2_65, %c0_66, %c0_67] : memref<1x3x192x64xf32, #tpu.memory_space<vmem>>, vector<1x1x192x64xf32>
      %93 = vector.shape_cast %92 : vector<1x1x192x64xf32> to vector<192x64xf32>
      %cst_68 = arith.constant dense<0.000000e+00> : vector<256x64xf32>
      %94 = tpu.matmul %91, %93, %cst_68 {dimension_numbers = #tpu.dot_dimension_numbers<[1], [0], [0], [1], [0, 0, 1, 1], [], []>} : vector<256x192xf32>, vector<192x64xf32>, vector<256x64xf32> -> vector<256x64xf32>
      %cst_69 = arith.constant 0.000000e+00 : f32
      %95 = vector.broadcast %cst_69 : f32 to vector<8x64xf32>
      %96 = tpu.concatenate %95, %86 in 0 : vector<8x64xf32>, vector<256x64xf32> -> vector<264x64xf32>
      %97 = vector.extract_strided_slice %96 {offsets = [7, 0], sizes = [256, 64], strides = [1, 1]} : vector<264x64xf32> to vector<256x64xf32>
      %98 = vector.broadcast %20 : vector<256x1xf32> to vector<256x64xf32>
      %99 = arith.mulf %98, %97 : vector<256x64xf32>
      %100 = arith.addf %90, %99 : vector<256x64xf32>
      %cst_70 = arith.constant 0.000000e+00 : f32
      %101 = vector.broadcast %cst_70 : f32 to vector<8x64xf32>
      %102 = tpu.concatenate %94, %101 in 0 : vector<256x64xf32>, vector<8x64xf32> -> vector<264x64xf32>
      %103 = vector.extract_strided_slice %102 {offsets = [1, 0], sizes = [256, 64], strides = [1, 1]} : vector<264x64xf32> to vector<256x64xf32>
      %104 = vector.broadcast %24 : vector<256x1xf32> to vector<256x64xf32>
      %105 = arith.mulf %104, %103 : vector<256x64xf32>
      %106 = arith.addf %100, %105 : vector<256x64xf32>
      %c0_71 = arith.constant 0 : index
      %c0_72 = arith.constant 0 : index
      %c0_73 = arith.constant 0 : index
      %107 = vector.load %arg6[%c0_71, %c0_72, %c0_73] : memref<1x1x64xf32, #tpu.memory_space<vmem>>, vector<1x1x64xf32>
      %108 = vector.shape_cast %107 : vector<1x1x64xf32> to vector<1x64xf32>
      %109 = vector.broadcast %108 : vector<1x64xf32> to vector<256x64xf32>
      %110 = arith.addf %106, %109 : vector<256x64xf32>
      %cst_74 = arith.constant dense<0.000000e+00> : vector<64xf32>
      %111 = vector.multi_reduction <add>, %110, %cst_74 [0] : vector<256x64xf32> to vector<64xf32>
      %112 = vector.shape_cast %111 : vector<64xf32> to vector<1x64xf32>
      %cst_75 = arith.constant 3.906250e-03 : f32
      %113 = vector.broadcast %cst_75 : f32 to vector<1x64xf32>
      %114 = arith.mulf %112, %113 : vector<1x64xf32>
      %c0_76 = arith.constant 0 : index
      %c0_77 = arith.constant 0 : index
      %c0_78 = arith.constant 0 : index
      %115 = vector.load %arg7[%c0_76, %c0_77, %c0_78] : memref<1x64x4xf32, #tpu.memory_space<vmem>>, vector<1x64x4xf32>
      %116 = vector.shape_cast %115 : vector<1x64x4xf32> to vector<64x4xf32>
      %cst_79 = arith.constant dense<0.000000e+00> : vector<1x4xf32>
      %117 = tpu.matmul %114, %116, %cst_79 {dimension_numbers = #tpu.dot_dimension_numbers<[1], [0], [0], [1], [0, 0, 1, 1], [], []>} : vector<1x64xf32>, vector<64x4xf32>, vector<1x4xf32> -> vector<1x4xf32>
      %c0_80 = arith.constant 0 : index
      %c0_81 = arith.constant 0 : index
      %c0_82 = arith.constant 0 : index
      %118 = vector.load %arg8[%c0_80, %c0_81, %c0_82] : memref<1x1x4xf32, #tpu.memory_space<vmem>>, vector<1x1x4xf32>
      %119 = vector.shape_cast %118 : vector<1x1x4xf32> to vector<1x4xf32>
      %120 = arith.addf %117, %119 : vector<1x4xf32>
      %cst_83 = arith.constant 0.000000e+00 : f32
      %121 = vector.broadcast %cst_83 : f32 to vector<1x4xf32>
      %122 = arith.maximumf %120, %121 : vector<1x4xf32>
      %c0_84 = arith.constant 0 : index
      %c0_85 = arith.constant 0 : index
      %c0_86 = arith.constant 0 : index
      %123 = vector.load %arg9[%c0_84, %c0_85, %c0_86] : memref<1x4x64xf32, #tpu.memory_space<vmem>>, vector<1x4x64xf32>
      %124 = vector.shape_cast %123 : vector<1x4x64xf32> to vector<4x64xf32>
      %cst_87 = arith.constant dense<0.000000e+00> : vector<1x64xf32>
      %125 = tpu.matmul %122, %124, %cst_87 {dimension_numbers = #tpu.dot_dimension_numbers<[1], [0], [0], [1], [0, 0, 1, 1], [], []>} : vector<1x4xf32>, vector<4x64xf32>, vector<1x64xf32> -> vector<1x64xf32>
      %c0_88 = arith.constant 0 : index
      %c0_89 = arith.constant 0 : index
      %c0_90 = arith.constant 0 : index
      %126 = vector.load %arg10[%c0_88, %c0_89, %c0_90] : memref<1x1x64xf32, #tpu.memory_space<vmem>>, vector<1x1x64xf32>
      %127 = vector.shape_cast %126 : vector<1x1x64xf32> to vector<1x64xf32>
      %128 = arith.addf %125, %127 : vector<1x64xf32>
      %129 = arith.negf %128 : vector<1x64xf32>
      %130 = math.exp %129 : vector<1x64xf32>
      %cst_91 = arith.constant 1.000000e+00 : f32
      %131 = vector.broadcast %cst_91 : f32 to vector<1x64xf32>
      %132 = arith.addf %131, %130 : vector<1x64xf32>
      %133 = arith.divf %131, %132 : vector<1x64xf32>
      %134 = vector.broadcast %133 : vector<1x64xf32> to vector<256x64xf32>
      %135 = arith.mulf %110, %134 : vector<256x64xf32>
      %136 = arith.addf %34, %135 : vector<256x64xf32>
      %c0_92 = arith.constant 0 : index
      %c0_93 = arith.constant 0 : index
      %137 = vector.load %arg12[%c0_92, %c0_93] : memref<256x64xf32, #tpu.memory_space<vmem>>, vector<256x64xf32>
      tpu.vector_store %arg12[%c0_92, %c0_93], %136 {strides = array<i32>} : memref<256x64xf32, #tpu.memory_space<vmem>>, vector<256x64xf32>,
      %c6_i32 = arith.constant 6 : i32
      %c0_i32_94 = arith.constant 0 : i32
      %138 = arith.cmpi eq, %c6_i32, %c0_i32_94 : i32
      %c1_i32_95 = arith.constant 1 : i32
      %139 = arith.select %138, %c1_i32_95, %c6_i32 : i32
      %140 = arith.remsi %arg1, %139 : i32
      %c0_i32_96 = arith.constant 0 : i32
      %141 = arith.cmpi ne, %140, %c0_i32_96 : i32
      %c0_i32_97 = arith.constant 0 : i32
      %142 = arith.cmpi slt, %140, %c0_i32_97 : i32
      %c0_i32_98 = arith.constant 0 : i32
      %143 = arith.cmpi slt, %139, %c0_i32_98 : i32
      %144 = arith.xori %142, %143 : i1
      %145 = arith.andi %144, %141 : i1
      %146 = arith.addi %140, %139 : i32
      %147 = arith.select %145, %146, %140 : i32
      %c5_i32 = arith.constant 5 : i32
      %148 = arith.cmpi eq, %147, %c5_i32 : i32
      %149 = arith.extui %148 : i1 to i32
      %c0_i32_99 = arith.constant 0 : i32
      %150 = arith.cmpi ne, %149, %c0_i32_99 : i32
      scf.if %150 {
        %c0_100 = arith.constant 0 : index
        %c0_101 = arith.constant 0 : index
        %151 = vector.load %arg13[%c0_100, %c0_101] : memref<256x64xf32, #tpu.memory_space<vmem>>, vector<256x64xf32>
        %c0_102 = arith.constant 0 : index
        %c0_103 = arith.constant 0 : index
        %152 = vector.load %arg12[%c0_102, %c0_103] : memref<256x64xf32, #tpu.memory_space<vmem>>, vector<256x64xf32>
        %153 = arith.addf %151, %152 : vector<256x64xf32>
        %c0_104 = arith.constant 0 : index
        %c0_105 = arith.constant 0 : index
        %154 = vector.load %arg12[%c0_104, %c0_105] : memref<256x64xf32, #tpu.memory_space<vmem>>, vector<256x64xf32>
        tpu.vector_store %arg12[%c0_104, %c0_105], %153 {strides = array<i32>} : memref<256x64xf32, #tpu.memory_space<vmem>>, vector<256x64xf32>,
        %c0_106 = arith.constant 0 : index
        %c0_107 = arith.constant 0 : index
        %155 = vector.load %arg13[%c0_106, %c0_107] : memref<256x64xf32, #tpu.memory_space<vmem>>, vector<256x64xf32>
        tpu.vector_store %arg13[%c0_106, %c0_107], %153 {strides = array<i32>} : memref<256x64xf32, #tpu.memory_space<vmem>>, vector<256x64xf32>,
      } else {
      }
    } else {
    }
    %c18_i32_7 = arith.constant 18 : i32
    %31 = arith.cmpi eq, %arg1, %c18_i32_7 : i32
    %32 = arith.extui %31 : i1 to i32
    %c0_i32_8 = arith.constant 0 : i32
    %33 = arith.cmpi ne, %32, %c0_i32_8 : i32
    scf.if %33 {
      %c0 = arith.constant 0 : index
      %c0_9 = arith.constant 0 : index
      %34 = vector.load %arg12[%c0, %c0_9] : memref<256x64xf32, #tpu.memory_space<vmem>>, vector<256x64xf32>
      %cst = arith.constant 0.000000e+00 : f32
      %35 = vector.broadcast %cst : f32 to vector<16x64xf32>
      %36 = tpu.concatenate %35, %34 in 0 : vector<16x64xf32>, vector<256x64xf32> -> vector<272x64xf32>
      %37 = vector.extract_strided_slice %36 {offsets = [0, 0], sizes = [256, 64], strides = [1, 1]} : vector<272x64xf32> to vector<256x64xf32>
      %c0_10 = arith.constant 0 : index
      %c0_11 = arith.constant 0 : index
      %38 = vector.load %arg14[%c0_10, %c0_11] : memref<256x192xf32, #tpu.memory_space<vmem>>, vector<256x64xf32>
      tpu.vector_store %arg14[%c0_10, %c0_11], %37 {strides = array<i32>} : memref<256x192xf32, #tpu.memory_space<vmem>>, vector<256x64xf32>,
      %c0_12 = arith.constant 0 : index
      %c64 = arith.constant 64 : index
      %39 = vector.load %arg14[%c0_12, %c64] : memref<256x192xf32, #tpu.memory_space<vmem>>, vector<256x64xf32>
      tpu.vector_store %arg14[%c0_12, %c64], %34 {strides = array<i32>} : memref<256x192xf32, #tpu.memory_space<vmem>>, vector<256x64xf32>,
      %cst_13 = arith.constant 0.000000e+00 : f32
      %40 = vector.broadcast %cst_13 : f32 to vector<16x64xf32>
      %41 = tpu.concatenate %34, %40 in 0 : vector<256x64xf32>, vector<16x64xf32> -> vector<272x64xf32>
      %42 = vector.extract_strided_slice %41 {offsets = [16, 0], sizes = [256, 64], strides = [1, 1]} : vector<272x64xf32> to vector<256x64xf32>
      %c0_14 = arith.constant 0 : index
      %c128 = arith.constant 128 : index
      %43 = vector.load %arg14[%c0_14, %c128] : memref<256x192xf32, #tpu.memory_space<vmem>>, vector<256x64xf32>
      tpu.vector_store %arg14[%c0_14, %c128], %42 {strides = array<i32>} : memref<256x192xf32, #tpu.memory_space<vmem>>, vector<256x64xf32>,
      %c0_15 = arith.constant 0 : index
      %c0_16 = arith.constant 0 : index
      %44 = vector.load %arg14[%c0_15, %c0_16] : memref<256x192xf32, #tpu.memory_space<vmem>>, vector<256x192xf32>
      %c0_17 = arith.constant 0 : index
      %c0_18 = arith.constant 0 : index
      %c0_19 = arith.constant 0 : index
      %c0_20 = arith.constant 0 : index
      %45 = vector.load %arg3[%c0_17, %c0_18, %c0_19, %c0_20] : memref<1x3x192x64xf32, #tpu.memory_space<vmem>>, vector<1x1x192x64xf32>
      %46 = vector.shape_cast %45 : vector<1x1x192x64xf32> to vector<192x64xf32>
      %cst_21 = arith.constant dense<0.000000e+00> : vector<256x64xf32>
      %47 = tpu.matmul %44, %46, %cst_21 {dimension_numbers = #tpu.dot_dimension_numbers<[1], [0], [0], [1], [0, 0, 1, 1], [], []>} : vector<256x192xf32>, vector<192x64xf32>, vector<256x64xf32> -> vector<256x64xf32>
      %c0_22 = arith.constant 0 : index
      %c0_23 = arith.constant 0 : index
      %48 = vector.load %arg14[%c0_22, %c0_23] : memref<256x192xf32, #tpu.memory_space<vmem>>, vector<256x192xf32>
      %c0_24 = arith.constant 0 : index
      %c1 = arith.constant 1 : index
      %c0_25 = arith.constant 0 : index
      %c0_26 = arith.constant 0 : index
      %49 = vector.load %arg3[%c0_24, %c1, %c0_25, %c0_26] : memref<1x3x192x64xf32, #tpu.memory_space<vmem>>, vector<1x1x192x64xf32>
      %50 = vector.shape_cast %49 : vector<1x1x192x64xf32> to vector<192x64xf32>
      %cst_27 = arith.constant dense<0.000000e+00> : vector<256x64xf32>
      %51 = tpu.matmul %48, %50, %cst_27 {dimension_numbers = #tpu.dot_dimension_numbers<[1], [0], [0], [1], [0, 0, 1, 1], [], []>} : vector<256x192xf32>, vector<192x64xf32>, vector<256x64xf32> -> vector<256x64xf32>
      %c0_28 = arith.constant 0 : index
      %c0_29 = arith.constant 0 : index
      %52 = vector.load %arg14[%c0_28, %c0_29] : memref<256x192xf32, #tpu.memory_space<vmem>>, vector<256x192xf32>
      %c0_30 = arith.constant 0 : index
      %c2 = arith.constant 2 : index
      %c0_31 = arith.constant 0 : index
      %c0_32 = arith.constant 0 : index
      %53 = vector.load %arg3[%c0_30, %c2, %c0_31, %c0_32] : memref<1x3x192x64xf32, #tpu.memory_space<vmem>>, vector<1x1x192x64xf32>
      %54 = vector.shape_cast %53 : vector<1x1x192x64xf32> to vector<192x64xf32>
      %cst_33 = arith.constant dense<0.000000e+00> : vector<256x64xf32>
      %55 = tpu.matmul %52, %54, %cst_33 {dimension_numbers = #tpu.dot_dimension_numbers<[1], [0], [0], [1], [0, 0, 1, 1], [], []>} : vector<256x192xf32>, vector<192x64xf32>, vector<256x64xf32> -> vector<256x64xf32>
      %cst_34 = arith.constant 0.000000e+00 : f32
      %56 = vector.broadcast %cst_34 : f32 to vector<8x64xf32>
      %57 = tpu.concatenate %56, %47 in 0 : vector<8x64xf32>, vector<256x64xf32> -> vector<264x64xf32>
      %58 = vector.extract_strided_slice %57 {offsets = [7, 0], sizes = [256, 64], strides = [1, 1]} : vector<264x64xf32> to vector<256x64xf32>
      %59 = vector.broadcast %20 : vector<256x1xf32> to vector<256x64xf32>
      %60 = arith.mulf %59, %58 : vector<256x64xf32>
      %61 = arith.addf %51, %60 : vector<256x64xf32>
      %cst_35 = arith.constant 0.000000e+00 : f32
      %62 = vector.broadcast %cst_35 : f32 to vector<8x64xf32>
      %63 = tpu.concatenate %55, %62 in 0 : vector<256x64xf32>, vector<8x64xf32> -> vector<264x64xf32>
      %64 = vector.extract_strided_slice %63 {offsets = [1, 0], sizes = [256, 64], strides = [1, 1]} : vector<264x64xf32> to vector<256x64xf32>
      %65 = vector.broadcast %24 : vector<256x1xf32> to vector<256x64xf32>
      %66 = arith.mulf %65, %64 : vector<256x64xf32>
      %67 = arith.addf %61, %66 : vector<256x64xf32>
      %c0_36 = arith.constant 0 : index
      %c0_37 = arith.constant 0 : index
      %c0_38 = arith.constant 0 : index
      %68 = vector.load %arg4[%c0_36, %c0_37, %c0_38] : memref<1x1x64xf32, #tpu.memory_space<vmem>>, vector<1x1x64xf32>
      %69 = vector.shape_cast %68 : vector<1x1x64xf32> to vector<1x64xf32>
      %70 = vector.broadcast %69 : vector<1x64xf32> to vector<256x64xf32>
      %71 = arith.addf %67, %70 : vector<256x64xf32>
      %c0_39 = arith.constant 0 : index
      %c0_40 = arith.constant 0 : index
      %c0_41 = arith.constant 0 : index
      %72 = vector.load %arg2[%c0_39, %c0_40, %c0_41] : memref<1x256x64xf32, #tpu.memory_space<vmem>>, vector<1x256x64xf32>
      %73 = vector.shape_cast %72 : vector<1x256x64xf32> to vector<256x64xf32>
      %74 = arith.addf %71, %73 : vector<256x64xf32>
      %c0_42 = arith.constant 0 : index
      %c0_43 = arith.constant 0 : index
      %c0_44 = arith.constant 0 : index
      %75 = vector.load %arg11[%c0_42, %c0_43, %c0_44] : memref<1x256x64xf32, #tpu.memory_space<vmem>>, vector<1x256x64xf32>
      %76 = vector.shape_cast %75 : vector<1x256x64xf32> to vector<256x64xf32>
      %77 = vector.shape_cast %74 : vector<256x64xf32> to vector<1x256x64xf32>
      tpu.vector_store %arg11[%c0_42, %c0_43, %c0_44], %77 {strides = array<i32>} : memref<1x256x64xf32, #tpu.memory_space<vmem>>, vector<1x256x64xf32>,
    } else {
    }
    return
  }
  func.func @transform_0(%arg0: i32, %arg1: i32) -> (i32, i32, i32) {
    %c0_i32 = arith.constant 0 : i32
    %c0_i32_0 = arith.constant 0 : i32
    %c0_i32_1 = arith.constant 0 : i32
    return %arg0, %c0_i32, %c0_i32_0 : i32, i32, i32
  }
  func.func @transform_1(%arg0: i32, %arg1: i32) -> (i32, i32, i32, i32) {
    %c0_i32 = arith.constant 0 : i32
    %c0_i32_0 = arith.constant 0 : i32
    %c0_i32_1 = arith.constant 0 : i32
    %c0_i32_2 = arith.constant 0 : i32
    return %arg1, %c0_i32, %c0_i32_0, %c0_i32_1 : i32, i32, i32, i32
  }
  func.func @transform_2(%arg0: i32, %arg1: i32) -> (i32, i32, i32) {
    %c0_i32 = arith.constant 0 : i32
    %c0_i32_0 = arith.constant 0 : i32
    %c0_i32_1 = arith.constant 0 : i32
    return %arg1, %c0_i32, %c0_i32_0 : i32, i32, i32
  }
  func.func @transform_3(%arg0: i32, %arg1: i32) -> (i32, i32, i32, i32) {
    %c0_i32 = arith.constant 0 : i32
    %c0_i32_0 = arith.constant 0 : i32
    %c0_i32_1 = arith.constant 0 : i32
    %c0_i32_2 = arith.constant 0 : i32
    return %arg1, %c0_i32, %c0_i32_0, %c0_i32_1 : i32, i32, i32, i32
  }
  func.func @transform_4(%arg0: i32, %arg1: i32) -> (i32, i32, i32) {
    %c0_i32 = arith.constant 0 : i32
    %c0_i32_0 = arith.constant 0 : i32
    %c0_i32_1 = arith.constant 0 : i32
    return %arg1, %c0_i32, %c0_i32_0 : i32, i32, i32
  }
  func.func @transform_5(%arg0: i32, %arg1: i32) -> (i32, i32, i32) {
    %c0_i32 = arith.constant 0 : i32
    %c0_i32_0 = arith.constant 0 : i32
    %c0_i32_1 = arith.constant 0 : i32
    return %arg1, %c0_i32, %c0_i32_0 : i32, i32, i32
  }
  func.func @transform_6(%arg0: i32, %arg1: i32) -> (i32, i32, i32) {
    %c0_i32 = arith.constant 0 : i32
    %c0_i32_0 = arith.constant 0 : i32
    %c0_i32_1 = arith.constant 0 : i32
    return %arg1, %c0_i32, %c0_i32_0 : i32, i32, i32
  }
  func.func @transform_7(%arg0: i32, %arg1: i32) -> (i32, i32, i32) {
    %c0_i32 = arith.constant 0 : i32
    %c0_i32_0 = arith.constant 0 : i32
    %c0_i32_1 = arith.constant 0 : i32
    return %arg1, %c0_i32, %c0_i32_0 : i32, i32, i32
  }
  func.func @transform_8(%arg0: i32, %arg1: i32) -> (i32, i32, i32) {
    %c0_i32 = arith.constant 0 : i32
    %c0_i32_0 = arith.constant 0 : i32
    %c0_i32_1 = arith.constant 0 : i32
    return %arg1, %c0_i32, %c0_i32_0 : i32, i32, i32
  }
  func.func @transform_9(%arg0: i32, %arg1: i32) -> (i32, i32, i32) {
    %c0_i32 = arith.constant 0 : i32
    %c0_i32_0 = arith.constant 0 : i32
    %c0_i32_1 = arith.constant 0 : i32
    return %arg0, %c0_i32, %c0_i32_0 : i32, i32, i32
  }
}

</mosaic_0001>

<llo_original>
// kernel: rir1_pallas.1
$region0: #{rir1_pallas.1}
  #allocation0 [shape = 'u32[]', space=smem, size = 0x4, offset = 0x4, fixed_abs, tag = 'smem constant byte address 0x4 - core index']
  #allocation1 [shape = 'u32[72,128]{1,0:T(1,128)}', space=vmem, size = 0x9000, scoped, tag = 'internal scratch']
  #allocation2 [shape = 'f32[256,64]{1,0:T(8,128)}', space=vmem, size = 0x20000, scoped, tag = 'scratch operand']
  #allocation3 [shape = 'f32[256,64]{1,0:T(8,128)}', space=vmem, size = 0x20000, scoped, tag = 'scratch operand']
  #allocation4 [shape = 'f32[256,192]{1,0:T(8,128)}', space=vmem, size = 0x40000, scoped, tag = 'scratch operand']
  %s0 = inlined_call_operand.vmem [shape: f32[2,256,64], index: 0, kind: input, shape index: {}]
  %s1 = inlined_call_operand.vmem [shape: f32[19,3,192,64], index: 1, kind: input, shape index: {}]
  %s2 = inlined_call_operand.vmem [shape: f32[19,1,64], index: 2, kind: input, shape index: {}]
  %s3 = inlined_call_operand.vmem [shape: f32[19,3,192,64], index: 3, kind: input, shape index: {}]
  %s4 = inlined_call_operand.vmem [shape: f32[19,1,64], index: 4, kind: input, shape index: {}]
  %s5 = inlined_call_operand.vmem [shape: f32[19,64,4], index: 5, kind: input, shape index: {}]
  %s6 = inlined_call_operand.vmem [shape: f32[19,1,4], index: 6, kind: input, shape index: {}]
  %s7 = inlined_call_operand.vmem [shape: f32[19,4,64], index: 7, kind: input, shape index: {}]
  %s8 = inlined_call_operand.vmem [shape: f32[19,1,64], index: 8, kind: input, shape index: {}]
  %s9 = inlined_call_operand.hbm [shape: f32[2,256,64], index: 9, kind: output, shape index: {}]
  %s10 = sld [smem:[#allocation0]]
  $region85: #{rir1_pallas.1} parent=0
    _
  %s12 = ssub.s32 1, %s10
  %s13 = scalar_select 0, %s12, %s10
  $region1: #{rir1_pallas.1} parent=0
    #allocation5 [shape = 'u8[262144]{0}', space=vmem, size = 0x40000, scoped, tag = 'output window, operand 0']
    #allocation6 [shape = 's32[2]{0}', space=sflag, size = 0x8, scoped, tag = 'scoped memory for rir1_pallas.1']
    %14 = vsyncpa [#allocation6], 0
    %s15 = scalar_lea.sflag [#allocation6], 1
    %16 = vsyncpa %s15, 0
    loop: start=0, step=1, limit=40
    $region2: #{rir1_pallas.1} parent=1 // loop_pre_header
      _
    $region3: #{rir1_pallas.1} parent=1 // loop_header
      %s18 = sphi 0, %s22
      %p19 = scmp.ge.s32.totalorder %s18, 40
      %s25 = sphi 0, %s37
      %s26 = sphi 0, %s33
      %s27 = sphi 0, %s25
      %s28 = sphi 0, %s26
      %s29 = sphi 0, %s27
      %s30 = sphi 0, %s28
      %s40 = sphi 0, %s42
      %s43 = sphi 0, %s40
      %s44 = sphi 0, %s43
      %s60 = sphi 0, %s44
      %s66 = sphi 0, %s68
      %s69 = sphi 0, %s66
      %s70 = sphi 0, %s69
      %s86 = sphi 0, %s70
      %s92 = sphi 0, %s94
      %s95 = sphi 0, %s92
      %s96 = sphi 0, %s95
      %s112 = sphi 0, %s96
      %s118 = sphi 0, %s120
      %s121 = sphi 0, %s118
      %s122 = sphi 0, %s121
      %s138 = sphi 0, %s122
      %s144 = sphi 0, %s146
      %s147 = sphi 0, %s144
      %s148 = sphi 0, %s147
      %s164 = sphi 0, %s148
      %s170 = sphi 0, %s172
      %s173 = sphi 0, %s170
      %s174 = sphi 0, %s173
      %s190 = sphi 0, %s174
      %s196 = sphi 0, %s198
      %s199 = sphi 0, %s196
      %s200 = sphi 0, %s199
      %s216 = sphi 0, %s200
      %s222 = sphi 0, %s224
      %s225 = sphi 0, %s222
      %s226 = sphi 0, %s225
      %s242 = sphi 0, %s226
      %s248 = sphi 0, %s250
      %s251 = sphi 0, %s248
      %s252 = sphi 0, %s251
      %s268 = sphi 0, %s252
      %s274 = sphi 0, %s276
      %s277 = sphi 0, %s274
      %s278 = sphi 0, %s277
      %s294 = sphi 0, %s278
    $region4: #{rir1_pallas.1} parent=1 // loop_header_branch
      %21 = sbr.rel (%p19) target = $region8
    $region5: #{rir1_pallas.1} parent=1 // loop_body
      %s23 = ssub.s32 %s18, 1
      %s24 = ssub.s32 %s18, 2
      %s31 = sadd.s32 1, %s26
      %p32 = scmp.ge.s32.totalorder %s31, 19
      %s33 = scalar_select %p32, 0, %s31
      %s34 = sadd.s32 1, %s25
      %s35 = scalar_select %p32, %s34, %s25
      %p36 = scmp.ge.s32.totalorder %s35, 2
      %s37 = scalar_select %p36, 0, %s35
      %s38 = ssub.s32 %s25, %s37
      %p39 = scmp.eq.s32.totalorder %s38, 0
      %s41 = sadd.s32 %s40, 1
      %s42 = scalar_select %p39, %s40, %s41
      %p45 = pneg %p39
      %p46 = scmp.eq.s32.totalorder %s18, 37
      %p47 = por %p45, %p46
      %p48 = scmp.ne.s32.totalorder %s40, %s43
      %p49 = scmp.eq.s32.totalorder %s18, 0
      %p50 = por %p48, %p49
      %p51 = scmp.ne.s32.totalorder %s40, %s43
      %p52 = scmp.eq.s32.totalorder %s23, 37
      %p53 = por %p51, %p52
      %p54 = scmp.ne.s32.totalorder %s43, %s44
      %p55 = scmp.eq.s32.totalorder %s23, 0
      %p56 = por %p54, %p55
      %p57 = scmp.ne.s32.totalorder %s43, %s44
      %p58 = scmp.eq.s32.totalorder %s24, 37
      %p59 = por %p57, %p58
      %p61 = scmp.ne.s32.totalorder %s44, %s60
      %p62 = scmp.eq.s32.totalorder %s24, 0
      %p63 = por %p61, %p62
      %s64 = ssub.s32 %s26, %s33
      %p65 = scmp.eq.s32.totalorder %s64, 0
      %s67 = sadd.s32 %s66, 1
      %s68 = scalar_select %p65, %s66, %s67
      %p71 = pneg %p65
      %p72 = scmp.eq.s32.totalorder %s18, 37
      %p73 = por %p71, %p72
      %p74 = scmp.ne.s32.totalorder %s66, %s69
      %p75 = scmp.eq.s32.totalorder %s18, 0
      %p76 = por %p74, %p75
      %p77 = scmp.ne.s32.totalorder %s66, %s69
      %p78 = scmp.eq.s32.totalorder %s23, 37
      %p79 = por %p77, %p78
      %p80 = scmp.ne.s32.totalorder %s69, %s70
      %p81 = scmp.eq.s32.totalorder %s23, 0
      %p82 = por %p80, %p81
      %p83 = scmp.ne.s32.totalorder %s69, %s70
      %p84 = scmp.eq.s32.totalorder %s24, 37
      %p85 = por %p83, %p84
      %p87 = scmp.ne.s32.totalorder %s70, %s86
      %p88 = scmp.eq.s32.totalorder %s24, 0
      %p89 = por %p87, %p88
      %s90 = ssub.s32 %s26, %s33
      %p91 = scmp.eq.s32.totalorder %s90, 0
      %s93 = sadd.s32 %s92, 1
      %s94 = scalar_select %p91, %s92, %s93
      %p97 = pneg %p91
      %p98 = scmp.eq.s32.totalorder %s18, 37
      %p99 = por %p97, %p98
      %p100 = scmp.ne.s32.totalorder %s92, %s95
      %p101 = scmp.eq.s32.totalorder %s18, 0
      %p102 = por %p100, %p101
      %p103 = scmp.ne.s32.totalorder %s92, %s95
      %p104 = scmp.eq.s32.totalorder %s23, 37
      %p105 = por %p103, %p104
      %p106 = scmp.ne.s32.totalorder %s95, %s96
      %p107 = scmp.eq.s32.totalorder %s23, 0
      %p108 = por %p106, %p107
      %p109 = scmp.ne.s32.totalorder %s95, %s96
      %p110 = scmp.eq.s32.totalorder %s24, 37
      %p111 = por %p109, %p110
      %p113 = scmp.ne.s32.totalorder %s96, %s112
      %p114 = scmp.eq.s32.totalorder %s24, 0
      %p115 = por %p113, %p114
      %s116 = ssub.s32 %s26, %s33
      %p117 = scmp.eq.s32.totalorder %s116, 0
      %s119 = sadd.s32 %s118, 1
      %s120 = scalar_select %p117, %s118, %s119
      %p123 = pneg %p117
      %p124 = scmp.eq.s32.totalorder %s18, 37
      %p125 = por %p123, %p124
      %p126 = scmp.ne.s32.totalorder %s118, %s121
      %p127 = scmp.eq.s32.totalorder %s18, 0
      %p128 = por %p126, %p127
      %p129 = scmp.ne.s32.totalorder %s118, %s121
      %p130 = scmp.eq.s32.totalorder %s23, 37
      %p131 = por %p129, %p130
      %p132 = scmp.ne.s32.totalorder %s121, %s122
      %p133 = scmp.eq.s32.totalorder %s23, 0
      %p134 = por %p132, %p133
      %p135 = scmp.ne.s32.totalorder %s121, %s122
      %p136 = scmp.eq.s32.totalorder %s24, 37
      %p137 = por %p135, %p136
      %p139 = scmp.ne.s32.totalorder %s122, %s138
      %p140 = scmp.eq.s32.totalorder %s24, 0
      %p141 = por %p139, %p140
      %s142 = ssub.s32 %s26, %s33
      %p143 = scmp.eq.s32.totalorder %s142, 0
      %s145 = sadd.s32 %s144, 1
      %s146 = scalar_select %p143, %s144, %s145
      %p149 = pneg %p143
      %p150 = scmp.eq.s32.totalorder %s18, 37
      %p151 = por %p149, %p150
      %p152 = scmp.ne.s32.totalorder %s144, %s147
      %p153 = scmp.eq.s32.totalorder %s18, 0
      %p154 = por %p152, %p153
      %p155 = scmp.ne.s32.totalorder %s144, %s147
      %p156 = scmp.eq.s32.totalorder %s23, 37
      %p157 = por %p155, %p156
      %p158 = scmp.ne.s32.totalorder %s147, %s148
      %p159 = scmp.eq.s32.totalorder %s23, 0
      %p160 = por %p158, %p159
      %p161 = scmp.ne.s32.totalorder %s147, %s148
      %p162 = scmp.eq.s32.totalorder %s24, 37
      %p163 = por %p161, %p162
      %p165 = scmp.ne.s32.totalorder %s148, %s164
      %p166 = scmp.eq.s32.totalorder %s24, 0
      %p167 = por %p165, %p166
      %s168 = ssub.s32 %s26, %s33
      %p169 = scmp.eq.s32.totalorder %s168, 0
      %s171 = sadd.s32 %s170, 1
      %s172 = scalar_select %p169, %s170, %s171
      %p175 = pneg %p169
      %p176 = scmp.eq.s32.totalorder %s18, 37
      %p177 = por %p175, %p176
      %p178 = scmp.ne.s32.totalorder %s170, %s173
      %p179 = scmp.eq.s32.totalorder %s18, 0
      %p180 = por %p178, %p179
      %p181 = scmp.ne.s32.totalorder %s170, %s173
      %p182 = scmp.eq.s32.totalorder %s23, 37
      %p183 = por %p181, %p182
      %p184 = scmp.ne.s32.totalorder %s173, %s174
      %p185 = scmp.eq.s32.totalorder %s23, 0
      %p186 = por %p184, %p185
      %p187 = scmp.ne.s32.totalorder %s173, %s174
      %p188 = scmp.eq.s32.totalorder %s24, 37
      %p189 = por %p187, %p188
      %p191 = scmp.ne.s32.totalorder %s174, %s190
      %p192 = scmp.eq.s32.totalorder %s24, 0
      %p193 = por %p191, %p192
      %s194 = ssub.s32 %s26, %s33
      %p195 = scmp.eq.s32.totalorder %s194, 0
      %s197 = sadd.s32 %s196, 1
      %s198 = scalar_select %p195, %s196, %s197
      %p201 = pneg %p195
      %p202 = scmp.eq.s32.totalorder %s18, 37
      %p203 = por %p201, %p202
      %p204 = scmp.ne.s32.totalorder %s196, %s199
      %p205 = scmp.eq.s32.totalorder %s18, 0
      %p206 = por %p204, %p205
      %p207 = scmp.ne.s32.totalorder %s196, %s199
      %p208 = scmp.eq.s32.totalorder %s23, 37
      %p209 = por %p207, %p208
      %p210 = scmp.ne.s32.totalorder %s199, %s200
      %p211 = scmp.eq.s32.totalorder %s23, 0
      %p212 = por %p210, %p211
      %p213 = scmp.ne.s32.totalorder %s199, %s200
      %p214 = scmp.eq.s32.totalorder %s24, 37
      %p215 = por %p213, %p214
      %p217 = scmp.ne.s32.totalorder %s200, %s216
      %p218 = scmp.eq.s32.totalorder %s24, 0
      %p219 = por %p217, %p218
      %s220 = ssub.s32 %s26, %s33
      %p221 = scmp.eq.s32.totalorder %s220, 0
      %s223 = sadd.s32 %s222, 1
      %s224 = scalar_select %p221, %s222, %s223
      %p227 = pneg %p221
      %p228 = scmp.eq.s32.totalorder %s18, 37
      %p229 = por %p227, %p228
      %p230 = scmp.ne.s32.totalorder %s222, %s225
      %p231 = scmp.eq.s32.totalorder %s18, 0
      %p232 = por %p230, %p231
      %p233 = scmp.ne.s32.totalorder %s222, %s225
      %p234 = scmp.eq.s32.totalorder %s23, 37
      %p235 = por %p233, %p234
      %p236 = scmp.ne.s32.totalorder %s225, %s226
      %p237 = scmp.eq.s32.totalorder %s23, 0
      %p238 = por %p236, %p237
      %p239 = scmp.ne.s32.totalorder %s225, %s226
      %p240 = scmp.eq.s32.totalorder %s24, 37
      %p241 = por %p239, %p240
      %p243 = scmp.ne.s32.totalorder %s226, %s242
      %p244 = scmp.eq.s32.totalorder %s24, 0
      %p245 = por %p243, %p244
      %s246 = ssub.s32 %s26, %s33
      %p247 = scmp.eq.s32.totalorder %s246, 0
      %s249 = sadd.s32 %s248, 1
      %s250 = scalar_select %p247, %s248, %s249
      %p253 = pneg %p247
      %p254 = scmp.eq.s32.totalorder %s18, 37
      %p255 = por %p253, %p254
      %p256 = scmp.ne.s32.totalorder %s248, %s251
      %p257 = scmp.eq.s32.totalorder %s18, 0
      %p258 = por %p256, %p257
      %p259 = scmp.ne.s32.totalorder %s248, %s251
      %p260 = scmp.eq.s32.totalorder %s23, 37
      %p261 = por %p259, %p260
      %p262 = scmp.ne.s32.totalorder %s251, %s252
      %p263 = scmp.eq.s32.totalorder %s23, 0
      %p264 = por %p262, %p263
      %p265 = scmp.ne.s32.totalorder %s251, %s252
      %p266 = scmp.eq.s32.totalorder %s24, 37
      %p267 = por %p265, %p266
      %p269 = scmp.ne.s32.totalorder %s252, %s268
      %p270 = scmp.eq.s32.totalorder %s24, 0
      %p271 = por %p269, %p270
      %s272 = ssub.s32 %s25, %s37
      %p273 = scmp.eq.s32.totalorder %s272, 0
      %s275 = sadd.s32 %s274, 1
      %s276 = scalar_select %p273, %s274, %s275
      %p279 = pneg %p273
      %p280 = scmp.eq.s32.totalorder %s18, 37
      %p281 = por %p279, %p280
      %p282 = scmp.ne.s32.totalorder %s274, %s277
      %p283 = scmp.eq.s32.totalorder %s18, 0
      %p284 = por %p282, %p283
      %p285 = scmp.ne.s32.totalorder %s274, %s277
      %p286 = scmp.eq.s32.totalorder %s23, 37
      %p287 = por %p285, %p286
      %p288 = scmp.ne.s32.totalorder %s277, %s278
      %p289 = scmp.eq.s32.totalorder %s23, 0
      %p290 = por %p288, %p289
      %p291 = scmp.ne.s32.totalorder %s277, %s278
      %p292 = scmp.eq.s32.totalorder %s24, 37
      %p293 = por %p291, %p292
      %p295 = scmp.ne.s32.totalorder %s278, %s294
      %p296 = scmp.eq.s32.totalorder %s24, 0
      %p297 = por %p295, %p296
      %p298 = scmp.le.s32.totalorder 1, %s18
      %p299 = scmp.lt.s32.totalorder %s18, 39
      %p300 = pnand %p298, %p299
      %p301 = pneg %p300
      // Predicated region
      $region9: #{rir1_pallas.1} parent=5 // pred_check
        _
      $region10: #{rir1_pallas.1} parent=5 // pred_check_branch
        %303 = sbr.rel (%p300) target = $region12
      $region11: #{rir1_pallas.1} parent=5 // pred_region
        %s304 = ssub.s32 %s18, 1
      $region12: #{rir1_pallas.1} parent=5 // pred_fallthru
        _
      %p305 = scmp.lt.s32.totalorder %s18, 38
      // Predicated region
      $region13: #{rir1_pallas.1} parent=5 // pred_check
        %p306 = pneg %p305
      $region14: #{rir1_pallas.1} parent=5 // pred_check_branch
        %308 = sbr.rel (%p306) target = $region16
      $region15: #{rir1_pallas.1} parent=5 // pred_region
        // Predicated region
        $region17: #{rir1_pallas.1} parent=15 // pred_check
          %p309 = pneg %p50
        $region18: #{rir1_pallas.1} parent=15 // pred_check_branch
          %311 = sbr.rel (%p309) target = $region20
        $region19: #{rir1_pallas.1} parent=15 // pred_region
          %p312 = scmp.lt.s32.totalorder %s25, 1
          %s313 = scalar_select %p312, %s25, 1
          %s314 = smul.addr %s313, 32
          %s315 = smul.addr %s314, 8
          %s316 = scalar_lea.vmem %s0, %s315
        $region20: #{rir1_pallas.1} parent=15 // pred_fallthru
          _
        // Predicated region
        $region21: #{rir1_pallas.1} parent=15 // pred_check
          %p317 = pneg %p76
        $region22: #{rir1_pallas.1} parent=15 // pred_check_branch
          %319 = sbr.rel (%p317) target = $region24
        $region23: #{rir1_pallas.1} parent=15 // pred_region
          %p320 = scmp.lt.s32.totalorder %s26, 18
          %s321 = scalar_select %p320, %s26, 18
          %s322 = smul.addr %s321, 72
          %s323 = smul.addr %s322, 8
          %s324 = scalar_lea.vmem %s1, %s323
        $region24: #{rir1_pallas.1} parent=15 // pred_fallthru
          _
        // Predicated region
        $region25: #{rir1_pallas.1} parent=15 // pred_check
          %p325 = pneg %p102
        $region26: #{rir1_pallas.1} parent=15 // pred_check_branch
          %327 = sbr.rel (%p325) target = $region28
        $region27: #{rir1_pallas.1} parent=15 // pred_region
          %p328 = scmp.lt.s32.totalorder %s26, 18
          %s329 = scalar_select %p328, %s26, 18
          %s330 = scalar_lea.vmem %s2, %s329
        $region28: #{rir1_pallas.1} parent=15 // pred_fallthru
          _
        // Predicated region
        $region29: #{rir1_pallas.1} parent=15 // pred_check
          %p331 = pneg %p128
        $region30: #{rir1_pallas.1} parent=15 // pred_check_branch
          %333 = sbr.rel (%p331) target = $region32
        $region31: #{rir1_pallas.1} parent=15 // pred_region
          %p334 = scmp.lt.s32.totalorder %s26, 18
          %s335 = scalar_select %p334, %s26, 18
          %s336 = smul.addr %s335, 72
          %s337 = smul.addr %s336, 8
          %s338 = scalar_lea.vmem %s3, %s337
        $region32: #{rir1_pallas.1} parent=15 // pred_fallthru
          _
        // Predicated region
        $region33: #{rir1_pallas.1} parent=15 // pred_check
          %p339 = pneg %p154
        $region34: #{rir1_pallas.1} parent=15 // pred_check_branch
          %341 = sbr.rel (%p339) target = $region36
        $region35: #{rir1_pallas.1} parent=15 // pred_region
          %p342 = scmp.lt.s32.totalorder %s26, 18
          %s343 = scalar_select %p342, %s26, 18
          %s344 = scalar_lea.vmem %s4, %s343
        $region36: #{rir1_pallas.1} parent=15 // pred_fallthru
          _
        // Predicated region
        $region37: #{rir1_pallas.1} parent=15 // pred_check
          %p345 = pneg %p180
        $region38: #{rir1_pallas.1} parent=15 // pred_check_branch
          %347 = sbr.rel (%p345) target = $region40
        $region39: #{rir1_pallas.1} parent=15 // pred_region
          %p348 = scmp.lt.s32.totalorder %s26, 18
          %s349 = scalar_select %p348, %s26, 18
          %s350 = smul.addr %s349, 8
          %s351 = smul.addr %s350, 8
          %s352 = scalar_lea.vmem %s5, %s351
        $region40: #{rir1_pallas.1} parent=15 // pred_fallthru
          _
        // Predicated region
        $region41: #{rir1_pallas.1} parent=15 // pred_check
          %p353 = pneg %p206
        $region42: #{rir1_pallas.1} parent=15 // pred_check_branch
          %355 = sbr.rel (%p353) target = $region44
        $region43: #{rir1_pallas.1} parent=15 // pred_region
          %p356 = scmp.lt.s32.totalorder %s26, 18
          %s357 = scalar_select %p356, %s26, 18
          %s358 = scalar_lea.vmem %s6, %s357
        $region44: #{rir1_pallas.1} parent=15 // pred_fallthru
          _
        // Predicated region
        $region45: #{rir1_pallas.1} parent=15 // pred_check
          %p359 = pneg %p232
        $region46: #{rir1_pallas.1} parent=15 // pred_check_branch
          %361 = sbr.rel (%p359) target = $region48
        $region47: #{rir1_pallas.1} parent=15 // pred_region
          %p362 = scmp.lt.s32.totalorder %s26, 18
          %s363 = scalar_select %p362, %s26, 18
          %s364 = smul.addr %s363, 4
          %s365 = scalar_lea.vmem %s7, %s364
        $region48: #{rir1_pallas.1} parent=15 // pred_fallthru
          _
        // Predicated region
        $region49: #{rir1_pallas.1} parent=15 // pred_check
          %p366 = pneg %p258
        $region50: #{rir1_pallas.1} parent=15 // pred_check_branch
          %368 = sbr.rel (%p366) target = $region52
        $region51: #{rir1_pallas.1} parent=15 // pred_region
          %p369 = scmp.lt.s32.totalorder %s26, 18
          %s370 = scalar_select %p369, %s26, 18
          %s371 = scalar_lea.vmem %s8, %s370
        $region52: #{rir1_pallas.1} parent=15 // pred_fallthru
          _
      $region16: #{rir1_pallas.1} parent=5 // pred_fallthru
        _
      %p372 = scmp.le.s32.totalorder 1, %s18
      %p373 = scmp.lt.s32.totalorder %s18, 39
      %p374 = pnand %p372, %p373
      %p375 = pneg %p374
      // Predicated region
      $region53: #{rir1_pallas.1} parent=5 // pred_check
        _
      $region54: #{rir1_pallas.1} parent=5 // pred_check_branch
        %377 = sbr.rel (%p374) target = $region56
      $region55: #{rir1_pallas.1} parent=5 // pred_region
        %s378 = ssub.s32 %s18, 1
        %p379 = scmp.lt.s32.totalorder %s27, 1
        %s380 = scalar_select %p379, %s27, 1
        %s381 = smul.addr %s380, 32
        %s382 = smul.addr %s381, 8
        %s383 = scalar_lea.vmem %s0, %s382
        %p384 = pneg %p56
        %p385 = pneg %p53
        %p386 = scmp.lt.s32.totalorder %s28, 18
        %s387 = scalar_select %p386, %s28, 18
        %s388 = smul.addr %s387, 72
        %s389 = smul.addr %s388, 8
        %s390 = scalar_lea.vmem %s1, %s389
        %p391 = pneg %p82
        %p392 = pneg %p79
        %p393 = scmp.lt.s32.totalorder %s28, 18
        %s394 = scalar_select %p393, %s28, 18
        %s395 = scalar_lea.vmem %s2, %s394
        %p396 = pneg %p108
        %p397 = pneg %p105
        %p398 = scmp.lt.s32.totalorder %s28, 18
        %s399 = scalar_select %p398, %s28, 18
        %s400 = smul.addr %s399, 72
        %s401 = smul.addr %s400, 8
        %s402 = scalar_lea.vmem %s3, %s401
        %p403 = pneg %p134
        %p404 = pneg %p131
        %p405 = scmp.lt.s32.totalorder %s28, 18
        %s406 = scalar_select %p405, %s28, 18
        %s407 = scalar_lea.vmem %s4, %s406
        %p408 = pneg %p160
        %p409 = pneg %p157
        %p410 = scmp.lt.s32.totalorder %s28, 18
        %s411 = scalar_select %p410, %s28, 18
        %s412 = smul.addr %s411, 8
        %s413 = smul.addr %s412, 8
        %s414 = scalar_lea.vmem %s5, %s413
        %p415 = pneg %p186
        %p416 = pneg %p183
        %p417 = scmp.lt.s32.totalorder %s28, 18
        %s418 = scalar_select %p417, %s28, 18
        %s419 = scalar_lea.vmem %s6, %s418
        %p420 = pneg %p212
        %p421 = pneg %p209
        %p422 = scmp.lt.s32.totalorder %s28, 18
        %s423 = scalar_select %p422, %s28, 18
        %s424 = smul.addr %s423, 4
        %s425 = scalar_lea.vmem %s7, %s424
        %p426 = pneg %p238
        %p427 = pneg %p235
        %p428 = scmp.lt.s32.totalorder %s28, 18
        %s429 = scalar_select %p428, %s28, 18
        %s430 = scalar_lea.vmem %s8, %s429
        %p431 = pneg %p264
        %p432 = pneg %p261
        %p433 = pneg %p290
        %p434 = pneg %p287
        %s435 = sand.u32 %s277, 1
        %s436 = scalar_lea.sflag [#allocation6], %s435
        %s437 = sand.u32 %s277, 1
        %s438 = smul.addr %s437, 256
        %s439 = scalar_lea.vmem [#allocation5], %s438
        %p440 = scmp.lt.s32.totalorder %s27, 1
        %s441 = scalar_select %p440, %s27, 1
        %s442 = smul.addr %s441, 32
        %s443 = smul.addr %s442, 8
        %s444 = scalar_lea.vmem %s0, %s443
        %p445 = scmp.lt.s32.totalorder %s28, 18
        %s446 = scalar_select %p445, %s28, 18
        %s447 = smul.addr %s446, 72
        %s448 = smul.addr %s447, 8
        %s449 = scalar_lea.vmem %s1, %s448
        %p450 = scmp.lt.s32.totalorder %s28, 18
        %s451 = scalar_select %p450, %s28, 18
        %s452 = scalar_lea.vmem %s2, %s451
        %p453 = scmp.lt.s32.totalorder %s28, 18
        %s454 = scalar_select %p453, %s28, 18
        %s455 = smul.addr %s454, 72
        %s456 = smul.addr %s455, 8
        %s457 = scalar_lea.vmem %s3, %s456
        %p458 = scmp.lt.s32.totalorder %s28, 18
        %s459 = scalar_select %p458, %s28, 18
        %s460 = scalar_lea.vmem %s4, %s459
        %p461 = scmp.lt.s32.totalorder %s28, 18
        %s462 = scalar_select %p461, %s28, 18
        %s463 = smul.addr %s462, 8
        %s464 = smul.addr %s463, 8
        %s465 = scalar_lea.vmem %s5, %s464
        %p466 = scmp.lt.s32.totalorder %s28, 18
        %s467 = scalar_select %p466, %s28, 18
        %s468 = scalar_lea.vmem %s6, %s467
        %p469 = scmp.lt.s32.totalorder %s28, 18
        %s470 = scalar_select %p469, %s28, 18
        %s471 = smul.addr %s470, 4
        %s472 = scalar_lea.vmem %s7, %s471
        %p473 = scmp.lt.s32.totalorder %s28, 18
        %s474 = scalar_select %p473, %s28, 18
        %s475 = scalar_lea.vmem %s8, %s474
        %v476 = vlaneseq
        %v477 = vshrl.u32 %v476, 7
        %v478 = vadd.s32 %v477, 8
        %v479 = vadd.s32 %v477, 16
        %v480 = vadd.s32 %v477, 24
        %v481 = vadd.s32 %v477, 32
        %v482 = vadd.s32 %v477, 40
        %v483 = vadd.s32 %v477, 48
        %v484 = vadd.s32 %v477, 56
        %v485 = vadd.s32 %v477, 64
        %v486 = vadd.s32 %v477, 72
        %v487 = vadd.s32 %v477, 80
        %v488 = vadd.s32 %v477, 88
        %v489 = vadd.s32 %v477, 96
        %v490 = vadd.s32 %v477, 104
        %v491 = vadd.s32 %v477, 112
        %v492 = vadd.s32 %v477, 120
        %v493 = vadd.s32 %v477, 128
        %v494 = vadd.s32 %v477, 136
        %v495 = vadd.s32 %v477, 144
        %v496 = vadd.s32 %v477, 152
        %v497 = vadd.s32 %v477, 160
        %v498 = vadd.s32 %v477, 168
        %v499 = vadd.s32 %v477, 176
        %v500 = vadd.s32 %v477, 184
        %v501 = vadd.s32 %v477, 192
        %v502 = vadd.s32 %v477, 200
        %v503 = vadd.s32 %v477, 208
        %v504 = vadd.s32 %v477, 216
        %v505 = vadd.s32 %v477, 224
        %v506 = vadd.s32 %v477, 232
        %v507 = vadd.s32 %v477, 240
        %v508 = vadd.s32 %v477, 248
        %vm509 = vcmp.lt.s32.totalorder %v477, 0
        %v510 = vsub.s32 0, %v477
        %v511 = vsel %vm509, %v510, %v477
        %v512 = vshrl.u32 %v511, 4
        %v513 = vand.u32 %v511, 15
        %v514 = vsub.s32 0, %v513
        %v515 = vsel %vm509, %v514, %v513
        %vm516 = vcmp.lt.s32.totalorder %v478, 0
        %v517 = vsub.s32 0, %v478
        %v518 = vsel %vm516, %v517, %v478
        %v519 = vshrl.u32 %v518, 4
        %v520 = vand.u32 %v518, 15
        %v521 = vsub.s32 0, %v520
        %v522 = vsel %vm516, %v521, %v520
        %vm523 = vcmp.lt.s32.totalorder %v479, 0
        %v524 = vsub.s32 0, %v479
        %v525 = vsel %vm523, %v524, %v479
        %v526 = vshrl.u32 %v525, 4
        %v527 = vand.u32 %v525, 15
        %v528 = vsub.s32 0, %v527
        %v529 = vsel %vm523, %v528, %v527
        %vm530 = vcmp.lt.s32.totalorder %v480, 0
        %v531 = vsub.s32 0, %v480
        %v532 = vsel %vm530, %v531, %v480
        %v533 = vshrl.u32 %v532, 4
        %v534 = vand.u32 %v532, 15
        %v535 = vsub.s32 0, %v534
        %v536 = vsel %vm530, %v535, %v534
        %vm537 = vcmp.lt.s32.totalorder %v481, 0
        %v538 = vsub.s32 0, %v481
        %v539 = vsel %vm537, %v538, %v481
        %v540 = vshrl.u32 %v539, 4
        %v541 = vand.u32 %v539, 15
        %v542 = vsub.s32 0, %v541
        %v543 = vsel %vm537, %v542, %v541
        %vm544 = vcmp.lt.s32.totalorder %v482, 0
        %v545 = vsub.s32 0, %v482
        %v546 = vsel %vm544, %v545, %v482
        %v547 = vshrl.u32 %v546, 4
        %v548 = vand.u32 %v546, 15
        %v549 = vsub.s32 0, %v548
        %v550 = vsel %vm544, %v549, %v548
        %vm551 = vcmp.lt.s32.totalorder %v483, 0
        %v552 = vsub.s32 0, %v483
        %v553 = vsel %vm551, %v552, %v483
        %v554 = vshrl.u32 %v553, 4
        %v555 = vand.u32 %v553, 15
        %v556 = vsub.s32 0, %v555
        %v557 = vsel %vm551, %v556, %v555
        %vm558 = vcmp.lt.s32.totalorder %v484, 0
        %v559 = vsub.s32 0, %v484
        %v560 = vsel %vm558, %v559, %v484
        %v561 = vshrl.u32 %v560, 4
        %v562 = vand.u32 %v560, 15
        %v563 = vsub.s32 0, %v562
        %v564 = vsel %vm558, %v563, %v562
        %vm565 = vcmp.lt.s32.totalorder %v485, 0
        %v566 = vsub.s32 0, %v485
        %v567 = vsel %vm565, %v566, %v485
        %v568 = vshrl.u32 %v567, 4
        %v569 = vand.u32 %v567, 15
        %v570 = vsub.s32 0, %v569
        %v571 = vsel %vm565, %v570, %v569
        %vm572 = vcmp.lt.s32.totalorder %v486, 0
        %v573 = vsub.s32 0, %v486
        %v574 = vsel %vm572, %v573, %v486
        %v575 = vshrl.u32 %v574, 4
        %v576 = vand.u32 %v574, 15
        %v577 = vsub.s32 0, %v576
        %v578 = vsel %vm572, %v577, %v576
        %vm579 = vcmp.lt.s32.totalorder %v487, 0
        %v580 = vsub.s32 0, %v487
        %v581 = vsel %vm579, %v580, %v487
        %v582 = vshrl.u32 %v581, 4
        %v583 = vand.u32 %v581, 15
        %v584 = vsub.s32 0, %v583
        %v585 = vsel %vm579, %v584, %v583
        %vm586 = vcmp.lt.s32.totalorder %v488, 0
        %v587 = vsub.s32 0, %v488
        %v588 = vsel %vm586, %v587, %v488
        %v589 = vshrl.u32 %v588, 4
        %v590 = vand.u32 %v588, 15
        %v591 = vsub.s32 0, %v590
        %v592 = vsel %vm586, %v591, %v590
        %vm593 = vcmp.lt.s32.totalorder %v489, 0
        %v594 = vsub.s32 0, %v489
        %v595 = vsel %vm593, %v594, %v489
        %v596 = vshrl.u32 %v595, 4
        %v597 = vand.u32 %v595, 15
        %v598 = vsub.s32 0, %v597
        %v599 = vsel %vm593, %v598, %v597
        %vm600 = vcmp.lt.s32.totalorder %v490, 0
        %v601 = vsub.s32 0, %v490
        %v602 = vsel %vm600, %v601, %v490
        %v603 = vshrl.u32 %v602, 4
        %v604 = vand.u32 %v602, 15
        %v605 = vsub.s32 0, %v604
        %v606 = vsel %vm600, %v605, %v604
        %vm607 = vcmp.lt.s32.totalorder %v491, 0
        %v608 = vsub.s32 0, %v491
        %v609 = vsel %vm607, %v608, %v491
        %v610 = vshrl.u32 %v609, 4
        %v611 = vand.u32 %v609, 15
        %v612 = vsub.s32 0, %v611
        %v613 = vsel %vm607, %v612, %v611
        %vm614 = vcmp.lt.s32.totalorder %v492, 0
        %v615 = vsub.s32 0, %v492
        %v616 = vsel %vm614, %v615, %v492
        %v617 = vshrl.u32 %v616, 4
        %v618 = vand.u32 %v616, 15
        %v619 = vsub.s32 0, %v618
        %v620 = vsel %vm614, %v619, %v618
        %vm621 = vcmp.lt.s32.totalorder %v493, 0
        %v622 = vsub.s32 0, %v493
        %v623 = vsel %vm621, %v622, %v493
        %v624 = vshrl.u32 %v623, 4
        %v625 = vand.u32 %v623, 15
        %v626 = vsub.s32 0, %v625
        %v627 = vsel %vm621, %v626, %v625
        %vm628 = vcmp.lt.s32.totalorder %v494, 0
        %v629 = vsub.s32 0, %v494
        %v630 = vsel %vm628, %v629, %v494
        %v631 = vshrl.u32 %v630, 4
        %v632 = vand.u32 %v630, 15
        %v633 = vsub.s32 0, %v632
        %v634 = vsel %vm628, %v633, %v632
        %vm635 = vcmp.lt.s32.totalorder %v495, 0
        %v636 = vsub.s32 0, %v495
        %v637 = vsel %vm635, %v636, %v495
        %v638 = vshrl.u32 %v637, 4
        %v639 = vand.u32 %v637, 15
        %v640 = vsub.s32 0, %v639
        %v641 = vsel %vm635, %v640, %v639
        %vm642 = vcmp.lt.s32.totalorder %v496, 0
        %v643 = vsub.s32 0, %v496
        %v644 = vsel %vm642, %v643, %v496
        %v645 = vshrl.u32 %v644, 4
        %v646 = vand.u32 %v644, 15
        %v647 = vsub.s32 0, %v646
        %v648 = vsel %vm642, %v647, %v646
        %vm649 = vcmp.lt.s32.totalorder %v497, 0
        %v650 = vsub.s32 0, %v497
        %v651 = vsel %vm649, %v650, %v497
        %v652 = vshrl.u32 %v651, 4
        %v653 = vand.u32 %v651, 15
        %v654 = vsub.s32 0, %v653
        %v655 = vsel %vm649, %v654, %v653
        %vm656 = vcmp.lt.s32.totalorder %v498, 0
        %v657 = vsub.s32 0, %v498
        %v658 = vsel %vm656, %v657, %v498
        %v659 = vshrl.u32 %v658, 4
        %v660 = vand.u32 %v658, 15
        %v661 = vsub.s32 0, %v660
        %v662 = vsel %vm656, %v661, %v660
        %vm663 = vcmp.lt.s32.totalorder %v499, 0
        %v664 = vsub.s32 0, %v499
        %v665 = vsel %vm663, %v664, %v499
        %v666 = vshrl.u32 %v665, 4
        %v667 = vand.u32 %v665, 15
        %v668 = vsub.s32 0, %v667
        %v669 = vsel %vm663, %v668, %v667
        %vm670 = vcmp.lt.s32.totalorder %v500, 0
        %v671 = vsub.s32 0, %v500
        %v672 = vsel %vm670, %v671, %v500
        %v673 = vshrl.u32 %v672, 4
        %v674 = vand.u32 %v672, 15
        %v675 = vsub.s32 0, %v674
        %v676 = vsel %vm670, %v675, %v674
        %vm677 = vcmp.lt.s32.totalorder %v501, 0
        %v678 = vsub.s32 0, %v501
        %v679 = vsel %vm677, %v678, %v501
        %v680 = vshrl.u32 %v679, 4
        %v681 = vand.u32 %v679, 15
        %v682 = vsub.s32 0, %v681
        %v683 = vsel %vm677, %v682, %v681
        %vm684 = vcmp.lt.s32.totalorder %v502, 0
        %v685 = vsub.s32 0, %v502
        %v686 = vsel %vm684, %v685, %v502
        %v687 = vshrl.u32 %v686, 4
        %v688 = vand.u32 %v686, 15
        %v689 = vsub.s32 0, %v688
        %v690 = vsel %vm684, %v689, %v688
        %vm691 = vcmp.lt.s32.totalorder %v503, 0
        %v692 = vsub.s32 0, %v503
        %v693 = vsel %vm691, %v692, %v503
        %v694 = vshrl.u32 %v693, 4
        %v695 = vand.u32 %v693, 15
        %v696 = vsub.s32 0, %v695
        %v697 = vsel %vm691, %v696, %v695
        %vm698 = vcmp.lt.s32.totalorder %v504, 0
        %v699 = vsub.s32 0, %v504
        %v700 = vsel %vm698, %v699, %v504
        %v701 = vshrl.u32 %v700, 4
        %v702 = vand.u32 %v700, 15
        %v703 = vsub.s32 0, %v702
        %v704 = vsel %vm698, %v703, %v702
        %vm705 = vcmp.lt.s32.totalorder %v505, 0
        %v706 = vsub.s32 0, %v505
        %v707 = vsel %vm705, %v706, %v505
        %v708 = vshrl.u32 %v707, 4
        %v709 = vand.u32 %v707, 15
        %v710 = vsub.s32 0, %v709
        %v711 = vsel %vm705, %v710, %v709
        %vm712 = vcmp.lt.s32.totalorder %v506, 0
        %v713 = vsub.s32 0, %v506
        %v714 = vsel %vm712, %v713, %v506
        %v715 = vshrl.u32 %v714, 4
        %v716 = vand.u32 %v714, 15
        %v717 = vsub.s32 0, %v716
        %v718 = vsel %vm712, %v717, %v716
        %vm719 = vcmp.lt.s32.totalorder %v507, 0
        %v720 = vsub.s32 0, %v507
        %v721 = vsel %vm719, %v720, %v507
        %v722 = vshrl.u32 %v721, 4
        %v723 = vand.u32 %v721, 15
        %v724 = vsub.s32 0, %v723
        %v725 = vsel %vm719, %v724, %v723
        %vm726 = vcmp.lt.s32.totalorder %v508, 0
        %v727 = vsub.s32 0, %v508
        %v728 = vsel %vm726, %v727, %v508
        %v729 = vshrl.u32 %v728, 4
        %v730 = vand.u32 %v728, 15
        %v731 = vsub.s32 0, %v730
        %v732 = vsel %vm726, %v731, %v730
        %vm733 = vcmp.ne.s32.totalorder %v515, 0
        %vm734 = vcmp.ne.s32.totalorder %v522, 0
        %vm735 = vcmp.ne.s32.totalorder %v529, 0
        %vm736 = vcmp.ne.s32.totalorder %v536, 0
        %vm737 = vcmp.ne.s32.totalorder %v543, 0
        %vm738 = vcmp.ne.s32.totalorder %v550, 0
        %vm739 = vcmp.ne.s32.totalorder %v557, 0
        %vm740 = vcmp.ne.s32.totalorder %v564, 0
        %vm741 = vcmp.ne.s32.totalorder %v571, 0
        %vm742 = vcmp.ne.s32.totalorder %v578, 0
        %vm743 = vcmp.ne.s32.totalorder %v585, 0
        %vm744 = vcmp.ne.s32.totalorder %v592, 0
        %vm745 = vcmp.ne.s32.totalorder %v599, 0
        %vm746 = vcmp.ne.s32.totalorder %v606, 0
        %vm747 = vcmp.ne.s32.totalorder %v613, 0
        %vm748 = vcmp.ne.s32.totalorder %v620, 0
        %vm749 = vcmp.ne.s32.totalorder %v627, 0
        %vm750 = vcmp.ne.s32.totalorder %v634, 0
        %vm751 = vcmp.ne.s32.totalorder %v641, 0
        %vm752 = vcmp.ne.s32.totalorder %v648, 0
        %vm753 = vcmp.ne.s32.totalorder %v655, 0
        %vm754 = vcmp.ne.s32.totalorder %v662, 0
        %vm755 = vcmp.ne.s32.totalorder %v669, 0
        %vm756 = vcmp.ne.s32.totalorder %v676, 0
        %vm757 = vcmp.ne.s32.totalorder %v683, 0
        %vm758 = vcmp.ne.s32.totalorder %v690, 0
        %vm759 = vcmp.ne.s32.totalorder %v697, 0
        %vm760 = vcmp.ne.s32.totalorder %v704, 0
        %vm761 = vcmp.ne.s32.totalorder %v711, 0
        %vm762 = vcmp.ne.s32.totalorder %v718, 0
        %vm763 = vcmp.ne.s32.totalorder %v725, 0
        %vm764 = vcmp.ne.s32.totalorder %v732, 0
        %vm765 = vcmp.lt.s32.totalorder %v515, 0
        %vm766 = vcmp.lt.s32.totalorder %v522, 0
        %vm767 = vcmp.lt.s32.totalorder %v529, 0
        %vm768 = vcmp.lt.s32.totalorder %v536, 0
        %vm769 = vcmp.lt.s32.totalorder %v543, 0
        %vm770 = vcmp.lt.s32.totalorder %v550, 0
        %vm771 = vcmp.lt.s32.totalorder %v557, 0
        %vm772 = vcmp.lt.s32.totalorder %v564, 0
        %vm773 = vcmp.lt.s32.totalorder %v571, 0
        %vm774 = vcmp.lt.s32.totalorder %v578, 0
        %vm775 = vcmp.lt.s32.totalorder %v585, 0
        %vm776 = vcmp.lt.s32.totalorder %v592, 0
        %vm777 = vcmp.lt.s32.totalorder %v599, 0
        %vm778 = vcmp.lt.s32.totalorder %v606, 0
        %vm779 = vcmp.lt.s32.totalorder %v613, 0
        %vm780 = vcmp.lt.s32.totalorder %v620, 0
        %vm781 = vcmp.lt.s32.totalorder %v627, 0
        %vm782 = vcmp.lt.s32.totalorder %v634, 0
        %vm783 = vcmp.lt.s32.totalorder %v641, 0
        %vm784 = vcmp.lt.s32.totalorder %v648, 0
        %vm785 = vcmp.lt.s32.totalorder %v655, 0
        %vm786 = vcmp.lt.s32.totalorder %v662, 0
        %vm787 = vcmp.lt.s32.totalorder %v669, 0
        %vm788 = vcmp.lt.s32.totalorder %v676, 0
        %vm789 = vcmp.lt.s32.totalorder %v683, 0
        %vm790 = vcmp.lt.s32.totalorder %v690, 0
        %vm791 = vcmp.lt.s32.totalorder %v697, 0
        %vm792 = vcmp.lt.s32.totalorder %v704, 0
        %vm793 = vcmp.lt.s32.totalorder %v711, 0
        %vm794 = vcmp.lt.s32.totalorder %v718, 0
        %vm795 = vcmp.lt.s32.totalorder %v725, 0
        %vm796 = vcmp.lt.s32.totalorder %v732, 0
        %vm797 = vmand %vm765, %vm733
        %vm798 = vmand %vm766, %vm734
        %vm799 = vmand %vm767, %vm735
        %vm800 = vmand %vm768, %vm736
        %vm801 = vmand %vm769, %vm737
        %vm802 = vmand %vm770, %vm738
        %vm803 = vmand %vm771, %vm739
        %vm804 = vmand %vm772, %vm740
        %vm805 = vmand %vm773, %vm741
        %vm806 = vmand %vm774, %vm742
        %vm807 = vmand %vm775, %vm743
        %vm808 = vmand %vm776, %vm744
        %vm809 = vmand %vm777, %vm745
        %vm810 = vmand %vm778, %vm746
        %vm811 = vmand %vm779, %vm747
        %vm812 = vmand %vm780, %vm748
        %vm813 = vmand %vm781, %vm749
        %vm814 = vmand %vm782, %vm750
        %vm815 = vmand %vm783, %vm751
        %vm816 = vmand %vm784, %vm752
        %vm817 = vmand %vm785, %vm753
        %vm818 = vmand %vm786, %vm754
        %vm819 = vmand %vm787, %vm755
        %vm820 = vmand %vm788, %vm756
        %vm821 = vmand %vm789, %vm757
        %vm822 = vmand %vm790, %vm758
        %vm823 = vmand %vm791, %vm759
        %vm824 = vmand %vm792, %vm760
        %vm825 = vmand %vm793, %vm761
        %vm826 = vmand %vm794, %vm762
        %vm827 = vmand %vm795, %vm763
        %vm828 = vmand %vm796, %vm764
        %v829 = vadd.s32 %v515, 16
        %v830 = vadd.s32 %v522, 16
        %v831 = vadd.s32 %v529, 16
        %v832 = vadd.s32 %v536, 16
        %v833 = vadd.s32 %v543, 16
        %v834 = vadd.s32 %v550, 16
        %v835 = vadd.s32 %v557, 16
        %v836 = vadd.s32 %v564, 16
        %v837 = vadd.s32 %v571, 16
        %v838 = vadd.s32 %v578, 16
        %v839 = vadd.s32 %v585, 16
        %v840 = vadd.s32 %v592, 16
        %v841 = vadd.s32 %v599, 16
        %v842 = vadd.s32 %v606, 16
        %v843 = vadd.s32 %v613, 16
        %v844 = vadd.s32 %v620, 16
        %v845 = vadd.s32 %v627, 16
        %v846 = vadd.s32 %v634, 16
        %v847 = vadd.s32 %v641, 16
        %v848 = vadd.s32 %v648, 16
        %v849 = vadd.s32 %v655, 16
        %v850 = vadd.s32 %v662, 16
        %v851 = vadd.s32 %v669, 16
        %v852 = vadd.s32 %v676, 16
        %v853 = vadd.s32 %v683, 16
        %v854 = vadd.s32 %v690, 16
        %v855 = vadd.s32 %v697, 16
        %v856 = vadd.s32 %v704, 16
        %v857 = vadd.s32 %v711, 16
        %v858 = vadd.s32 %v718, 16
        %v859 = vadd.s32 %v725, 16
        %v860 = vadd.s32 %v732, 16
        %v861 = vsel %vm797, %v829, %v515
        %v862 = vsel %vm798, %v830, %v522
        %v863 = vsel %vm799, %v831, %v529
        %v864 = vsel %vm800, %v832, %v536
        %v865 = vsel %vm801, %v833, %v543
        %v866 = vsel %vm802, %v834, %v550
        %v867 = vsel %vm803, %v835, %v557
        %v868 = vsel %vm804, %v836, %v564
        %v869 = vsel %vm805, %v837, %v571
        %v870 = vsel %vm806, %v838, %v578
        %v871 = vsel %vm807, %v839, %v585
        %v872 = vsel %vm808, %v840, %v592
        %v873 = vsel %vm809, %v841, %v599
        %v874 = vsel %vm810, %v842, %v606
        %v875 = vsel %vm811, %v843, %v613
        %v876 = vsel %vm812, %v844, %v620
        %v877 = vsel %vm813, %v845, %v627
        %v878 = vsel %vm814, %v846, %v634
        %v879 = vsel %vm815, %v847, %v641
        %v880 = vsel %vm816, %v848, %v648
        %v881 = vsel %vm817, %v849, %v655
        %v882 = vsel %vm818, %v850, %v662
        %v883 = vsel %vm819, %v851, %v669
        %v884 = vsel %vm820, %v852, %v676
        %v885 = vsel %vm821, %v853, %v683
        %v886 = vsel %vm822, %v854, %v690
        %v887 = vsel %vm823, %v855, %v697
        %v888 = vsel %vm824, %v856, %v704
        %v889 = vsel %vm825, %v857, %v711
        %v890 = vsel %vm826, %v858, %v718
        %v891 = vsel %vm827, %v859, %v725
        %v892 = vsel %vm828, %v860, %v732
        %vm893 = vcmp.gt.s32.totalorder %v861, 0
        %vm894 = vcmp.gt.s32.totalorder %v862, 0
        %vm895 = vcmp.gt.s32.totalorder %v863, 0
        %vm896 = vcmp.gt.s32.totalorder %v864, 0
        %vm897 = vcmp.gt.s32.totalorder %v865, 0
        %vm898 = vcmp.gt.s32.totalorder %v866, 0
        %vm899 = vcmp.gt.s32.totalorder %v867, 0
        %vm900 = vcmp.gt.s32.totalorder %v868, 0
        %vm901 = vcmp.gt.s32.totalorder %v869, 0
        %vm902 = vcmp.gt.s32.totalorder %v870, 0
        %vm903 = vcmp.gt.s32.totalorder %v871, 0
        %vm904 = vcmp.gt.s32.totalorder %v872, 0
        %vm905 = vcmp.gt.s32.totalorder %v873, 0
        %vm906 = vcmp.gt.s32.totalorder %v874, 0
        %vm907 = vcmp.gt.s32.totalorder %v875, 0
        %vm908 = vcmp.gt.s32.totalorder %v876, 0
        %vm909 = vcmp.gt.s32.totalorder %v877, 0
        %vm910 = vcmp.gt.s32.totalorder %v878, 0
        %vm911 = vcmp.gt.s32.totalorder %v879, 0
        %vm912 = vcmp.gt.s32.totalorder %v880, 0
        %vm913 = vcmp.gt.s32.totalorder %v881, 0
        %vm914 = vcmp.gt.s32.totalorder %v882, 0
        %vm915 = vcmp.gt.s32.totalorder %v883, 0
        %vm916 = vcmp.gt.s32.totalorder %v884, 0
        %vm917 = vcmp.gt.s32.totalorder %v885, 0
        %vm918 = vcmp.gt.s32.totalorder %v886, 0
        %vm919 = vcmp.gt.s32.totalorder %v887, 0
        %vm920 = vcmp.gt.s32.totalorder %v888, 0
        %vm921 = vcmp.gt.s32.totalorder %v889, 0
        %vm922 = vcmp.gt.s32.totalorder %v890, 0
        %vm923 = vcmp.gt.s32.totalorder %v891, 0
        %vm924 = vcmp.gt.s32.totalorder %v892, 0
        %v925 = vsel %vm893, 1, 0
        %v926 = vsel %vm894, 1, 0
        %v927 = vsel %vm895, 1, 0
        %v928 = vsel %vm896, 1, 0
        %v929 = vsel %vm897, 1, 0
        %v930 = vsel %vm898, 1, 0
        %v931 = vsel %vm899, 1, 0
        %v932 = vsel %vm900, 1, 0
        %v933 = vsel %vm901, 1, 0
        %v934 = vsel %vm902, 1, 0
        %v935 = vsel %vm903, 1, 0
        %v936 = vsel %vm904, 1, 0
        %v937 = vsel %vm905, 1, 0
        %v938 = vsel %vm906, 1, 0
        %v939 = vsel %vm907, 1, 0
        %v940 = vsel %vm908, 1, 0
        %v941 = vsel %vm909, 1, 0
        %v942 = vsel %vm910, 1, 0
        %v943 = vsel %vm911, 1, 0
        %v944 = vsel %vm912, 1, 0
        %v945 = vsel %vm913, 1, 0
        %v946 = vsel %vm914, 1, 0
        %v947 = vsel %vm915, 1, 0
        %v948 = vsel %vm916, 1, 0
        %v949 = vsel %vm917, 1, 0
        %v950 = vsel %vm918, 1, 0
        %v951 = vsel %vm919, 1, 0
        %v952 = vsel %vm920, 1, 0
        %v953 = vsel %vm921, 1, 0
        %v954 = vsel %vm922, 1, 0
        %v955 = vsel %vm923, 1, 0
        %v956 = vsel %vm924, 1, 0
        %v957 = vcvt.s32.f32 %v925
        %v958 = vcvt.s32.f32 %v926
        %v959 = vcvt.s32.f32 %v927
        %v960 = vcvt.s32.f32 %v928
        %v961 = vcvt.s32.f32 %v929
        %v962 = vcvt.s32.f32 %v930
        %v963 = vcvt.s32.f32 %v931
        %v964 = vcvt.s32.f32 %v932
        %v965 = vcvt.s32.f32 %v933
        %v966 = vcvt.s32.f32 %v934
        %v967 = vcvt.s32.f32 %v935
        %v968 = vcvt.s32.f32 %v936
        %v969 = vcvt.s32.f32 %v937
        %v970 = vcvt.s32.f32 %v938
        %v971 = vcvt.s32.f32 %v939
        %v972 = vcvt.s32.f32 %v940
        %v973 = vcvt.s32.f32 %v941
        %v974 = vcvt.s32.f32 %v942
        %v975 = vcvt.s32.f32 %v943
        %v976 = vcvt.s32.f32 %v944
        %v977 = vcvt.s32.f32 %v945
        %v978 = vcvt.s32.f32 %v946
        %v979 = vcvt.s32.f32 %v947
        %v980 = vcvt.s32.f32 %v948
        %v981 = vcvt.s32.f32 %v949
        %v982 = vcvt.s32.f32 %v950
        %v983 = vcvt.s32.f32 %v951
        %v984 = vcvt.s32.f32 %v952
        %v985 = vcvt.s32.f32 %v953
        %v986 = vcvt.s32.f32 %v954
        %v987 = vcvt.s32.f32 %v955
        %v988 = vcvt.s32.f32 %v956
        %vm989 = vcmp.lt.s32.totalorder %v861, 15
        %vm990 = vcmp.lt.s32.totalorder %v862, 15
        %vm991 = vcmp.lt.s32.totalorder %v863, 15
        %vm992 = vcmp.lt.s32.totalorder %v864, 15
        %vm993 = vcmp.lt.s32.totalorder %v865, 15
        %vm994 = vcmp.lt.s32.totalorder %v866, 15
        %vm995 = vcmp.lt.s32.totalorder %v867, 15
        %vm996 = vcmp.lt.s32.totalorder %v868, 15
        %vm997 = vcmp.lt.s32.totalorder %v869, 15
        %vm998 = vcmp.lt.s32.totalorder %v870, 15
        %vm999 = vcmp.lt.s32.totalorder %v871, 15
        %vm1000 = vcmp.lt.s32.totalorder %v872, 15
        %vm1001 = vcmp.lt.s32.totalorder %v873, 15
        %vm1002 = vcmp.lt.s32.totalorder %v874, 15
        %vm1003 = vcmp.lt.s32.totalorder %v875, 15
        %vm1004 = vcmp.lt.s32.totalorder %v876, 15
        %vm1005 = vcmp.lt.s32.totalorder %v877, 15
        %vm1006 = vcmp.lt.s32.totalorder %v878, 15
        %vm1007 = vcmp.lt.s32.totalorder %v879, 15
        %vm1008 = vcmp.lt.s32.totalorder %v880, 15
        %vm1009 = vcmp.lt.s32.totalorder %v881, 15
        %vm1010 = vcmp.lt.s32.totalorder %v882, 15
        %vm1011 = vcmp.lt.s32.totalorder %v883, 15
        %vm1012 = vcmp.lt.s32.totalorder %v884, 15
        %vm1013 = vcmp.lt.s32.totalorder %v885, 15
        %vm1014 = vcmp.lt.s32.totalorder %v886, 15
        %vm1015 = vcmp.lt.s32.totalorder %v887, 15
        %vm1016 = vcmp.lt.s32.totalorder %v888, 15
        %vm1017 = vcmp.lt.s32.totalorder %v889, 15
        %vm1018 = vcmp.lt.s32.totalorder %v890, 15
        %vm1019 = vcmp.lt.s32.totalorder %v891, 15
        %vm1020 = vcmp.lt.s32.totalorder %v892, 15
        %v1021 = vsel %vm989, 1, 0
        %v1022 = vsel %vm990, 1, 0
        %v1023 = vsel %vm991, 1, 0
        %v1024 = vsel %vm992, 1, 0
        %v1025 = vsel %vm993, 1, 0
        %v1026 = vsel %vm994, 1, 0
        %v1027 = vsel %vm995, 1, 0
        %v1028 = vsel %vm996, 1, 0
        %v1029 = vsel %vm997, 1, 0
        %v1030 = vsel %vm998, 1, 0
        %v1031 = vsel %vm999, 1, 0
        %v1032 = vsel %vm1000, 1, 0
        %v1033 = vsel %vm1001, 1, 0
        %v1034 = vsel %vm1002, 1, 0
        %v1035 = vsel %vm1003, 1, 0
        %v1036 = vsel %vm1004, 1, 0
        %v1037 = vsel %vm1005, 1, 0
        %v1038 = vsel %vm1006, 1, 0
        %v1039 = vsel %vm1007, 1, 0
        %v1040 = vsel %vm1008, 1, 0
        %v1041 = vsel %vm1009, 1, 0
        %v1042 = vsel %vm1010, 1, 0
        %v1043 = vsel %vm1011, 1, 0
        %v1044 = vsel %vm1012, 1, 0
        %v1045 = vsel %vm1013, 1, 0
        %v1046 = vsel %vm1014, 1, 0
        %v1047 = vsel %vm1015, 1, 0
        %v1048 = vsel %vm1016, 1, 0
        %v1049 = vsel %vm1017, 1, 0
        %v1050 = vsel %vm1018, 1, 0
        %v1051 = vsel %vm1019, 1, 0
        %v1052 = vsel %vm1020, 1, 0
        %v1053 = vcvt.s32.f32 %v1021
        %v1054 = vcvt.s32.f32 %v1022
        %v1055 = vcvt.s32.f32 %v1023
        %v1056 = vcvt.s32.f32 %v1024
        %v1057 = vcvt.s32.f32 %v1025
        %v1058 = vcvt.s32.f32 %v1026
        %v1059 = vcvt.s32.f32 %v1027
        %v1060 = vcvt.s32.f32 %v1028
        %v1061 = vcvt.s32.f32 %v1029
        %v1062 = vcvt.s32.f32 %v1030
        %v1063 = vcvt.s32.f32 %v1031
        %v1064 = vcvt.s32.f32 %v1032
        %v1065 = vcvt.s32.f32 %v1033
        %v1066 = vcvt.s32.f32 %v1034
        %v1067 = vcvt.s32.f32 %v1035
        %v1068 = vcvt.s32.f32 %v1036
        %v1069 = vcvt.s32.f32 %v1037
        %v1070 = vcvt.s32.f32 %v1038
        %v1071 = vcvt.s32.f32 %v1039
        %v1072 = vcvt.s32.f32 %v1040
        %v1073 = vcvt.s32.f32 %v1041
        %v1074 = vcvt.s32.f32 %v1042
        %v1075 = vcvt.s32.f32 %v1043
        %v1076 = vcvt.s32.f32 %v1044
        %v1077 = vcvt.s32.f32 %v1045
        %v1078 = vcvt.s32.f32 %v1046
        %v1079 = vcvt.s32.f32 %v1047
        %v1080 = vcvt.s32.f32 %v1048
        %v1081 = vcvt.s32.f32 %v1049
        %v1082 = vcvt.s32.f32 %v1050
        %v1083 = vcvt.s32.f32 %v1051
        %v1084 = vcvt.s32.f32 %v1052
        %p1085 = scmp.eq.s32.totalorder %s28, 0
        // Predicated region
        $region57: #{rir1_pallas.1} parent=55 // pred_check
          %p1086 = pneg %p1085
        $region58: #{rir1_pallas.1} parent=55 // pred_check_branch
          %1088 = sbr.rel (%p1086) target = $region60
        $region59: #{rir1_pallas.1} parent=55 // pred_region
          %v1089 = vld [vmem:[%s444] sm:$0xff]
          %v1090 = vld [vmem:[%s444 + $0x8] sm:$0xff]
          %v1091 = vld [vmem:[%s444 + $0x10] sm:$0xff]
          %v1092 = vld [vmem:[%s444 + $0x18] sm:$0xff]
          %v1093 = vld [vmem:[%s444 + $0x20] sm:$0xff]
          %v1094 = vld [vmem:[%s444 + $0x28] sm:$0xff]
          %v1095 = vld [vmem:[%s444 + $0x30] sm:$0xff]
          %v1096 = vld [vmem:[%s444 + $0x38] sm:$0xff]
          %v1097 = vld [vmem:[%s444 + $0x40] sm:$0xff]
          %v1098 = vld [vmem:[%s444 + $0x48] sm:$0xff]
          %v1099 = vld [vmem:[%s444 + $0x50] sm:$0xff]
          %v1100 = vld [vmem:[%s444 + $0x58] sm:$0xff]
          %v1101 = vld [vmem:[%s444 + $0x60] sm:$0xff]
          %v1102 = vld [vmem:[%s444 + $0x68] sm:$0xff]
          %v1103 = vld [vmem:[%s444 + $0x70] sm:$0xff]
          %v1104 = vld [vmem:[%s444 + $0x78] sm:$0xff]
          %v1105 = vld [vmem:[%s444 + $0x80] sm:$0xff]
          %v1106 = vld [vmem:[%s444 + $0x88] sm:$0xff]
          %v1107 = vld [vmem:[%s444 + $0x90] sm:$0xff]
          %v1108 = vld [vmem:[%s444 + $0x98] sm:$0xff]
          %v1109 = vld [vmem:[%s444 + $0xa0] sm:$0xff]
          %v1110 = vld [vmem:[%s444 + $0xa8] sm:$0xff]
          %v1111 = vld [vmem:[%s444 + $0xb0] sm:$0xff]
          %v1112 = vld [vmem:[%s444 + $0xb8] sm:$0xff]
          %v1113 = vld [vmem:[%s444 + $0xc0] sm:$0xff]
          %v1114 = vld [vmem:[%s444 + $0xc8] sm:$0xff]
          %v1115 = vld [vmem:[%s444 + $0xd0] sm:$0xff]
          %v1116 = vld [vmem:[%s444 + $0xd8] sm:$0xff]
          %v1117 = vld [vmem:[%s444 + $0xe0] sm:$0xff]
          %v1118 = vld [vmem:[%s444 + $0xe8] sm:$0xff]
          %v1119 = vld [vmem:[%s444 + $0xf0] sm:$0xff]
          %v1120 = vld [vmem:[%s444 + $0xf8] sm:$0xff]
          %vm1121 = vcmask 523264
          %1122 = vst.msk [vmem:[#allocation2] sm:$0xff] %vm1121, %v1089
          %1123 = vst.msk [vmem:[#allocation2 + $0x8] sm:$0xff] %vm1121, %v1090
          %1124 = vst.msk [vmem:[#allocation2 + $0x10] sm:$0xff] %vm1121, %v1091
          %1125 = vst.msk [vmem:[#allocation2 + $0x18] sm:$0xff] %vm1121, %v1092
          %1126 = vst.msk [vmem:[#allocation2 + $0x20] sm:$0xff] %vm1121, %v1093
          %1127 = vst.msk [vmem:[#allocation2 + $0x28] sm:$0xff] %vm1121, %v1094
          %1128 = vst.msk [vmem:[#allocation2 + $0x30] sm:$0xff] %vm1121, %v1095
          %1129 = vst.msk [vmem:[#allocation2 + $0x38] sm:$0xff] %vm1121, %v1096
          %1130 = vst.msk [vmem:[#allocation2 + $0x40] sm:$0xff] %vm1121, %v1097
          %1131 = vst.msk [vmem:[#allocation2 + $0x48] sm:$0xff] %vm1121, %v1098
          %1132 = vst.msk [vmem:[#allocation2 + $0x50] sm:$0xff] %vm1121, %v1099
          %1133 = vst.msk [vmem:[#allocation2 + $0x58] sm:$0xff] %vm1121, %v1100
          %1134 = vst.msk [vmem:[#allocation2 + $0x60] sm:$0xff] %vm1121, %v1101
          %1135 = vst.msk [vmem:[#allocation2 + $0x68] sm:$0xff] %vm1121, %v1102
          %1136 = vst.msk [vmem:[#allocation2 + $0x70] sm:$0xff] %vm1121, %v1103
          %1137 = vst.msk [vmem:[#allocation2 + $0x78] sm:$0xff] %vm1121, %v1104
          %1138 = vst.msk [vmem:[#allocation2 + $0x80] sm:$0xff] %vm1121, %v1105
          %1139 = vst.msk [vmem:[#allocation2 + $0x88] sm:$0xff] %vm1121, %v1106
          %1140 = vst.msk [vmem:[#allocation2 + $0x90] sm:$0xff] %vm1121, %v1107
          %1141 = vst.msk [vmem:[#allocation2 + $0x98] sm:$0xff] %vm1121, %v1108
          %1142 = vst.msk [vmem:[#allocation2 + $0xa0] sm:$0xff] %vm1121, %v1109
          %1143 = vst.msk [vmem:[#allocation2 + $0xa8] sm:$0xff] %vm1121, %v1110
          %1144 = vst.msk [vmem:[#allocation2 + $0xb0] sm:$0xff] %vm1121, %v1111
          %1145 = vst.msk [vmem:[#allocation2 + $0xb8] sm:$0xff] %vm1121, %v1112
          %1146 = vst.msk [vmem:[#allocation2 + $0xc0] sm:$0xff] %vm1121, %v1113
          %1147 = vst.msk [vmem:[#allocation2 + $0xc8] sm:$0xff] %vm1121, %v1114
          %1148 = vst.msk [vmem:[#allocation2 + $0xd0] sm:$0xff] %vm1121, %v1115
          %1149 = vst.msk [vmem:[#allocation2 + $0xd8] sm:$0xff] %vm1121, %v1116
          %1150 = vst.msk [vmem:[#allocation2 + $0xe0] sm:$0xff] %vm1121, %v1117
          %1151 = vst.msk [vmem:[#allocation2 + $0xe8] sm:$0xff] %vm1121, %v1118
          %1152 = vst.msk [vmem:[#allocation2 + $0xf0] sm:$0xff] %vm1121, %v1119
          %1153 = vst.msk [vmem:[#allocation2 + $0xf8] sm:$0xff] %vm1121, %v1120
          %1154 = vst.msk [vmem:[#allocation3] sm:$0xff] %vm1121, %v1089
          %1155 = vst.msk [vmem:[#allocation3 + $0x8] sm:$0xff] %vm1121, %v1090
          %1156 = vst.msk [vmem:[#allocation3 + $0x10] sm:$0xff] %vm1121, %v1091
          %1157 = vst.msk [vmem:[#allocation3 + $0x18] sm:$0xff] %vm1121, %v1092
          %1158 = vst.msk [vmem:[#allocation3 + $0x20] sm:$0xff] %vm1121, %v1093
          %1159 = vst.msk [vmem:[#allocation3 + $0x28] sm:$0xff] %vm1121, %v1094
          %1160 = vst.msk [vmem:[#allocation3 + $0x30] sm:$0xff] %vm1121, %v1095
          %1161 = vst.msk [vmem:[#allocation3 + $0x38] sm:$0xff] %vm1121, %v1096
          %1162 = vst.msk [vmem:[#allocation3 + $0x40] sm:$0xff] %vm1121, %v1097
          %1163 = vst.msk [vmem:[#allocation3 + $0x48] sm:$0xff] %vm1121, %v1098
          %1164 = vst.msk [vmem:[#allocation3 + $0x50] sm:$0xff] %vm1121, %v1099
          %1165 = vst.msk [vmem:[#allocation3 + $0x58] sm:$0xff] %vm1121, %v1100
          %1166 = vst.msk [vmem:[#allocation3 + $0x60] sm:$0xff] %vm1121, %v1101
          %1167 = vst.msk [vmem:[#allocation3 + $0x68] sm:$0xff] %vm1121, %v1102
          %1168 = vst.msk [vmem:[#allocation3 + $0x70] sm:$0xff] %vm1121, %v1103
          %1169 = vst.msk [vmem:[#allocation3 + $0x78] sm:$0xff] %vm1121, %v1104
          %1170 = vst.msk [vmem:[#allocation3 + $0x80] sm:$0xff] %vm1121, %v1105
          %1171 = vst.msk [vmem:[#allocation3 + $0x88] sm:$0xff] %vm1121, %v1106
          %1172 = vst.msk [vmem:[#allocation3 + $0x90] sm:$0xff] %vm1121, %v1107
          %1173 = vst.msk [vmem:[#allocation3 + $0x98] sm:$0xff] %vm1121, %v1108
          %1174 = vst.msk [vmem:[#allocation3 + $0xa0] sm:$0xff] %vm1121, %v1109
          %1175 = vst.msk [vmem:[#allocation3 + $0xa8] sm:$0xff] %vm1121, %v1110
          %1176 = vst.msk [vmem:[#allocation3 + $0xb0] sm:$0xff] %vm1121, %v1111
          %1177 = vst.msk [vmem:[#allocation3 + $0xb8] sm:$0xff] %vm1121, %v1112
          %1178 = vst.msk [vmem:[#allocation3 + $0xc0] sm:$0xff] %vm1121, %v1113
          %1179 = vst.msk [vmem:[#allocation3 + $0xc8] sm:$0xff] %vm1121, %v1114
          %1180 = vst.msk [vmem:[#allocation3 + $0xd0] sm:$0xff] %vm1121, %v1115
          %1181 = vst.msk [vmem:[#allocation3 + $0xd8] sm:$0xff] %vm1121, %v1116
          %1182 = vst.msk [vmem:[#allocation3 + $0xe0] sm:$0xff] %vm1121, %v1117
          %1183 = vst.msk [vmem:[#allocation3 + $0xe8] sm:$0xff] %vm1121, %v1118
          %1184 = vst.msk [vmem:[#allocation3 + $0xf0] sm:$0xff] %vm1121, %v1119
          %1185 = vst.msk [vmem:[#allocation3 + $0xf8] sm:$0xff] %vm1121, %v1120
        $region60: #{rir1_pallas.1} parent=55 // pred_fallthru
          _
        %p1186 = scmp.lt.s32.totalorder %s28, 18
        // Predicated region
        $region61: #{rir1_pallas.1} parent=55 // pred_check
          %p1187 = pneg %p1186
        $region62: #{rir1_pallas.1} parent=55 // pred_check_branch
          %1189 = sbr.rel (%p1187) target = $region64
        $region63: #{rir1_pallas.1} parent=55 // pred_region
          %v1190 = vld [vmem:[#allocation2] sm:$0xff]
          %v1191 = vld [vmem:[#allocation2 + $0x8] sm:$0xff]
          %v1192 = vld [vmem:[#allocation2 + $0x10] sm:$0xff]
          %v1193 = vld [vmem:[#allocation2 + $0x18] sm:$0xff]
          %v1194 = vld [vmem:[#allocation2 + $0x20] sm:$0xff]
          %v1195 = vld [vmem:[#allocation2 + $0x28] sm:$0xff]
          %v1196 = vld [vmem:[#allocation2 + $0x30] sm:$0xff]
          %v1197 = vld [vmem:[#allocation2 + $0x38] sm:$0xff]
          %v1198 = vld [vmem:[#allocation2 + $0x40] sm:$0xff]
          %v1199 = vld [vmem:[#allocation2 + $0x48] sm:$0xff]
          %v1200 = vld [vmem:[#allocation2 + $0x50] sm:$0xff]
          %v1201 = vld [vmem:[#allocation2 + $0x58] sm:$0xff]
          %v1202 = vld [vmem:[#allocation2 + $0x60] sm:$0xff]
          %v1203 = vld [vmem:[#allocation2 + $0x68] sm:$0xff]
          %v1204 = vld [vmem:[#allocation2 + $0x70] sm:$0xff]
          %v1205 = vld [vmem:[#allocation2 + $0x78] sm:$0xff]
          %v1206 = vld [vmem:[#allocation2 + $0x80] sm:$0xff]
          %v1207 = vld [vmem:[#allocation2 + $0x88] sm:$0xff]
          %v1208 = vld [vmem:[#allocation2 + $0x90] sm:$0xff]
          %v1209 = vld [vmem:[#allocation2 + $0x98] sm:$0xff]
          %v1210 = vld [vmem:[#allocation2 + $0xa0] sm:$0xff]
          %v1211 = vld [vmem:[#allocation2 + $0xa8] sm:$0xff]
          %v1212 = vld [vmem:[#allocation2 + $0xb0] sm:$0xff]
          %v1213 = vld [vmem:[#allocation2 + $0xb8] sm:$0xff]
          %v1214 = vld [vmem:[#allocation2 + $0xc0] sm:$0xff]
          %v1215 = vld [vmem:[#allocation2 + $0xc8] sm:$0xff]
          %v1216 = vld [vmem:[#allocation2 + $0xd0] sm:$0xff]
          %v1217 = vld [vmem:[#allocation2 + $0xd8] sm:$0xff]
          %v1218 = vld [vmem:[#allocation2 + $0xe0] sm:$0xff]
          %v1219 = vld [vmem:[#allocation2 + $0xe8] sm:$0xff]
          %v1220 = vld [vmem:[#allocation2 + $0xf0] sm:$0xff]
          %v1221 = vld [vmem:[#allocation2 + $0xf8] sm:$0xff]
          %vm1222 = vcmask 523264
          %1223 = vst.msk [vmem:[#allocation4] sm:$0xff] %vm1222, 0.0
          %1224 = vst.msk [vmem:[#allocation4 + $0x10] sm:$0xff] %vm1222, 0.0
          %1225 = vst.msk [vmem:[#allocation4 + $0x20] sm:$0xff] %vm1222, %v1190
          %1226 = vst.msk [vmem:[#allocation4 + $0x30] sm:$0xff] %vm1222, %v1191
          %1227 = vst.msk [vmem:[#allocation4 + $0x40] sm:$0xff] %vm1222, %v1192
          %1228 = vst.msk [vmem:[#allocation4 + $0x50] sm:$0xff] %vm1222, %v1193
          %1229 = vst.msk [vmem:[#allocation4 + $0x60] sm:$0xff] %vm1222, %v1194
          %1230 = vst.msk [vmem:[#allocation4 + $0x70] sm:$0xff] %vm1222, %v1195
          %1231 = vst.msk [vmem:[#allocation4 + $0x80] sm:$0xff] %vm1222, %v1196
          %1232 = vst.msk [vmem:[#allocation4 + $0x90] sm:$0xff] %vm1222, %v1197
          %1233 = vst.msk [vmem:[#allocation4 + $0xa0] sm:$0xff] %vm1222, %v1198
          %1234 = vst.msk [vmem:[#allocation4 + $0xb0] sm:$0xff] %vm1222, %v1199
          %1235 = vst.msk [vmem:[#allocation4 + $0xc0] sm:$0xff] %vm1222, %v1200
          %1236 = vst.msk [vmem:[#allocation4 + $0xd0] sm:$0xff] %vm1222, %v1201
          %1237 = vst.msk [vmem:[#allocation4 + $0xe0] sm:$0xff] %vm1222, %v1202
          %1238 = vst.msk [vmem:[#allocation4 + $0xf0] sm:$0xff] %vm1222, %v1203
          %1239 = vst.msk [vmem:[#allocation4 + $0x100] sm:$0xff] %vm1222, %v1204
          %1240 = vst.msk [vmem:[#allocation4 + $0x110] sm:$0xff] %vm1222, %v1205
          %1241 = vst.msk [vmem:[#allocation4 + $0x120] sm:$0xff] %vm1222, %v1206
          %1242 = vst.msk [vmem:[#allocation4 + $0x130] sm:$0xff] %vm1222, %v1207
          %1243 = vst.msk [vmem:[#allocation4 + $0x140] sm:$0xff] %vm1222, %v1208
          %1244 = vst.msk [vmem:[#allocation4 + $0x150] sm:$0xff] %vm1222, %v1209
          %1245 = vst.msk [vmem:[#allocation4 + $0x160] sm:$0xff] %vm1222, %v1210
          %1246 = vst.msk [vmem:[#allocation4 + $0x170] sm:$0xff] %vm1222, %v1211
          %1247 = vst.msk [vmem:[#allocation4 + $0x180] sm:$0xff] %vm1222, %v1212
          %1248 = vst.msk [vmem:[#allocation4 + $0x190] sm:$0xff] %vm1222, %v1213
          %1249 = vst.msk [vmem:[#allocation4 + $0x1a0] sm:$0xff] %vm1222, %v1214
          %1250 = vst.msk [vmem:[#allocation4 + $0x1b0] sm:$0xff] %vm1222, %v1215
          %1251 = vst.msk [vmem:[#allocation4 + $0x1c0] sm:$0xff] %vm1222, %v1216
          %1252 = vst.msk [vmem:[#allocation4 + $0x1d0] sm:$0xff] %vm1222, %v1217
          %1253 = vst.msk [vmem:[#allocation4 + $0x1e0] sm:$0xff] %vm1222, %v1218
          %1254 = vst.msk [vmem:[#allocation4 + $0x1f0] sm:$0xff] %vm1222, %v1219
          %1287 = vrot.lane.b32.xlu0 %v1190, 64
          %v1288 = vpop.permute.xlu0 %1287
          %1289 = vrot.lane.b32.xlu0 %v1191, 64
          %v1290 = vpop.permute.xlu0 %1289
          %1291 = vrot.lane.b32.xlu0 %v1192, 64
          %v1292 = vpop.permute.xlu0 %1291
          %1293 = vrot.lane.b32.xlu0 %v1193, 64
          %v1294 = vpop.permute.xlu0 %1293
          %1295 = vrot.lane.b32.xlu0 %v1194, 64
          %v1296 = vpop.permute.xlu0 %1295
          %1297 = vrot.lane.b32.xlu0 %v1195, 64
          %v1298 = vpop.permute.xlu0 %1297
          %1299 = vrot.lane.b32.xlu0 %v1196, 64
          %v1300 = vpop.permute.xlu0 %1299
          %1301 = vrot.lane.b32.xlu0 %v1197, 64
          %v1302 = vpop.permute.xlu0 %1301
          %1303 = vrot.lane.b32.xlu0 %v1198, 64
          %v1304 = vpop.permute.xlu0 %1303
          %1305 = vrot.lane.b32.xlu0 %v1199, 64
          %v1306 = vpop.permute.xlu0 %1305
          %1307 = vrot.lane.b32.xlu0 %v1200, 64
          %v1308 = vpop.permute.xlu0 %1307
          %1309 = vrot.lane.b32.xlu0 %v1201, 64
          %v1310 = vpop.permute.xlu0 %1309
          %1311 = vrot.lane.b32.xlu0 %v1202, 64
          %v1312 = vpop.permute.xlu0 %1311
          %1313 = vrot.lane.b32.xlu0 %v1203, 64
          %v1314 = vpop.permute.xlu0 %1313
          %1315 = vrot.lane.b32.xlu0 %v1204, 64
          %v1316 = vpop.permute.xlu0 %1315
          %1317 = vrot.lane.b32.xlu0 %v1205, 64
          %v1318 = vpop.permute.xlu0 %1317
          %1319 = vrot.lane.b32.xlu0 %v1206, 64
          %v1320 = vpop.permute.xlu0 %1319
          %1321 = vrot.lane.b32.xlu0 %v1207, 64
          %v1322 = vpop.permute.xlu0 %1321
          %1323 = vrot.lane.b32.xlu0 %v1208, 64
          %v1324 = vpop.permute.xlu0 %1323
          %1325 = vrot.lane.b32.xlu0 %v1209, 64
          %v1326 = vpop.permute.xlu0 %1325
          %1327 = vrot.lane.b32.xlu0 %v1210, 64
          %v1328 = vpop.permute.xlu0 %1327
          %1329 = vrot.lane.b32.xlu0 %v1211, 64
          %v1330 = vpop.permute.xlu0 %1329
          %1331 = vrot.lane.b32.xlu0 %v1212, 64
          %v1332 = vpop.permute.xlu0 %1331
          %1333 = vrot.lane.b32.xlu0 %v1213, 64
          %v1334 = vpop.permute.xlu0 %1333
          %1335 = vrot.lane.b32.xlu0 %v1214, 64
          %v1336 = vpop.permute.xlu0 %1335
          %1337 = vrot.lane.b32.xlu0 %v1215, 64
          %v1338 = vpop.permute.xlu0 %1337
          %1339 = vrot.lane.b32.xlu0 %v1216, 64
          %v1340 = vpop.permute.xlu0 %1339
          %1341 = vrot.lane.b32.xlu0 %v1217, 64
          %v1342 = vpop.permute.xlu0 %1341
          %1343 = vrot.lane.b32.xlu0 %v1218, 64
          %v1344 = vpop.permute.xlu0 %1343
          %1345 = vrot.lane.b32.xlu0 %v1219, 64
          %v1346 = vpop.permute.xlu0 %1345
          %1347 = vrot.lane.b32.xlu0 %v1220, 64
          %v1348 = vpop.permute.xlu0 %1347
          %1349 = vrot.lane.b32.xlu0 %v1221, 64
          %v1350 = vpop.permute.xlu0 %1349
          %vm1383 = vcmask 1048064
          %1384 = vst.msk [vmem:[#allocation4] sm:$0xff] %vm1383, %v1288
          %1385 = vst.msk [vmem:[#allocation4 + $0x10] sm:$0xff] %vm1383, %v1290
          %1386 = vst.msk [vmem:[#allocation4 + $0x20] sm:$0xff] %vm1383, %v1292
          %1387 = vst.msk [vmem:[#allocation4 + $0x30] sm:$0xff] %vm1383, %v1294
          %1388 = vst.msk [vmem:[#allocation4 + $0x40] sm:$0xff] %vm1383, %v1296
          %1389 = vst.msk [vmem:[#allocation4 + $0x50] sm:$0xff] %vm1383, %v1298
          %1390 = vst.msk [vmem:[#allocation4 + $0x60] sm:$0xff] %vm1383, %v1300
          %1391 = vst.msk [vmem:[#allocation4 + $0x70] sm:$0xff] %vm1383, %v1302
          %1392 = vst.msk [vmem:[#allocation4 + $0x80] sm:$0xff] %vm1383, %v1304
          %1393 = vst.msk [vmem:[#allocation4 + $0x90] sm:$0xff] %vm1383, %v1306
          %1394 = vst.msk [vmem:[#allocation4 + $0xa0] sm:$0xff] %vm1383, %v1308
          %1395 = vst.msk [vmem:[#allocation4 + $0xb0] sm:$0xff] %vm1383, %v1310
          %1396 = vst.msk [vmem:[#allocation4 + $0xc0] sm:$0xff] %vm1383, %v1312
          %1397 = vst.msk [vmem:[#allocation4 + $0xd0] sm:$0xff] %vm1383, %v1314
          %1398 = vst.msk [vmem:[#allocation4 + $0xe0] sm:$0xff] %vm1383, %v1316
          %1399 = vst.msk [vmem:[#allocation4 + $0xf0] sm:$0xff] %vm1383, %v1318
          %1400 = vst.msk [vmem:[#allocation4 + $0x100] sm:$0xff] %vm1383, %v1320
          %1401 = vst.msk [vmem:[#allocation4 + $0x110] sm:$0xff] %vm1383, %v1322
          %1402 = vst.msk [vmem:[#allocation4 + $0x120] sm:$0xff] %vm1383, %v1324
          %1403 = vst.msk [vmem:[#allocation4 + $0x130] sm:$0xff] %vm1383, %v1326
          %1404 = vst.msk [vmem:[#allocation4 + $0x140] sm:$0xff] %vm1383, %v1328
          %1405 = vst.msk [vmem:[#allocation4 + $0x150] sm:$0xff] %vm1383, %v1330
          %1406 = vst.msk [vmem:[#allocation4 + $0x160] sm:$0xff] %vm1383, %v1332
          %1407 = vst.msk [vmem:[#allocation4 + $0x170] sm:$0xff] %vm1383, %v1334
          %1408 = vst.msk [vmem:[#allocation4 + $0x180] sm:$0xff] %vm1383, %v1336
          %1409 = vst.msk [vmem:[#allocation4 + $0x190] sm:$0xff] %vm1383, %v1338
          %1410 = vst.msk [vmem:[#allocation4 + $0x1a0] sm:$0xff] %vm1383, %v1340
          %1411 = vst.msk [vmem:[#allocation4 + $0x1b0] sm:$0xff] %vm1383, %v1342
          %1412 = vst.msk [vmem:[#allocation4 + $0x1c0] sm:$0xff] %vm1383, %v1344
          %1413 = vst.msk [vmem:[#allocation4 + $0x1d0] sm:$0xff] %vm1383, %v1346
          %1414 = vst.msk [vmem:[#allocation4 + $0x1e0] sm:$0xff] %vm1383, %v1348
          %1415 = vst.msk [vmem:[#allocation4 + $0x1f0] sm:$0xff] %vm1383, %v1350
          %1416 = vst.msk [vmem:[#allocation4 + $0x8] sm:$0xff] %vm1222, %v1192
          %1417 = vst.msk [vmem:[#allocation4 + $0x18] sm:$0xff] %vm1222, %v1193
          %1418 = vst.msk [vmem:[#allocation4 + $0x28] sm:$0xff] %vm1222, %v1194
          %1419 = vst.msk [vmem:[#allocation4 + $0x38] sm:$0xff] %vm1222, %v1195
          %1420 = vst.msk [vmem:[#allocation4 + $0x48] sm:$0xff] %vm1222, %v1196
          %1421 = vst.msk [vmem:[#allocation4 + $0x58] sm:$0xff] %vm1222, %v1197
          %1422 = vst.msk [vmem:[#allocation4 + $0x68] sm:$0xff] %vm1222, %v1198
          %1423 = vst.msk [vmem:[#allocation4 + $0x78] sm:$0xff] %vm1222, %v1199
          %1424 = vst.msk [vmem:[#allocation4 + $0x88] sm:$0xff] %vm1222, %v1200
          %1425 = vst.msk [vmem:[#allocation4 + $0x98] sm:$0xff] %vm1222, %v1201
          %1426 = vst.msk [vmem:[#allocation4 + $0xa8] sm:$0xff] %vm1222, %v1202
          %1427 = vst.msk [vmem:[#allocation4 + $0xb8] sm:$0xff] %vm1222, %v1203
          %1428 = vst.msk [vmem:[#allocation4 + $0xc8] sm:$0xff] %vm1222, %v1204
          %1429 = vst.msk [vmem:[#allocation4 + $0xd8] sm:$0xff] %vm1222, %v1205
          %1430 = vst.msk [vmem:[#allocation4 + $0xe8] sm:$0xff] %vm1222, %v1206
          %1431 = vst.msk [vmem:[#allocation4 + $0xf8] sm:$0xff] %vm1222, %v1207
          %1432 = vst.msk [vmem:[#allocation4 + $0x108] sm:$0xff] %vm1222, %v1208
          %1433 = vst.msk [vmem:[#allocation4 + $0x118] sm:$0xff] %vm1222, %v1209
          %1434 = vst.msk [vmem:[#allocation4 + $0x128] sm:$0xff] %vm1222, %v1210
          %1435 = vst.msk [vmem:[#allocation4 + $0x138] sm:$0xff] %vm1222, %v1211
          %1436 = vst.msk [vmem:[#allocation4 + $0x148] sm:$0xff] %vm1222, %v1212
          %1437 = vst.msk [vmem:[#allocation4 + $0x158] sm:$0xff] %vm1222, %v1213
          %1438 = vst.msk [vmem:[#allocation4 + $0x168] sm:$0xff] %vm1222, %v1214
          %1439 = vst.msk [vmem:[#allocation4 + $0x178] sm:$0xff] %vm1222, %v1215
          %1440 = vst.msk [vmem:[#allocation4 + $0x188] sm:$0xff] %vm1222, %v1216
          %1441 = vst.msk [vmem:[#allocation4 + $0x198] sm:$0xff] %vm1222, %v1217
          %1442 = vst.msk [vmem:[#allocation4 + $0x1a8] sm:$0xff] %vm1222, %v1218
          %1443 = vst.msk [vmem:[#allocation4 + $0x1b8] sm:$0xff] %vm1222, %v1219
          %1444 = vst.msk [vmem:[#allocation4 + $0x1c8] sm:$0xff] %vm1222, %v1220
          %1445 = vst.msk [vmem:[#allocation4 + $0x1d8] sm:$0xff] %vm1222, %v1221
          %1446 = vst.msk [vmem:[#allocation4 + $0x1e8] sm:$0xff] %vm1222, 0.0
          %1447 = vst.msk [vmem:[#allocation4 + $0x1f8] sm:$0xff] %vm1222, 0.0
          %v1448 = vld [vmem:[#allocation4] sm:$0xff]
          %v1449 = vld [vmem:[#allocation4 + $0x8] sm:$0xff]
          %v1450 = vld [vmem:[#allocation4 + $0x10] sm:$0xff]
          %v1451 = vld [vmem:[#allocation4 + $0x18] sm:$0xff]
          %v1452 = vld [vmem:[#allocation4 + $0x20] sm:$0xff]
          %v1453 = vld [vmem:[#allocation4 + $0x28] sm:$0xff]
          %v1454 = vld [vmem:[#allocation4 + $0x30] sm:$0xff]
          %v1455 = vld [vmem:[#allocation4 + $0x38] sm:$0xff]
          %v1456 = vld [vmem:[#allocation4 + $0x40] sm:$0xff]
          %v1457 = vld [vmem:[#allocation4 + $0x48] sm:$0xff]
          %v1458 = vld [vmem:[#allocation4 + $0x50] sm:$0xff]
          %v1459 = vld [vmem:[#allocation4 + $0x58] sm:$0xff]
          %v1460 = vld [vmem:[#allocation4 + $0x60] sm:$0xff]
          %v1461 = vld [vmem:[#allocation4 + $0x68] sm:$0xff]
          %v1462 = vld [vmem:[#allocation4 + $0x70] sm:$0xff]
          %v1463 = vld [vmem:[#allocation4 + $0x78] sm:$0xff]
          %v1464 = vld [vmem:[#allocation4 + $0x80] sm:$0xff]
          %v1465 = vld [vmem:[#allocation4 + $0x88] sm:$0xff]
          %v1466 = vld [vmem:[#allocation4 + $0x90] sm:$0xff]
          %v1467 = vld [vmem:[#allocation4 + $0x98] sm:$0xff]
          %v1468 = vld [vmem:[#allocation4 + $0xa0] sm:$0xff]
          %v1469 = vld [vmem:[#allocation4 + $0xa8] sm:$0xff]
          %v1470 = vld [vmem:[#allocation4 + $0xb0] sm:$0xff]
          %v1471 = vld [vmem:[#allocation4 + $0xb8] sm:$0xff]
          %v1472 = vld [vmem:[#allocation4 + $0xc0] sm:$0xff]
          %v1473 = vld [vmem:[#allocation4 + $0xc8] sm:$0xff]
          %v1474 = vld [vmem:[#allocation4 + $0xd0] sm:$0xff]
          %v1475 = vld [vmem:[#allocation4 + $0xd8] sm:$0xff]
          %v1476 = vld [vmem:[#allocation4 + $0xe0] sm:$0xff]
          %v1477 = vld [vmem:[#allocation4 + $0xe8] sm:$0xff]
          %v1478 = vld [vmem:[#allocation4 + $0xf0] sm:$0xff]
          %v1479 = vld [vmem:[#allocation4 + $0xf8] sm:$0xff]
          %v1480 = vld [vmem:[#allocation4 + $0x100] sm:$0xff]
          %v1481 = vld [vmem:[#allocation4 + $0x108] sm:$0xff]
          %v1482 = vld [vmem:[#allocation4 + $0x110] sm:$0xff]
          %v1483 = vld [vmem:[#allocation4 + $0x118] sm:$0xff]
          %v1484 = vld [vmem:[#allocation4 + $0x120] sm:$0xff]
          %v1485 = vld [vmem:[#allocation4 + $0x128] sm:$0xff]
          %v1486 = vld [vmem:[#allocation4 + $0x130] sm:$0xff]
          %v1487 = vld [vmem:[#allocation4 + $0x138] sm:$0xff]
          %v1488 = vld [vmem:[#allocation4 + $0x140] sm:$0xff]
          %v1489 = vld [vmem:[#allocation4 + $0x148] sm:$0xff]
          %v1490 = vld [vmem:[#allocation4 + $0x150] sm:$0xff]
          %v1491 = vld [vmem:[#allocation4 + $0x158] sm:$0xff]
          %v1492 = vld [vmem:[#allocation4 + $0x160] sm:$0xff]
          %v1493 = vld [vmem:[#allocation4 + $0x168] sm:$0xff]
          %v1494 = vld [vmem:[#allocation4 + $0x170] sm:$0xff]
          %v1495 = vld [vmem:[#allocation4 + $0x178] sm:$0xff]
          %v1496 = vld [vmem:[#allocation4 + $0x180] sm:$0xff]
          %v1497 = vld [vmem:[#allocation4 + $0x188] sm:$0xff]
          %v1498 = vld [vmem:[#allocation4 + $0x190] sm:$0xff]
          %v1499 = vld [vmem:[#allocation4 + $0x198] sm:$0xff]
          %v1500 = vld [vmem:[#allocation4 + $0x1a0] sm:$0xff]
          %v1501 = vld [vmem:[#allocation4 + $0x1a8] sm:$0xff]
          %v1502 = vld [vmem:[#allocation4 + $0x1b0] sm:$0xff]
          %v1503 = vld [vmem:[#allocation4 + $0x1b8] sm:$0xff]
          %v1504 = vld [vmem:[#allocation4 + $0x1c0] sm:$0xff]
          %v1505 = vld [vmem:[#allocation4 + $0x1c8] sm:$0xff]
          %v1506 = vld [vmem:[#allocation4 + $0x1d0] sm:$0xff]
          %v1507 = vld [vmem:[#allocation4 + $0x1d8] sm:$0xff]
          %v1508 = vld [vmem:[#allocation4 + $0x1e0] sm:$0xff]
          %v1509 = vld [vmem:[#allocation4 + $0x1e8] sm:$0xff]
          %v1510 = vld [vmem:[#allocation4 + $0x1f0] sm:$0xff]
          %v1511 = vld [vmem:[#allocation4 + $0x1f8] sm:$0xff]
          %v1512 = vld [vmem:[%s449] sm:$0xff]
          %v1513 = vld [vmem:[%s449 + $0x8] sm:$0xff]
          %v1514 = vld [vmem:[%s449 + $0x10] sm:$0xff]
          %v1515 = vld [vmem:[%s449 + $0x18] sm:$0xff]
          %v1516 = vld [vmem:[%s449 + $0x20] sm:$0xff]
          %v1517 = vld [vmem:[%s449 + $0x28] sm:$0xff]
          %v1518 = vld [vmem:[%s449 + $0x30] sm:$0xff]
          %v1519 = vld [vmem:[%s449 + $0x38] sm:$0xff]
          %v1520 = vld [vmem:[%s449 + $0x40] sm:$0xff]
          %v1521 = vld [vmem:[%s449 + $0x48] sm:$0xff]
          %v1522 = vld [vmem:[%s449 + $0x50] sm:$0xff]
          %v1523 = vld [vmem:[%s449 + $0x58] sm:$0xff]
          %v1524 = vld [vmem:[%s449 + $0x60] sm:$0xff]
          %v1525 = vld [vmem:[%s449 + $0x68] sm:$0xff]
          %v1526 = vld [vmem:[%s449 + $0x70] sm:$0xff]
          %v1527 = vld [vmem:[%s449 + $0x78] sm:$0xff]
          %v1528 = vld [vmem:[%s449 + $0x80] sm:$0xff]
          %v1529 = vld [vmem:[%s449 + $0x88] sm:$0xff]
          %v1530 = vld [vmem:[%s449 + $0x90] sm:$0xff]
          %v1531 = vld [vmem:[%s449 + $0x98] sm:$0xff]
          %v1532 = vld [vmem:[%s449 + $0xa0] sm:$0xff]
          %v1533 = vld [vmem:[%s449 + $0xa8] sm:$0xff]
          %v1534 = vld [vmem:[%s449 + $0xb0] sm:$0xff]
          %v1535 = vld [vmem:[%s449 + $0xb8] sm:$0xff]
          %v1537 = vsel %vm1222, %v1449, 0
          %v1540 = vsel %vm1222, %v1451, 0
          %v1543 = vsel %vm1222, %v1453, 0
          %v1546 = vsel %vm1222, %v1455, 0
          %v1549 = vsel %vm1222, %v1457, 0
          %v1552 = vsel %vm1222, %v1459, 0
          %v1555 = vsel %vm1222, %v1461, 0
          %v1558 = vsel %vm1222, %v1463, 0
          %v1561 = vsel %vm1222, %v1465, 0
          %v1564 = vsel %vm1222, %v1467, 0
          %v1567 = vsel %vm1222, %v1469, 0
          %v1570 = vsel %vm1222, %v1471, 0
          %v1573 = vsel %vm1222, %v1473, 0
          %v1576 = vsel %vm1222, %v1475, 0
          %v1579 = vsel %vm1222, %v1477, 0
          %v1582 = vsel %vm1222, %v1479, 0
          %v1585 = vsel %vm1222, %v1481, 0
          %v1588 = vsel %vm1222, %v1483, 0
          %v1591 = vsel %vm1222, %v1485, 0
          %v1594 = vsel %vm1222, %v1487, 0
          %v1597 = vsel %vm1222, %v1489, 0
          %v1600 = vsel %vm1222, %v1491, 0
          %v1603 = vsel %vm1222, %v1493, 0
          %v1606 = vsel %vm1222, %v1495, 0
          %v1609 = vsel %vm1222, %v1497, 0
          %v1612 = vsel %vm1222, %v1499, 0
          %v1615 = vsel %vm1222, %v1501, 0
          %v1618 = vsel %vm1222, %v1503, 0
          %v1621 = vsel %vm1222, %v1505, 0
          %v1624 = vsel %vm1222, %v1507, 0
          %v1627 = vsel %vm1222, %v1509, 0
          %v1630 = vsel %vm1222, %v1511, 0
          %1632 = vmatpush.msra.mxu0 %v1527
          %1633 = vmatpush.msra.mxu0 %v1526
          %1634 = vmatpush.msra.mxu0 %v1525
          %1635 = vmatpush.msra.mxu0 %v1524
          %1636 = vmatpush.msra.mxu0 %v1523
          %1637 = vmatpush.msra.mxu0 %v1522
          %1638 = vmatpush.msra.mxu0 %v1521
          %1639 = vmatpush.msra.mxu0 %v1520
          %1640 = vmatpush.msra.mxu0 %v1519
          %1641 = vmatpush.msra.mxu0 %v1518
          %1642 = vmatpush.msra.mxu0 %v1517
          %1643 = vmatpush.msra.mxu0 %v1516
          %1644 = vmatpush.msra.mxu0 %v1515
          %1645 = vmatpush.msra.mxu0 %v1514
          %1646 = vmatpush.msra.mxu0 %v1513
          %1647 = vmatpush.msra.mxu0 %v1512
          %1648 = vmatmul.f32.gmra.mxu0 %v1448
          %v1649 = vpop.f32.mrf.mxu0
          %v1650 = vadd.f32 0.0, %v1649
          %1651 = vmatmul.f32.gmra.mxu0 %v1450
          %v1652 = vpop.f32.mrf.mxu0
          %v1653 = vadd.f32 0.0, %v1652
          %1654 = vmatmul.f32.gmra.mxu0 %v1452
          %v1655 = vpop.f32.mrf.mxu0
          %v1656 = vadd.f32 0.0, %v1655
          %1657 = vmatmul.f32.gmra.mxu0 %v1454
          %v1658 = vpop.f32.mrf.mxu0
          %v1659 = vadd.f32 0.0, %v1658
          %1660 = vmatmul.f32.gmra.mxu0 %v1456
          %v1661 = vpop.f32.mrf.mxu0
          %v1662 = vadd.f32 0.0, %v1661
          %1663 = vmatmul.f32.gmra.mxu0 %v1458
          %v1664 = vpop.f32.mrf.mxu0
          %v1665 = vadd.f32 0.0, %v1664
          %1666 = vmatmul.f32.gmra.mxu0 %v1460
          %v1667 = vpop.f32.mrf.mxu0
          %v1668 = vadd.f32 0.0, %v1667
          %1669 = vmatmul.f32.gmra.mxu0 %v1462
          %v1670 = vpop.f32.mrf.mxu0
          %v1671 = vadd.f32 0.0, %v1670
          %1672 = vmatmul.f32.gmra.mxu0 %v1464
          %v1673 = vpop.f32.mrf.mxu0
          %v1674 = vadd.f32 0.0, %v1673
          %1675 = vmatmul.f32.gmra.mxu0 %v1466
          %v1676 = vpop.f32.mrf.mxu0
          %v1677 = vadd.f32 0.0, %v1676
          %1678 = vmatmul.f32.gmra.mxu0 %v1468
          %v1679 = vpop.f32.mrf.mxu0
          %v1680 = vadd.f32 0.0, %v1679
          %1681 = vmatmul.f32.gmra.mxu0 %v1470
          %v1682 = vpop.f32.mrf.mxu0
          %v1683 = vadd.f32 0.0, %v1682
          %1684 = vmatmul.f32.gmra.mxu0 %v1472
          %v1685 = vpop.f32.mrf.mxu0
          %v1686 = vadd.f32 0.0, %v1685
          %1687 = vmatmul.f32.gmra.mxu0 %v1474
          %v1688 = vpop.f32.mrf.mxu0
          %v1689 = vadd.f32 0.0, %v1688
          %1690 = vmatmul.f32.gmra.mxu0 %v1476
          %v1691 = vpop.f32.mrf.mxu0
          %v1692 = vadd.f32 0.0, %v1691
          %1693 = vmatmul.f32.gmra.mxu0 %v1478
          %v1694 = vpop.f32.mrf.mxu0
          %v1695 = vadd.f32 0.0, %v1694
          %1696 = vmatmul.f32.gmra.mxu0 %v1480
          %v1697 = vpop.f32.mrf.mxu0
          %v1698 = vadd.f32 0.0, %v1697
          %1699 = vmatmul.f32.gmra.mxu0 %v1482
          %v1700 = vpop.f32.mrf.mxu0
          %v1701 = vadd.f32 0.0, %v1700
          %1702 = vmatmul.f32.gmra.mxu0 %v1484
          %v1703 = vpop.f32.mrf.mxu0
          %v1704 = vadd.f32 0.0, %v1703
          %1705 = vmatmul.f32.gmra.mxu0 %v1486
          %v1706 = vpop.f32.mrf.mxu0
          %v1707 = vadd.f32 0.0, %v1706
          %1708 = vmatmul.f32.gmra.mxu0 %v1488
          %v1709 = vpop.f32.mrf.mxu0
          %v1710 = vadd.f32 0.0, %v1709
          %1711 = vmatmul.f32.gmra.mxu0 %v1490
          %v1712 = vpop.f32.mrf.mxu0
          %v1713 = vadd.f32 0.0, %v1712
          %1714 = vmatmul.f32.gmra.mxu0 %v1492
          %v1715 = vpop.f32.mrf.mxu0
          %v1716 = vadd.f32 0.0, %v1715
          %1717 = vmatmul.f32.gmra.mxu0 %v1494
          %v1718 = vpop.f32.mrf.mxu0
          %v1719 = vadd.f32 0.0, %v1718
          %1720 = vmatmul.f32.gmra.mxu0 %v1496
          %v1721 = vpop.f32.mrf.mxu0
          %v1722 = vadd.f32 0.0, %v1721
          %1723 = vmatmul.f32.gmra.mxu0 %v1498
          %v1724 = vpop.f32.mrf.mxu0
          %v1725 = vadd.f32 0.0, %v1724
          %1726 = vmatmul.f32.gmra.mxu0 %v1500
          %v1727 = vpop.f32.mrf.mxu0
          %v1728 = vadd.f32 0.0, %v1727
          %1729 = vmatmul.f32.gmra.mxu0 %v1502
          %v1730 = vpop.f32.mrf.mxu0
          %v1731 = vadd.f32 0.0, %v1730
          %1732 = vmatmul.f32.gmra.mxu0 %v1504
          %v1733 = vpop.f32.mrf.mxu0
          %v1734 = vadd.f32 0.0, %v1733
          %1735 = vmatmul.f32.gmra.mxu0 %v1506
          %v1736 = vpop.f32.mrf.mxu0
          %v1737 = vadd.f32 0.0, %v1736
          %1738 = vmatmul.f32.gmra.mxu0 %v1508
          %v1739 = vpop.f32.mrf.mxu0
          %v1740 = vadd.f32 0.0, %v1739
          %1741 = vmatmul.f32.gmra.mxu0 %v1510
          %v1742 = vpop.f32.mrf.mxu0
          %v1743 = vadd.f32 0.0, %v1742
          %1744 = vdwg.mxu0
          %1745 = vmatpush.msra.mxu0 0.0
          %1746 = vmatpush.msra.mxu0 0.0
          %1747 = vmatpush.msra.mxu0 0.0
          %1748 = vmatpush.msra.mxu0 0.0
          %1749 = vmatpush.msra.mxu0 0.0
          %1750 = vmatpush.msra.mxu0 0.0
          %1751 = vmatpush.msra.mxu0 0.0
          %1752 = vmatpush.msra.mxu0 0.0
          %1753 = vmatpush.msra.mxu0 %v1535
          %1754 = vmatpush.msra.mxu0 %v1534
          %1755 = vmatpush.msra.mxu0 %v1533
          %1756 = vmatpush.msra.mxu0 %v1532
          %1757 = vmatpush.msra.mxu0 %v1531
          %1758 = vmatpush.msra.mxu0 %v1530
          %1759 = vmatpush.msra.mxu0 %v1529
          %1760 = vmatpush.msra.mxu0 %v1528
          %1761 = vmatmul.f32.gmra.mxu0 %v1537
          %v1762 = vpop.f32.mrf.mxu0
          %v1763 = vadd.f32 %v1650, %v1762
          %1764 = vmatmul.f32.gmra.mxu0 %v1540
          %v1765 = vpop.f32.mrf.mxu0
          %v1766 = vadd.f32 %v1653, %v1765
          %1767 = vmatmul.f32.gmra.mxu0 %v1543
          %v1768 = vpop.f32.mrf.mxu0
          %v1769 = vadd.f32 %v1656, %v1768
          %1770 = vmatmul.f32.gmra.mxu0 %v1546
          %v1771 = vpop.f32.mrf.mxu0
          %v1772 = vadd.f32 %v1659, %v1771
          %1773 = vmatmul.f32.gmra.mxu0 %v1549
          %v1774 = vpop.f32.mrf.mxu0
          %v1775 = vadd.f32 %v1662, %v1774
          %1776 = vmatmul.f32.gmra.mxu0 %v1552
          %v1777 = vpop.f32.mrf.mxu0
          %v1778 = vadd.f32 %v1665, %v1777
          %1779 = vmatmul.f32.gmra.mxu0 %v1555
          %v1780 = vpop.f32.mrf.mxu0
          %v1781 = vadd.f32 %v1668, %v1780
          %1782 = vmatmul.f32.gmra.mxu0 %v1558
          %v1783 = vpop.f32.mrf.mxu0
          %v1784 = vadd.f32 %v1671, %v1783
          %1785 = vmatmul.f32.gmra.mxu0 %v1561
          %v1786 = vpop.f32.mrf.mxu0
          %v1787 = vadd.f32 %v1674, %v1786
          %1788 = vmatmul.f32.gmra.mxu0 %v1564
          %v1789 = vpop.f32.mrf.mxu0
          %v1790 = vadd.f32 %v1677, %v1789
          %1791 = vmatmul.f32.gmra.mxu0 %v1567
          %v1792 = vpop.f32.mrf.mxu0
          %v1793 = vadd.f32 %v1680, %v1792
          %1794 = vmatmul.f32.gmra.mxu0 %v1570
          %v1795 = vpop.f32.mrf.mxu0
          %v1796 = vadd.f32 %v1683, %v1795
          %1797 = vmatmul.f32.gmra.mxu0 %v1573
          %v1798 = vpop.f32.mrf.mxu0
          %v1799 = vadd.f32 %v1686, %v1798
          %1800 = vmatmul.f32.gmra.mxu0 %v1576
          %v1801 = vpop.f32.mrf.mxu0
          %v1802 = vadd.f32 %v1689, %v1801
          %1803 = vmatmul.f32.gmra.mxu0 %v1579
          %v1804 = vpop.f32.mrf.mxu0
          %v1805 = vadd.f32 %v1692, %v1804
          %1806 = vmatmul.f32.gmra.mxu0 %v1582
          %v1807 = vpop.f32.mrf.mxu0
          %v1808 = vadd.f32 %v1695, %v1807
          %1809 = vmatmul.f32.gmra.mxu0 %v1585
          %v1810 = vpop.f32.mrf.mxu0
          %v1811 = vadd.f32 %v1698, %v1810
          %1812 = vmatmul.f32.gmra.mxu0 %v1588
          %v1813 = vpop.f32.mrf.mxu0
          %v1814 = vadd.f32 %v1701, %v1813
          %1815 = vmatmul.f32.gmra.mxu0 %v1591
          %v1816 = vpop.f32.mrf.mxu0
          %v1817 = vadd.f32 %v1704, %v1816
          %1818 = vmatmul.f32.gmra.mxu0 %v1594
          %v1819 = vpop.f32.mrf.mxu0
          %v1820 = vadd.f32 %v1707, %v1819
          %1821 = vmatmul.f32.gmra.mxu0 %v1597
          %v1822 = vpop.f32.mrf.mxu0
          %v1823 = vadd.f32 %v1710, %v1822
          %1824 = vmatmul.f32.gmra.mxu0 %v1600
          %v1825 = vpop.f32.mrf.mxu0
          %v1826 = vadd.f32 %v1713, %v1825
          %1827 = vmatmul.f32.gmra.mxu0 %v1603
          %v1828 = vpop.f32.mrf.mxu0
          %v1829 = vadd.f32 %v1716, %v1828
          %1830 = vmatmul.f32.gmra.mxu0 %v1606
          %v1831 = vpop.f32.mrf.mxu0
          %v1832 = vadd.f32 %v1719, %v1831
          %1833 = vmatmul.f32.gmra.mxu0 %v1609
          %v1834 = vpop.f32.mrf.mxu0
          %v1835 = vadd.f32 %v1722, %v1834
          %1836 = vmatmul.f32.gmra.mxu0 %v1612
          %v1837 = vpop.f32.mrf.mxu0
          %v1838 = vadd.f32 %v1725, %v1837
          %1839 = vmatmul.f32.gmra.mxu0 %v1615
          %v1840 = vpop.f32.mrf.mxu0
          %v1841 = vadd.f32 %v1728, %v1840
          %1842 = vmatmul.f32.gmra.mxu0 %v1618
          %v1843 = vpop.f32.mrf.mxu0
          %v1844 = vadd.f32 %v1731, %v1843
          %1845 = vmatmul.f32.gmra.mxu0 %v1621
          %v1846 = vpop.f32.mrf.mxu0
          %v1847 = vadd.f32 %v1734, %v1846
          %1848 = vmatmul.f32.gmra.mxu0 %v1624
          %v1849 = vpop.f32.mrf.mxu0
          %v1850 = vadd.f32 %v1737, %v1849
          %1851 = vmatmul.f32.gmra.mxu0 %v1627
          %v1852 = vpop.f32.mrf.mxu0
          %v1853 = vadd.f32 %v1740, %v1852
          %1854 = vmatmul.f32.gmra.mxu0 %v1630
          %v1855 = vpop.f32.mrf.mxu0
          %v1856 = vadd.f32 %v1743, %v1855
          %1857 = vdwg.mxu0
          %s1858 = scalar_lea.vmem %s449, 192
          %v1859 = vld [vmem:[%s1858] sm:$0xff]
          %v1860 = vld [vmem:[%s1858 + $0x8] sm:$0xff]
          %v1861 = vld [vmem:[%s1858 + $0x10] sm:$0xff]
          %v1862 = vld [vmem:[%s1858 + $0x18] sm:$0xff]
          %v1863 = vld [vmem:[%s1858 + $0x20] sm:$0xff]
          %v1864 = vld [vmem:[%s1858 + $0x28] sm:$0xff]
          %v1865 = vld [vmem:[%s1858 + $0x30] sm:$0xff]
          %v1866 = vld [vmem:[%s1858 + $0x38] sm:$0xff]
          %v1867 = vld [vmem:[%s1858 + $0x40] sm:$0xff]
          %v1868 = vld [vmem:[%s1858 + $0x48] sm:$0xff]
          %v1869 = vld [vmem:[%s1858 + $0x50] sm:$0xff]
          %v1870 = vld [vmem:[%s1858 + $0x58] sm:$0xff]
          %v1871 = vld [vmem:[%s1858 + $0x60] sm:$0xff]
          %v1872 = vld [vmem:[%s1858 + $0x68] sm:$0xff]
          %v1873 = vld [vmem:[%s1858 + $0x70] sm:$0xff]
          %v1874 = vld [vmem:[%s1858 + $0x78] sm:$0xff]
          %v1875 = vld [vmem:[%s1858 + $0x80] sm:$0xff]
          %v1876 = vld [vmem:[%s1858 + $0x88] sm:$0xff]
          %v1877 = vld [vmem:[%s1858 + $0x90] sm:$0xff]
          %v1878 = vld [vmem:[%s1858 + $0x98] sm:$0xff]
          %v1879 = vld [vmem:[%s1858 + $0xa0] sm:$0xff]
          %v1880 = vld [vmem:[%s1858 + $0xa8] sm:$0xff]
          %v1881 = vld [vmem:[%s1858 + $0xb0] sm:$0xff]
          %v1882 = vld [vmem:[%s1858 + $0xb8] sm:$0xff]
          %s1883 = scalar_lea.vmem %s449, 384
          %v1884 = vld [vmem:[%s1883] sm:$0xff]
          %v1885 = vld [vmem:[%s1883 + $0x8] sm:$0xff]
          %v1886 = vld [vmem:[%s1883 + $0x10] sm:$0xff]
          %v1887 = vld [vmem:[%s1883 + $0x18] sm:$0xff]
          %v1888 = vld [vmem:[%s1883 + $0x20] sm:$0xff]
          %v1889 = vld [vmem:[%s1883 + $0x28] sm:$0xff]
          %v1890 = vld [vmem:[%s1883 + $0x30] sm:$0xff]
          %v1891 = vld [vmem:[%s1883 + $0x38] sm:$0xff]
          %v1892 = vld [vmem:[%s1883 + $0x40] sm:$0xff]
          %v1893 = vld [vmem:[%s1883 + $0x48] sm:$0xff]
          %v1894 = vld [vmem:[%s1883 + $0x50] sm:$0xff]
          %v1895 = vld [vmem:[%s1883 + $0x58] sm:$0xff]
          %v1896 = vld [vmem:[%s1883 + $0x60] sm:$0xff]
          %v1897 = vld [vmem:[%s1883 + $0x68] sm:$0xff]
          %v1898 = vld [vmem:[%s1883 + $0x70] sm:$0xff]
          %v1899 = vld [vmem:[%s1883 + $0x78] sm:$0xff]
          %v1900 = vld [vmem:[%s1883 + $0x80] sm:$0xff]
          %v1901 = vld [vmem:[%s1883 + $0x88] sm:$0xff]
          %v1902 = vld [vmem:[%s1883 + $0x90] sm:$0xff]
          %v1903 = vld [vmem:[%s1883 + $0x98] sm:$0xff]
          %v1904 = vld [vmem:[%s1883 + $0xa0] sm:$0xff]
          %v1905 = vld [vmem:[%s1883 + $0xa8] sm:$0xff]
          %v1906 = vld [vmem:[%s1883 + $0xb0] sm:$0xff]
          %v1907 = vld [vmem:[%s1883 + $0xb8] sm:$0xff]
          %1908 = vmatpush.msra.mxu0 %v1899
          %1909 = vmatpush.msra.mxu0 %v1898
          %1910 = vmatpush.msra.mxu0 %v1897
          %1911 = vmatpush.msra.mxu0 %v1896
          %1912 = vmatpush.msra.mxu0 %v1895
          %1913 = vmatpush.msra.mxu0 %v1894
          %1914 = vmatpush.msra.mxu0 %v1893
          %1915 = vmatpush.msra.mxu0 %v1892
          %1916 = vmatpush.msra.mxu0 %v1891
          %1917 = vmatpush.msra.mxu0 %v1890
          %1918 = vmatpush.msra.mxu0 %v1889
          %1919 = vmatpush.msra.mxu0 %v1888
          %1920 = vmatpush.msra.mxu0 %v1887
          %1921 = vmatpush.msra.mxu0 %v1886
          %1922 = vmatpush.msra.mxu0 %v1885
          %1923 = vmatpush.msra.mxu0 %v1884
          %1924 = vmatmul.f32.gmra.mxu0 %v1448
          %v1925 = vpop.f32.mrf.mxu0
          %v1926 = vadd.f32 0.0, %v1925
          %1927 = vmatmul.f32.gmra.mxu0 %v1450
          %v1928 = vpop.f32.mrf.mxu0
          %v1929 = vadd.f32 0.0, %v1928
          %1930 = vmatmul.f32.gmra.mxu0 %v1452
          %v1931 = vpop.f32.mrf.mxu0
          %v1932 = vadd.f32 0.0, %v1931
          %1933 = vmatmul.f32.gmra.mxu0 %v1454
          %v1934 = vpop.f32.mrf.mxu0
          %v1935 = vadd.f32 0.0, %v1934
          %1936 = vmatmul.f32.gmra.mxu0 %v1456
          %v1937 = vpop.f32.mrf.mxu0
          %v1938 = vadd.f32 0.0, %v1937
          %1939 = vmatmul.f32.gmra.mxu0 %v1458
          %v1940 = vpop.f32.mrf.mxu0
          %v1941 = vadd.f32 0.0, %v1940
          %1942 = vmatmul.f32.gmra.mxu0 %v1460
          %v1943 = vpop.f32.mrf.mxu0
          %v1944 = vadd.f32 0.0, %v1943
          %1945 = vmatmul.f32.gmra.mxu0 %v1462
          %v1946 = vpop.f32.mrf.mxu0
          %v1947 = vadd.f32 0.0, %v1946
          %1948 = vmatmul.f32.gmra.mxu0 %v1464
          %v1949 = vpop.f32.mrf.mxu0
          %v1950 = vadd.f32 0.0, %v1949
          %1951 = vmatmul.f32.gmra.mxu0 %v1466
          %v1952 = vpop.f32.mrf.mxu0
          %v1953 = vadd.f32 0.0, %v1952
          %1954 = vmatmul.f32.gmra.mxu0 %v1468
          %v1955 = vpop.f32.mrf.mxu0
          %v1956 = vadd.f32 0.0, %v1955
          %1957 = vmatmul.f32.gmra.mxu0 %v1470
          %v1958 = vpop.f32.mrf.mxu0
          %v1959 = vadd.f32 0.0, %v1958
          %1960 = vmatmul.f32.gmra.mxu0 %v1472
          %v1961 = vpop.f32.mrf.mxu0
          %v1962 = vadd.f32 0.0, %v1961
          %1963 = vmatmul.f32.gmra.mxu0 %v1474
          %v1964 = vpop.f32.mrf.mxu0
          %v1965 = vadd.f32 0.0, %v1964
          %1966 = vmatmul.f32.gmra.mxu0 %v1476
          %v1967 = vpop.f32.mrf.mxu0
          %v1968 = vadd.f32 0.0, %v1967
          %1969 = vmatmul.f32.gmra.mxu0 %v1478
          %v1970 = vpop.f32.mrf.mxu0
          %v1971 = vadd.f32 0.0, %v1970
          %1972 = vmatmul.f32.gmra.mxu0 %v1480
          %v1973 = vpop.f32.mrf.mxu0
          %v1974 = vadd.f32 0.0, %v1973
          %1975 = vmatmul.f32.gmra.mxu0 %v1482
          %v1976 = vpop.f32.mrf.mxu0
          %v1977 = vadd.f32 0.0, %v1976
          %1978 = vmatmul.f32.gmra.mxu0 %v1484
          %v1979 = vpop.f32.mrf.mxu0
          %v1980 = vadd.f32 0.0, %v1979
          %1981 = vmatmul.f32.gmra.mxu0 %v1486
          %v1982 = vpop.f32.mrf.mxu0
          %v1983 = vadd.f32 0.0, %v1982
          %1984 = vmatmul.f32.gmra.mxu0 %v1488
          %v1985 = vpop.f32.mrf.mxu0
          %v1986 = vadd.f32 0.0, %v1985
          %1987 = vmatmul.f32.gmra.mxu0 %v1490
          %v1988 = vpop.f32.mrf.mxu0
          %v1989 = vadd.f32 0.0, %v1988
          %1990 = vmatmul.f32.gmra.mxu0 %v1492
          %v1991 = vpop.f32.mrf.mxu0
          %v1992 = vadd.f32 0.0, %v1991
          %1993 = vmatmul.f32.gmra.mxu0 %v1494
          %v1994 = vpop.f32.mrf.mxu0
          %v1995 = vadd.f32 0.0, %v1994
          %1996 = vmatmul.f32.gmra.mxu0 %v1496
          %v1997 = vpop.f32.mrf.mxu0
          %v1998 = vadd.f32 0.0, %v1997
          %1999 = vmatmul.f32.gmra.mxu0 %v1498
          %v2000 = vpop.f32.mrf.mxu0
          %v2001 = vadd.f32 0.0, %v2000
          %2002 = vmatmul.f32.gmra.mxu0 %v1500
          %v2003 = vpop.f32.mrf.mxu0
          %v2004 = vadd.f32 0.0, %v2003
          %2005 = vmatmul.f32.gmra.mxu0 %v1502
          %v2006 = vpop.f32.mrf.mxu0
          %v2007 = vadd.f32 0.0, %v2006
          %2008 = vmatmul.f32.gmra.mxu0 %v1504
          %v2009 = vpop.f32.mrf.mxu0
          %v2010 = vadd.f32 0.0, %v2009
          %2011 = vmatmul.f32.gmra.mxu0 %v1506
          %v2012 = vpop.f32.mrf.mxu0
          %v2013 = vadd.f32 0.0, %v2012
          %2014 = vmatmul.f32.gmra.mxu0 %v1508
          %v2015 = vpop.f32.mrf.mxu0
          %v2016 = vadd.f32 0.0, %v2015
          %2017 = vmatmul.f32.gmra.mxu0 %v1510
          %v2018 = vpop.f32.mrf.mxu0
          %v2019 = vadd.f32 0.0, %v2018
          %2020 = vdwg.mxu0
          %2021 = vmatpush.msra.mxu0 0.0
          %2022 = vmatpush.msra.mxu0 0.0
          %2023 = vmatpush.msra.mxu0 0.0
          %2024 = vmatpush.msra.mxu0 0.0
          %2025 = vmatpush.msra.mxu0 0.0
          %2026 = vmatpush.msra.mxu0 0.0
          %2027 = vmatpush.msra.mxu0 0.0
          %2028 = vmatpush.msra.mxu0 0.0
          %2029 = vmatpush.msra.mxu0 %v1907
          %2030 = vmatpush.msra.mxu0 %v1906
          %2031 = vmatpush.msra.mxu0 %v1905
          %2032 = vmatpush.msra.mxu0 %v1904
          %2033 = vmatpush.msra.mxu0 %v1903
          %2034 = vmatpush.msra.mxu0 %v1902
          %2035 = vmatpush.msra.mxu0 %v1901
          %2036 = vmatpush.msra.mxu0 %v1900
          %2037 = vmatmul.f32.gmra.mxu0 %v1537
          %v2038 = vpop.f32.mrf.mxu0
          %v2039 = vadd.f32 %v1926, %v2038
          %2040 = vmatmul.f32.gmra.mxu0 %v1540
          %v2041 = vpop.f32.mrf.mxu0
          %v2042 = vadd.f32 %v1929, %v2041
          %2043 = vmatmul.f32.gmra.mxu0 %v1543
          %v2044 = vpop.f32.mrf.mxu0
          %v2045 = vadd.f32 %v1932, %v2044
          %2046 = vmatmul.f32.gmra.mxu0 %v1546
          %v2047 = vpop.f32.mrf.mxu0
          %v2048 = vadd.f32 %v1935, %v2047
          %2049 = vmatmul.f32.gmra.mxu0 %v1549
          %v2050 = vpop.f32.mrf.mxu0
          %v2051 = vadd.f32 %v1938, %v2050
          %2052 = vmatmul.f32.gmra.mxu0 %v1552
          %v2053 = vpop.f32.mrf.mxu0
          %v2054 = vadd.f32 %v1941, %v2053
          %2055 = vmatmul.f32.gmra.mxu0 %v1555
          %v2056 = vpop.f32.mrf.mxu0
          %v2057 = vadd.f32 %v1944, %v2056
          %2058 = vmatmul.f32.gmra.mxu0 %v1558
          %v2059 = vpop.f32.mrf.mxu0
          %v2060 = vadd.f32 %v1947, %v2059
          %2061 = vmatmul.f32.gmra.mxu0 %v1561
          %v2062 = vpop.f32.mrf.mxu0
          %v2063 = vadd.f32 %v1950, %v2062
          %2064 = vmatmul.f32.gmra.mxu0 %v1564
          %v2065 = vpop.f32.mrf.mxu0
          %v2066 = vadd.f32 %v1953, %v2065
          %2067 = vmatmul.f32.gmra.mxu0 %v1567
          %v2068 = vpop.f32.mrf.mxu0
          %v2069 = vadd.f32 %v1956, %v2068
          %2070 = vmatmul.f32.gmra.mxu0 %v1570
          %v2071 = vpop.f32.mrf.mxu0
          %v2072 = vadd.f32 %v1959, %v2071
          %2073 = vmatmul.f32.gmra.mxu0 %v1573
          %v2074 = vpop.f32.mrf.mxu0
          %v2075 = vadd.f32 %v1962, %v2074
          %2076 = vmatmul.f32.gmra.mxu0 %v1576
          %v2077 = vpop.f32.mrf.mxu0
          %v2078 = vadd.f32 %v1965, %v2077
          %2079 = vmatmul.f32.gmra.mxu0 %v1579
          %v2080 = vpop.f32.mrf.mxu0
          %v2081 = vadd.f32 %v1968, %v2080
          %2082 = vmatmul.f32.gmra.mxu0 %v1582
          %v2083 = vpop.f32.mrf.mxu0
          %v2084 = vadd.f32 %v1971, %v2083
          %2085 = vmatmul.f32.gmra.mxu0 %v1585
          %v2086 = vpop.f32.mrf.mxu0
          %v2087 = vadd.f32 %v1974, %v2086
          %2088 = vmatmul.f32.gmra.mxu0 %v1588
          %v2089 = vpop.f32.mrf.mxu0
          %v2090 = vadd.f32 %v1977, %v2089
          %2091 = vmatmul.f32.gmra.mxu0 %v1591
          %v2092 = vpop.f32.mrf.mxu0
          %v2093 = vadd.f32 %v1980, %v2092
          %2094 = vmatmul.f32.gmra.mxu0 %v1594
          %v2095 = vpop.f32.mrf.mxu0
          %v2096 = vadd.f32 %v1983, %v2095
          %2097 = vmatmul.f32.gmra.mxu0 %v1597
          %v2098 = vpop.f32.mrf.mxu0
          %v2099 = vadd.f32 %v1986, %v2098
          %2100 = vmatmul.f32.gmra.mxu0 %v1600
          %v2101 = vpop.f32.mrf.mxu0
          %v2102 = vadd.f32 %v1989, %v2101
          %2103 = vmatmul.f32.gmra.mxu0 %v1603
          %v2104 = vpop.f32.mrf.mxu0
          %v2105 = vadd.f32 %v1992, %v2104
          %2106 = vmatmul.f32.gmra.mxu0 %v1606
          %v2107 = vpop.f32.mrf.mxu0
          %v2108 = vadd.f32 %v1995, %v2107
          %2109 = vmatmul.f32.gmra.mxu0 %v1609
          %v2110 = vpop.f32.mrf.mxu0
          %v2111 = vadd.f32 %v1998, %v2110
          %2112 = vmatmul.f32.gmra.mxu0 %v1612
          %v2113 = vpop.f32.mrf.mxu0
          %v2114 = vadd.f32 %v2001, %v2113
          %2115 = vmatmul.f32.gmra.mxu0 %v1615
          %v2116 = vpop.f32.mrf.mxu0
          %v2117 = vadd.f32 %v2004, %v2116
          %2118 = vmatmul.f32.gmra.mxu0 %v1618
          %v2119 = vpop.f32.mrf.mxu0
          %v2120 = vadd.f32 %v2007, %v2119
          %2121 = vmatmul.f32.gmra.mxu0 %v1621
          %v2122 = vpop.f32.mrf.mxu0
          %v2123 = vadd.f32 %v2010, %v2122
          %2124 = vmatmul.f32.gmra.mxu0 %v1624
          %v2125 = vpop.f32.mrf.mxu0
          %v2126 = vadd.f32 %v2013, %v2125
          %2127 = vmatmul.f32.gmra.mxu0 %v1627
          %v2128 = vpop.f32.mrf.mxu0
          %v2129 = vadd.f32 %v2016, %v2128
          %2130 = vmatmul.f32.gmra.mxu0 %v1630
          %v2131 = vpop.f32.mrf.mxu0
          %v2132 = vadd.f32 %v2019, %v2131
          %2133 = vdwg.mxu0
          %vm2167 = vcmask 1040384
          %v2168 = vrot.slane 0.0, 7
          %v2169 = vrot.slane %v1763, 7
          %v2170 = vsel %vm2167, %v2168, %v2169
          %v2171 = vrot.slane %v1766, 7
          %v2172 = vsel %vm2167, %v2169, %v2171
          %v2173 = vrot.slane %v1769, 7
          %v2174 = vsel %vm2167, %v2171, %v2173
          %v2175 = vrot.slane %v1772, 7
          %v2176 = vsel %vm2167, %v2173, %v2175
          %v2177 = vrot.slane %v1775, 7
          %v2178 = vsel %vm2167, %v2175, %v2177
          %v2179 = vrot.slane %v1778, 7
          %v2180 = vsel %vm2167, %v2177, %v2179
          %v2181 = vrot.slane %v1781, 7
          %v2182 = vsel %vm2167, %v2179, %v2181
          %v2183 = vrot.slane %v1784, 7
          %v2184 = vsel %vm2167, %v2181, %v2183
          %v2185 = vrot.slane %v1787, 7
          %v2186 = vsel %vm2167, %v2183, %v2185
          %v2187 = vrot.slane %v1790, 7
          %v2188 = vsel %vm2167, %v2185, %v2187
          %v2189 = vrot.slane %v1793, 7
          %v2190 = vsel %vm2167, %v2187, %v2189
          %v2191 = vrot.slane %v1796, 7
          %v2192 = vsel %vm2167, %v2189, %v2191
          %v2193 = vrot.slane %v1799, 7
          %v2194 = vsel %vm2167, %v2191, %v2193
          %v2195 = vrot.slane %v1802, 7
          %v2196 = vsel %vm2167, %v2193, %v2195
          %v2197 = vrot.slane %v1805, 7
          %v2198 = vsel %vm2167, %v2195, %v2197
          %v2199 = vrot.slane %v1808, 7
          %v2200 = vsel %vm2167, %v2197, %v2199
          %v2201 = vrot.slane %v1811, 7
          %v2202 = vsel %vm2167, %v2199, %v2201
          %v2203 = vrot.slane %v1814, 7
          %v2204 = vsel %vm2167, %v2201, %v2203
          %v2205 = vrot.slane %v1817, 7
          %v2206 = vsel %vm2167, %v2203, %v2205
          %v2207 = vrot.slane %v1820, 7
          %v2208 = vsel %vm2167, %v2205, %v2207
          %v2209 = vrot.slane %v1823, 7
          %v2210 = vsel %vm2167, %v2207, %v2209
          %v2211 = vrot.slane %v1826, 7
          %v2212 = vsel %vm2167, %v2209, %v2211
          %v2213 = vrot.slane %v1829, 7
          %v2214 = vsel %vm2167, %v2211, %v2213
          %v2215 = vrot.slane %v1832, 7
          %v2216 = vsel %vm2167, %v2213, %v2215
          %v2217 = vrot.slane %v1835, 7
          %v2218 = vsel %vm2167, %v2215, %v2217
          %v2219 = vrot.slane %v1838, 7
          %v2220 = vsel %vm2167, %v2217, %v2219
          %v2221 = vrot.slane %v1841, 7
          %v2222 = vsel %vm2167, %v2219, %v2221
          %v2223 = vrot.slane %v1844, 7
          %v2224 = vsel %vm2167, %v2221, %v2223
          %v2225 = vrot.slane %v1847, 7
          %v2226 = vsel %vm2167, %v2223, %v2225
          %v2227 = vrot.slane %v1850, 7
          %v2228 = vsel %vm2167, %v2225, %v2227
          %v2229 = vrot.slane %v1853, 7
          %v2230 = vsel %vm2167, %v2227, %v2229
          %v2231 = vrot.slane %v1856, 7
          %v2232 = vsel %vm2167, %v2229, %v2231
          %v2265 = vmul.f32 %v957, %v2170
          %v2266 = vmul.f32 %v958, %v2172
          %v2267 = vmul.f32 %v959, %v2174
          %v2268 = vmul.f32 %v960, %v2176
          %v2269 = vmul.f32 %v961, %v2178
          %v2270 = vmul.f32 %v962, %v2180
          %v2271 = vmul.f32 %v963, %v2182
          %v2272 = vmul.f32 %v964, %v2184
          %v2273 = vmul.f32 %v965, %v2186
          %v2274 = vmul.f32 %v966, %v2188
          %v2275 = vmul.f32 %v967, %v2190
          %v2276 = vmul.f32 %v968, %v2192
          %v2277 = vmul.f32 %v969, %v2194
          %v2278 = vmul.f32 %v970, %v2196
          %v2279 = vmul.f32 %v971, %v2198
          %v2280 = vmul.f32 %v972, %v2200
          %v2281 = vmul.f32 %v973, %v2202
          %v2282 = vmul.f32 %v974, %v2204
          %v2283 = vmul.f32 %v975, %v2206
          %v2284 = vmul.f32 %v976, %v2208
          %v2285 = vmul.f32 %v977, %v2210
          %v2286 = vmul.f32 %v978, %v2212
          %v2287 = vmul.f32 %v979, %v2214
          %v2288 = vmul.f32 %v980, %v2216
          %v2289 = vmul.f32 %v981, %v2218
          %v2290 = vmul.f32 %v982, %v2220
          %v2291 = vmul.f32 %v983, %v2222
          %v2292 = vmul.f32 %v984, %v2224
          %v2293 = vmul.f32 %v985, %v2226
          %v2294 = vmul.f32 %v986, %v2228
          %v2295 = vmul.f32 %v987, %v2230
          %v2296 = vmul.f32 %v988, %v2232
          %2297 = vmatpush.msra.mxu0 %v1874
          %2298 = vmatpush.msra.mxu0 %v1873
          %2299 = vmatpush.msra.mxu0 %v1872
          %2300 = vmatpush.msra.mxu0 %v1871
          %2301 = vmatpush.msra.mxu0 %v1870
          %2302 = vmatpush.msra.mxu0 %v1869
          %2303 = vmatpush.msra.mxu0 %v1868
          %2304 = vmatpush.msra.mxu0 %v1867
          %2305 = vmatpush.msra.mxu0 %v1866
          %2306 = vmatpush.msra.mxu0 %v1865
          %2307 = vmatpush.msra.mxu0 %v1864
          %2308 = vmatpush.msra.mxu0 %v1863
          %2309 = vmatpush.msra.mxu0 %v1862
          %2310 = vmatpush.msra.mxu0 %v1861
          %2311 = vmatpush.msra.mxu0 %v1860
          %2312 = vmatpush.msra.mxu0 %v1859
          %2313 = vmatmul.f32.gmra.mxu0 %v1448
          %v2314 = vpop.f32.mrf.mxu0
          %v2315 = vadd.f32 %v2265, %v2314
          %2316 = vmatmul.f32.gmra.mxu0 %v1450
          %v2317 = vpop.f32.mrf.mxu0
          %v2318 = vadd.f32 %v2266, %v2317
          %2319 = vmatmul.f32.gmra.mxu0 %v1452
          %v2320 = vpop.f32.mrf.mxu0
          %v2321 = vadd.f32 %v2267, %v2320
          %2322 = vmatmul.f32.gmra.mxu0 %v1454
          %v2323 = vpop.f32.mrf.mxu0
          %v2324 = vadd.f32 %v2268, %v2323
          %2325 = vmatmul.f32.gmra.mxu0 %v1456
          %v2326 = vpop.f32.mrf.mxu0
          %v2327 = vadd.f32 %v2269, %v2326
          %2328 = vmatmul.f32.gmra.mxu0 %v1458
          %v2329 = vpop.f32.mrf.mxu0
          %v2330 = vadd.f32 %v2270, %v2329
          %2331 = vmatmul.f32.gmra.mxu0 %v1460
          %v2332 = vpop.f32.mrf.mxu0
          %v2333 = vadd.f32 %v2271, %v2332
          %2334 = vmatmul.f32.gmra.mxu0 %v1462
          %v2335 = vpop.f32.mrf.mxu0
          %v2336 = vadd.f32 %v2272, %v2335
          %2337 = vmatmul.f32.gmra.mxu0 %v1464
          %v2338 = vpop.f32.mrf.mxu0
          %v2339 = vadd.f32 %v2273, %v2338
          %2340 = vmatmul.f32.gmra.mxu0 %v1466
          %v2341 = vpop.f32.mrf.mxu0
          %v2342 = vadd.f32 %v2274, %v2341
          %2343 = vmatmul.f32.gmra.mxu0 %v1468
          %v2344 = vpop.f32.mrf.mxu0
          %v2345 = vadd.f32 %v2275, %v2344
          %2346 = vmatmul.f32.gmra.mxu0 %v1470
          %v2347 = vpop.f32.mrf.mxu0
          %v2348 = vadd.f32 %v2276, %v2347
          %2349 = vmatmul.f32.gmra.mxu0 %v1472
          %v2350 = vpop.f32.mrf.mxu0
          %v2351 = vadd.f32 %v2277, %v2350
          %2352 = vmatmul.f32.gmra.mxu0 %v1474
          %v2353 = vpop.f32.mrf.mxu0
          %v2354 = vadd.f32 %v2278, %v2353
          %2355 = vmatmul.f32.gmra.mxu0 %v1476
          %v2356 = vpop.f32.mrf.mxu0
          %v2357 = vadd.f32 %v2279, %v2356
          %2358 = vmatmul.f32.gmra.mxu0 %v1478
          %v2359 = vpop.f32.mrf.mxu0
          %v2360 = vadd.f32 %v2280, %v2359
          %2361 = vmatmul.f32.gmra.mxu0 %v1480
          %v2362 = vpop.f32.mrf.mxu0
          %v2363 = vadd.f32 %v2281, %v2362
          %2364 = vmatmul.f32.gmra.mxu0 %v1482
          %v2365 = vpop.f32.mrf.mxu0
          %v2366 = vadd.f32 %v2282, %v2365
          %2367 = vmatmul.f32.gmra.mxu0 %v1484
          %v2368 = vpop.f32.mrf.mxu0
          %v2369 = vadd.f32 %v2283, %v2368
          %2370 = vmatmul.f32.gmra.mxu0 %v1486
          %v2371 = vpop.f32.mrf.mxu0
          %v2372 = vadd.f32 %v2284, %v2371
          %2373 = vmatmul.f32.gmra.mxu0 %v1488
          %v2374 = vpop.f32.mrf.mxu0
          %v2375 = vadd.f32 %v2285, %v2374
          %2376 = vmatmul.f32.gmra.mxu0 %v1490
          %v2377 = vpop.f32.mrf.mxu0
          %v2378 = vadd.f32 %v2286, %v2377
          %2379 = vmatmul.f32.gmra.mxu0 %v1492
          %v2380 = vpop.f32.mrf.mxu0
          %v2381 = vadd.f32 %v2287, %v2380
          %2382 = vmatmul.f32.gmra.mxu0 %v1494
          %v2383 = vpop.f32.mrf.mxu0
          %v2384 = vadd.f32 %v2288, %v2383
          %2385 = vmatmul.f32.gmra.mxu0 %v1496
          %v2386 = vpop.f32.mrf.mxu0
          %v2387 = vadd.f32 %v2289, %v2386
          %2388 = vmatmul.f32.gmra.mxu0 %v1498
          %v2389 = vpop.f32.mrf.mxu0
          %v2390 = vadd.f32 %v2290, %v2389
          %2391 = vmatmul.f32.gmra.mxu0 %v1500
          %v2392 = vpop.f32.mrf.mxu0
          %v2393 = vadd.f32 %v2291, %v2392
          %2394 = vmatmul.f32.gmra.mxu0 %v1502
          %v2395 = vpop.f32.mrf.mxu0
          %v2396 = vadd.f32 %v2292, %v2395
          %2397 = vmatmul.f32.gmra.mxu0 %v1504
          %v2398 = vpop.f32.mrf.mxu0
          %v2399 = vadd.f32 %v2293, %v2398
          %2400 = vmatmul.f32.gmra.mxu0 %v1506
          %v2401 = vpop.f32.mrf.mxu0
          %v2402 = vadd.f32 %v2294, %v2401
          %2403 = vmatmul.f32.gmra.mxu0 %v1508
          %v2404 = vpop.f32.mrf.mxu0
          %v2405 = vadd.f32 %v2295, %v2404
          %2406 = vmatmul.f32.gmra.mxu0 %v1510
          %v2407 = vpop.f32.mrf.mxu0
          %v2408 = vadd.f32 %v2296, %v2407
          %2409 = vdwg.mxu0
          %2410 = vmatpush.msra.mxu0 0.0
          %2411 = vmatpush.msra.mxu0 0.0
          %2412 = vmatpush.msra.mxu0 0.0
          %2413 = vmatpush.msra.mxu0 0.0
          %2414 = vmatpush.msra.mxu0 0.0
          %2415 = vmatpush.msra.mxu0 0.0
          %2416 = vmatpush.msra.mxu0 0.0
          %2417 = vmatpush.msra.mxu0 0.0
          %2418 = vmatpush.msra.mxu0 %v1882
          %2419 = vmatpush.msra.mxu0 %v1881
          %2420 = vmatpush.msra.mxu0 %v1880
          %2421 = vmatpush.msra.mxu0 %v1879
          %2422 = vmatpush.msra.mxu0 %v1878
          %2423 = vmatpush.msra.mxu0 %v1877
          %2424 = vmatpush.msra.mxu0 %v1876
          %2425 = vmatpush.msra.mxu0 %v1875
          %2426 = vmatmul.f32.gmra.mxu0 %v1537
          %v2427 = vpop.f32.mrf.mxu0
          %v2428 = vadd.f32 %v2315, %v2427
          %2429 = vmatmul.f32.gmra.mxu0 %v1540
          %v2430 = vpop.f32.mrf.mxu0
          %v2431 = vadd.f32 %v2318, %v2430
          %2432 = vmatmul.f32.gmra.mxu0 %v1543
          %v2433 = vpop.f32.mrf.mxu0
          %v2434 = vadd.f32 %v2321, %v2433
          %2435 = vmatmul.f32.gmra.mxu0 %v1546
          %v2436 = vpop.f32.mrf.mxu0
          %v2437 = vadd.f32 %v2324, %v2436
          %2438 = vmatmul.f32.gmra.mxu0 %v1549
          %v2439 = vpop.f32.mrf.mxu0
          %v2440 = vadd.f32 %v2327, %v2439
          %2441 = vmatmul.f32.gmra.mxu0 %v1552
          %v2442 = vpop.f32.mrf.mxu0
          %v2443 = vadd.f32 %v2330, %v2442
          %2444 = vmatmul.f32.gmra.mxu0 %v1555
          %v2445 = vpop.f32.mrf.mxu0
          %v2446 = vadd.f32 %v2333, %v2445
          %2447 = vmatmul.f32.gmra.mxu0 %v1558
          %v2448 = vpop.f32.mrf.mxu0
          %v2449 = vadd.f32 %v2336, %v2448
          %2450 = vmatmul.f32.gmra.mxu0 %v1561
          %v2451 = vpop.f32.mrf.mxu0
          %v2452 = vadd.f32 %v2339, %v2451
          %2453 = vmatmul.f32.gmra.mxu0 %v1564
          %v2454 = vpop.f32.mrf.mxu0
          %v2455 = vadd.f32 %v2342, %v2454
          %2456 = vmatmul.f32.gmra.mxu0 %v1567
          %v2457 = vpop.f32.mrf.mxu0
          %v2458 = vadd.f32 %v2345, %v2457
          %2459 = vmatmul.f32.gmra.mxu0 %v1570
          %v2460 = vpop.f32.mrf.mxu0
          %v2461 = vadd.f32 %v2348, %v2460
          %2462 = vmatmul.f32.gmra.mxu0 %v1573
          %v2463 = vpop.f32.mrf.mxu0
          %v2464 = vadd.f32 %v2351, %v2463
          %2465 = vmatmul.f32.gmra.mxu0 %v1576
          %v2466 = vpop.f32.mrf.mxu0
          %v2467 = vadd.f32 %v2354, %v2466
          %2468 = vmatmul.f32.gmra.mxu0 %v1579
          %v2469 = vpop.f32.mrf.mxu0
          %v2470 = vadd.f32 %v2357, %v2469
          %2471 = vmatmul.f32.gmra.mxu0 %v1582
          %v2472 = vpop.f32.mrf.mxu0
          %v2473 = vadd.f32 %v2360, %v2472
          %2474 = vmatmul.f32.gmra.mxu0 %v1585
          %v2475 = vpop.f32.mrf.mxu0
          %v2476 = vadd.f32 %v2363, %v2475
          %2477 = vmatmul.f32.gmra.mxu0 %v1588
          %v2478 = vpop.f32.mrf.mxu0
          %v2479 = vadd.f32 %v2366, %v2478
          %2480 = vmatmul.f32.gmra.mxu0 %v1591
          %v2481 = vpop.f32.mrf.mxu0
          %v2482 = vadd.f32 %v2369, %v2481
          %2483 = vmatmul.f32.gmra.mxu0 %v1594
          %v2484 = vpop.f32.mrf.mxu0
          %v2485 = vadd.f32 %v2372, %v2484
          %2486 = vmatmul.f32.gmra.mxu0 %v1597
          %v2487 = vpop.f32.mrf.mxu0
          %v2488 = vadd.f32 %v2375, %v2487
          %2489 = vmatmul.f32.gmra.mxu0 %v1600
          %v2490 = vpop.f32.mrf.mxu0
          %v2491 = vadd.f32 %v2378, %v2490
          %2492 = vmatmul.f32.gmra.mxu0 %v1603
          %v2493 = vpop.f32.mrf.mxu0
          %v2494 = vadd.f32 %v2381, %v2493
          %2495 = vmatmul.f32.gmra.mxu0 %v1606
          %v2496 = vpop.f32.mrf.mxu0
          %v2497 = vadd.f32 %v2384, %v2496
          %2498 = vmatmul.f32.gmra.mxu0 %v1609
          %v2499 = vpop.f32.mrf.mxu0
          %v2500 = vadd.f32 %v2387, %v2499
          %2501 = vmatmul.f32.gmra.mxu0 %v1612
          %v2502 = vpop.f32.mrf.mxu0
          %v2503 = vadd.f32 %v2390, %v2502
          %2504 = vmatmul.f32.gmra.mxu0 %v1615
          %v2505 = vpop.f32.mrf.mxu0
          %v2506 = vadd.f32 %v2393, %v2505
          %2507 = vmatmul.f32.gmra.mxu0 %v1618
          %v2508 = vpop.f32.mrf.mxu0
          %v2509 = vadd.f32 %v2396, %v2508
          %2510 = vmatmul.f32.gmra.mxu0 %v1621
          %v2511 = vpop.f32.mrf.mxu0
          %v2512 = vadd.f32 %v2399, %v2511
          %2513 = vmatmul.f32.gmra.mxu0 %v1624
          %v2514 = vpop.f32.mrf.mxu0
          %v2515 = vadd.f32 %v2402, %v2514
          %2516 = vmatmul.f32.gmra.mxu0 %v1627
          %v2517 = vpop.f32.mrf.mxu0
          %v2518 = vadd.f32 %v2405, %v2517
          %2519 = vmatmul.f32.gmra.mxu0 %v1630
          %v2520 = vpop.f32.mrf.mxu0
          %v2521 = vadd.f32 %v2408, %v2520
          %2522 = vdwg.mxu0
          %vm2555 = vcmask 1046528
          %v2556 = vrot.slane %v2039, 1
          %v2557 = vrot.slane %v2042, 1
          %v2558 = vsel %vm2555, %v2556, %v2557
          %v2559 = vrot.slane %v2045, 1
          %v2560 = vsel %vm2555, %v2557, %v2559
          %v2561 = vrot.slane %v2048, 1
          %v2562 = vsel %vm2555, %v2559, %v2561
          %v2563 = vrot.slane %v2051, 1
          %v2564 = vsel %vm2555, %v2561, %v2563
          %v2565 = vrot.slane %v2054, 1
          %v2566 = vsel %vm2555, %v2563, %v2565
          %v2567 = vrot.slane %v2057, 1
          %v2568 = vsel %vm2555, %v2565, %v2567
          %v2569 = vrot.slane %v2060, 1
          %v2570 = vsel %vm2555, %v2567, %v2569
          %v2571 = vrot.slane %v2063, 1
          %v2572 = vsel %vm2555, %v2569, %v2571
          %v2573 = vrot.slane %v2066, 1
          %v2574 = vsel %vm2555, %v2571, %v2573
          %v2575 = vrot.slane %v2069, 1
          %v2576 = vsel %vm2555, %v2573, %v2575
          %v2577 = vrot.slane %v2072, 1
          %v2578 = vsel %vm2555, %v2575, %v2577
          %v2579 = vrot.slane %v2075, 1
          %v2580 = vsel %vm2555, %v2577, %v2579
          %v2581 = vrot.slane %v2078, 1
          %v2582 = vsel %vm2555, %v2579, %v2581
          %v2583 = vrot.slane %v2081, 1
          %v2584 = vsel %vm2555, %v2581, %v2583
          %v2585 = vrot.slane %v2084, 1
          %v2586 = vsel %vm2555, %v2583, %v2585
          %v2587 = vrot.slane %v2087, 1
          %v2588 = vsel %vm2555, %v2585, %v2587
          %v2589 = vrot.slane %v2090, 1
          %v2590 = vsel %vm2555, %v2587, %v2589
          %v2591 = vrot.slane %v2093, 1
          %v2592 = vsel %vm2555, %v2589, %v2591
          %v2593 = vrot.slane %v2096, 1
          %v2594 = vsel %vm2555, %v2591, %v2593
          %v2595 = vrot.slane %v2099, 1
          %v2596 = vsel %vm2555, %v2593, %v2595
          %v2597 = vrot.slane %v2102, 1
          %v2598 = vsel %vm2555, %v2595, %v2597
          %v2599 = vrot.slane %v2105, 1
          %v2600 = vsel %vm2555, %v2597, %v2599
          %v2601 = vrot.slane %v2108, 1
          %v2602 = vsel %vm2555, %v2599, %v2601
          %v2603 = vrot.slane %v2111, 1
          %v2604 = vsel %vm2555, %v2601, %v2603
          %v2605 = vrot.slane %v2114, 1
          %v2606 = vsel %vm2555, %v2603, %v2605
          %v2607 = vrot.slane %v2117, 1
          %v2608 = vsel %vm2555, %v2605, %v2607
          %v2609 = vrot.slane %v2120, 1
          %v2610 = vsel %vm2555, %v2607, %v2609
          %v2611 = vrot.slane %v2123, 1
          %v2612 = vsel %vm2555, %v2609, %v2611
          %v2613 = vrot.slane %v2126, 1
          %v2614 = vsel %vm2555, %v2611, %v2613
          %v2615 = vrot.slane %v2129, 1
          %v2616 = vsel %vm2555, %v2613, %v2615
          %v2617 = vrot.slane %v2132, 1
          %v2618 = vsel %vm2555, %v2615, %v2617
          %v2619 = vrot.slane 0.0, 1
          %v2620 = vsel %vm2555, %v2617, %v2619
          %v2653 = vmul.f32 %v1053, %v2558
          %v2654 = vmul.f32 %v1054, %v2560
          %v2655 = vmul.f32 %v1055, %v2562
          %v2656 = vmul.f32 %v1056, %v2564
          %v2657 = vmul.f32 %v1057, %v2566
          %v2658 = vmul.f32 %v1058, %v2568
          %v2659 = vmul.f32 %v1059, %v2570
          %v2660 = vmul.f32 %v1060, %v2572
          %v2661 = vmul.f32 %v1061, %v2574
          %v2662 = vmul.f32 %v1062, %v2576
          %v2663 = vmul.f32 %v1063, %v2578
          %v2664 = vmul.f32 %v1064, %v2580
          %v2665 = vmul.f32 %v1065, %v2582
          %v2666 = vmul.f32 %v1066, %v2584
          %v2667 = vmul.f32 %v1067, %v2586
          %v2668 = vmul.f32 %v1068, %v2588
          %v2669 = vmul.f32 %v1069, %v2590
          %v2670 = vmul.f32 %v1070, %v2592
          %v2671 = vmul.f32 %v1071, %v2594
          %v2672 = vmul.f32 %v1072, %v2596
          %v2673 = vmul.f32 %v1073, %v2598
          %v2674 = vmul.f32 %v1074, %v2600
          %v2675 = vmul.f32 %v1075, %v2602
          %v2676 = vmul.f32 %v1076, %v2604
          %v2677 = vmul.f32 %v1077, %v2606
          %v2678 = vmul.f32 %v1078, %v2608
          %v2679 = vmul.f32 %v1079, %v2610
          %v2680 = vmul.f32 %v1080, %v2612
          %v2681 = vmul.f32 %v1081, %v2614
          %v2682 = vmul.f32 %v1082, %v2616
          %v2683 = vmul.f32 %v1083, %v2618
          %v2684 = vmul.f32 %v1084, %v2620
          %v2685 = vadd.f32 %v2428, %v2653
          %v2686 = vadd.f32 %v2431, %v2654
          %v2687 = vadd.f32 %v2434, %v2655
          %v2688 = vadd.f32 %v2437, %v2656
          %v2689 = vadd.f32 %v2440, %v2657
          %v2690 = vadd.f32 %v2443, %v2658
          %v2691 = vadd.f32 %v2446, %v2659
          %v2692 = vadd.f32 %v2449, %v2660
          %v2693 = vadd.f32 %v2452, %v2661
          %v2694 = vadd.f32 %v2455, %v2662
          %v2695 = vadd.f32 %v2458, %v2663
          %v2696 = vadd.f32 %v2461, %v2664
          %v2697 = vadd.f32 %v2464, %v2665
          %v2698 = vadd.f32 %v2467, %v2666
          %v2699 = vadd.f32 %v2470, %v2667
          %v2700 = vadd.f32 %v2473, %v2668
          %v2701 = vadd.f32 %v2476, %v2669
          %v2702 = vadd.f32 %v2479, %v2670
          %v2703 = vadd.f32 %v2482, %v2671
          %v2704 = vadd.f32 %v2485, %v2672
          %v2705 = vadd.f32 %v2488, %v2673
          %v2706 = vadd.f32 %v2491, %v2674
          %v2707 = vadd.f32 %v2494, %v2675
          %v2708 = vadd.f32 %v2497, %v2676
          %v2709 = vadd.f32 %v2500, %v2677
          %v2710 = vadd.f32 %v2503, %v2678
          %v2711 = vadd.f32 %v2506, %v2679
          %v2712 = vadd.f32 %v2509, %v2680
          %v2713 = vadd.f32 %v2512, %v2681
          %v2714 = vadd.f32 %v2515, %v2682
          %v2715 = vadd.f32 %v2518, %v2683
          %v2716 = vadd.f32 %v2521, %v2684
          %v2717 = vld [vmem:[%s452] sm:$0x1]
          %v2719 = vperm.slane %v2717, 0
          %v2721 = vadd.f32 %v2685, %v2719
          %v2722 = vadd.f32 %v2686, %v2719
          %v2723 = vadd.f32 %v2687, %v2719
          %v2724 = vadd.f32 %v2688, %v2719
          %v2725 = vadd.f32 %v2689, %v2719
          %v2726 = vadd.f32 %v2690, %v2719
          %v2727 = vadd.f32 %v2691, %v2719
          %v2728 = vadd.f32 %v2692, %v2719
          %v2729 = vadd.f32 %v2693, %v2719
          %v2730 = vadd.f32 %v2694, %v2719
          %v2731 = vadd.f32 %v2695, %v2719
          %v2732 = vadd.f32 %v2696, %v2719
          %v2733 = vadd.f32 %v2697, %v2719
          %v2734 = vadd.f32 %v2698, %v2719
          %v2735 = vadd.f32 %v2699, %v2719
          %v2736 = vadd.f32 %v2700, %v2719
          %v2737 = vadd.f32 %v2701, %v2719
          %v2738 = vadd.f32 %v2702, %v2719
          %v2739 = vadd.f32 %v2703, %v2719
          %v2740 = vadd.f32 %v2704, %v2719
          %v2741 = vadd.f32 %v2705, %v2719
          %v2742 = vadd.f32 %v2706, %v2719
          %v2743 = vadd.f32 %v2707, %v2719
          %v2744 = vadd.f32 %v2708, %v2719
          %v2745 = vadd.f32 %v2709, %v2719
          %v2746 = vadd.f32 %v2710, %v2719
          %v2747 = vadd.f32 %v2711, %v2719
          %v2748 = vadd.f32 %v2712, %v2719
          %v2749 = vadd.f32 %v2713, %v2719
          %v2750 = vadd.f32 %v2714, %v2719
          %v2751 = vadd.f32 %v2715, %v2719
          %v2752 = vadd.f32 %v2716, %v2719
          %v2753 = vmax.f32 %v2721, 0.0
          %v2754 = vmax.f32 %v2722, 0.0
          %v2755 = vmax.f32 %v2723, 0.0
          %v2756 = vmax.f32 %v2724, 0.0
          %v2757 = vmax.f32 %v2725, 0.0
          %v2758 = vmax.f32 %v2726, 0.0
          %v2759 = vmax.f32 %v2727, 0.0
          %v2760 = vmax.f32 %v2728, 0.0
          %v2761 = vmax.f32 %v2729, 0.0
          %v2762 = vmax.f32 %v2730, 0.0
          %v2763 = vmax.f32 %v2731, 0.0
          %v2764 = vmax.f32 %v2732, 0.0
          %v2765 = vmax.f32 %v2733, 0.0
          %v2766 = vmax.f32 %v2734, 0.0
          %v2767 = vmax.f32 %v2735, 0.0
          %v2768 = vmax.f32 %v2736, 0.0
          %v2769 = vmax.f32 %v2737, 0.0
          %v2770 = vmax.f32 %v2738, 0.0
          %v2771 = vmax.f32 %v2739, 0.0
          %v2772 = vmax.f32 %v2740, 0.0
          %v2773 = vmax.f32 %v2741, 0.0
          %v2774 = vmax.f32 %v2742, 0.0
          %v2775 = vmax.f32 %v2743, 0.0
          %v2776 = vmax.f32 %v2744, 0.0
          %v2777 = vmax.f32 %v2745, 0.0
          %v2778 = vmax.f32 %v2746, 0.0
          %v2779 = vmax.f32 %v2747, 0.0
          %v2780 = vmax.f32 %v2748, 0.0
          %v2781 = vmax.f32 %v2749, 0.0
          %v2782 = vmax.f32 %v2750, 0.0
          %v2783 = vmax.f32 %v2751, 0.0
          %v2784 = vmax.f32 %v2752, 0.0
          %2785 = vst.msk [vmem:[#allocation4] sm:$0xff] %vm1222, 0.0
          %2786 = vst.msk [vmem:[#allocation4 + $0x10] sm:$0xff] %vm1222, 0.0
          %2787 = vst.msk [vmem:[#allocation4 + $0x20] sm:$0xff] %vm1222, %v2753
          %2788 = vst.msk [vmem:[#allocation4 + $0x30] sm:$0xff] %vm1222, %v2754
          %2789 = vst.msk [vmem:[#allocation4 + $0x40] sm:$0xff] %vm1222, %v2755
          %2790 = vst.msk [vmem:[#allocation4 + $0x50] sm:$0xff] %vm1222, %v2756
          %2791 = vst.msk [vmem:[#allocation4 + $0x60] sm:$0xff] %vm1222, %v2757
          %2792 = vst.msk [vmem:[#allocation4 + $0x70] sm:$0xff] %vm1222, %v2758
          %2793 = vst.msk [vmem:[#allocation4 + $0x80] sm:$0xff] %vm1222, %v2759
          %2794 = vst.msk [vmem:[#allocation4 + $0x90] sm:$0xff] %vm1222, %v2760
          %2795 = vst.msk [vmem:[#allocation4 + $0xa0] sm:$0xff] %vm1222, %v2761
          %2796 = vst.msk [vmem:[#allocation4 + $0xb0] sm:$0xff] %vm1222, %v2762
          %2797 = vst.msk [vmem:[#allocation4 + $0xc0] sm:$0xff] %vm1222, %v2763
          %2798 = vst.msk [vmem:[#allocation4 + $0xd0] sm:$0xff] %vm1222, %v2764
          %2799 = vst.msk [vmem:[#allocation4 + $0xe0] sm:$0xff] %vm1222, %v2765
          %2800 = vst.msk [vmem:[#allocation4 + $0xf0] sm:$0xff] %vm1222, %v2766
          %2801 = vst.msk [vmem:[#allocation4 + $0x100] sm:$0xff] %vm1222, %v2767
          %2802 = vst.msk [vmem:[#allocation4 + $0x110] sm:$0xff] %vm1222, %v2768
          %2803 = vst.msk [vmem:[#allocation4 + $0x120] sm:$0xff] %vm1222, %v2769
          %2804 = vst.msk [vmem:[#allocation4 + $0x130] sm:$0xff] %vm1222, %v2770
          %2805 = vst.msk [vmem:[#allocation4 + $0x140] sm:$0xff] %vm1222, %v2771
          %2806 = vst.msk [vmem:[#allocation4 + $0x150] sm:$0xff] %vm1222, %v2772
          %2807 = vst.msk [vmem:[#allocation4 + $0x160] sm:$0xff] %vm1222, %v2773
          %2808 = vst.msk [vmem:[#allocation4 + $0x170] sm:$0xff] %vm1222, %v2774
          %2809 = vst.msk [vmem:[#allocation4 + $0x180] sm:$0xff] %vm1222, %v2775
          %2810 = vst.msk [vmem:[#allocation4 + $0x190] sm:$0xff] %vm1222, %v2776
          %2811 = vst.msk [vmem:[#allocation4 + $0x1a0] sm:$0xff] %vm1222, %v2777
          %2812 = vst.msk [vmem:[#allocation4 + $0x1b0] sm:$0xff] %vm1222, %v2778
          %2813 = vst.msk [vmem:[#allocation4 + $0x1c0] sm:$0xff] %vm1222, %v2779
          %2814 = vst.msk [vmem:[#allocation4 + $0x1d0] sm:$0xff] %vm1222, %v2780
          %2815 = vst.msk [vmem:[#allocation4 + $0x1e0] sm:$0xff] %vm1222, %v2781
          %2816 = vst.msk [vmem:[#allocation4 + $0x1f0] sm:$0xff] %vm1222, %v2782
          %2849 = vrot.lane.b32.xlu0 %v2753, 64
          %v2850 = vpop.permute.xlu0 %2849
          %2851 = vrot.lane.b32.xlu0 %v2754, 64
          %v2852 = vpop.permute.xlu0 %2851
          %2853 = vrot.lane.b32.xlu0 %v2755, 64
          %v2854 = vpop.permute.xlu0 %2853
          %2855 = vrot.lane.b32.xlu0 %v2756, 64
          %v2856 = vpop.permute.xlu0 %2855
          %2857 = vrot.lane.b32.xlu0 %v2757, 64
          %v2858 = vpop.permute.xlu0 %2857
          %2859 = vrot.lane.b32.xlu0 %v2758, 64
          %v2860 = vpop.permute.xlu0 %2859
          %2861 = vrot.lane.b32.xlu0 %v2759, 64
          %v2862 = vpop.permute.xlu0 %2861
          %2863 = vrot.lane.b32.xlu0 %v2760, 64
          %v2864 = vpop.permute.xlu0 %2863
          %2865 = vrot.lane.b32.xlu0 %v2761, 64
          %v2866 = vpop.permute.xlu0 %2865
          %2867 = vrot.lane.b32.xlu0 %v2762, 64
          %v2868 = vpop.permute.xlu0 %2867
          %2869 = vrot.lane.b32.xlu0 %v2763, 64
          %v2870 = vpop.permute.xlu0 %2869
          %2871 = vrot.lane.b32.xlu0 %v2764, 64
          %v2872 = vpop.permute.xlu0 %2871
          %2873 = vrot.lane.b32.xlu0 %v2765, 64
          %v2874 = vpop.permute.xlu0 %2873
          %2875 = vrot.lane.b32.xlu0 %v2766, 64
          %v2876 = vpop.permute.xlu0 %2875
          %2877 = vrot.lane.b32.xlu0 %v2767, 64
          %v2878 = vpop.permute.xlu0 %2877
          %2879 = vrot.lane.b32.xlu0 %v2768, 64
          %v2880 = vpop.permute.xlu0 %2879
          %2881 = vrot.lane.b32.xlu0 %v2769, 64
          %v2882 = vpop.permute.xlu0 %2881
          %2883 = vrot.lane.b32.xlu0 %v2770, 64
          %v2884 = vpop.permute.xlu0 %2883
          %2885 = vrot.lane.b32.xlu0 %v2771, 64
          %v2886 = vpop.permute.xlu0 %2885
          %2887 = vrot.lane.b32.xlu0 %v2772, 64
          %v2888 = vpop.permute.xlu0 %2887
          %2889 = vrot.lane.b32.xlu0 %v2773, 64
          %v2890 = vpop.permute.xlu0 %2889
          %2891 = vrot.lane.b32.xlu0 %v2774, 64
          %v2892 = vpop.permute.xlu0 %2891
          %2893 = vrot.lane.b32.xlu0 %v2775, 64
          %v2894 = vpop.permute.xlu0 %2893
          %2895 = vrot.lane.b32.xlu0 %v2776, 64
          %v2896 = vpop.permute.xlu0 %2895
          %2897 = vrot.lane.b32.xlu0 %v2777, 64
          %v2898 = vpop.permute.xlu0 %2897
          %2899 = vrot.lane.b32.xlu0 %v2778, 64
          %v2900 = vpop.permute.xlu0 %2899
          %2901 = vrot.lane.b32.xlu0 %v2779, 64
          %v2902 = vpop.permute.xlu0 %2901
          %2903 = vrot.lane.b32.xlu0 %v2780, 64
          %v2904 = vpop.permute.xlu0 %2903
          %2905 = vrot.lane.b32.xlu0 %v2781, 64
          %v2906 = vpop.permute.xlu0 %2905
          %2907 = vrot.lane.b32.xlu0 %v2782, 64
          %v2908 = vpop.permute.xlu0 %2907
          %2909 = vrot.lane.b32.xlu0 %v2783, 64
          %v2910 = vpop.permute.xlu0 %2909
          %2911 = vrot.lane.b32.xlu0 %v2784, 64
          %v2912 = vpop.permute.xlu0 %2911
          %2945 = vst.msk [vmem:[#allocation4] sm:$0xff] %vm1383, %v2850
          %2946 = vst.msk [vmem:[#allocation4 + $0x10] sm:$0xff] %vm1383, %v2852
          %2947 = vst.msk [vmem:[#allocation4 + $0x20] sm:$0xff] %vm1383, %v2854
          %2948 = vst.msk [vmem:[#allocation4 + $0x30] sm:$0xff] %vm1383, %v2856
          %2949 = vst.msk [vmem:[#allocation4 + $0x40] sm:$0xff] %vm1383, %v2858
          %2950 = vst.msk [vmem:[#allocation4 + $0x50] sm:$0xff] %vm1383, %v2860
          %2951 = vst.msk [vmem:[#allocation4 + $0x60] sm:$0xff] %vm1383, %v2862
          %2952 = vst.msk [vmem:[#allocation4 + $0x70] sm:$0xff] %vm1383, %v2864
          %2953 = vst.msk [vmem:[#allocation4 + $0x80] sm:$0xff] %vm1383, %v2866
          %2954 = vst.msk [vmem:[#allocation4 + $0x90] sm:$0xff] %vm1383, %v2868
          %2955 = vst.msk [vmem:[#allocation4 + $0xa0] sm:$0xff] %vm1383, %v2870
          %2956 = vst.msk [vmem:[#allocation4 + $0xb0] sm:$0xff] %vm1383, %v2872
          %2957 = vst.msk [vmem:[#allocation4 + $0xc0] sm:$0xff] %vm1383, %v2874
          %2958 = vst.msk [vmem:[#allocation4 + $0xd0] sm:$0xff] %vm1383, %v2876
          %2959 = vst.msk [vmem:[#allocation4 + $0xe0] sm:$0xff] %vm1383, %v2878
          %2960 = vst.msk [vmem:[#allocation4 + $0xf0] sm:$0xff] %vm1383, %v2880
          %2961 = vst.msk [vmem:[#allocation4 + $0x100] sm:$0xff] %vm1383, %v2882
          %2962 = vst.msk [vmem:[#allocation4 + $0x110] sm:$0xff] %vm1383, %v2884
          %2963 = vst.msk [vmem:[#allocation4 + $0x120] sm:$0xff] %vm1383, %v2886
          %2964 = vst.msk [vmem:[#allocation4 + $0x130] sm:$0xff] %vm1383, %v2888
          %2965 = vst.msk [vmem:[#allocation4 + $0x140] sm:$0xff] %vm1383, %v2890
          %2966 = vst.msk [vmem:[#allocation4 + $0x150] sm:$0xff] %vm1383, %v2892
          %2967 = vst.msk [vmem:[#allocation4 + $0x160] sm:$0xff] %vm1383, %v2894
          %2968 = vst.msk [vmem:[#allocation4 + $0x170] sm:$0xff] %vm1383, %v2896
          %2969 = vst.msk [vmem:[#allocation4 + $0x180] sm:$0xff] %vm1383, %v2898
          %2970 = vst.msk [vmem:[#allocation4 + $0x190] sm:$0xff] %vm1383, %v2900
          %2971 = vst.msk [vmem:[#allocation4 + $0x1a0] sm:$0xff] %vm1383, %v2902
          %2972 = vst.msk [vmem:[#allocation4 + $0x1b0] sm:$0xff] %vm1383, %v2904
          %2973 = vst.msk [vmem:[#allocation4 + $0x1c0] sm:$0xff] %vm1383, %v2906
          %2974 = vst.msk [vmem:[#allocation4 + $0x1d0] sm:$0xff] %vm1383, %v2908
          %2975 = vst.msk [vmem:[#allocation4 + $0x1e0] sm:$0xff] %vm1383, %v2910
          %2976 = vst.msk [vmem:[#allocation4 + $0x1f0] sm:$0xff] %vm1383, %v2912
          %2977 = vst.msk [vmem:[#allocation4 + $0x8] sm:$0xff] %vm1222, %v2755
          %2978 = vst.msk [vmem:[#allocation4 + $0x18] sm:$0xff] %vm1222, %v2756
          %2979 = vst.msk [vmem:[#allocation4 + $0x28] sm:$0xff] %vm1222, %v2757
          %2980 = vst.msk [vmem:[#allocation4 + $0x38] sm:$0xff] %vm1222, %v2758
          %2981 = vst.msk [vmem:[#allocation4 + $0x48] sm:$0xff] %vm1222, %v2759
          %2982 = vst.msk [vmem:[#allocation4 + $0x58] sm:$0xff] %vm1222, %v2760
          %2983 = vst.msk [vmem:[#allocation4 + $0x68] sm:$0xff] %vm1222, %v2761
          %2984 = vst.msk [vmem:[#allocation4 + $0x78] sm:$0xff] %vm1222, %v2762
          %2985 = vst.msk [vmem:[#allocation4 + $0x88] sm:$0xff] %vm1222, %v2763
          %2986 = vst.msk [vmem:[#allocation4 + $0x98] sm:$0xff] %vm1222, %v2764
          %2987 = vst.msk [vmem:[#allocation4 + $0xa8] sm:$0xff] %vm1222, %v2765
          %2988 = vst.msk [vmem:[#allocation4 + $0xb8] sm:$0xff] %vm1222, %v2766
          %2989 = vst.msk [vmem:[#allocation4 + $0xc8] sm:$0xff] %vm1222, %v2767
          %2990 = vst.msk [vmem:[#allocation4 + $0xd8] sm:$0xff] %vm1222, %v2768
          %2991 = vst.msk [vmem:[#allocation4 + $0xe8] sm:$0xff] %vm1222, %v2769
          %2992 = vst.msk [vmem:[#allocation4 + $0xf8] sm:$0xff] %vm1222, %v2770
          %2993 = vst.msk [vmem:[#allocation4 + $0x108] sm:$0xff] %vm1222, %v2771
          %2994 = vst.msk [vmem:[#allocation4 + $0x118] sm:$0xff] %vm1222, %v2772
          %2995 = vst.msk [vmem:[#allocation4 + $0x128] sm:$0xff] %vm1222, %v2773
          %2996 = vst.msk [vmem:[#allocation4 + $0x138] sm:$0xff] %vm1222, %v2774
          %2997 = vst.msk [vmem:[#allocation4 + $0x148] sm:$0xff] %vm1222, %v2775
          %2998 = vst.msk [vmem:[#allocation4 + $0x158] sm:$0xff] %vm1222, %v2776
          %2999 = vst.msk [vmem:[#allocation4 + $0x168] sm:$0xff] %vm1222, %v2777
          %3000 = vst.msk [vmem:[#allocation4 + $0x178] sm:$0xff] %vm1222, %v2778
          %3001 = vst.msk [vmem:[#allocation4 + $0x188] sm:$0xff] %vm1222, %v2779
          %3002 = vst.msk [vmem:[#allocation4 + $0x198] sm:$0xff] %vm1222, %v2780
          %3003 = vst.msk [vmem:[#allocation4 + $0x1a8] sm:$0xff] %vm1222, %v2781
          %3004 = vst.msk [vmem:[#allocation4 + $0x1b8] sm:$0xff] %vm1222, %v2782
          %3005 = vst.msk [vmem:[#allocation4 + $0x1c8] sm:$0xff] %vm1222, %v2783
          %3006 = vst.msk [vmem:[#allocation4 + $0x1d8] sm:$0xff] %vm1222, %v2784
          %3007 = vst.msk [vmem:[#allocation4 + $0x1e8] sm:$0xff] %vm1222, 0.0
          %3008 = vst.msk [vmem:[#allocation4 + $0x1f8] sm:$0xff] %vm1222, 0.0
          %v3009 = vld [vmem:[#allocation4] sm:$0xff]
          %v3010 = vld [vmem:[#allocation4 + $0x8] sm:$0xff]
          %v3011 = vld [vmem:[#allocation4 + $0x10] sm:$0xff]
          %v3012 = vld [vmem:[#allocation4 + $0x18] sm:$0xff]
          %v3013 = vld [vmem:[#allocation4 + $0x20] sm:$0xff]
          %v3014 = vld [vmem:[#allocation4 + $0x28] sm:$0xff]
          %v3015 = vld [vmem:[#allocation4 + $0x30] sm:$0xff]
          %v3016 = vld [vmem:[#allocation4 + $0x38] sm:$0xff]
          %v3017 = vld [vmem:[#allocation4 + $0x40] sm:$0xff]
          %v3018 = vld [vmem:[#allocation4 + $0x48] sm:$0xff]
          %v3019 = vld [vmem:[#allocation4 + $0x50] sm:$0xff]
          %v3020 = vld [vmem:[#allocation4 + $0x58] sm:$0xff]
          %v3021 = vld [vmem:[#allocation4 + $0x60] sm:$0xff]
          %v3022 = vld [vmem:[#allocation4 + $0x68] sm:$0xff]
          %v3023 = vld [vmem:[#allocation4 + $0x70] sm:$0xff]
          %v3024 = vld [vmem:[#allocation4 + $0x78] sm:$0xff]
          %v3025 = vld [vmem:[#allocation4 + $0x80] sm:$0xff]
          %v3026 = vld [vmem:[#allocation4 + $0x88] sm:$0xff]
          %v3027 = vld [vmem:[#allocation4 + $0x90] sm:$0xff]
          %v3028 = vld [vmem:[#allocation4 + $0x98] sm:$0xff]
          %v3029 = vld [vmem:[#allocation4 + $0xa0] sm:$0xff]
          %v3030 = vld [vmem:[#allocation4 + $0xa8] sm:$0xff]
          %v3031 = vld [vmem:[#allocation4 + $0xb0] sm:$0xff]
          %v3032 = vld [vmem:[#allocation4 + $0xb8] sm:$0xff]
          %v3033 = vld [vmem:[#allocation4 + $0xc0] sm:$0xff]
          %v3034 = vld [vmem:[#allocation4 + $0xc8] sm:$0xff]
          %v3035 = vld [vmem:[#allocation4 + $0xd0] sm:$0xff]
          %v3036 = vld [vmem:[#allocation4 + $0xd8] sm:$0xff]
          %v3037 = vld [vmem:[#allocation4 + $0xe0] sm:$0xff]
          %v3038 = vld [vmem:[#allocation4 + $0xe8] sm:$0xff]
          %v3039 = vld [vmem:[#allocation4 + $0xf0] sm:$0xff]
          %v3040 = vld [vmem:[#allocation4 + $0xf8] sm:$0xff]
          %v3041 = vld [vmem:[#allocation4 + $0x100] sm:$0xff]
          %v3042 = vld [vmem:[#allocation4 + $0x108] sm:$0xff]
          %v3043 = vld [vmem:[#allocation4 + $0x110] sm:$0xff]
          %v3044 = vld [vmem:[#allocation4 + $0x118] sm:$0xff]
          %v3045 = vld [vmem:[#allocation4 + $0x120] sm:$0xff]
          %v3046 = vld [vmem:[#allocation4 + $0x128] sm:$0xff]
          %v3047 = vld [vmem:[#allocation4 + $0x130] sm:$0xff]
          %v3048 = vld [vmem:[#allocation4 + $0x138] sm:$0xff]
          %v3049 = vld [vmem:[#allocation4 + $0x140] sm:$0xff]
          %v3050 = vld [vmem:[#allocation4 + $0x148] sm:$0xff]
          %v3051 = vld [vmem:[#allocation4 + $0x150] sm:$0xff]
          %v3052 = vld [vmem:[#allocation4 + $0x158] sm:$0xff]
          %v3053 = vld [vmem:[#allocation4 + $0x160] sm:$0xff]
          %v3054 = vld [vmem:[#allocation4 + $0x168] sm:$0xff]
          %v3055 = vld [vmem:[#allocation4 + $0x170] sm:$0xff]
          %v3056 = vld [vmem:[#allocation4 + $0x178] sm:$0xff]
          %v3057 = vld [vmem:[#allocation4 + $0x180] sm:$0xff]
          %v3058 = vld [vmem:[#allocation4 + $0x188] sm:$0xff]
          %v3059 = vld [vmem:[#allocation4 + $0x190] sm:$0xff]
          %v3060 = vld [vmem:[#allocation4 + $0x198] sm:$0xff]
          %v3061 = vld [vmem:[#allocation4 + $0x1a0] sm:$0xff]
          %v3062 = vld [vmem:[#allocation4 + $0x1a8] sm:$0xff]
          %v3063 = vld [vmem:[#allocation4 + $0x1b0] sm:$0xff]
          %v3064 = vld [vmem:[#allocation4 + $0x1b8] sm:$0xff]
          %v3065 = vld [vmem:[#allocation4 + $0x1c0] sm:$0xff]
          %v3066 = vld [vmem:[#allocation4 + $0x1c8] sm:$0xff]
          %v3067 = vld [vmem:[#allocation4 + $0x1d0] sm:$0xff]
          %v3068 = vld [vmem:[#allocation4 + $0x1d8] sm:$0xff]
          %v3069 = vld [vmem:[#allocation4 + $0x1e0] sm:$0xff]
          %v3070 = vld [vmem:[#allocation4 + $0x1e8] sm:$0xff]
          %v3071 = vld [vmem:[#allocation4 + $0x1f0] sm:$0xff]
          %v3072 = vld [vmem:[#allocation4 + $0x1f8] sm:$0xff]
          %v3073 = vld [vmem:[%s457] sm:$0xff]
          %v3074 = vld [vmem:[%s457 + $0x8] sm:$0xff]
          %v3075 = vld [vmem:[%s457 + $0x10] sm:$0xff]
          %v3076 = vld [vmem:[%s457 + $0x18] sm:$0xff]
          %v3077 = vld [vmem:[%s457 + $0x20] sm:$0xff]
          %v3078 = vld [vmem:[%s457 + $0x28] sm:$0xff]
          %v3079 = vld [vmem:[%s457 + $0x30] sm:$0xff]
          %v3080 = vld [vmem:[%s457 + $0x38] sm:$0xff]
          %v3081 = vld [vmem:[%s457 + $0x40] sm:$0xff]
          %v3082 = vld [vmem:[%s457 + $0x48] sm:$0xff]
          %v3083 = vld [vmem:[%s457 + $0x50] sm:$0xff]
          %v3084 = vld [vmem:[%s457 + $0x58] sm:$0xff]
          %v3085 = vld [vmem:[%s457 + $0x60] sm:$0xff]
          %v3086 = vld [vmem:[%s457 + $0x68] sm:$0xff]
          %v3087 = vld [vmem:[%s457 + $0x70] sm:$0xff]
          %v3088 = vld [vmem:[%s457 + $0x78] sm:$0xff]
          %v3089 = vld [vmem:[%s457 + $0x80] sm:$0xff]
          %v3090 = vld [vmem:[%s457 + $0x88] sm:$0xff]
          %v3091 = vld [vmem:[%s457 + $0x90] sm:$0xff]
          %v3092 = vld [vmem:[%s457 + $0x98] sm:$0xff]
          %v3093 = vld [vmem:[%s457 + $0xa0] sm:$0xff]
          %v3094 = vld [vmem:[%s457 + $0xa8] sm:$0xff]
          %v3095 = vld [vmem:[%s457 + $0xb0] sm:$0xff]
          %v3096 = vld [vmem:[%s457 + $0xb8] sm:$0xff]
          %v3098 = vsel %vm1222, %v3010, 0
          %v3101 = vsel %vm1222, %v3012, 0
          %v3104 = vsel %vm1222, %v3014, 0
          %v3107 = vsel %vm1222, %v3016, 0
          %v3110 = vsel %vm1222, %v3018, 0
          %v3113 = vsel %vm1222, %v3020, 0
          %v3116 = vsel %vm1222, %v3022, 0
          %v3119 = vsel %vm1222, %v3024, 0
          %v3122 = vsel %vm1222, %v3026, 0
          %v3125 = vsel %vm1222, %v3028, 0
          %v3128 = vsel %vm1222, %v3030, 0
          %v3131 = vsel %vm1222, %v3032, 0
          %v3134 = vsel %vm1222, %v3034, 0
          %v3137 = vsel %vm1222, %v3036, 0
          %v3140 = vsel %vm1222, %v3038, 0
          %v3143 = vsel %vm1222, %v3040, 0
          %v3146 = vsel %vm1222, %v3042, 0
          %v3149 = vsel %vm1222, %v3044, 0
          %v3152 = vsel %vm1222, %v3046, 0
          %v3155 = vsel %vm1222, %v3048, 0
          %v3158 = vsel %vm1222, %v3050, 0
          %v3161 = vsel %vm1222, %v3052, 0
          %v3164 = vsel %vm1222, %v3054, 0
          %v3167 = vsel %vm1222, %v3056, 0
          %v3170 = vsel %vm1222, %v3058, 0
          %v3173 = vsel %vm1222, %v3060, 0
          %v3176 = vsel %vm1222, %v3062, 0
          %v3179 = vsel %vm1222, %v3064, 0
          %v3182 = vsel %vm1222, %v3066, 0
          %v3185 = vsel %vm1222, %v3068, 0
          %v3188 = vsel %vm1222, %v3070, 0
          %v3191 = vsel %vm1222, %v3072, 0
          %3193 = vmatpush.msra.mxu0 %v3088
          %3194 = vmatpush.msra.mxu0 %v3087
          %3195 = vmatpush.msra.mxu0 %v3086
          %3196 = vmatpush.msra.mxu0 %v3085
          %3197 = vmatpush.msra.mxu0 %v3084
          %3198 = vmatpush.msra.mxu0 %v3083
          %3199 = vmatpush.msra.mxu0 %v3082
          %3200 = vmatpush.msra.mxu0 %v3081
          %3201 = vmatpush.msra.mxu0 %v3080
          %3202 = vmatpush.msra.mxu0 %v3079
          %3203 = vmatpush.msra.mxu0 %v3078
          %3204 = vmatpush.msra.mxu0 %v3077
          %3205 = vmatpush.msra.mxu0 %v3076
          %3206 = vmatpush.msra.mxu0 %v3075
          %3207 = vmatpush.msra.mxu0 %v3074
          %3208 = vmatpush.msra.mxu0 %v3073
          %3209 = vmatmul.f32.gmra.mxu0 %v3009
          %v3210 = vpop.f32.mrf.mxu0
          %v3211 = vadd.f32 0.0, %v3210
          %3212 = vmatmul.f32.gmra.mxu0 %v3011
          %v3213 = vpop.f32.mrf.mxu0
          %v3214 = vadd.f32 0.0, %v3213
          %3215 = vmatmul.f32.gmra.mxu0 %v3013
          %v3216 = vpop.f32.mrf.mxu0
          %v3217 = vadd.f32 0.0, %v3216
          %3218 = vmatmul.f32.gmra.mxu0 %v3015
          %v3219 = vpop.f32.mrf.mxu0
          %v3220 = vadd.f32 0.0, %v3219
          %3221 = vmatmul.f32.gmra.mxu0 %v3017
          %v3222 = vpop.f32.mrf.mxu0
          %v3223 = vadd.f32 0.0, %v3222
          %3224 = vmatmul.f32.gmra.mxu0 %v3019
          %v3225 = vpop.f32.mrf.mxu0
          %v3226 = vadd.f32 0.0, %v3225
          %3227 = vmatmul.f32.gmra.mxu0 %v3021
          %v3228 = vpop.f32.mrf.mxu0
          %v3229 = vadd.f32 0.0, %v3228
          %3230 = vmatmul.f32.gmra.mxu0 %v3023
          %v3231 = vpop.f32.mrf.mxu0
          %v3232 = vadd.f32 0.0, %v3231
          %3233 = vmatmul.f32.gmra.mxu0 %v3025
          %v3234 = vpop.f32.mrf.mxu0
          %v3235 = vadd.f32 0.0, %v3234
          %3236 = vmatmul.f32.gmra.mxu0 %v3027
          %v3237 = vpop.f32.mrf.mxu0
          %v3238 = vadd.f32 0.0, %v3237
          %3239 = vmatmul.f32.gmra.mxu0 %v3029
          %v3240 = vpop.f32.mrf.mxu0
          %v3241 = vadd.f32 0.0, %v3240
          %3242 = vmatmul.f32.gmra.mxu0 %v3031
          %v3243 = vpop.f32.mrf.mxu0
          %v3244 = vadd.f32 0.0, %v3243
          %3245 = vmatmul.f32.gmra.mxu0 %v3033
          %v3246 = vpop.f32.mrf.mxu0
          %v3247 = vadd.f32 0.0, %v3246
          %3248 = vmatmul.f32.gmra.mxu0 %v3035
          %v3249 = vpop.f32.mrf.mxu0
          %v3250 = vadd.f32 0.0, %v3249
          %3251 = vmatmul.f32.gmra.mxu0 %v3037
          %v3252 = vpop.f32.mrf.mxu0
          %v3253 = vadd.f32 0.0, %v3252
          %3254 = vmatmul.f32.gmra.mxu0 %v3039
          %v3255 = vpop.f32.mrf.mxu0
          %v3256 = vadd.f32 0.0, %v3255
          %3257 = vmatmul.f32.gmra.mxu0 %v3041
          %v3258 = vpop.f32.mrf.mxu0
          %v3259 = vadd.f32 0.0, %v3258
          %3260 = vmatmul.f32.gmra.mxu0 %v3043
          %v3261 = vpop.f32.mrf.mxu0
          %v3262 = vadd.f32 0.0, %v3261
          %3263 = vmatmul.f32.gmra.mxu0 %v3045
          %v3264 = vpop.f32.mrf.mxu0
          %v3265 = vadd.f32 0.0, %v3264
          %3266 = vmatmul.f32.gmra.mxu0 %v3047
          %v3267 = vpop.f32.mrf.mxu0
          %v3268 = vadd.f32 0.0, %v3267
          %3269 = vmatmul.f32.gmra.mxu0 %v3049
          %v3270 = vpop.f32.mrf.mxu0
          %v3271 = vadd.f32 0.0, %v3270
          %3272 = vmatmul.f32.gmra.mxu0 %v3051
          %v3273 = vpop.f32.mrf.mxu0
          %v3274 = vadd.f32 0.0, %v3273
          %3275 = vmatmul.f32.gmra.mxu0 %v3053
          %v3276 = vpop.f32.mrf.mxu0
          %v3277 = vadd.f32 0.0, %v3276
          %3278 = vmatmul.f32.gmra.mxu0 %v3055
          %v3279 = vpop.f32.mrf.mxu0
          %v3280 = vadd.f32 0.0, %v3279
          %3281 = vmatmul.f32.gmra.mxu0 %v3057
          %v3282 = vpop.f32.mrf.mxu0
          %v3283 = vadd.f32 0.0, %v3282
          %3284 = vmatmul.f32.gmra.mxu0 %v3059
          %v3285 = vpop.f32.mrf.mxu0
          %v3286 = vadd.f32 0.0, %v3285
          %3287 = vmatmul.f32.gmra.mxu0 %v3061
          %v3288 = vpop.f32.mrf.mxu0
          %v3289 = vadd.f32 0.0, %v3288
          %3290 = vmatmul.f32.gmra.mxu0 %v3063
          %v3291 = vpop.f32.mrf.mxu0
          %v3292 = vadd.f32 0.0, %v3291
          %3293 = vmatmul.f32.gmra.mxu0 %v3065
          %v3294 = vpop.f32.mrf.mxu0
          %v3295 = vadd.f32 0.0, %v3294
          %3296 = vmatmul.f32.gmra.mxu0 %v3067
          %v3297 = vpop.f32.mrf.mxu0
          %v3298 = vadd.f32 0.0, %v3297
          %3299 = vmatmul.f32.gmra.mxu0 %v3069
          %v3300 = vpop.f32.mrf.mxu0
          %v3301 = vadd.f32 0.0, %v3300
          %3302 = vmatmul.f32.gmra.mxu0 %v3071
          %v3303 = vpop.f32.mrf.mxu0
          %v3304 = vadd.f32 0.0, %v3303
          %3305 = vdwg.mxu0
          %3306 = vmatpush.msra.mxu0 0.0
          %3307 = vmatpush.msra.mxu0 0.0
          %3308 = vmatpush.msra.mxu0 0.0
          %3309 = vmatpush.msra.mxu0 0.0
          %3310 = vmatpush.msra.mxu0 0.0
          %3311 = vmatpush.msra.mxu0 0.0
          %3312 = vmatpush.msra.mxu0 0.0
          %3313 = vmatpush.msra.mxu0 0.0
          %3314 = vmatpush.msra.mxu0 %v3096
          %3315 = vmatpush.msra.mxu0 %v3095
          %3316 = vmatpush.msra.mxu0 %v3094
          %3317 = vmatpush.msra.mxu0 %v3093
          %3318 = vmatpush.msra.mxu0 %v3092
          %3319 = vmatpush.msra.mxu0 %v3091
          %3320 = vmatpush.msra.mxu0 %v3090
          %3321 = vmatpush.msra.mxu0 %v3089
          %3322 = vmatmul.f32.gmra.mxu0 %v3098
          %v3323 = vpop.f32.mrf.mxu0
          %v3324 = vadd.f32 %v3211, %v3323
          %3325 = vmatmul.f32.gmra.mxu0 %v3101
          %v3326 = vpop.f32.mrf.mxu0
          %v3327 = vadd.f32 %v3214, %v3326
          %3328 = vmatmul.f32.gmra.mxu0 %v3104
          %v3329 = vpop.f32.mrf.mxu0
          %v3330 = vadd.f32 %v3217, %v3329
          %3331 = vmatmul.f32.gmra.mxu0 %v3107
          %v3332 = vpop.f32.mrf.mxu0
          %v3333 = vadd.f32 %v3220, %v3332
          %3334 = vmatmul.f32.gmra.mxu0 %v3110
          %v3335 = vpop.f32.mrf.mxu0
          %v3336 = vadd.f32 %v3223, %v3335
          %3337 = vmatmul.f32.gmra.mxu0 %v3113
          %v3338 = vpop.f32.mrf.mxu0
          %v3339 = vadd.f32 %v3226, %v3338
          %3340 = vmatmul.f32.gmra.mxu0 %v3116
          %v3341 = vpop.f32.mrf.mxu0
          %v3342 = vadd.f32 %v3229, %v3341
          %3343 = vmatmul.f32.gmra.mxu0 %v3119
          %v3344 = vpop.f32.mrf.mxu0
          %v3345 = vadd.f32 %v3232, %v3344
          %3346 = vmatmul.f32.gmra.mxu0 %v3122
          %v3347 = vpop.f32.mrf.mxu0
          %v3348 = vadd.f32 %v3235, %v3347
          %3349 = vmatmul.f32.gmra.mxu0 %v3125
          %v3350 = vpop.f32.mrf.mxu0
          %v3351 = vadd.f32 %v3238, %v3350
          %3352 = vmatmul.f32.gmra.mxu0 %v3128
          %v3353 = vpop.f32.mrf.mxu0
          %v3354 = vadd.f32 %v3241, %v3353
          %3355 = vmatmul.f32.gmra.mxu0 %v3131
          %v3356 = vpop.f32.mrf.mxu0
          %v3357 = vadd.f32 %v3244, %v3356
          %3358 = vmatmul.f32.gmra.mxu0 %v3134
          %v3359 = vpop.f32.mrf.mxu0
          %v3360 = vadd.f32 %v3247, %v3359
          %3361 = vmatmul.f32.gmra.mxu0 %v3137
          %v3362 = vpop.f32.mrf.mxu0
          %v3363 = vadd.f32 %v3250, %v3362
          %3364 = vmatmul.f32.gmra.mxu0 %v3140
          %v3365 = vpop.f32.mrf.mxu0
          %v3366 = vadd.f32 %v3253, %v3365
          %3367 = vmatmul.f32.gmra.mxu0 %v3143
          %v3368 = vpop.f32.mrf.mxu0
          %v3369 = vadd.f32 %v3256, %v3368
          %3370 = vmatmul.f32.gmra.mxu0 %v3146
          %v3371 = vpop.f32.mrf.mxu0
          %v3372 = vadd.f32 %v3259, %v3371
          %3373 = vmatmul.f32.gmra.mxu0 %v3149
          %v3374 = vpop.f32.mrf.mxu0
          %v3375 = vadd.f32 %v3262, %v3374
          %3376 = vmatmul.f32.gmra.mxu0 %v3152
          %v3377 = vpop.f32.mrf.mxu0
          %v3378 = vadd.f32 %v3265, %v3377
          %3379 = vmatmul.f32.gmra.mxu0 %v3155
          %v3380 = vpop.f32.mrf.mxu0
          %v3381 = vadd.f32 %v3268, %v3380
          %3382 = vmatmul.f32.gmra.mxu0 %v3158
          %v3383 = vpop.f32.mrf.mxu0
          %v3384 = vadd.f32 %v3271, %v3383
          %3385 = vmatmul.f32.gmra.mxu0 %v3161
          %v3386 = vpop.f32.mrf.mxu0
          %v3387 = vadd.f32 %v3274, %v3386
          %3388 = vmatmul.f32.gmra.mxu0 %v3164
          %v3389 = vpop.f32.mrf.mxu0
          %v3390 = vadd.f32 %v3277, %v3389
          %3391 = vmatmul.f32.gmra.mxu0 %v3167
          %v3392 = vpop.f32.mrf.mxu0
          %v3393 = vadd.f32 %v3280, %v3392
          %3394 = vmatmul.f32.gmra.mxu0 %v3170
          %v3395 = vpop.f32.mrf.mxu0
          %v3396 = vadd.f32 %v3283, %v3395
          %3397 = vmatmul.f32.gmra.mxu0 %v3173
          %v3398 = vpop.f32.mrf.mxu0
          %v3399 = vadd.f32 %v3286, %v3398
          %3400 = vmatmul.f32.gmra.mxu0 %v3176
          %v3401 = vpop.f32.mrf.mxu0
          %v3402 = vadd.f32 %v3289, %v3401
          %3403 = vmatmul.f32.gmra.mxu0 %v3179
          %v3404 = vpop.f32.mrf.mxu0
          %v3405 = vadd.f32 %v3292, %v3404
          %3406 = vmatmul.f32.gmra.mxu0 %v3182
          %v3407 = vpop.f32.mrf.mxu0
          %v3408 = vadd.f32 %v3295, %v3407
          %3409 = vmatmul.f32.gmra.mxu0 %v3185
          %v3410 = vpop.f32.mrf.mxu0
          %v3411 = vadd.f32 %v3298, %v3410
          %3412 = vmatmul.f32.gmra.mxu0 %v3188
          %v3413 = vpop.f32.mrf.mxu0
          %v3414 = vadd.f32 %v3301, %v3413
          %3415 = vmatmul.f32.gmra.mxu0 %v3191
          %v3416 = vpop.f32.mrf.mxu0
          %v3417 = vadd.f32 %v3304, %v3416
          %3418 = vdwg.mxu0
          %s3419 = scalar_lea.vmem %s457, 192
          %v3420 = vld [vmem:[%s3419] sm:$0xff]
          %v3421 = vld [vmem:[%s3419 + $0x8] sm:$0xff]
          %v3422 = vld [vmem:[%s3419 + $0x10] sm:$0xff]
          %v3423 = vld [vmem:[%s3419 + $0x18] sm:$0xff]
          %v3424 = vld [vmem:[%s3419 + $0x20] sm:$0xff]
          %v3425 = vld [vmem:[%s3419 + $0x28] sm:$0xff]
          %v3426 = vld [vmem:[%s3419 + $0x30] sm:$0xff]
          %v3427 = vld [vmem:[%s3419 + $0x38] sm:$0xff]
          %v3428 = vld [vmem:[%s3419 + $0x40] sm:$0xff]
          %v3429 = vld [vmem:[%s3419 + $0x48] sm:$0xff]
          %v3430 = vld [vmem:[%s3419 + $0x50] sm:$0xff]
          %v3431 = vld [vmem:[%s3419 + $0x58] sm:$0xff]
          %v3432 = vld [vmem:[%s3419 + $0x60] sm:$0xff]
          %v3433 = vld [vmem:[%s3419 + $0x68] sm:$0xff]
          %v3434 = vld [vmem:[%s3419 + $0x70] sm:$0xff]
          %v3435 = vld [vmem:[%s3419 + $0x78] sm:$0xff]
          %v3436 = vld [vmem:[%s3419 + $0x80] sm:$0xff]
          %v3437 = vld [vmem:[%s3419 + $0x88] sm:$0xff]
          %v3438 = vld [vmem:[%s3419 + $0x90] sm:$0xff]
          %v3439 = vld [vmem:[%s3419 + $0x98] sm:$0xff]
          %v3440 = vld [vmem:[%s3419 + $0xa0] sm:$0xff]
          %v3441 = vld [vmem:[%s3419 + $0xa8] sm:$0xff]
          %v3442 = vld [vmem:[%s3419 + $0xb0] sm:$0xff]
          %v3443 = vld [vmem:[%s3419 + $0xb8] sm:$0xff]
          %s3444 = scalar_lea.vmem %s457, 384
          %v3445 = vld [vmem:[%s3444] sm:$0xff]
          %v3446 = vld [vmem:[%s3444 + $0x8] sm:$0xff]
          %v3447 = vld [vmem:[%s3444 + $0x10] sm:$0xff]
          %v3448 = vld [vmem:[%s3444 + $0x18] sm:$0xff]
          %v3449 = vld [vmem:[%s3444 + $0x20] sm:$0xff]
          %v3450 = vld [vmem:[%s3444 + $0x28] sm:$0xff]
          %v3451 = vld [vmem:[%s3444 + $0x30] sm:$0xff]
          %v3452 = vld [vmem:[%s3444 + $0x38] sm:$0xff]
          %v3453 = vld [vmem:[%s3444 + $0x40] sm:$0xff]
          %v3454 = vld [vmem:[%s3444 + $0x48] sm:$0xff]
          %v3455 = vld [vmem:[%s3444 + $0x50] sm:$0xff]
          %v3456 = vld [vmem:[%s3444 + $0x58] sm:$0xff]
          %v3457 = vld [vmem:[%s3444 + $0x60] sm:$0xff]
          %v3458 = vld [vmem:[%s3444 + $0x68] sm:$0xff]
          %v3459 = vld [vmem:[%s3444 + $0x70] sm:$0xff]
          %v3460 = vld [vmem:[%s3444 + $0x78] sm:$0xff]
          %v3461 = vld [vmem:[%s3444 + $0x80] sm:$0xff]
          %v3462 = vld [vmem:[%s3444 + $0x88] sm:$0xff]
          %v3463 = vld [vmem:[%s3444 + $0x90] sm:$0xff]
          %v3464 = vld [vmem:[%s3444 + $0x98] sm:$0xff]
          %v3465 = vld [vmem:[%s3444 + $0xa0] sm:$0xff]
          %v3466 = vld [vmem:[%s3444 + $0xa8] sm:$0xff]
          %v3467 = vld [vmem:[%s3444 + $0xb0] sm:$0xff]
          %v3468 = vld [vmem:[%s3444 + $0xb8] sm:$0xff]
          %3469 = vmatpush.msra.mxu0 %v3460
          %3470 = vmatpush.msra.mxu0 %v3459
          %3471 = vmatpush.msra.mxu0 %v3458
          %3472 = vmatpush.msra.mxu0 %v3457
          %3473 = vmatpush.msra.mxu0 %v3456
          %3474 = vmatpush.msra.mxu0 %v3455
          %3475 = vmatpush.msra.mxu0 %v3454
          %3476 = vmatpush.msra.mxu0 %v3453
          %3477 = vmatpush.msra.mxu0 %v3452
          %3478 = vmatpush.msra.mxu0 %v3451
          %3479 = vmatpush.msra.mxu0 %v3450
          %3480 = vmatpush.msra.mxu0 %v3449
          %3481 = vmatpush.msra.mxu0 %v3448
          %3482 = vmatpush.msra.mxu0 %v3447
          %3483 = vmatpush.msra.mxu0 %v3446
          %3484 = vmatpush.msra.mxu0 %v3445
          %3485 = vmatmul.f32.gmra.mxu0 %v3009
          %v3486 = vpop.f32.mrf.mxu0
          %v3487 = vadd.f32 0.0, %v3486
          %3488 = vmatmul.f32.gmra.mxu0 %v3011
          %v3489 = vpop.f32.mrf.mxu0
          %v3490 = vadd.f32 0.0, %v3489
          %3491 = vmatmul.f32.gmra.mxu0 %v3013
          %v3492 = vpop.f32.mrf.mxu0
          %v3493 = vadd.f32 0.0, %v3492
          %3494 = vmatmul.f32.gmra.mxu0 %v3015
          %v3495 = vpop.f32.mrf.mxu0
          %v3496 = vadd.f32 0.0, %v3495
          %3497 = vmatmul.f32.gmra.mxu0 %v3017
          %v3498 = vpop.f32.mrf.mxu0
          %v3499 = vadd.f32 0.0, %v3498
          %3500 = vmatmul.f32.gmra.mxu0 %v3019
          %v3501 = vpop.f32.mrf.mxu0
          %v3502 = vadd.f32 0.0, %v3501
          %3503 = vmatmul.f32.gmra.mxu0 %v3021
          %v3504 = vpop.f32.mrf.mxu0
          %v3505 = vadd.f32 0.0, %v3504
          %3506 = vmatmul.f32.gmra.mxu0 %v3023
          %v3507 = vpop.f32.mrf.mxu0
          %v3508 = vadd.f32 0.0, %v3507
          %3509 = vmatmul.f32.gmra.mxu0 %v3025
          %v3510 = vpop.f32.mrf.mxu0
          %v3511 = vadd.f32 0.0, %v3510
          %3512 = vmatmul.f32.gmra.mxu0 %v3027
          %v3513 = vpop.f32.mrf.mxu0
          %v3514 = vadd.f32 0.0, %v3513
          %3515 = vmatmul.f32.gmra.mxu0 %v3029
          %v3516 = vpop.f32.mrf.mxu0
          %v3517 = vadd.f32 0.0, %v3516
          %3518 = vmatmul.f32.gmra.mxu0 %v3031
          %v3519 = vpop.f32.mrf.mxu0
          %v3520 = vadd.f32 0.0, %v3519
          %3521 = vmatmul.f32.gmra.mxu0 %v3033
          %v3522 = vpop.f32.mrf.mxu0
          %v3523 = vadd.f32 0.0, %v3522
          %3524 = vmatmul.f32.gmra.mxu0 %v3035
          %v3525 = vpop.f32.mrf.mxu0
          %v3526 = vadd.f32 0.0, %v3525
          %3527 = vmatmul.f32.gmra.mxu0 %v3037
          %v3528 = vpop.f32.mrf.mxu0
          %v3529 = vadd.f32 0.0, %v3528
          %3530 = vmatmul.f32.gmra.mxu0 %v3039
          %v3531 = vpop.f32.mrf.mxu0
          %v3532 = vadd.f32 0.0, %v3531
          %3533 = vmatmul.f32.gmra.mxu0 %v3041
          %v3534 = vpop.f32.mrf.mxu0
          %v3535 = vadd.f32 0.0, %v3534
          %3536 = vmatmul.f32.gmra.mxu0 %v3043
          %v3537 = vpop.f32.mrf.mxu0
          %v3538 = vadd.f32 0.0, %v3537
          %3539 = vmatmul.f32.gmra.mxu0 %v3045
          %v3540 = vpop.f32.mrf.mxu0
          %v3541 = vadd.f32 0.0, %v3540
          %3542 = vmatmul.f32.gmra.mxu0 %v3047
          %v3543 = vpop.f32.mrf.mxu0
          %v3544 = vadd.f32 0.0, %v3543
          %3545 = vmatmul.f32.gmra.mxu0 %v3049
          %v3546 = vpop.f32.mrf.mxu0
          %v3547 = vadd.f32 0.0, %v3546
          %3548 = vmatmul.f32.gmra.mxu0 %v3051
          %v3549 = vpop.f32.mrf.mxu0
          %v3550 = vadd.f32 0.0, %v3549
          %3551 = vmatmul.f32.gmra.mxu0 %v3053
          %v3552 = vpop.f32.mrf.mxu0
          %v3553 = vadd.f32 0.0, %v3552
          %3554 = vmatmul.f32.gmra.mxu0 %v3055
          %v3555 = vpop.f32.mrf.mxu0
          %v3556 = vadd.f32 0.0, %v3555
          %3557 = vmatmul.f32.gmra.mxu0 %v3057
          %v3558 = vpop.f32.mrf.mxu0
          %v3559 = vadd.f32 0.0, %v3558
          %3560 = vmatmul.f32.gmra.mxu0 %v3059
          %v3561 = vpop.f32.mrf.mxu0
          %v3562 = vadd.f32 0.0, %v3561
          %3563 = vmatmul.f32.gmra.mxu0 %v3061
          %v3564 = vpop.f32.mrf.mxu0
          %v3565 = vadd.f32 0.0, %v3564
          %3566 = vmatmul.f32.gmra.mxu0 %v3063
          %v3567 = vpop.f32.mrf.mxu0
          %v3568 = vadd.f32 0.0, %v3567
          %3569 = vmatmul.f32.gmra.mxu0 %v3065
          %v3570 = vpop.f32.mrf.mxu0
          %v3571 = vadd.f32 0.0, %v3570
          %3572 = vmatmul.f32.gmra.mxu0 %v3067
          %v3573 = vpop.f32.mrf.mxu0
          %v3574 = vadd.f32 0.0, %v3573
          %3575 = vmatmul.f32.gmra.mxu0 %v3069
          %v3576 = vpop.f32.mrf.mxu0
          %v3577 = vadd.f32 0.0, %v3576
          %3578 = vmatmul.f32.gmra.mxu0 %v3071
          %v3579 = vpop.f32.mrf.mxu0
          %v3580 = vadd.f32 0.0, %v3579
          %3581 = vdwg.mxu0
          %3582 = vmatpush.msra.mxu0 0.0
          %3583 = vmatpush.msra.mxu0 0.0
          %3584 = vmatpush.msra.mxu0 0.0
          %3585 = vmatpush.msra.mxu0 0.0
          %3586 = vmatpush.msra.mxu0 0.0
          %3587 = vmatpush.msra.mxu0 0.0
          %3588 = vmatpush.msra.mxu0 0.0
          %3589 = vmatpush.msra.mxu0 0.0
          %3590 = vmatpush.msra.mxu0 %v3468
          %3591 = vmatpush.msra.mxu0 %v3467
          %3592 = vmatpush.msra.mxu0 %v3466
          %3593 = vmatpush.msra.mxu0 %v3465
          %3594 = vmatpush.msra.mxu0 %v3464
          %3595 = vmatpush.msra.mxu0 %v3463
          %3596 = vmatpush.msra.mxu0 %v3462
          %3597 = vmatpush.msra.mxu0 %v3461
          %3598 = vmatmul.f32.gmra.mxu0 %v3098
          %v3599 = vpop.f32.mrf.mxu0
          %v3600 = vadd.f32 %v3487, %v3599
          %3601 = vmatmul.f32.gmra.mxu0 %v3101
          %v3602 = vpop.f32.mrf.mxu0
          %v3603 = vadd.f32 %v3490, %v3602
          %3604 = vmatmul.f32.gmra.mxu0 %v3104
          %v3605 = vpop.f32.mrf.mxu0
          %v3606 = vadd.f32 %v3493, %v3605
          %3607 = vmatmul.f32.gmra.mxu0 %v3107
          %v3608 = vpop.f32.mrf.mxu0
          %v3609 = vadd.f32 %v3496, %v3608
          %3610 = vmatmul.f32.gmra.mxu0 %v3110
          %v3611 = vpop.f32.mrf.mxu0
          %v3612 = vadd.f32 %v3499, %v3611
          %3613 = vmatmul.f32.gmra.mxu0 %v3113
          %v3614 = vpop.f32.mrf.mxu0
          %v3615 = vadd.f32 %v3502, %v3614
          %3616 = vmatmul.f32.gmra.mxu0 %v3116
          %v3617 = vpop.f32.mrf.mxu0
          %v3618 = vadd.f32 %v3505, %v3617
          %3619 = vmatmul.f32.gmra.mxu0 %v3119
          %v3620 = vpop.f32.mrf.mxu0
          %v3621 = vadd.f32 %v3508, %v3620
          %3622 = vmatmul.f32.gmra.mxu0 %v3122
          %v3623 = vpop.f32.mrf.mxu0
          %v3624 = vadd.f32 %v3511, %v3623
          %3625 = vmatmul.f32.gmra.mxu0 %v3125
          %v3626 = vpop.f32.mrf.mxu0
          %v3627 = vadd.f32 %v3514, %v3626
          %3628 = vmatmul.f32.gmra.mxu0 %v3128
          %v3629 = vpop.f32.mrf.mxu0
          %v3630 = vadd.f32 %v3517, %v3629
          %3631 = vmatmul.f32.gmra.mxu0 %v3131
          %v3632 = vpop.f32.mrf.mxu0
          %v3633 = vadd.f32 %v3520, %v3632
          %3634 = vmatmul.f32.gmra.mxu0 %v3134
          %v3635 = vpop.f32.mrf.mxu0
          %v3636 = vadd.f32 %v3523, %v3635
          %3637 = vmatmul.f32.gmra.mxu0 %v3137
          %v3638 = vpop.f32.mrf.mxu0
          %v3639 = vadd.f32 %v3526, %v3638
          %3640 = vmatmul.f32.gmra.mxu0 %v3140
          %v3641 = vpop.f32.mrf.mxu0
          %v3642 = vadd.f32 %v3529, %v3641
          %3643 = vmatmul.f32.gmra.mxu0 %v3143
          %v3644 = vpop.f32.mrf.mxu0
          %v3645 = vadd.f32 %v3532, %v3644
          %3646 = vmatmul.f32.gmra.mxu0 %v3146
          %v3647 = vpop.f32.mrf.mxu0
          %v3648 = vadd.f32 %v3535, %v3647
          %3649 = vmatmul.f32.gmra.mxu0 %v3149
          %v3650 = vpop.f32.mrf.mxu0
          %v3651 = vadd.f32 %v3538, %v3650
          %3652 = vmatmul.f32.gmra.mxu0 %v3152
          %v3653 = vpop.f32.mrf.mxu0
          %v3654 = vadd.f32 %v3541, %v3653
          %3655 = vmatmul.f32.gmra.mxu0 %v3155
          %v3656 = vpop.f32.mrf.mxu0
          %v3657 = vadd.f32 %v3544, %v3656
          %3658 = vmatmul.f32.gmra.mxu0 %v3158
          %v3659 = vpop.f32.mrf.mxu0
          %v3660 = vadd.f32 %v3547, %v3659
          %3661 = vmatmul.f32.gmra.mxu0 %v3161
          %v3662 = vpop.f32.mrf.mxu0
          %v3663 = vadd.f32 %v3550, %v3662
          %3664 = vmatmul.f32.gmra.mxu0 %v3164
          %v3665 = vpop.f32.mrf.mxu0
          %v3666 = vadd.f32 %v3553, %v3665
          %3667 = vmatmul.f32.gmra.mxu0 %v3167
          %v3668 = vpop.f32.mrf.mxu0
          %v3669 = vadd.f32 %v3556, %v3668
          %3670 = vmatmul.f32.gmra.mxu0 %v3170
          %v3671 = vpop.f32.mrf.mxu0
          %v3672 = vadd.f32 %v3559, %v3671
          %3673 = vmatmul.f32.gmra.mxu0 %v3173
          %v3674 = vpop.f32.mrf.mxu0
          %v3675 = vadd.f32 %v3562, %v3674
          %3676 = vmatmul.f32.gmra.mxu0 %v3176
          %v3677 = vpop.f32.mrf.mxu0
          %v3678 = vadd.f32 %v3565, %v3677
          %3679 = vmatmul.f32.gmra.mxu0 %v3179
          %v3680 = vpop.f32.mrf.mxu0
          %v3681 = vadd.f32 %v3568, %v3680
          %3682 = vmatmul.f32.gmra.mxu0 %v3182
          %v3683 = vpop.f32.mrf.mxu0
          %v3684 = vadd.f32 %v3571, %v3683
          %3685 = vmatmul.f32.gmra.mxu0 %v3185
          %v3686 = vpop.f32.mrf.mxu0
          %v3687 = vadd.f32 %v3574, %v3686
          %3688 = vmatmul.f32.gmra.mxu0 %v3188
          %v3689 = vpop.f32.mrf.mxu0
          %v3690 = vadd.f32 %v3577, %v3689
          %3691 = vmatmul.f32.gmra.mxu0 %v3191
          %v3692 = vpop.f32.mrf.mxu0
          %v3693 = vadd.f32 %v3580, %v3692
          %3694 = vdwg.mxu0
          %v3727 = vrot.slane %v3324, 7
          %v3728 = vsel %vm2167, %v2168, %v3727
          %v3729 = vrot.slane %v3327, 7
          %v3730 = vsel %vm2167, %v3727, %v3729
          %v3731 = vrot.slane %v3330, 7
          %v3732 = vsel %vm2167, %v3729, %v3731
          %v3733 = vrot.slane %v3333, 7
          %v3734 = vsel %vm2167, %v3731, %v3733
          %v3735 = vrot.slane %v3336, 7
          %v3736 = vsel %vm2167, %v3733, %v3735
          %v3737 = vrot.slane %v3339, 7
          %v3738 = vsel %vm2167, %v3735, %v3737
          %v3739 = vrot.slane %v3342, 7
          %v3740 = vsel %vm2167, %v3737, %v3739
          %v3741 = vrot.slane %v3345, 7
          %v3742 = vsel %vm2167, %v3739, %v3741
          %v3743 = vrot.slane %v3348, 7
          %v3744 = vsel %vm2167, %v3741, %v3743
          %v3745 = vrot.slane %v3351, 7
          %v3746 = vsel %vm2167, %v3743, %v3745
          %v3747 = vrot.slane %v3354, 7
          %v3748 = vsel %vm2167, %v3745, %v3747
          %v3749 = vrot.slane %v3357, 7
          %v3750 = vsel %vm2167, %v3747, %v3749
          %v3751 = vrot.slane %v3360, 7
          %v3752 = vsel %vm2167, %v3749, %v3751
          %v3753 = vrot.slane %v3363, 7
          %v3754 = vsel %vm2167, %v3751, %v3753
          %v3755 = vrot.slane %v3366, 7
          %v3756 = vsel %vm2167, %v3753, %v3755
          %v3757 = vrot.slane %v3369, 7
          %v3758 = vsel %vm2167, %v3755, %v3757
          %v3759 = vrot.slane %v3372, 7
          %v3760 = vsel %vm2167, %v3757, %v3759
          %v3761 = vrot.slane %v3375, 7
          %v3762 = vsel %vm2167, %v3759, %v3761
          %v3763 = vrot.slane %v3378, 7
          %v3764 = vsel %vm2167, %v3761, %v3763
          %v3765 = vrot.slane %v3381, 7
          %v3766 = vsel %vm2167, %v3763, %v3765
          %v3767 = vrot.slane %v3384, 7
          %v3768 = vsel %vm2167, %v3765, %v3767
          %v3769 = vrot.slane %v3387, 7
          %v3770 = vsel %vm2167, %v3767, %v3769
          %v3771 = vrot.slane %v3390, 7
          %v3772 = vsel %vm2167, %v3769, %v3771
          %v3773 = vrot.slane %v3393, 7
          %v3774 = vsel %vm2167, %v3771, %v3773
          %v3775 = vrot.slane %v3396, 7
          %v3776 = vsel %vm2167, %v3773, %v3775
          %v3777 = vrot.slane %v3399, 7
          %v3778 = vsel %vm2167, %v3775, %v3777
          %v3779 = vrot.slane %v3402, 7
          %v3780 = vsel %vm2167, %v3777, %v3779
          %v3781 = vrot.slane %v3405, 7
          %v3782 = vsel %vm2167, %v3779, %v3781
          %v3783 = vrot.slane %v3408, 7
          %v3784 = vsel %vm2167, %v3781, %v3783
          %v3785 = vrot.slane %v3411, 7
          %v3786 = vsel %vm2167, %v3783, %v3785
          %v3787 = vrot.slane %v3414, 7
          %v3788 = vsel %vm2167, %v3785, %v3787
          %v3789 = vrot.slane %v3417, 7
          %v3790 = vsel %vm2167, %v3787, %v3789
          %v3823 = vmul.f32 %v957, %v3728
          %v3824 = vmul.f32 %v958, %v3730
          %v3825 = vmul.f32 %v959, %v3732
          %v3826 = vmul.f32 %v960, %v3734
          %v3827 = vmul.f32 %v961, %v3736
          %v3828 = vmul.f32 %v962, %v3738
          %v3829 = vmul.f32 %v963, %v3740
          %v3830 = vmul.f32 %v964, %v3742
          %v3831 = vmul.f32 %v965, %v3744
          %v3832 = vmul.f32 %v966, %v3746
          %v3833 = vmul.f32 %v967, %v3748
          %v3834 = vmul.f32 %v968, %v3750
          %v3835 = vmul.f32 %v969, %v3752
          %v3836 = vmul.f32 %v970, %v3754
          %v3837 = vmul.f32 %v971, %v3756
          %v3838 = vmul.f32 %v972, %v3758
          %v3839 = vmul.f32 %v973, %v3760
          %v3840 = vmul.f32 %v974, %v3762
          %v3841 = vmul.f32 %v975, %v3764
          %v3842 = vmul.f32 %v976, %v3766
          %v3843 = vmul.f32 %v977, %v3768
          %v3844 = vmul.f32 %v978, %v3770
          %v3845 = vmul.f32 %v979, %v3772
          %v3846 = vmul.f32 %v980, %v3774
          %v3847 = vmul.f32 %v981, %v3776
          %v3848 = vmul.f32 %v982, %v3778
          %v3849 = vmul.f32 %v983, %v3780
          %v3850 = vmul.f32 %v984, %v3782
          %v3851 = vmul.f32 %v985, %v3784
          %v3852 = vmul.f32 %v986, %v3786
          %v3853 = vmul.f32 %v987, %v3788
          %v3854 = vmul.f32 %v988, %v3790
          %3855 = vmatpush.msra.mxu0 %v3435
          %3856 = vmatpush.msra.mxu0 %v3434
          %3857 = vmatpush.msra.mxu0 %v3433
          %3858 = vmatpush.msra.mxu0 %v3432
          %3859 = vmatpush.msra.mxu0 %v3431
          %3860 = vmatpush.msra.mxu0 %v3430
          %3861 = vmatpush.msra.mxu0 %v3429
          %3862 = vmatpush.msra.mxu0 %v3428
          %3863 = vmatpush.msra.mxu0 %v3427
          %3864 = vmatpush.msra.mxu0 %v3426
          %3865 = vmatpush.msra.mxu0 %v3425
          %3866 = vmatpush.msra.mxu0 %v3424
          %3867 = vmatpush.msra.mxu0 %v3423
          %3868 = vmatpush.msra.mxu0 %v3422
          %3869 = vmatpush.msra.mxu0 %v3421
          %3870 = vmatpush.msra.mxu0 %v3420
          %3871 = vmatmul.f32.gmra.mxu0 %v3009
          %v3872 = vpop.f32.mrf.mxu0
          %v3873 = vadd.f32 %v3823, %v3872
          %3874 = vmatmul.f32.gmra.mxu0 %v3011
          %v3875 = vpop.f32.mrf.mxu0
          %v3876 = vadd.f32 %v3824, %v3875
          %3877 = vmatmul.f32.gmra.mxu0 %v3013
          %v3878 = vpop.f32.mrf.mxu0
          %v3879 = vadd.f32 %v3825, %v3878
          %3880 = vmatmul.f32.gmra.mxu0 %v3015
          %v3881 = vpop.f32.mrf.mxu0
          %v3882 = vadd.f32 %v3826, %v3881
          %3883 = vmatmul.f32.gmra.mxu0 %v3017
          %v3884 = vpop.f32.mrf.mxu0
          %v3885 = vadd.f32 %v3827, %v3884
          %3886 = vmatmul.f32.gmra.mxu0 %v3019
          %v3887 = vpop.f32.mrf.mxu0
          %v3888 = vadd.f32 %v3828, %v3887
          %3889 = vmatmul.f32.gmra.mxu0 %v3021
          %v3890 = vpop.f32.mrf.mxu0
          %v3891 = vadd.f32 %v3829, %v3890
          %3892 = vmatmul.f32.gmra.mxu0 %v3023
          %v3893 = vpop.f32.mrf.mxu0
          %v3894 = vadd.f32 %v3830, %v3893
          %3895 = vmatmul.f32.gmra.mxu0 %v3025
          %v3896 = vpop.f32.mrf.mxu0
          %v3897 = vadd.f32 %v3831, %v3896
          %3898 = vmatmul.f32.gmra.mxu0 %v3027
          %v3899 = vpop.f32.mrf.mxu0
          %v3900 = vadd.f32 %v3832, %v3899
          %3901 = vmatmul.f32.gmra.mxu0 %v3029
          %v3902 = vpop.f32.mrf.mxu0
          %v3903 = vadd.f32 %v3833, %v3902
          %3904 = vmatmul.f32.gmra.mxu0 %v3031
          %v3905 = vpop.f32.mrf.mxu0
          %v3906 = vadd.f32 %v3834, %v3905
          %3907 = vmatmul.f32.gmra.mxu0 %v3033
          %v3908 = vpop.f32.mrf.mxu0
          %v3909 = vadd.f32 %v3835, %v3908
          %3910 = vmatmul.f32.gmra.mxu0 %v3035
          %v3911 = vpop.f32.mrf.mxu0
          %v3912 = vadd.f32 %v3836, %v3911
          %3913 = vmatmul.f32.gmra.mxu0 %v3037
          %v3914 = vpop.f32.mrf.mxu0
          %v3915 = vadd.f32 %v3837, %v3914
          %3916 = vmatmul.f32.gmra.mxu0 %v3039
          %v3917 = vpop.f32.mrf.mxu0
          %v3918 = vadd.f32 %v3838, %v3917
          %3919 = vmatmul.f32.gmra.mxu0 %v3041
          %v3920 = vpop.f32.mrf.mxu0
          %v3921 = vadd.f32 %v3839, %v3920
          %3922 = vmatmul.f32.gmra.mxu0 %v3043
          %v3923 = vpop.f32.mrf.mxu0
          %v3924 = vadd.f32 %v3840, %v3923
          %3925 = vmatmul.f32.gmra.mxu0 %v3045
          %v3926 = vpop.f32.mrf.mxu0
          %v3927 = vadd.f32 %v3841, %v3926
          %3928 = vmatmul.f32.gmra.mxu0 %v3047
          %v3929 = vpop.f32.mrf.mxu0
          %v3930 = vadd.f32 %v3842, %v3929
          %3931 = vmatmul.f32.gmra.mxu0 %v3049
          %v3932 = vpop.f32.mrf.mxu0
          %v3933 = vadd.f32 %v3843, %v3932
          %3934 = vmatmul.f32.gmra.mxu0 %v3051
          %v3935 = vpop.f32.mrf.mxu0
          %v3936 = vadd.f32 %v3844, %v3935
          %3937 = vmatmul.f32.gmra.mxu0 %v3053
          %v3938 = vpop.f32.mrf.mxu0
          %v3939 = vadd.f32 %v3845, %v3938
          %3940 = vmatmul.f32.gmra.mxu0 %v3055
          %v3941 = vpop.f32.mrf.mxu0
          %v3942 = vadd.f32 %v3846, %v3941
          %3943 = vmatmul.f32.gmra.mxu0 %v3057
          %v3944 = vpop.f32.mrf.mxu0
          %v3945 = vadd.f32 %v3847, %v3944
          %3946 = vmatmul.f32.gmra.mxu0 %v3059
          %v3947 = vpop.f32.mrf.mxu0
          %v3948 = vadd.f32 %v3848, %v3947
          %3949 = vmatmul.f32.gmra.mxu0 %v3061
          %v3950 = vpop.f32.mrf.mxu0
          %v3951 = vadd.f32 %v3849, %v3950
          %3952 = vmatmul.f32.gmra.mxu0 %v3063
          %v3953 = vpop.f32.mrf.mxu0
          %v3954 = vadd.f32 %v3850, %v3953
          %3955 = vmatmul.f32.gmra.mxu0 %v3065
          %v3956 = vpop.f32.mrf.mxu0
          %v3957 = vadd.f32 %v3851, %v3956
          %3958 = vmatmul.f32.gmra.mxu0 %v3067
          %v3959 = vpop.f32.mrf.mxu0
          %v3960 = vadd.f32 %v3852, %v3959
          %3961 = vmatmul.f32.gmra.mxu0 %v3069
          %v3962 = vpop.f32.mrf.mxu0
          %v3963 = vadd.f32 %v3853, %v3962
          %3964 = vmatmul.f32.gmra.mxu0 %v3071
          %v3965 = vpop.f32.mrf.mxu0
          %v3966 = vadd.f32 %v3854, %v3965
          %3967 = vdwg.mxu0
          %3968 = vmatpush.msra.mxu0 0.0
          %3969 = vmatpush.msra.mxu0 0.0
          %3970 = vmatpush.msra.mxu0 0.0
          %3971 = vmatpush.msra.mxu0 0.0
          %3972 = vmatpush.msra.mxu0 0.0
          %3973 = vmatpush.msra.mxu0 0.0
          %3974 = vmatpush.msra.mxu0 0.0
          %3975 = vmatpush.msra.mxu0 0.0
          %3976 = vmatpush.msra.mxu0 %v3443
          %3977 = vmatpush.msra.mxu0 %v3442
          %3978 = vmatpush.msra.mxu0 %v3441
          %3979 = vmatpush.msra.mxu0 %v3440
          %3980 = vmatpush.msra.mxu0 %v3439
          %3981 = vmatpush.msra.mxu0 %v3438
          %3982 = vmatpush.msra.mxu0 %v3437
          %3983 = vmatpush.msra.mxu0 %v3436
          %3984 = vmatmul.f32.gmra.mxu0 %v3098
          %v3985 = vpop.f32.mrf.mxu0
          %v3986 = vadd.f32 %v3873, %v3985
          %3987 = vmatmul.f32.gmra.mxu0 %v3101
          %v3988 = vpop.f32.mrf.mxu0
          %v3989 = vadd.f32 %v3876, %v3988
          %3990 = vmatmul.f32.gmra.mxu0 %v3104
          %v3991 = vpop.f32.mrf.mxu0
          %v3992 = vadd.f32 %v3879, %v3991
          %3993 = vmatmul.f32.gmra.mxu0 %v3107
          %v3994 = vpop.f32.mrf.mxu0
          %v3995 = vadd.f32 %v3882, %v3994
          %3996 = vmatmul.f32.gmra.mxu0 %v3110
          %v3997 = vpop.f32.mrf.mxu0
          %v3998 = vadd.f32 %v3885, %v3997
          %3999 = vmatmul.f32.gmra.mxu0 %v3113
          %v4000 = vpop.f32.mrf.mxu0
          %v4001 = vadd.f32 %v3888, %v4000
          %4002 = vmatmul.f32.gmra.mxu0 %v3116
          %v4003 = vpop.f32.mrf.mxu0
          %v4004 = vadd.f32 %v3891, %v4003
          %4005 = vmatmul.f32.gmra.mxu0 %v3119
          %v4006 = vpop.f32.mrf.mxu0
          %v4007 = vadd.f32 %v3894, %v4006
          %4008 = vmatmul.f32.gmra.mxu0 %v3122
          %v4009 = vpop.f32.mrf.mxu0
          %v4010 = vadd.f32 %v3897, %v4009
          %4011 = vmatmul.f32.gmra.mxu0 %v3125
          %v4012 = vpop.f32.mrf.mxu0
          %v4013 = vadd.f32 %v3900, %v4012
          %4014 = vmatmul.f32.gmra.mxu0 %v3128
          %v4015 = vpop.f32.mrf.mxu0
          %v4016 = vadd.f32 %v3903, %v4015
          %4017 = vmatmul.f32.gmra.mxu0 %v3131
          %v4018 = vpop.f32.mrf.mxu0
          %v4019 = vadd.f32 %v3906, %v4018
          %4020 = vmatmul.f32.gmra.mxu0 %v3134
          %v4021 = vpop.f32.mrf.mxu0
          %v4022 = vadd.f32 %v3909, %v4021
          %4023 = vmatmul.f32.gmra.mxu0 %v3137
          %v4024 = vpop.f32.mrf.mxu0
          %v4025 = vadd.f32 %v3912, %v4024
          %4026 = vmatmul.f32.gmra.mxu0 %v3140
          %v4027 = vpop.f32.mrf.mxu0
          %v4028 = vadd.f32 %v3915, %v4027
          %4029 = vmatmul.f32.gmra.mxu0 %v3143
          %v4030 = vpop.f32.mrf.mxu0
          %v4031 = vadd.f32 %v3918, %v4030
          %4032 = vmatmul.f32.gmra.mxu0 %v3146
          %v4033 = vpop.f32.mrf.mxu0
          %v4034 = vadd.f32 %v3921, %v4033
          %4035 = vmatmul.f32.gmra.mxu0 %v3149
          %v4036 = vpop.f32.mrf.mxu0
          %v4037 = vadd.f32 %v3924, %v4036
          %4038 = vmatmul.f32.gmra.mxu0 %v3152
          %v4039 = vpop.f32.mrf.mxu0
          %v4040 = vadd.f32 %v3927, %v4039
          %4041 = vmatmul.f32.gmra.mxu0 %v3155
          %v4042 = vpop.f32.mrf.mxu0
          %v4043 = vadd.f32 %v3930, %v4042
          %4044 = vmatmul.f32.gmra.mxu0 %v3158
          %v4045 = vpop.f32.mrf.mxu0
          %v4046 = vadd.f32 %v3933, %v4045
          %4047 = vmatmul.f32.gmra.mxu0 %v3161
          %v4048 = vpop.f32.mrf.mxu0
          %v4049 = vadd.f32 %v3936, %v4048
          %4050 = vmatmul.f32.gmra.mxu0 %v3164
          %v4051 = vpop.f32.mrf.mxu0
          %v4052 = vadd.f32 %v3939, %v4051
          %4053 = vmatmul.f32.gmra.mxu0 %v3167
          %v4054 = vpop.f32.mrf.mxu0
          %v4055 = vadd.f32 %v3942, %v4054
          %4056 = vmatmul.f32.gmra.mxu0 %v3170
          %v4057 = vpop.f32.mrf.mxu0
          %v4058 = vadd.f32 %v3945, %v4057
          %4059 = vmatmul.f32.gmra.mxu0 %v3173
          %v4060 = vpop.f32.mrf.mxu0
          %v4061 = vadd.f32 %v3948, %v4060
          %4062 = vmatmul.f32.gmra.mxu0 %v3176
          %v4063 = vpop.f32.mrf.mxu0
          %v4064 = vadd.f32 %v3951, %v4063
          %4065 = vmatmul.f32.gmra.mxu0 %v3179
          %v4066 = vpop.f32.mrf.mxu0
          %v4067 = vadd.f32 %v3954, %v4066
          %4068 = vmatmul.f32.gmra.mxu0 %v3182
          %v4069 = vpop.f32.mrf.mxu0
          %v4070 = vadd.f32 %v3957, %v4069
          %4071 = vmatmul.f32.gmra.mxu0 %v3185
          %v4072 = vpop.f32.mrf.mxu0
          %v4073 = vadd.f32 %v3960, %v4072
          %4074 = vmatmul.f32.gmra.mxu0 %v3188
          %v4075 = vpop.f32.mrf.mxu0
          %v4076 = vadd.f32 %v3963, %v4075
          %4077 = vmatmul.f32.gmra.mxu0 %v3191
          %v4078 = vpop.f32.mrf.mxu0
          %v4079 = vadd.f32 %v3966, %v4078
          %4080 = vdwg.mxu0
          %v4113 = vrot.slane %v3600, 1
          %v4114 = vrot.slane %v3603, 1
          %v4115 = vsel %vm2555, %v4113, %v4114
          %v4116 = vrot.slane %v3606, 1
          %v4117 = vsel %vm2555, %v4114, %v4116
          %v4118 = vrot.slane %v3609, 1
          %v4119 = vsel %vm2555, %v4116, %v4118
          %v4120 = vrot.slane %v3612, 1
          %v4121 = vsel %vm2555, %v4118, %v4120
          %v4122 = vrot.slane %v3615, 1
          %v4123 = vsel %vm2555, %v4120, %v4122
          %v4124 = vrot.slane %v3618, 1
          %v4125 = vsel %vm2555, %v4122, %v4124
          %v4126 = vrot.slane %v3621, 1
          %v4127 = vsel %vm2555, %v4124, %v4126
          %v4128 = vrot.slane %v3624, 1
          %v4129 = vsel %vm2555, %v4126, %v4128
          %v4130 = vrot.slane %v3627, 1
          %v4131 = vsel %vm2555, %v4128, %v4130
          %v4132 = vrot.slane %v3630, 1
          %v4133 = vsel %vm2555, %v4130, %v4132
          %v4134 = vrot.slane %v3633, 1
          %v4135 = vsel %vm2555, %v4132, %v4134
          %v4136 = vrot.slane %v3636, 1
          %v4137 = vsel %vm2555, %v4134, %v4136
          %v4138 = vrot.slane %v3639, 1
          %v4139 = vsel %vm2555, %v4136, %v4138
          %v4140 = vrot.slane %v3642, 1
          %v4141 = vsel %vm2555, %v4138, %v4140
          %v4142 = vrot.slane %v3645, 1
          %v4143 = vsel %vm2555, %v4140, %v4142
          %v4144 = vrot.slane %v3648, 1
          %v4145 = vsel %vm2555, %v4142, %v4144
          %v4146 = vrot.slane %v3651, 1
          %v4147 = vsel %vm2555, %v4144, %v4146
          %v4148 = vrot.slane %v3654, 1
          %v4149 = vsel %vm2555, %v4146, %v4148
          %v4150 = vrot.slane %v3657, 1
          %v4151 = vsel %vm2555, %v4148, %v4150
          %v4152 = vrot.slane %v3660, 1
          %v4153 = vsel %vm2555, %v4150, %v4152
          %v4154 = vrot.slane %v3663, 1
          %v4155 = vsel %vm2555, %v4152, %v4154
          %v4156 = vrot.slane %v3666, 1
          %v4157 = vsel %vm2555, %v4154, %v4156
          %v4158 = vrot.slane %v3669, 1
          %v4159 = vsel %vm2555, %v4156, %v4158
          %v4160 = vrot.slane %v3672, 1
          %v4161 = vsel %vm2555, %v4158, %v4160
          %v4162 = vrot.slane %v3675, 1
          %v4163 = vsel %vm2555, %v4160, %v4162
          %v4164 = vrot.slane %v3678, 1
          %v4165 = vsel %vm2555, %v4162, %v4164
          %v4166 = vrot.slane %v3681, 1
          %v4167 = vsel %vm2555, %v4164, %v4166
          %v4168 = vrot.slane %v3684, 1
          %v4169 = vsel %vm2555, %v4166, %v4168
          %v4170 = vrot.slane %v3687, 1
          %v4171 = vsel %vm2555, %v4168, %v4170
          %v4172 = vrot.slane %v3690, 1
          %v4173 = vsel %vm2555, %v4170, %v4172
          %v4174 = vrot.slane %v3693, 1
          %v4175 = vsel %vm2555, %v4172, %v4174
          %v4176 = vsel %vm2555, %v4174, %v2619
          %v4209 = vmul.f32 %v1053, %v4115
          %v4210 = vmul.f32 %v1054, %v4117
          %v4211 = vmul.f32 %v1055, %v4119
          %v4212 = vmul.f32 %v1056, %v4121
          %v4213 = vmul.f32 %v1057, %v4123
          %v4214 = vmul.f32 %v1058, %v4125
          %v4215 = vmul.f32 %v1059, %v4127
          %v4216 = vmul.f32 %v1060, %v4129
          %v4217 = vmul.f32 %v1061, %v4131
          %v4218 = vmul.f32 %v1062, %v4133
          %v4219 = vmul.f32 %v1063, %v4135
          %v4220 = vmul.f32 %v1064, %v4137
          %v4221 = vmul.f32 %v1065, %v4139
          %v4222 = vmul.f32 %v1066, %v4141
          %v4223 = vmul.f32 %v1067, %v4143
          %v4224 = vmul.f32 %v1068, %v4145
          %v4225 = vmul.f32 %v1069, %v4147
          %v4226 = vmul.f32 %v1070, %v4149
          %v4227 = vmul.f32 %v1071, %v4151
          %v4228 = vmul.f32 %v1072, %v4153
          %v4229 = vmul.f32 %v1073, %v4155
          %v4230 = vmul.f32 %v1074, %v4157
          %v4231 = vmul.f32 %v1075, %v4159
          %v4232 = vmul.f32 %v1076, %v4161
          %v4233 = vmul.f32 %v1077, %v4163
          %v4234 = vmul.f32 %v1078, %v4165
          %v4235 = vmul.f32 %v1079, %v4167
          %v4236 = vmul.f32 %v1080, %v4169
          %v4237 = vmul.f32 %v1081, %v4171
          %v4238 = vmul.f32 %v1082, %v4173
          %v4239 = vmul.f32 %v1083, %v4175
          %v4240 = vmul.f32 %v1084, %v4176
          %v4241 = vadd.f32 %v3986, %v4209
          %v4242 = vadd.f32 %v3989, %v4210
          %v4243 = vadd.f32 %v3992, %v4211
          %v4244 = vadd.f32 %v3995, %v4212
          %v4245 = vadd.f32 %v3998, %v4213
          %v4246 = vadd.f32 %v4001, %v4214
          %v4247 = vadd.f32 %v4004, %v4215
          %v4248 = vadd.f32 %v4007, %v4216
          %v4249 = vadd.f32 %v4010, %v4217
          %v4250 = vadd.f32 %v4013, %v4218
          %v4251 = vadd.f32 %v4016, %v4219
          %v4252 = vadd.f32 %v4019, %v4220
          %v4253 = vadd.f32 %v4022, %v4221
          %v4254 = vadd.f32 %v4025, %v4222
          %v4255 = vadd.f32 %v4028, %v4223
          %v4256 = vadd.f32 %v4031, %v4224
          %v4257 = vadd.f32 %v4034, %v4225
          %v4258 = vadd.f32 %v4037, %v4226
          %v4259 = vadd.f32 %v4040, %v4227
          %v4260 = vadd.f32 %v4043, %v4228
          %v4261 = vadd.f32 %v4046, %v4229
          %v4262 = vadd.f32 %v4049, %v4230
          %v4263 = vadd.f32 %v4052, %v4231
          %v4264 = vadd.f32 %v4055, %v4232
          %v4265 = vadd.f32 %v4058, %v4233
          %v4266 = vadd.f32 %v4061, %v4234
          %v4267 = vadd.f32 %v4064, %v4235
          %v4268 = vadd.f32 %v4067, %v4236
          %v4269 = vadd.f32 %v4070, %v4237
          %v4270 = vadd.f32 %v4073, %v4238
          %v4271 = vadd.f32 %v4076, %v4239
          %v4272 = vadd.f32 %v4079, %v4240
          %v4273 = vld [vmem:[%s460] sm:$0x1]
          %v4275 = vperm.slane %v4273, 0
          %v4277 = vadd.f32 %v4241, %v4275
          %v4278 = vadd.f32 %v4242, %v4275
          %v4279 = vadd.f32 %v4243, %v4275
          %v4280 = vadd.f32 %v4244, %v4275
          %v4281 = vadd.f32 %v4245, %v4275
          %v4282 = vadd.f32 %v4246, %v4275
          %v4283 = vadd.f32 %v4247, %v4275
          %v4284 = vadd.f32 %v4248, %v4275
          %v4285 = vadd.f32 %v4249, %v4275
          %v4286 = vadd.f32 %v4250, %v4275
          %v4287 = vadd.f32 %v4251, %v4275
          %v4288 = vadd.f32 %v4252, %v4275
          %v4289 = vadd.f32 %v4253, %v4275
          %v4290 = vadd.f32 %v4254, %v4275
          %v4291 = vadd.f32 %v4255, %v4275
          %v4292 = vadd.f32 %v4256, %v4275
          %v4293 = vadd.f32 %v4257, %v4275
          %v4294 = vadd.f32 %v4258, %v4275
          %v4295 = vadd.f32 %v4259, %v4275
          %v4296 = vadd.f32 %v4260, %v4275
          %v4297 = vadd.f32 %v4261, %v4275
          %v4298 = vadd.f32 %v4262, %v4275
          %v4299 = vadd.f32 %v4263, %v4275
          %v4300 = vadd.f32 %v4264, %v4275
          %v4301 = vadd.f32 %v4265, %v4275
          %v4302 = vadd.f32 %v4266, %v4275
          %v4303 = vadd.f32 %v4267, %v4275
          %v4304 = vadd.f32 %v4268, %v4275
          %v4305 = vadd.f32 %v4269, %v4275
          %v4306 = vadd.f32 %v4270, %v4275
          %v4307 = vadd.f32 %v4271, %v4275
          %v4308 = vadd.f32 %v4272, %v4275
          %v4309 = vsel %vm1222, %v4277, 0.0
          %v4310 = vsel %vm1222, %v4278, 0.0
          %v4311 = vadd.f32 %v4309, %v4310
          %v4312 = vsel %vm1222, %v4279, 0.0
          %v4313 = vadd.f32 %v4311, %v4312
          %v4314 = vsel %vm1222, %v4280, 0.0
          %v4315 = vadd.f32 %v4313, %v4314
          %v4316 = vsel %vm1222, %v4281, 0.0
          %v4317 = vadd.f32 %v4315, %v4316
          %v4318 = vsel %vm1222, %v4282, 0.0
          %v4319 = vadd.f32 %v4317, %v4318
          %v4320 = vsel %vm1222, %v4283, 0.0
          %v4321 = vadd.f32 %v4319, %v4320
          %v4322 = vsel %vm1222, %v4284, 0.0
          %v4323 = vadd.f32 %v4321, %v4322
          %v4324 = vsel %vm1222, %v4285, 0.0
          %v4325 = vadd.f32 %v4323, %v4324
          %v4326 = vsel %vm1222, %v4286, 0.0
          %v4327 = vadd.f32 %v4325, %v4326
          %v4328 = vsel %vm1222, %v4287, 0.0
          %v4329 = vadd.f32 %v4327, %v4328
          %v4330 = vsel %vm1222, %v4288, 0.0
          %v4331 = vadd.f32 %v4329, %v4330
          %v4332 = vsel %vm1222, %v4289, 0.0
          %v4333 = vadd.f32 %v4331, %v4332
          %v4334 = vsel %vm1222, %v4290, 0.0
          %v4335 = vadd.f32 %v4333, %v4334
          %v4336 = vsel %vm1222, %v4291, 0.0
          %v4337 = vadd.f32 %v4335, %v4336
          %v4338 = vsel %vm1222, %v4292, 0.0
          %v4339 = vadd.f32 %v4337, %v4338
          %v4340 = vsel %vm1222, %v4293, 0.0
          %v4341 = vadd.f32 %v4339, %v4340
          %v4342 = vsel %vm1222, %v4294, 0.0
          %v4343 = vadd.f32 %v4341, %v4342
          %v4344 = vsel %vm1222, %v4295, 0.0
          %v4345 = vadd.f32 %v4343, %v4344
          %v4346 = vsel %vm1222, %v4296, 0.0
          %v4347 = vadd.f32 %v4345, %v4346
          %v4348 = vsel %vm1222, %v4297, 0.0
          %v4349 = vadd.f32 %v4347, %v4348
          %v4350 = vsel %vm1222, %v4298, 0.0
          %v4351 = vadd.f32 %v4349, %v4350
          %v4352 = vsel %vm1222, %v4299, 0.0
          %v4353 = vadd.f32 %v4351, %v4352
          %v4354 = vsel %vm1222, %v4300, 0.0
          %v4355 = vadd.f32 %v4353, %v4354
          %v4356 = vsel %vm1222, %v4301, 0.0
          %v4357 = vadd.f32 %v4355, %v4356
          %v4358 = vsel %vm1222, %v4302, 0.0
          %v4359 = vadd.f32 %v4357, %v4358
          %v4360 = vsel %vm1222, %v4303, 0.0
          %v4361 = vadd.f32 %v4359, %v4360
          %v4362 = vsel %vm1222, %v4304, 0.0
          %v4363 = vadd.f32 %v4361, %v4362
          %v4364 = vsel %vm1222, %v4305, 0.0
          %v4365 = vadd.f32 %v4363, %v4364
          %v4366 = vsel %vm1222, %v4306, 0.0
          %v4367 = vadd.f32 %v4365, %v4366
          %v4368 = vsel %vm1222, %v4307, 0.0
          %v4369 = vadd.f32 %v4367, %v4368
          %v4370 = vsel %vm1222, %v4308, 0.0
          %v4371 = vadd.f32 %v4369, %v4370
          %v4372 = vrot.slane %v4371, 4
          %v4373 = vadd.f32 %v4371, %v4372
          %v4374 = vrot.slane %v4373, 2
          %v4375 = vadd.f32 %v4373, %v4374
          %v4376 = vrot.slane %v4375, 1
          %v4377 = vadd.f32 %v4375, %v4376
          %v4378 = vmul.f32 %v4377, 0.00390625
          %v4379 = vld [vmem:[%s465] sm:$0xff]
          %v4380 = vld [vmem:[%s465 + $0x8] sm:$0xff]
          %v4381 = vld [vmem:[%s465 + $0x10] sm:$0xff]
          %v4382 = vld [vmem:[%s465 + $0x18] sm:$0xff]
          %v4383 = vld [vmem:[%s465 + $0x20] sm:$0xff]
          %v4384 = vld [vmem:[%s465 + $0x28] sm:$0xff]
          %v4385 = vld [vmem:[%s465 + $0x30] sm:$0xff]
          %v4386 = vld [vmem:[%s465 + $0x38] sm:$0xff]
          %v4387 = vld [vmem:[%s468] sm:$0x1]
          %v4389 = vsel %vm1222, %v4378, 0
          %4391 = vmatpush.msra.mxu0 0.0
          %4392 = vmatpush.msra.mxu0 0.0
          %4393 = vmatpush.msra.mxu0 0.0
          %4394 = vmatpush.msra.mxu0 0.0
          %4395 = vmatpush.msra.mxu0 0.0
          %4396 = vmatpush.msra.mxu0 0.0
          %4397 = vmatpush.msra.mxu0 0.0
          %4398 = vmatpush.msra.mxu0 0.0
          %4399 = vmatpush.msra.mxu0 %v4386
          %4400 = vmatpush.msra.mxu0 %v4385
          %4401 = vmatpush.msra.mxu0 %v4384
          %4402 = vmatpush.msra.mxu0 %v4383
          %4403 = vmatpush.msra.mxu0 %v4382
          %4404 = vmatpush.msra.mxu0 %v4381
          %4405 = vmatpush.msra.mxu0 %v4380
          %4406 = vmatpush.msra.mxu0 %v4379
          %4407 = vmatmul.f32.gmra.mxu0 %v4389
          %v4408 = vpop.f32.mrf.mxu0
          %v4409 = vadd.f32 %v4387, %v4408
          %4410 = vdwg.mxu0
          %v4411 = vmax.f32 %v4409, 0.0
          %v4412 = vld [vmem:[%s472] sm:$0xf]
          %v4413 = vld [vmem:[%s475] sm:$0x1]
          %vm4414 = vcmask 31744
          %v4416 = vsel %vm4414, %v4411, 0
          %vm4418 = vcmask 1043456
          %v4420 = vsel %vm4418, %v4412, 0
          %4422 = vmatpush.msra.mxu0 0.0
          %4423 = vmatpush.msra.mxu0 0.0
          %4424 = vmatpush.msra.mxu0 0.0
          %4425 = vmatpush.msra.mxu0 0.0
          %4426 = vmatpush.msra.mxu0 0.0
          %4427 = vmatpush.msra.mxu0 0.0
          %4428 = vmatpush.msra.mxu0 0.0
          %4429 = vmatpush.msra.mxu0 0.0
          %4430 = vmatpush.msra.mxu0 0.0
          %4431 = vmatpush.msra.mxu0 0.0
          %4432 = vmatpush.msra.mxu0 0.0
          %4433 = vmatpush.msra.mxu0 0.0
          %4434 = vmatpush.msra.mxu0 0.0
          %4435 = vmatpush.msra.mxu0 0.0
          %4436 = vmatpush.msra.mxu0 0.0
          %4437 = vmatpush.msra.mxu0 %v4420
          %4438 = vmatmul.f32.gmra.mxu0 %v4416
          %v4439 = vpop.f32.mrf.mxu0
          %v4440 = vadd.f32 %v4413, %v4439
          %4441 = vdwg.mxu0
          %v4442 = vxor.u32 %v4440, 2147483648
          %v4443 = vmul.f32 %v4442, 1.442695
          %v4444 = vpow.pop %v4443
          %v4445 = vadd.f32 %v4444, 1.0
          %v4446 = vrcp.pop %v4445
          %v4447 = vmul.f32 %v4445, %v4446
          %v4448 = vsub.f32 1.0, %v4447
          %v4449 = vmul.f32 %v4446, %v4448
          %v4450 = vadd.f32 %v4446, %v4449
          %vm4451 = vweird.f32 %v4445
          %vm4452 = vweird.f32 %v4446
          %vm4453 = vmor %vm4451, %vm4452
          %v4454 = vsel %vm4453, %v4446, %v4450
          %v4455 = vand.u32 2147483647, %v4445
          %vm4456 = vcmp.eq.f32.partialorder %v4455, 8.507059e+37
          %v4457 = vand.u32 %v4445, 2147483648
          %v4458 = vor.u32 1.1754944e-38, %v4457
          %v4459 = vsel %vm4456, %v4458, %v4454
          %v4460 = vmul.f32 1.0, %v4459
          %v4461 = vperm.slane %v4460, 0
          %v4462 = vmul.f32 %v4277, %v4461
          %v4463 = vmul.f32 %v4278, %v4461
          %v4464 = vmul.f32 %v4279, %v4461
          %v4465 = vmul.f32 %v4280, %v4461
          %v4466 = vmul.f32 %v4281, %v4461
          %v4467 = vmul.f32 %v4282, %v4461
          %v4468 = vmul.f32 %v4283, %v4461
          %v4469 = vmul.f32 %v4284, %v4461
          %v4470 = vmul.f32 %v4285, %v4461
          %v4471 = vmul.f32 %v4286, %v4461
          %v4472 = vmul.f32 %v4287, %v4461
          %v4473 = vmul.f32 %v4288, %v4461
          %v4474 = vmul.f32 %v4289, %v4461
          %v4475 = vmul.f32 %v4290, %v4461
          %v4476 = vmul.f32 %v4291, %v4461
          %v4477 = vmul.f32 %v4292, %v4461
          %v4478 = vmul.f32 %v4293, %v4461
          %v4479 = vmul.f32 %v4294, %v4461
          %v4480 = vmul.f32 %v4295, %v4461
          %v4481 = vmul.f32 %v4296, %v4461
          %v4482 = vmul.f32 %v4297, %v4461
          %v4483 = vmul.f32 %v4298, %v4461
          %v4484 = vmul.f32 %v4299, %v4461
          %v4485 = vmul.f32 %v4300, %v4461
          %v4486 = vmul.f32 %v4301, %v4461
          %v4487 = vmul.f32 %v4302, %v4461
          %v4488 = vmul.f32 %v4303, %v4461
          %v4489 = vmul.f32 %v4304, %v4461
          %v4490 = vmul.f32 %v4305, %v4461
          %v4491 = vmul.f32 %v4306, %v4461
          %v4492 = vmul.f32 %v4307, %v4461
          %v4493 = vmul.f32 %v4308, %v4461
          %v4494 = vadd.f32 %v1190, %v4462
          %v4495 = vadd.f32 %v1191, %v4463
          %v4496 = vadd.f32 %v1192, %v4464
          %v4497 = vadd.f32 %v1193, %v4465
          %v4498 = vadd.f32 %v1194, %v4466
          %v4499 = vadd.f32 %v1195, %v4467
          %v4500 = vadd.f32 %v1196, %v4468
          %v4501 = vadd.f32 %v1197, %v4469
          %v4502 = vadd.f32 %v1198, %v4470
          %v4503 = vadd.f32 %v1199, %v4471
          %v4504 = vadd.f32 %v1200, %v4472
          %v4505 = vadd.f32 %v1201, %v4473
          %v4506 = vadd.f32 %v1202, %v4474
          %v4507 = vadd.f32 %v1203, %v4475
          %v4508 = vadd.f32 %v1204, %v4476
          %v4509 = vadd.f32 %v1205, %v4477
          %v4510 = vadd.f32 %v1206, %v4478
          %v4511 = vadd.f32 %v1207, %v4479
          %v4512 = vadd.f32 %v1208, %v4480
          %v4513 = vadd.f32 %v1209, %v4481
          %v4514 = vadd.f32 %v1210, %v4482
          %v4515 = vadd.f32 %v1211, %v4483
          %v4516 = vadd.f32 %v1212, %v4484
          %v4517 = vadd.f32 %v1213, %v4485
          %v4518 = vadd.f32 %v1214, %v4486
          %v4519 = vadd.f32 %v1215, %v4487
          %v4520 = vadd.f32 %v1216, %v4488
          %v4521 = vadd.f32 %v1217, %v4489
          %v4522 = vadd.f32 %v1218, %v4490
          %v4523 = vadd.f32 %v1219, %v4491
          %v4524 = vadd.f32 %v1220, %v4492
          %v4525 = vadd.f32 %v1221, %v4493
          %4526 = vst.msk [vmem:[#allocation2] sm:$0xff] %vm1222, %v4494
          %4527 = vst.msk [vmem:[#allocation2 + $0x8] sm:$0xff] %vm1222, %v4495
          %4528 = vst.msk [vmem:[#allocation2 + $0x10] sm:$0xff] %vm1222, %v4496
          %4529 = vst.msk [vmem:[#allocation2 + $0x18] sm:$0xff] %vm1222, %v4497
          %4530 = vst.msk [vmem:[#allocation2 + $0x20] sm:$0xff] %vm1222, %v4498
          %4531 = vst.msk [vmem:[#allocation2 + $0x28] sm:$0xff] %vm1222, %v4499
          %4532 = vst.msk [vmem:[#allocation2 + $0x30] sm:$0xff] %vm1222, %v4500
          %4533 = vst.msk [vmem:[#allocation2 + $0x38] sm:$0xff] %vm1222, %v4501
          %4534 = vst.msk [vmem:[#allocation2 + $0x40] sm:$0xff] %vm1222, %v4502
          %4535 = vst.msk [vmem:[#allocation2 + $0x48] sm:$0xff] %vm1222, %v4503
          %4536 = vst.msk [vmem:[#allocation2 + $0x50] sm:$0xff] %vm1222, %v4504
          %4537 = vst.msk [vmem:[#allocation2 + $0x58] sm:$0xff] %vm1222, %v4505
          %4538 = vst.msk [vmem:[#allocation2 + $0x60] sm:$0xff] %vm1222, %v4506
          %4539 = vst.msk [vmem:[#allocation2 + $0x68] sm:$0xff] %vm1222, %v4507
          %4540 = vst.msk [vmem:[#allocation2 + $0x70] sm:$0xff] %vm1222, %v4508
          %4541 = vst.msk [vmem:[#allocation2 + $0x78] sm:$0xff] %vm1222, %v4509
          %4542 = vst.msk [vmem:[#allocation2 + $0x80] sm:$0xff] %vm1222, %v4510
          %4543 = vst.msk [vmem:[#allocation2 + $0x88] sm:$0xff] %vm1222, %v4511
          %4544 = vst.msk [vmem:[#allocation2 + $0x90] sm:$0xff] %vm1222, %v4512
          %4545 = vst.msk [vmem:[#allocation2 + $0x98] sm:$0xff] %vm1222, %v4513
          %4546 = vst.msk [vmem:[#allocation2 + $0xa0] sm:$0xff] %vm1222, %v4514
          %4547 = vst.msk [vmem:[#allocation2 + $0xa8] sm:$0xff] %vm1222, %v4515
          %4548 = vst.msk [vmem:[#allocation2 + $0xb0] sm:$0xff] %vm1222, %v4516
          %4549 = vst.msk [vmem:[#allocation2 + $0xb8] sm:$0xff] %vm1222, %v4517
          %4550 = vst.msk [vmem:[#allocation2 + $0xc0] sm:$0xff] %vm1222, %v4518
          %4551 = vst.msk [vmem:[#allocation2 + $0xc8] sm:$0xff] %vm1222, %v4519
          %4552 = vst.msk [vmem:[#allocation2 + $0xd0] sm:$0xff] %vm1222, %v4520
          %4553 = vst.msk [vmem:[#allocation2 + $0xd8] sm:$0xff] %vm1222, %v4521
          %4554 = vst.msk [vmem:[#allocation2 + $0xe0] sm:$0xff] %vm1222, %v4522
          %4555 = vst.msk [vmem:[#allocation2 + $0xe8] sm:$0xff] %vm1222, %v4523
          %4556 = vst.msk [vmem:[#allocation2 + $0xf0] sm:$0xff] %vm1222, %v4524
          %4557 = vst.msk [vmem:[#allocation2 + $0xf8] sm:$0xff] %vm1222, %v4525
          %p4558 = scmp.lt.s32.totalorder %s28, 0
          %s4559 = ssub.s32 0, %s28
          %s4560 = scalar_select %p4558, %s4559, %s28
          %s4561 = sdiv.u32.pop %s4560, 6
          %s4562 = srem.u32.pop %s4560, 6
          %s4563 = ssub.s32 0, %s4562
          %s4564 = scalar_select %p4558, %s4563, %s4562
          %p4565 = scmp.ne.s32.totalorder %s4564, 0
          %p4566 = scmp.lt.s32.totalorder %s4564, 0
          %p4567 = pnand %p4566, %p4565
          %p4568 = pneg %p4567
          %s4569 = sadd.s32 %s4564, 6
          %s4570 = scalar_select %p4568, %s4569, %s4564
          %p4571 = scmp.eq.s32.totalorder %s4570, 5
          // Predicated region
          $region65: #{rir1_pallas.1} parent=63 // pred_check
            %p4572 = pneg %p4571
          $region66: #{rir1_pallas.1} parent=63 // pred_check_branch
            %4574 = sbr.rel (%p4572) target = $region68
          $region67: #{rir1_pallas.1} parent=63 // pred_region
            %v4575 = vld [vmem:[#allocation3] sm:$0xff]
            %v4576 = vld [vmem:[#allocation3 + $0x8] sm:$0xff]
            %v4577 = vld [vmem:[#allocation3 + $0x10] sm:$0xff]
            %v4578 = vld [vmem:[#allocation3 + $0x18] sm:$0xff]
            %v4579 = vld [vmem:[#allocation3 + $0x20] sm:$0xff]
            %v4580 = vld [vmem:[#allocation3 + $0x28] sm:$0xff]
            %v4581 = vld [vmem:[#allocation3 + $0x30] sm:$0xff]
            %v4582 = vld [vmem:[#allocation3 + $0x38] sm:$0xff]
            %v4583 = vld [vmem:[#allocation3 + $0x40] sm:$0xff]
            %v4584 = vld [vmem:[#allocation3 + $0x48] sm:$0xff]
            %v4585 = vld [vmem:[#allocation3 + $0x50] sm:$0xff]
            %v4586 = vld [vmem:[#allocation3 + $0x58] sm:$0xff]
            %v4587 = vld [vmem:[#allocation3 + $0x60] sm:$0xff]
            %v4588 = vld [vmem:[#allocation3 + $0x68] sm:$0xff]
            %v4589 = vld [vmem:[#allocation3 + $0x70] sm:$0xff]
            %v4590 = vld [vmem:[#allocation3 + $0x78] sm:$0xff]
            %v4591 = vld [vmem:[#allocation3 + $0x80] sm:$0xff]
            %v4592 = vld [vmem:[#allocation3 + $0x88] sm:$0xff]
            %v4593 = vld [vmem:[#allocation3 + $0x90] sm:$0xff]
            %v4594 = vld [vmem:[#allocation3 + $0x98] sm:$0xff]
            %v4595 = vld [vmem:[#allocation3 + $0xa0] sm:$0xff]
            %v4596 = vld [vmem:[#allocation3 + $0xa8] sm:$0xff]
            %v4597 = vld [vmem:[#allocation3 + $0xb0] sm:$0xff]
            %v4598 = vld [vmem:[#allocation3 + $0xb8] sm:$0xff]
            %v4599 = vld [vmem:[#allocation3 + $0xc0] sm:$0xff]
            %v4600 = vld [vmem:[#allocation3 + $0xc8] sm:$0xff]
            %v4601 = vld [vmem:[#allocation3 + $0xd0] sm:$0xff]
            %v4602 = vld [vmem:[#allocation3 + $0xd8] sm:$0xff]
            %v4603 = vld [vmem:[#allocation3 + $0xe0] sm:$0xff]
            %v4604 = vld [vmem:[#allocation3 + $0xe8] sm:$0xff]
            %v4605 = vld [vmem:[#allocation3 + $0xf0] sm:$0xff]
            %v4606 = vld [vmem:[#allocation3 + $0xf8] sm:$0xff]
            %v4607 = vld [vmem:[#allocation2] sm:$0xff]
            %v4608 = vld [vmem:[#allocation2 + $0x8] sm:$0xff]
            %v4609 = vld [vmem:[#allocation2 + $0x10] sm:$0xff]
            %v4610 = vld [vmem:[#allocation2 + $0x18] sm:$0xff]
            %v4611 = vld [vmem:[#allocation2 + $0x20] sm:$0xff]
            %v4612 = vld [vmem:[#allocation2 + $0x28] sm:$0xff]
            %v4613 = vld [vmem:[#allocation2 + $0x30] sm:$0xff]
            %v4614 = vld [vmem:[#allocation2 + $0x38] sm:$0xff]
            %v4615 = vld [vmem:[#allocation2 + $0x40] sm:$0xff]
            %v4616 = vld [vmem:[#allocation2 + $0x48] sm:$0xff]
            %v4617 = vld [vmem:[#allocation2 + $0x50] sm:$0xff]
            %v4618 = vld [vmem:[#allocation2 + $0x58] sm:$0xff]
            %v4619 = vld [vmem:[#allocation2 + $0x60] sm:$0xff]
            %v4620 = vld [vmem:[#allocation2 + $0x68] sm:$0xff]
            %v4621 = vld [vmem:[#allocation2 + $0x70] sm:$0xff]
            %v4622 = vld [vmem:[#allocation2 + $0x78] sm:$0xff]
            %v4623 = vld [vmem:[#allocation2 + $0x80] sm:$0xff]
            %v4624 = vld [vmem:[#allocation2 + $0x88] sm:$0xff]
            %v4625 = vld [vmem:[#allocation2 + $0x90] sm:$0xff]
            %v4626 = vld [vmem:[#allocation2 + $0x98] sm:$0xff]
            %v4627 = vld [vmem:[#allocation2 + $0xa0] sm:$0xff]
            %v4628 = vld [vmem:[#allocation2 + $0xa8] sm:$0xff]
            %v4629 = vld [vmem:[#allocation2 + $0xb0] sm:$0xff]
            %v4630 = vld [vmem:[#allocation2 + $0xb8] sm:$0xff]
            %v4631 = vld [vmem:[#allocation2 + $0xc0] sm:$0xff]
            %v4632 = vld [vmem:[#allocation2 + $0xc8] sm:$0xff]
            %v4633 = vld [vmem:[#allocation2 + $0xd0] sm:$0xff]
            %v4634 = vld [vmem:[#allocation2 + $0xd8] sm:$0xff]
            %v4635 = vld [vmem:[#allocation2 + $0xe0] sm:$0xff]
            %v4636 = vld [vmem:[#allocation2 + $0xe8] sm:$0xff]
            %v4637 = vld [vmem:[#allocation2 + $0xf0] sm:$0xff]
            %v4638 = vld [vmem:[#allocation2 + $0xf8] sm:$0xff]
            %v4639 = vadd.f32 %v4575, %v4607
            %v4640 = vadd.f32 %v4576, %v4608
            %v4641 = vadd.f32 %v4577, %v4609
            %v4642 = vadd.f32 %v4578, %v4610
            %v4643 = vadd.f32 %v4579, %v4611
            %v4644 = vadd.f32 %v4580, %v4612
            %v4645 = vadd.f32 %v4581, %v4613
            %v4646 = vadd.f32 %v4582, %v4614
            %v4647 = vadd.f32 %v4583, %v4615
            %v4648 = vadd.f32 %v4584, %v4616
            %v4649 = vadd.f32 %v4585, %v4617
            %v4650 = vadd.f32 %v4586, %v4618
            %v4651 = vadd.f32 %v4587, %v4619
            %v4652 = vadd.f32 %v4588, %v4620
            %v4653 = vadd.f32 %v4589, %v4621
            %v4654 = vadd.f32 %v4590, %v4622
            %v4655 = vadd.f32 %v4591, %v4623
            %v4656 = vadd.f32 %v4592, %v4624
            %v4657 = vadd.f32 %v4593, %v4625
            %v4658 = vadd.f32 %v4594, %v4626
            %v4659 = vadd.f32 %v4595, %v4627
            %v4660 = vadd.f32 %v4596, %v4628
            %v4661 = vadd.f32 %v4597, %v4629
            %v4662 = vadd.f32 %v4598, %v4630
            %v4663 = vadd.f32 %v4599, %v4631
            %v4664 = vadd.f32 %v4600, %v4632
            %v4665 = vadd.f32 %v4601, %v4633
            %v4666 = vadd.f32 %v4602, %v4634
            %v4667 = vadd.f32 %v4603, %v4635
            %v4668 = vadd.f32 %v4604, %v4636
            %v4669 = vadd.f32 %v4605, %v4637
            %v4670 = vadd.f32 %v4606, %v4638
            %4671 = vst.msk [vmem:[#allocation2] sm:$0xff] %vm1222, %v4639
            %4672 = vst.msk [vmem:[#allocation2 + $0x8] sm:$0xff] %vm1222, %v4640
            %4673 = vst.msk [vmem:[#allocation2 + $0x10] sm:$0xff] %vm1222, %v4641
            %4674 = vst.msk [vmem:[#allocation2 + $0x18] sm:$0xff] %vm1222, %v4642
            %4675 = vst.msk [vmem:[#allocation2 + $0x20] sm:$0xff] %vm1222, %v4643
            %4676 = vst.msk [vmem:[#allocation2 + $0x28] sm:$0xff] %vm1222, %v4644
            %4677 = vst.msk [vmem:[#allocation2 + $0x30] sm:$0xff] %vm1222, %v4645
            %4678 = vst.msk [vmem:[#allocation2 + $0x38] sm:$0xff] %vm1222, %v4646
            %4679 = vst.msk [vmem:[#allocation2 + $0x40] sm:$0xff] %vm1222, %v4647
            %4680 = vst.msk [vmem:[#allocation2 + $0x48] sm:$0xff] %vm1222, %v4648
            %4681 = vst.msk [vmem:[#allocation2 + $0x50] sm:$0xff] %vm1222, %v4649
            %4682 = vst.msk [vmem:[#allocation2 + $0x58] sm:$0xff] %vm1222, %v4650
            %4683 = vst.msk [vmem:[#allocation2 + $0x60] sm:$0xff] %vm1222, %v4651
            %4684 = vst.msk [vmem:[#allocation2 + $0x68] sm:$0xff] %vm1222, %v4652
            %4685 = vst.msk [vmem:[#allocation2 + $0x70] sm:$0xff] %vm1222, %v4653
            %4686 = vst.msk [vmem:[#allocation2 + $0x78] sm:$0xff] %vm1222, %v4654
            %4687 = vst.msk [vmem:[#allocation2 + $0x80] sm:$0xff] %vm1222, %v4655
            %4688 = vst.msk [vmem:[#allocation2 + $0x88] sm:$0xff] %vm1222, %v4656
            %4689 = vst.msk [vmem:[#allocation2 + $0x90] sm:$0xff] %vm1222, %v4657
            %4690 = vst.msk [vmem:[#allocation2 + $0x98] sm:$0xff] %vm1222, %v4658
            %4691 = vst.msk [vmem:[#allocation2 + $0xa0] sm:$0xff] %vm1222, %v4659
            %4692 = vst.msk [vmem:[#allocation2 + $0xa8] sm:$0xff] %vm1222, %v4660
            %4693 = vst.msk [vmem:[#allocation2 + $0xb0] sm:$0xff] %vm1222, %v4661
            %4694 = vst.msk [vmem:[#allocation2 + $0xb8] sm:$0xff] %vm1222, %v4662
            %4695 = vst.msk [vmem:[#allocation2 + $0xc0] sm:$0xff] %vm1222, %v4663
            %4696 = vst.msk [vmem:[#allocation2 + $0xc8] sm:$0xff] %vm1222, %v4664
            %4697 = vst.msk [vmem:[#allocation2 + $0xd0] sm:$0xff] %vm1222, %v4665
            %4698 = vst.msk [vmem:[#allocation2 + $0xd8] sm:$0xff] %vm1222, %v4666
            %4699 = vst.msk [vmem:[#allocation2 + $0xe0] sm:$0xff] %vm1222, %v4667
            %4700 = vst.msk [vmem:[#allocation2 + $0xe8] sm:$0xff] %vm1222, %v4668
            %4701 = vst.msk [vmem:[#allocation2 + $0xf0] sm:$0xff] %vm1222, %v4669
            %4702 = vst.msk [vmem:[#allocation2 + $0xf8] sm:$0xff] %vm1222, %v4670
            %4703 = vst.msk [vmem:[#allocation3] sm:$0xff] %vm1222, %v4639
            %4704 = vst.msk [vmem:[#allocation3 + $0x8] sm:$0xff] %vm1222, %v4640
            %4705 = vst.msk [vmem:[#allocation3 + $0x10] sm:$0xff] %vm1222, %v4641
            %4706 = vst.msk [vmem:[#allocation3 + $0x18] sm:$0xff] %vm1222, %v4642
            %4707 = vst.msk [vmem:[#allocation3 + $0x20] sm:$0xff] %vm1222, %v4643
            %4708 = vst.msk [vmem:[#allocation3 + $0x28] sm:$0xff] %vm1222, %v4644
            %4709 = vst.msk [vmem:[#allocation3 + $0x30] sm:$0xff] %vm1222, %v4645
            %4710 = vst.msk [vmem:[#allocation3 + $0x38] sm:$0xff] %vm1222, %v4646
            %4711 = vst.msk [vmem:[#allocation3 + $0x40] sm:$0xff] %vm1222, %v4647
            %4712 = vst.msk [vmem:[#allocation3 + $0x48] sm:$0xff] %vm1222, %v4648
            %4713 = vst.msk [vmem:[#allocation3 + $0x50] sm:$0xff] %vm1222, %v4649
            %4714 = vst.msk [vmem:[#allocation3 + $0x58] sm:$0xff] %vm1222, %v4650
            %4715 = vst.msk [vmem:[#allocation3 + $0x60] sm:$0xff] %vm1222, %v4651
            %4716 = vst.msk [vmem:[#allocation3 + $0x68] sm:$0xff] %vm1222, %v4652
            %4717 = vst.msk [vmem:[#allocation3 + $0x70] sm:$0xff] %vm1222, %v4653
            %4718 = vst.msk [vmem:[#allocation3 + $0x78] sm:$0xff] %vm1222, %v4654
            %4719 = vst.msk [vmem:[#allocation3 + $0x80] sm:$0xff] %vm1222, %v4655
            %4720 = vst.msk [vmem:[#allocation3 + $0x88] sm:$0xff] %vm1222, %v4656
            %4721 = vst.msk [vmem:[#allocation3 + $0x90] sm:$0xff] %vm1222, %v4657
            %4722 = vst.msk [vmem:[#allocation3 + $0x98] sm:$0xff] %vm1222, %v4658
            %4723 = vst.msk [vmem:[#allocation3 + $0xa0] sm:$0xff] %vm1222, %v4659
            %4724 = vst.msk [vmem:[#allocation3 + $0xa8] sm:$0xff] %vm1222, %v4660
            %4725 = vst.msk [vmem:[#allocation3 + $0xb0] sm:$0xff] %vm1222, %v4661
            %4726 = vst.msk [vmem:[#allocation3 + $0xb8] sm:$0xff] %vm1222, %v4662
            %4727 = vst.msk [vmem:[#allocation3 + $0xc0] sm:$0xff] %vm1222, %v4663
            %4728 = vst.msk [vmem:[#allocation3 + $0xc8] sm:$0xff] %vm1222, %v4664
            %4729 = vst.msk [vmem:[#allocation3 + $0xd0] sm:$0xff] %vm1222, %v4665
            %4730 = vst.msk [vmem:[#allocation3 + $0xd8] sm:$0xff] %vm1222, %v4666
            %4731 = vst.msk [vmem:[#allocation3 + $0xe0] sm:$0xff] %vm1222, %v4667
            %4732 = vst.msk [vmem:[#allocation3 + $0xe8] sm:$0xff] %vm1222, %v4668
            %4733 = vst.msk [vmem:[#allocation3 + $0xf0] sm:$0xff] %vm1222, %v4669
            %4734 = vst.msk [vmem:[#allocation3 + $0xf8] sm:$0xff] %vm1222, %v4670
          $region68: #{rir1_pallas.1} parent=63 // pred_fallthru
            _
        $region64: #{rir1_pallas.1} parent=55 // pred_fallthru
          _
        %p4735 = scmp.eq.s32.totalorder %s28, 18
        // Predicated region
        $region69: #{rir1_pallas.1} parent=55 // pred_check
          %p4736 = pneg %p4735
        $region70: #{rir1_pallas.1} parent=55 // pred_check_branch
          %4738 = sbr.rel (%p4736) target = $region72
        $region71: #{rir1_pallas.1} parent=55 // pred_region
          %v4739 = vld [vmem:[#allocation2] sm:$0xff]
          %v4740 = vld [vmem:[#allocation2 + $0x8] sm:$0xff]
          %v4741 = vld [vmem:[#allocation2 + $0x10] sm:$0xff]
          %v4742 = vld [vmem:[#allocation2 + $0x18] sm:$0xff]
          %v4743 = vld [vmem:[#allocation2 + $0x20] sm:$0xff]
          %v4744 = vld [vmem:[#allocation2 + $0x28] sm:$0xff]
          %v4745 = vld [vmem:[#allocation2 + $0x30] sm:$0xff]
          %v4746 = vld [vmem:[#allocation2 + $0x38] sm:$0xff]
          %v4747 = vld [vmem:[#allocation2 + $0x40] sm:$0xff]
          %v4748 = vld [vmem:[#allocation2 + $0x48] sm:$0xff]
          %v4749 = vld [vmem:[#allocation2 + $0x50] sm:$0xff]
          %v4750 = vld [vmem:[#allocation2 + $0x58] sm:$0xff]
          %v4751 = vld [vmem:[#allocation2 + $0x60] sm:$0xff]
          %v4752 = vld [vmem:[#allocation2 + $0x68] sm:$0xff]
          %v4753 = vld [vmem:[#allocation2 + $0x70] sm:$0xff]
          %v4754 = vld [vmem:[#allocation2 + $0x78] sm:$0xff]
          %v4755 = vld [vmem:[#allocation2 + $0x80] sm:$0xff]
          %v4756 = vld [vmem:[#allocation2 + $0x88] sm:$0xff]
          %v4757 = vld [vmem:[#allocation2 + $0x90] sm:$0xff]
          %v4758 = vld [vmem:[#allocation2 + $0x98] sm:$0xff]
          %v4759 = vld [vmem:[#allocation2 + $0xa0] sm:$0xff]
          %v4760 = vld [vmem:[#allocation2 + $0xa8] sm:$0xff]
          %v4761 = vld [vmem:[#allocation2 + $0xb0] sm:$0xff]
          %v4762 = vld [vmem:[#allocation2 + $0xb8] sm:$0xff]
          %v4763 = vld [vmem:[#allocation2 + $0xc0] sm:$0xff]
          %v4764 = vld [vmem:[#allocation2 + $0xc8] sm:$0xff]
          %v4765 = vld [vmem:[#allocation2 + $0xd0] sm:$0xff]
          %v4766 = vld [vmem:[#allocation2 + $0xd8] sm:$0xff]
          %v4767 = vld [vmem:[#allocation2 + $0xe0] sm:$0xff]
          %v4768 = vld [vmem:[#allocation2 + $0xe8] sm:$0xff]
          %v4769 = vld [vmem:[#allocation2 + $0xf0] sm:$0xff]
          %v4770 = vld [vmem:[#allocation2 + $0xf8] sm:$0xff]
          %vm4771 = vcmask 523264
          %4772 = vst.msk [vmem:[#allocation4] sm:$0xff] %vm4771, 0.0
          %4773 = vst.msk [vmem:[#allocation4 + $0x10] sm:$0xff] %vm4771, 0.0
          %4774 = vst.msk [vmem:[#allocation4 + $0x20] sm:$0xff] %vm4771, %v4739
          %4775 = vst.msk [vmem:[#allocation4 + $0x30] sm:$0xff] %vm4771, %v4740
          %4776 = vst.msk [vmem:[#allocation4 + $0x40] sm:$0xff] %vm4771, %v4741
          %4777 = vst.msk [vmem:[#allocation4 + $0x50] sm:$0xff] %vm4771, %v4742
          %4778 = vst.msk [vmem:[#allocation4 + $0x60] sm:$0xff] %vm4771, %v4743
          %4779 = vst.msk [vmem:[#allocation4 + $0x70] sm:$0xff] %vm4771, %v4744
          %4780 = vst.msk [vmem:[#allocation4 + $0x80] sm:$0xff] %vm4771, %v4745
          %4781 = vst.msk [vmem:[#allocation4 + $0x90] sm:$0xff] %vm4771, %v4746
          %4782 = vst.msk [vmem:[#allocation4 + $0xa0] sm:$0xff] %vm4771, %v4747
          %4783 = vst.msk [vmem:[#allocation4 + $0xb0] sm:$0xff] %vm4771, %v4748
          %4784 = vst.msk [vmem:[#allocation4 + $0xc0] sm:$0xff] %vm4771, %v4749
          %4785 = vst.msk [vmem:[#allocation4 + $0xd0] sm:$0xff] %vm4771, %v4750
          %4786 = vst.msk [vmem:[#allocation4 + $0xe0] sm:$0xff] %vm4771, %v4751
          %4787 = vst.msk [vmem:[#allocation4 + $0xf0] sm:$0xff] %vm4771, %v4752
          %4788 = vst.msk [vmem:[#allocation4 + $0x100] sm:$0xff] %vm4771, %v4753
          %4789 = vst.msk [vmem:[#allocation4 + $0x110] sm:$0xff] %vm4771, %v4754
          %4790 = vst.msk [vmem:[#allocation4 + $0x120] sm:$0xff] %vm4771, %v4755
          %4791 = vst.msk [vmem:[#allocation4 + $0x130] sm:$0xff] %vm4771, %v4756
          %4792 = vst.msk [vmem:[#allocation4 + $0x140] sm:$0xff] %vm4771, %v4757
          %4793 = vst.msk [vmem:[#allocation4 + $0x150] sm:$0xff] %vm4771, %v4758
          %4794 = vst.msk [vmem:[#allocation4 + $0x160] sm:$0xff] %vm4771, %v4759
          %4795 = vst.msk [vmem:[#allocation4 + $0x170] sm:$0xff] %vm4771, %v4760
          %4796 = vst.msk [vmem:[#allocation4 + $0x180] sm:$0xff] %vm4771, %v4761
          %4797 = vst.msk [vmem:[#allocation4 + $0x190] sm:$0xff] %vm4771, %v4762
          %4798 = vst.msk [vmem:[#allocation4 + $0x1a0] sm:$0xff] %vm4771, %v4763
          %4799 = vst.msk [vmem:[#allocation4 + $0x1b0] sm:$0xff] %vm4771, %v4764
          %4800 = vst.msk [vmem:[#allocation4 + $0x1c0] sm:$0xff] %vm4771, %v4765
          %4801 = vst.msk [vmem:[#allocation4 + $0x1d0] sm:$0xff] %vm4771, %v4766
          %4802 = vst.msk [vmem:[#allocation4 + $0x1e0] sm:$0xff] %vm4771, %v4767
          %4803 = vst.msk [vmem:[#allocation4 + $0x1f0] sm:$0xff] %vm4771, %v4768
          %4836 = vrot.lane.b32.xlu0 %v4739, 64
          %v4837 = vpop.permute.xlu0 %4836
          %4838 = vrot.lane.b32.xlu0 %v4740, 64
          %v4839 = vpop.permute.xlu0 %4838
          %4840 = vrot.lane.b32.xlu0 %v4741, 64
          %v4841 = vpop.permute.xlu0 %4840
          %4842 = vrot.lane.b32.xlu0 %v4742, 64
          %v4843 = vpop.permute.xlu0 %4842
          %4844 = vrot.lane.b32.xlu0 %v4743, 64
          %v4845 = vpop.permute.xlu0 %4844
          %4846 = vrot.lane.b32.xlu0 %v4744, 64
          %v4847 = vpop.permute.xlu0 %4846
          %4848 = vrot.lane.b32.xlu0 %v4745, 64
          %v4849 = vpop.permute.xlu0 %4848
          %4850 = vrot.lane.b32.xlu0 %v4746, 64
          %v4851 = vpop.permute.xlu0 %4850
          %4852 = vrot.lane.b32.xlu0 %v4747, 64
          %v4853 = vpop.permute.xlu0 %4852
          %4854 = vrot.lane.b32.xlu0 %v4748, 64
          %v4855 = vpop.permute.xlu0 %4854
          %4856 = vrot.lane.b32.xlu0 %v4749, 64
          %v4857 = vpop.permute.xlu0 %4856
          %4858 = vrot.lane.b32.xlu0 %v4750, 64
          %v4859 = vpop.permute.xlu0 %4858
          %4860 = vrot.lane.b32.xlu0 %v4751, 64
          %v4861 = vpop.permute.xlu0 %4860
          %4862 = vrot.lane.b32.xlu0 %v4752, 64
          %v4863 = vpop.permute.xlu0 %4862
          %4864 = vrot.lane.b32.xlu0 %v4753, 64
          %v4865 = vpop.permute.xlu0 %4864
          %4866 = vrot.lane.b32.xlu0 %v4754, 64
          %v4867 = vpop.permute.xlu0 %4866
          %4868 = vrot.lane.b32.xlu0 %v4755, 64
          %v4869 = vpop.permute.xlu0 %4868
          %4870 = vrot.lane.b32.xlu0 %v4756, 64
          %v4871 = vpop.permute.xlu0 %4870
          %4872 = vrot.lane.b32.xlu0 %v4757, 64
          %v4873 = vpop.permute.xlu0 %4872
          %4874 = vrot.lane.b32.xlu0 %v4758, 64
          %v4875 = vpop.permute.xlu0 %4874
          %4876 = vrot.lane.b32.xlu0 %v4759, 64
          %v4877 = vpop.permute.xlu0 %4876
          %4878 = vrot.lane.b32.xlu0 %v4760, 64
          %v4879 = vpop.permute.xlu0 %4878
          %4880 = vrot.lane.b32.xlu0 %v4761, 64
          %v4881 = vpop.permute.xlu0 %4880
          %4882 = vrot.lane.b32.xlu0 %v4762, 64
          %v4883 = vpop.permute.xlu0 %4882
          %4884 = vrot.lane.b32.xlu0 %v4763, 64
          %v4885 = vpop.permute.xlu0 %4884
          %4886 = vrot.lane.b32.xlu0 %v4764, 64
          %v4887 = vpop.permute.xlu0 %4886
          %4888 = vrot.lane.b32.xlu0 %v4765, 64
          %v4889 = vpop.permute.xlu0 %4888
          %4890 = vrot.lane.b32.xlu0 %v4766, 64
          %v4891 = vpop.permute.xlu0 %4890
          %4892 = vrot.lane.b32.xlu0 %v4767, 64
          %v4893 = vpop.permute.xlu0 %4892
          %4894 = vrot.lane.b32.xlu0 %v4768, 64
          %v4895 = vpop.permute.xlu0 %4894
          %4896 = vrot.lane.b32.xlu0 %v4769, 64
          %v4897 = vpop.permute.xlu0 %4896
          %4898 = vrot.lane.b32.xlu0 %v4770, 64
          %v4899 = vpop.permute.xlu0 %4898
          %vm4932 = vcmask 1048064
          %4933 = vst.msk [vmem:[#allocation4] sm:$0xff] %vm4932, %v4837
          %4934 = vst.msk [vmem:[#allocation4 + $0x10] sm:$0xff] %vm4932, %v4839
          %4935 = vst.msk [vmem:[#allocation4 + $0x20] sm:$0xff] %vm4932, %v4841
          %4936 = vst.msk [vmem:[#allocation4 + $0x30] sm:$0xff] %vm4932, %v4843
          %4937 = vst.msk [vmem:[#allocation4 + $0x40] sm:$0xff] %vm4932, %v4845
          %4938 = vst.msk [vmem:[#allocation4 + $0x50] sm:$0xff] %vm4932, %v4847
          %4939 = vst.msk [vmem:[#allocation4 + $0x60] sm:$0xff] %vm4932, %v4849
          %4940 = vst.msk [vmem:[#allocation4 + $0x70] sm:$0xff] %vm4932, %v4851
          %4941 = vst.msk [vmem:[#allocation4 + $0x80] sm:$0xff] %vm4932, %v4853
          %4942 = vst.msk [vmem:[#allocation4 + $0x90] sm:$0xff] %vm4932, %v4855
          %4943 = vst.msk [vmem:[#allocation4 + $0xa0] sm:$0xff] %vm4932, %v4857
          %4944 = vst.msk [vmem:[#allocation4 + $0xb0] sm:$0xff] %vm4932, %v4859
          %4945 = vst.msk [vmem:[#allocation4 + $0xc0] sm:$0xff] %vm4932, %v4861
          %4946 = vst.msk [vmem:[#allocation4 + $0xd0] sm:$0xff] %vm4932, %v4863
          %4947 = vst.msk [vmem:[#allocation4 + $0xe0] sm:$0xff] %vm4932, %v4865
          %4948 = vst.msk [vmem:[#allocation4 + $0xf0] sm:$0xff] %vm4932, %v4867
          %4949 = vst.msk [vmem:[#allocation4 + $0x100] sm:$0xff] %vm4932, %v4869
          %4950 = vst.msk [vmem:[#allocation4 + $0x110] sm:$0xff] %vm4932, %v4871
          %4951 = vst.msk [vmem:[#allocation4 + $0x120] sm:$0xff] %vm4932, %v4873
          %4952 = vst.msk [vmem:[#allocation4 + $0x130] sm:$0xff] %vm4932, %v4875
          %4953 = vst.msk [vmem:[#allocation4 + $0x140] sm:$0xff] %vm4932, %v4877
          %4954 = vst.msk [vmem:[#allocation4 + $0x150] sm:$0xff] %vm4932, %v4879
          %4955 = vst.msk [vmem:[#allocation4 + $0x160] sm:$0xff] %vm4932, %v4881
          %4956 = vst.msk [vmem:[#allocation4 + $0x170] sm:$0xff] %vm4932, %v4883
          %4957 = vst.msk [vmem:[#allocation4 + $0x180] sm:$0xff] %vm4932, %v4885
          %4958 = vst.msk [vmem:[#allocation4 + $0x190] sm:$0xff] %vm4932, %v4887
          %4959 = vst.msk [vmem:[#allocation4 + $0x1a0] sm:$0xff] %vm4932, %v4889
          %4960 = vst.msk [vmem:[#allocation4 + $0x1b0] sm:$0xff] %vm4932, %v4891
          %4961 = vst.msk [vmem:[#allocation4 + $0x1c0] sm:$0xff] %vm4932, %v4893
          %4962 = vst.msk [vmem:[#allocation4 + $0x1d0] sm:$0xff] %vm4932, %v4895
          %4963 = vst.msk [vmem:[#allocation4 + $0x1e0] sm:$0xff] %vm4932, %v4897
          %4964 = vst.msk [vmem:[#allocation4 + $0x1f0] sm:$0xff] %vm4932, %v4899
          %4965 = vst.msk [vmem:[#allocation4 + $0x8] sm:$0xff] %vm4771, %v4741
          %4966 = vst.msk [vmem:[#allocation4 + $0x18] sm:$0xff] %vm4771, %v4742
          %4967 = vst.msk [vmem:[#allocation4 + $0x28] sm:$0xff] %vm4771, %v4743
          %4968 = vst.msk [vmem:[#allocation4 + $0x38] sm:$0xff] %vm4771, %v4744
          %4969 = vst.msk [vmem:[#allocation4 + $0x48] sm:$0xff] %vm4771, %v4745
          %4970 = vst.msk [vmem:[#allocation4 + $0x58] sm:$0xff] %vm4771, %v4746
          %4971 = vst.msk [vmem:[#allocation4 + $0x68] sm:$0xff] %vm4771, %v4747
          %4972 = vst.msk [vmem:[#allocation4 + $0x78] sm:$0xff] %vm4771, %v4748
          %4973 = vst.msk [vmem:[#allocation4 + $0x88] sm:$0xff] %vm4771, %v4749
          %4974 = vst.msk [vmem:[#allocation4 + $0x98] sm:$0xff] %vm4771, %v4750
          %4975 = vst.msk [vmem:[#allocation4 + $0xa8] sm:$0xff] %vm4771, %v4751
          %4976 = vst.msk [vmem:[#allocation4 + $0xb8] sm:$0xff] %vm4771, %v4752
          %4977 = vst.msk [vmem:[#allocation4 + $0xc8] sm:$0xff] %vm4771, %v4753
          %4978 = vst.msk [vmem:[#allocation4 + $0xd8] sm:$0xff] %vm4771, %v4754
          %4979 = vst.msk [vmem:[#allocation4 + $0xe8] sm:$0xff] %vm4771, %v4755
          %4980 = vst.msk [vmem:[#allocation4 + $0xf8] sm:$0xff] %vm4771, %v4756
          %4981 = vst.msk [vmem:[#allocation4 + $0x108] sm:$0xff] %vm4771, %v4757
          %4982 = vst.msk [vmem:[#allocation4 + $0x118] sm:$0xff] %vm4771, %v4758
          %4983 = vst.msk [vmem:[#allocation4 + $0x128] sm:$0xff] %vm4771, %v4759
          %4984 = vst.msk [vmem:[#allocation4 + $0x138] sm:$0xff] %vm4771, %v4760
          %4985 = vst.msk [vmem:[#allocation4 + $0x148] sm:$0xff] %vm4771, %v4761
          %4986 = vst.msk [vmem:[#allocation4 + $0x158] sm:$0xff] %vm4771, %v4762
          %4987 = vst.msk [vmem:[#allocation4 + $0x168] sm:$0xff] %vm4771, %v4763
          %4988 = vst.msk [vmem:[#allocation4 + $0x178] sm:$0xff] %vm4771, %v4764
          %4989 = vst.msk [vmem:[#allocation4 + $0x188] sm:$0xff] %vm4771, %v4765
          %4990 = vst.msk [vmem:[#allocation4 + $0x198] sm:$0xff] %vm4771, %v4766
          %4991 = vst.msk [vmem:[#allocation4 + $0x1a8] sm:$0xff] %vm4771, %v4767
          %4992 = vst.msk [vmem:[#allocation4 + $0x1b8] sm:$0xff] %vm4771, %v4768
          %4993 = vst.msk [vmem:[#allocation4 + $0x1c8] sm:$0xff] %vm4771, %v4769
          %4994 = vst.msk [vmem:[#allocation4 + $0x1d8] sm:$0xff] %vm4771, %v4770
          %4995 = vst.msk [vmem:[#allocation4 + $0x1e8] sm:$0xff] %vm4771, 0.0
          %4996 = vst.msk [vmem:[#allocation4 + $0x1f8] sm:$0xff] %vm4771, 0.0
          %v4997 = vld [vmem:[#allocation4] sm:$0xff]
          %v4998 = vld [vmem:[#allocation4 + $0x8] sm:$0xff]
          %v4999 = vld [vmem:[#allocation4 + $0x10] sm:$0xff]
          %v5000 = vld [vmem:[#allocation4 + $0x18] sm:$0xff]
          %v5001 = vld [vmem:[#allocation4 + $0x20] sm:$0xff]
          %v5002 = vld [vmem:[#allocation4 + $0x28] sm:$0xff]
          %v5003 = vld [vmem:[#allocation4 + $0x30] sm:$0xff]
          %v5004 = vld [vmem:[#allocation4 + $0x38] sm:$0xff]
          %v5005 = vld [vmem:[#allocation4 + $0x40] sm:$0xff]
          %v5006 = vld [vmem:[#allocation4 + $0x48] sm:$0xff]
          %v5007 = vld [vmem:[#allocation4 + $0x50] sm:$0xff]
          %v5008 = vld [vmem:[#allocation4 + $0x58] sm:$0xff]
          %v5009 = vld [vmem:[#allocation4 + $0x60] sm:$0xff]
          %v5010 = vld [vmem:[#allocation4 + $0x68] sm:$0xff]
          %v5011 = vld [vmem:[#allocation4 + $0x70] sm:$0xff]
          %v5012 = vld [vmem:[#allocation4 + $0x78] sm:$0xff]
          %v5013 = vld [vmem:[#allocation4 + $0x80] sm:$0xff]
          %v5014 = vld [vmem:[#allocation4 + $0x88] sm:$0xff]
          %v5015 = vld [vmem:[#allocation4 + $0x90] sm:$0xff]
          %v5016 = vld [vmem:[#allocation4 + $0x98] sm:$0xff]
          %v5017 = vld [vmem:[#allocation4 + $0xa0] sm:$0xff]
          %v5018 = vld [vmem:[#allocation4 + $0xa8] sm:$0xff]
          %v5019 = vld [vmem:[#allocation4 + $0xb0] sm:$0xff]
          %v5020 = vld [vmem:[#allocation4 + $0xb8] sm:$0xff]
          %v5021 = vld [vmem:[#allocation4 + $0xc0] sm:$0xff]
          %v5022 = vld [vmem:[#allocation4 + $0xc8] sm:$0xff]
          %v5023 = vld [vmem:[#allocation4 + $0xd0] sm:$0xff]
          %v5024 = vld [vmem:[#allocation4 + $0xd8] sm:$0xff]
          %v5025 = vld [vmem:[#allocation4 + $0xe0] sm:$0xff]
          %v5026 = vld [vmem:[#allocation4 + $0xe8] sm:$0xff]
          %v5027 = vld [vmem:[#allocation4 + $0xf0] sm:$0xff]
          %v5028 = vld [vmem:[#allocation4 + $0xf8] sm:$0xff]
          %v5029 = vld [vmem:[#allocation4 + $0x100] sm:$0xff]
          %v5030 = vld [vmem:[#allocation4 + $0x108] sm:$0xff]
          %v5031 = vld [vmem:[#allocation4 + $0x110] sm:$0xff]
          %v5032 = vld [vmem:[#allocation4 + $0x118] sm:$0xff]
          %v5033 = vld [vmem:[#allocation4 + $0x120] sm:$0xff]
          %v5034 = vld [vmem:[#allocation4 + $0x128] sm:$0xff]
          %v5035 = vld [vmem:[#allocation4 + $0x130] sm:$0xff]
          %v5036 = vld [vmem:[#allocation4 + $0x138] sm:$0xff]
          %v5037 = vld [vmem:[#allocation4 + $0x140] sm:$0xff]
          %v5038 = vld [vmem:[#allocation4 + $0x148] sm:$0xff]
          %v5039 = vld [vmem:[#allocation4 + $0x150] sm:$0xff]
          %v5040 = vld [vmem:[#allocation4 + $0x158] sm:$0xff]
          %v5041 = vld [vmem:[#allocation4 + $0x160] sm:$0xff]
          %v5042 = vld [vmem:[#allocation4 + $0x168] sm:$0xff]
          %v5043 = vld [vmem:[#allocation4 + $0x170] sm:$0xff]
          %v5044 = vld [vmem:[#allocation4 + $0x178] sm:$0xff]
          %v5045 = vld [vmem:[#allocation4 + $0x180] sm:$0xff]
          %v5046 = vld [vmem:[#allocation4 + $0x188] sm:$0xff]
          %v5047 = vld [vmem:[#allocation4 + $0x190] sm:$0xff]
          %v5048 = vld [vmem:[#allocation4 + $0x198] sm:$0xff]
          %v5049 = vld [vmem:[#allocation4 + $0x1a0] sm:$0xff]
          %v5050 = vld [vmem:[#allocation4 + $0x1a8] sm:$0xff]
          %v5051 = vld [vmem:[#allocation4 + $0x1b0] sm:$0xff]
          %v5052 = vld [vmem:[#allocation4 + $0x1b8] sm:$0xff]
          %v5053 = vld [vmem:[#allocation4 + $0x1c0] sm:$0xff]
          %v5054 = vld [vmem:[#allocation4 + $0x1c8] sm:$0xff]
          %v5055 = vld [vmem:[#allocation4 + $0x1d0] sm:$0xff]
          %v5056 = vld [vmem:[#allocation4 + $0x1d8] sm:$0xff]
          %v5057 = vld [vmem:[#allocation4 + $0x1e0] sm:$0xff]
          %v5058 = vld [vmem:[#allocation4 + $0x1e8] sm:$0xff]
          %v5059 = vld [vmem:[#allocation4 + $0x1f0] sm:$0xff]
          %v5060 = vld [vmem:[#allocation4 + $0x1f8] sm:$0xff]
          %v5061 = vld [vmem:[%s449] sm:$0xff]
          %v5062 = vld [vmem:[%s449 + $0x8] sm:$0xff]
          %v5063 = vld [vmem:[%s449 + $0x10] sm:$0xff]
          %v5064 = vld [vmem:[%s449 + $0x18] sm:$0xff]
          %v5065 = vld [vmem:[%s449 + $0x20] sm:$0xff]
          %v5066 = vld [vmem:[%s449 + $0x28] sm:$0xff]
          %v5067 = vld [vmem:[%s449 + $0x30] sm:$0xff]
          %v5068 = vld [vmem:[%s449 + $0x38] sm:$0xff]
          %v5069 = vld [vmem:[%s449 + $0x40] sm:$0xff]
          %v5070 = vld [vmem:[%s449 + $0x48] sm:$0xff]
          %v5071 = vld [vmem:[%s449 + $0x50] sm:$0xff]
          %v5072 = vld [vmem:[%s449 + $0x58] sm:$0xff]
          %v5073 = vld [vmem:[%s449 + $0x60] sm:$0xff]
          %v5074 = vld [vmem:[%s449 + $0x68] sm:$0xff]
          %v5075 = vld [vmem:[%s449 + $0x70] sm:$0xff]
          %v5076 = vld [vmem:[%s449 + $0x78] sm:$0xff]
          %v5077 = vld [vmem:[%s449 + $0x80] sm:$0xff]
          %v5078 = vld [vmem:[%s449 + $0x88] sm:$0xff]
          %v5079 = vld [vmem:[%s449 + $0x90] sm:$0xff]
          %v5080 = vld [vmem:[%s449 + $0x98] sm:$0xff]
          %v5081 = vld [vmem:[%s449 + $0xa0] sm:$0xff]
          %v5082 = vld [vmem:[%s449 + $0xa8] sm:$0xff]
          %v5083 = vld [vmem:[%s449 + $0xb0] sm:$0xff]
          %v5084 = vld [vmem:[%s449 + $0xb8] sm:$0xff]
          %v5086 = vsel %vm4771, %v4998, 0
          %v5089 = vsel %vm4771, %v5000, 0
          %v5092 = vsel %vm4771, %v5002, 0
          %v5095 = vsel %vm4771, %v5004, 0
          %v5098 = vsel %vm4771, %v5006, 0
          %v5101 = vsel %vm4771, %v5008, 0
          %v5104 = vsel %vm4771, %v5010, 0
          %v5107 = vsel %vm4771, %v5012, 0
          %v5110 = vsel %vm4771, %v5014, 0
          %v5113 = vsel %vm4771, %v5016, 0
          %v5116 = vsel %vm4771, %v5018, 0
          %v5119 = vsel %vm4771, %v5020, 0
          %v5122 = vsel %vm4771, %v5022, 0
          %v5125 = vsel %vm4771, %v5024, 0
          %v5128 = vsel %vm4771, %v5026, 0
          %v5131 = vsel %vm4771, %v5028, 0
          %v5134 = vsel %vm4771, %v5030, 0
          %v5137 = vsel %vm4771, %v5032, 0
          %v5140 = vsel %vm4771, %v5034, 0
          %v5143 = vsel %vm4771, %v5036, 0
          %v5146 = vsel %vm4771, %v5038, 0
          %v5149 = vsel %vm4771, %v5040, 0
          %v5152 = vsel %vm4771, %v5042, 0
          %v5155 = vsel %vm4771, %v5044, 0
          %v5158 = vsel %vm4771, %v5046, 0
          %v5161 = vsel %vm4771, %v5048, 0
          %v5164 = vsel %vm4771, %v5050, 0
          %v5167 = vsel %vm4771, %v5052, 0
          %v5170 = vsel %vm4771, %v5054, 0
          %v5173 = vsel %vm4771, %v5056, 0
          %v5176 = vsel %vm4771, %v5058, 0
          %v5179 = vsel %vm4771, %v5060, 0
          %5181 = vmatpush.msra.mxu0 %v5076
          %5182 = vmatpush.msra.mxu0 %v5075
          %5183 = vmatpush.msra.mxu0 %v5074
          %5184 = vmatpush.msra.mxu0 %v5073
          %5185 = vmatpush.msra.mxu0 %v5072
          %5186 = vmatpush.msra.mxu0 %v5071
          %5187 = vmatpush.msra.mxu0 %v5070
          %5188 = vmatpush.msra.mxu0 %v5069
          %5189 = vmatpush.msra.mxu0 %v5068
          %5190 = vmatpush.msra.mxu0 %v5067
          %5191 = vmatpush.msra.mxu0 %v5066
          %5192 = vmatpush.msra.mxu0 %v5065
          %5193 = vmatpush.msra.mxu0 %v5064
          %5194 = vmatpush.msra.mxu0 %v5063
          %5195 = vmatpush.msra.mxu0 %v5062
          %5196 = vmatpush.msra.mxu0 %v5061
          %5197 = vmatmul.f32.gmra.mxu0 %v4997
          %v5198 = vpop.f32.mrf.mxu0
          %v5199 = vadd.f32 0.0, %v5198
          %5200 = vmatmul.f32.gmra.mxu0 %v4999
          %v5201 = vpop.f32.mrf.mxu0
          %v5202 = vadd.f32 0.0, %v5201
          %5203 = vmatmul.f32.gmra.mxu0 %v5001
          %v5204 = vpop.f32.mrf.mxu0
          %v5205 = vadd.f32 0.0, %v5204
          %5206 = vmatmul.f32.gmra.mxu0 %v5003
          %v5207 = vpop.f32.mrf.mxu0
          %v5208 = vadd.f32 0.0, %v5207
          %5209 = vmatmul.f32.gmra.mxu0 %v5005
          %v5210 = vpop.f32.mrf.mxu0
          %v5211 = vadd.f32 0.0, %v5210
          %5212 = vmatmul.f32.gmra.mxu0 %v5007
          %v5213 = vpop.f32.mrf.mxu0
          %v5214 = vadd.f32 0.0, %v5213
          %5215 = vmatmul.f32.gmra.mxu0 %v5009
          %v5216 = vpop.f32.mrf.mxu0
          %v5217 = vadd.f32 0.0, %v5216
          %5218 = vmatmul.f32.gmra.mxu0 %v5011
          %v5219 = vpop.f32.mrf.mxu0
          %v5220 = vadd.f32 0.0, %v5219
          %5221 = vmatmul.f32.gmra.mxu0 %v5013
          %v5222 = vpop.f32.mrf.mxu0
          %v5223 = vadd.f32 0.0, %v5222
          %5224 = vmatmul.f32.gmra.mxu0 %v5015
          %v5225 = vpop.f32.mrf.mxu0
          %v5226 = vadd.f32 0.0, %v5225
          %5227 = vmatmul.f32.gmra.mxu0 %v5017
          %v5228 = vpop.f32.mrf.mxu0
          %v5229 = vadd.f32 0.0, %v5228
          %5230 = vmatmul.f32.gmra.mxu0 %v5019
          %v5231 = vpop.f32.mrf.mxu0
          %v5232 = vadd.f32 0.0, %v5231
          %5233 = vmatmul.f32.gmra.mxu0 %v5021
          %v5234 = vpop.f32.mrf.mxu0
          %v5235 = vadd.f32 0.0, %v5234
          %5236 = vmatmul.f32.gmra.mxu0 %v5023
          %v5237 = vpop.f32.mrf.mxu0
          %v5238 = vadd.f32 0.0, %v5237
          %5239 = vmatmul.f32.gmra.mxu0 %v5025
          %v5240 = vpop.f32.mrf.mxu0
          %v5241 = vadd.f32 0.0, %v5240
          %5242 = vmatmul.f32.gmra.mxu0 %v5027
          %v5243 = vpop.f32.mrf.mxu0
          %v5244 = vadd.f32 0.0, %v5243
          %5245 = vmatmul.f32.gmra.mxu0 %v5029
          %v5246 = vpop.f32.mrf.mxu0
          %v5247 = vadd.f32 0.0, %v5246
          %5248 = vmatmul.f32.gmra.mxu0 %v5031
          %v5249 = vpop.f32.mrf.mxu0
          %v5250 = vadd.f32 0.0, %v5249
          %5251 = vmatmul.f32.gmra.mxu0 %v5033
          %v5252 = vpop.f32.mrf.mxu0
          %v5253 = vadd.f32 0.0, %v5252
          %5254 = vmatmul.f32.gmra.mxu0 %v5035
          %v5255 = vpop.f32.mrf.mxu0
          %v5256 = vadd.f32 0.0, %v5255
          %5257 = vmatmul.f32.gmra.mxu0 %v5037
          %v5258 = vpop.f32.mrf.mxu0
          %v5259 = vadd.f32 0.0, %v5258
          %5260 = vmatmul.f32.gmra.mxu0 %v5039
          %v5261 = vpop.f32.mrf.mxu0
          %v5262 = vadd.f32 0.0, %v5261
          %5263 = vmatmul.f32.gmra.mxu0 %v5041
          %v5264 = vpop.f32.mrf.mxu0
          %v5265 = vadd.f32 0.0, %v5264
          %5266 = vmatmul.f32.gmra.mxu0 %v5043
          %v5267 = vpop.f32.mrf.mxu0
          %v5268 = vadd.f32 0.0, %v5267
          %5269 = vmatmul.f32.gmra.mxu0 %v5045
          %v5270 = vpop.f32.mrf.mxu0
          %v5271 = vadd.f32 0.0, %v5270
          %5272 = vmatmul.f32.gmra.mxu0 %v5047
          %v5273 = vpop.f32.mrf.mxu0
          %v5274 = vadd.f32 0.0, %v5273
          %5275 = vmatmul.f32.gmra.mxu0 %v5049
          %v5276 = vpop.f32.mrf.mxu0
          %v5277 = vadd.f32 0.0, %v5276
          %5278 = vmatmul.f32.gmra.mxu0 %v5051
          %v5279 = vpop.f32.mrf.mxu0
          %v5280 = vadd.f32 0.0, %v5279
          %5281 = vmatmul.f32.gmra.mxu0 %v5053
          %v5282 = vpop.f32.mrf.mxu0
          %v5283 = vadd.f32 0.0, %v5282
          %5284 = vmatmul.f32.gmra.mxu0 %v5055
          %v5285 = vpop.f32.mrf.mxu0
          %v5286 = vadd.f32 0.0, %v5285
          %5287 = vmatmul.f32.gmra.mxu0 %v5057
          %v5288 = vpop.f32.mrf.mxu0
          %v5289 = vadd.f32 0.0, %v5288
          %5290 = vmatmul.f32.gmra.mxu0 %v5059
          %v5291 = vpop.f32.mrf.mxu0
          %v5292 = vadd.f32 0.0, %v5291
          %5293 = vdwg.mxu0
          %5294 = vmatpush.msra.mxu0 0.0
          %5295 = vmatpush.msra.mxu0 0.0
          %5296 = vmatpush.msra.mxu0 0.0
          %5297 = vmatpush.msra.mxu0 0.0
          %5298 = vmatpush.msra.mxu0 0.0
          %5299 = vmatpush.msra.mxu0 0.0
          %5300 = vmatpush.msra.mxu0 0.0
          %5301 = vmatpush.msra.mxu0 0.0
          %5302 = vmatpush.msra.mxu0 %v5084
          %5303 = vmatpush.msra.mxu0 %v5083
          %5304 = vmatpush.msra.mxu0 %v5082
          %5305 = vmatpush.msra.mxu0 %v5081
          %5306 = vmatpush.msra.mxu0 %v5080
          %5307 = vmatpush.msra.mxu0 %v5079
          %5308 = vmatpush.msra.mxu0 %v5078
          %5309 = vmatpush.msra.mxu0 %v5077
          %5310 = vmatmul.f32.gmra.mxu0 %v5086
          %v5311 = vpop.f32.mrf.mxu0
          %v5312 = vadd.f32 %v5199, %v5311
          %5313 = vmatmul.f32.gmra.mxu0 %v5089
          %v5314 = vpop.f32.mrf.mxu0
          %v5315 = vadd.f32 %v5202, %v5314
          %5316 = vmatmul.f32.gmra.mxu0 %v5092
          %v5317 = vpop.f32.mrf.mxu0
          %v5318 = vadd.f32 %v5205, %v5317
          %5319 = vmatmul.f32.gmra.mxu0 %v5095
          %v5320 = vpop.f32.mrf.mxu0
          %v5321 = vadd.f32 %v5208, %v5320
          %5322 = vmatmul.f32.gmra.mxu0 %v5098
          %v5323 = vpop.f32.mrf.mxu0
          %v5324 = vadd.f32 %v5211, %v5323
          %5325 = vmatmul.f32.gmra.mxu0 %v5101
          %v5326 = vpop.f32.mrf.mxu0
          %v5327 = vadd.f32 %v5214, %v5326
          %5328 = vmatmul.f32.gmra.mxu0 %v5104
          %v5329 = vpop.f32.mrf.mxu0
          %v5330 = vadd.f32 %v5217, %v5329
          %5331 = vmatmul.f32.gmra.mxu0 %v5107
          %v5332 = vpop.f32.mrf.mxu0
          %v5333 = vadd.f32 %v5220, %v5332
          %5334 = vmatmul.f32.gmra.mxu0 %v5110
          %v5335 = vpop.f32.mrf.mxu0
          %v5336 = vadd.f32 %v5223, %v5335
          %5337 = vmatmul.f32.gmra.mxu0 %v5113
          %v5338 = vpop.f32.mrf.mxu0
          %v5339 = vadd.f32 %v5226, %v5338
          %5340 = vmatmul.f32.gmra.mxu0 %v5116
          %v5341 = vpop.f32.mrf.mxu0
          %v5342 = vadd.f32 %v5229, %v5341
          %5343 = vmatmul.f32.gmra.mxu0 %v5119
          %v5344 = vpop.f32.mrf.mxu0
          %v5345 = vadd.f32 %v5232, %v5344
          %5346 = vmatmul.f32.gmra.mxu0 %v5122
          %v5347 = vpop.f32.mrf.mxu0
          %v5348 = vadd.f32 %v5235, %v5347
          %5349 = vmatmul.f32.gmra.mxu0 %v5125
          %v5350 = vpop.f32.mrf.mxu0
          %v5351 = vadd.f32 %v5238, %v5350
          %5352 = vmatmul.f32.gmra.mxu0 %v5128
          %v5353 = vpop.f32.mrf.mxu0
          %v5354 = vadd.f32 %v5241, %v5353
          %5355 = vmatmul.f32.gmra.mxu0 %v5131
          %v5356 = vpop.f32.mrf.mxu0
          %v5357 = vadd.f32 %v5244, %v5356
          %5358 = vmatmul.f32.gmra.mxu0 %v5134
          %v5359 = vpop.f32.mrf.mxu0
          %v5360 = vadd.f32 %v5247, %v5359
          %5361 = vmatmul.f32.gmra.mxu0 %v5137
          %v5362 = vpop.f32.mrf.mxu0
          %v5363 = vadd.f32 %v5250, %v5362
          %5364 = vmatmul.f32.gmra.mxu0 %v5140
          %v5365 = vpop.f32.mrf.mxu0
          %v5366 = vadd.f32 %v5253, %v5365
          %5367 = vmatmul.f32.gmra.mxu0 %v5143
          %v5368 = vpop.f32.mrf.mxu0
          %v5369 = vadd.f32 %v5256, %v5368
          %5370 = vmatmul.f32.gmra.mxu0 %v5146
          %v5371 = vpop.f32.mrf.mxu0
          %v5372 = vadd.f32 %v5259, %v5371
          %5373 = vmatmul.f32.gmra.mxu0 %v5149
          %v5374 = vpop.f32.mrf.mxu0
          %v5375 = vadd.f32 %v5262, %v5374
          %5376 = vmatmul.f32.gmra.mxu0 %v5152
          %v5377 = vpop.f32.mrf.mxu0
          %v5378 = vadd.f32 %v5265, %v5377
          %5379 = vmatmul.f32.gmra.mxu0 %v5155
          %v5380 = vpop.f32.mrf.mxu0
          %v5381 = vadd.f32 %v5268, %v5380
          %5382 = vmatmul.f32.gmra.mxu0 %v5158
          %v5383 = vpop.f32.mrf.mxu0
          %v5384 = vadd.f32 %v5271, %v5383
          %5385 = vmatmul.f32.gmra.mxu0 %v5161
          %v5386 = vpop.f32.mrf.mxu0
          %v5387 = vadd.f32 %v5274, %v5386
          %5388 = vmatmul.f32.gmra.mxu0 %v5164
          %v5389 = vpop.f32.mrf.mxu0
          %v5390 = vadd.f32 %v5277, %v5389
          %5391 = vmatmul.f32.gmra.mxu0 %v5167
          %v5392 = vpop.f32.mrf.mxu0
          %v5393 = vadd.f32 %v5280, %v5392
          %5394 = vmatmul.f32.gmra.mxu0 %v5170
          %v5395 = vpop.f32.mrf.mxu0
          %v5396 = vadd.f32 %v5283, %v5395
          %5397 = vmatmul.f32.gmra.mxu0 %v5173
          %v5398 = vpop.f32.mrf.mxu0
          %v5399 = vadd.f32 %v5286, %v5398
          %5400 = vmatmul.f32.gmra.mxu0 %v5176
          %v5401 = vpop.f32.mrf.mxu0
          %v5402 = vadd.f32 %v5289, %v5401
          %5403 = vmatmul.f32.gmra.mxu0 %v5179
          %v5404 = vpop.f32.mrf.mxu0
          %v5405 = vadd.f32 %v5292, %v5404
          %5406 = vdwg.mxu0
          %s5407 = scalar_lea.vmem %s449, 192
          %v5408 = vld [vmem:[%s5407] sm:$0xff]
          %v5409 = vld [vmem:[%s5407 + $0x8] sm:$0xff]
          %v5410 = vld [vmem:[%s5407 + $0x10] sm:$0xff]
          %v5411 = vld [vmem:[%s5407 + $0x18] sm:$0xff]
          %v5412 = vld [vmem:[%s5407 + $0x20] sm:$0xff]
          %v5413 = vld [vmem:[%s5407 + $0x28] sm:$0xff]
          %v5414 = vld [vmem:[%s5407 + $0x30] sm:$0xff]
          %v5415 = vld [vmem:[%s5407 + $0x38] sm:$0xff]
          %v5416 = vld [vmem:[%s5407 + $0x40] sm:$0xff]
          %v5417 = vld [vmem:[%s5407 + $0x48] sm:$0xff]
          %v5418 = vld [vmem:[%s5407 + $0x50] sm:$0xff]
          %v5419 = vld [vmem:[%s5407 + $0x58] sm:$0xff]
          %v5420 = vld [vmem:[%s5407 + $0x60] sm:$0xff]
          %v5421 = vld [vmem:[%s5407 + $0x68] sm:$0xff]
          %v5422 = vld [vmem:[%s5407 + $0x70] sm:$0xff]
          %v5423 = vld [vmem:[%s5407 + $0x78] sm:$0xff]
          %v5424 = vld [vmem:[%s5407 + $0x80] sm:$0xff]
          %v5425 = vld [vmem:[%s5407 + $0x88] sm:$0xff]
          %v5426 = vld [vmem:[%s5407 + $0x90] sm:$0xff]
          %v5427 = vld [vmem:[%s5407 + $0x98] sm:$0xff]
          %v5428 = vld [vmem:[%s5407 + $0xa0] sm:$0xff]
          %v5429 = vld [vmem:[%s5407 + $0xa8] sm:$0xff]
          %v5430 = vld [vmem:[%s5407 + $0xb0] sm:$0xff]
          %v5431 = vld [vmem:[%s5407 + $0xb8] sm:$0xff]
          %s5432 = scalar_lea.vmem %s449, 384
          %v5433 = vld [vmem:[%s5432] sm:$0xff]
          %v5434 = vld [vmem:[%s5432 + $0x8] sm:$0xff]
          %v5435 = vld [vmem:[%s5432 + $0x10] sm:$0xff]
          %v5436 = vld [vmem:[%s5432 + $0x18] sm:$0xff]
          %v5437 = vld [vmem:[%s5432 + $0x20] sm:$0xff]
          %v5438 = vld [vmem:[%s5432 + $0x28] sm:$0xff]
          %v5439 = vld [vmem:[%s5432 + $0x30] sm:$0xff]
          %v5440 = vld [vmem:[%s5432 + $0x38] sm:$0xff]
          %v5441 = vld [vmem:[%s5432 + $0x40] sm:$0xff]
          %v5442 = vld [vmem:[%s5432 + $0x48] sm:$0xff]
          %v5443 = vld [vmem:[%s5432 + $0x50] sm:$0xff]
          %v5444 = vld [vmem:[%s5432 + $0x58] sm:$0xff]
          %v5445 = vld [vmem:[%s5432 + $0x60] sm:$0xff]
          %v5446 = vld [vmem:[%s5432 + $0x68] sm:$0xff]
          %v5447 = vld [vmem:[%s5432 + $0x70] sm:$0xff]
          %v5448 = vld [vmem:[%s5432 + $0x78] sm:$0xff]
          %v5449 = vld [vmem:[%s5432 + $0x80] sm:$0xff]
          %v5450 = vld [vmem:[%s5432 + $0x88] sm:$0xff]
          %v5451 = vld [vmem:[%s5432 + $0x90] sm:$0xff]
          %v5452 = vld [vmem:[%s5432 + $0x98] sm:$0xff]
          %v5453 = vld [vmem:[%s5432 + $0xa0] sm:$0xff]
          %v5454 = vld [vmem:[%s5432 + $0xa8] sm:$0xff]
          %v5455 = vld [vmem:[%s5432 + $0xb0] sm:$0xff]
          %v5456 = vld [vmem:[%s5432 + $0xb8] sm:$0xff]
          %5457 = vmatpush.msra.mxu0 %v5448
          %5458 = vmatpush.msra.mxu0 %v5447
          %5459 = vmatpush.msra.mxu0 %v5446
          %5460 = vmatpush.msra.mxu0 %v5445
          %5461 = vmatpush.msra.mxu0 %v5444
          %5462 = vmatpush.msra.mxu0 %v5443
          %5463 = vmatpush.msra.mxu0 %v5442
          %5464 = vmatpush.msra.mxu0 %v5441
          %5465 = vmatpush.msra.mxu0 %v5440
          %5466 = vmatpush.msra.mxu0 %v5439
          %5467 = vmatpush.msra.mxu0 %v5438
          %5468 = vmatpush.msra.mxu0 %v5437
          %5469 = vmatpush.msra.mxu0 %v5436
          %5470 = vmatpush.msra.mxu0 %v5435
          %5471 = vmatpush.msra.mxu0 %v5434
          %5472 = vmatpush.msra.mxu0 %v5433
          %5473 = vmatmul.f32.gmra.mxu0 %v4997
          %v5474 = vpop.f32.mrf.mxu0
          %v5475 = vadd.f32 0.0, %v5474
          %5476 = vmatmul.f32.gmra.mxu0 %v4999
          %v5477 = vpop.f32.mrf.mxu0
          %v5478 = vadd.f32 0.0, %v5477
          %5479 = vmatmul.f32.gmra.mxu0 %v5001
          %v5480 = vpop.f32.mrf.mxu0
          %v5481 = vadd.f32 0.0, %v5480
          %5482 = vmatmul.f32.gmra.mxu0 %v5003
          %v5483 = vpop.f32.mrf.mxu0
          %v5484 = vadd.f32 0.0, %v5483
          %5485 = vmatmul.f32.gmra.mxu0 %v5005
          %v5486 = vpop.f32.mrf.mxu0
          %v5487 = vadd.f32 0.0, %v5486
          %5488 = vmatmul.f32.gmra.mxu0 %v5007
          %v5489 = vpop.f32.mrf.mxu0
          %v5490 = vadd.f32 0.0, %v5489
          %5491 = vmatmul.f32.gmra.mxu0 %v5009
          %v5492 = vpop.f32.mrf.mxu0
          %v5493 = vadd.f32 0.0, %v5492
          %5494 = vmatmul.f32.gmra.mxu0 %v5011
          %v5495 = vpop.f32.mrf.mxu0
          %v5496 = vadd.f32 0.0, %v5495
          %5497 = vmatmul.f32.gmra.mxu0 %v5013
          %v5498 = vpop.f32.mrf.mxu0
          %v5499 = vadd.f32 0.0, %v5498
          %5500 = vmatmul.f32.gmra.mxu0 %v5015
          %v5501 = vpop.f32.mrf.mxu0
          %v5502 = vadd.f32 0.0, %v5501
          %5503 = vmatmul.f32.gmra.mxu0 %v5017
          %v5504 = vpop.f32.mrf.mxu0
          %v5505 = vadd.f32 0.0, %v5504
          %5506 = vmatmul.f32.gmra.mxu0 %v5019
          %v5507 = vpop.f32.mrf.mxu0
          %v5508 = vadd.f32 0.0, %v5507
          %5509 = vmatmul.f32.gmra.mxu0 %v5021
          %v5510 = vpop.f32.mrf.mxu0
          %v5511 = vadd.f32 0.0, %v5510
          %5512 = vmatmul.f32.gmra.mxu0 %v5023
          %v5513 = vpop.f32.mrf.mxu0
          %v5514 = vadd.f32 0.0, %v5513
          %5515 = vmatmul.f32.gmra.mxu0 %v5025
          %v5516 = vpop.f32.mrf.mxu0
          %v5517 = vadd.f32 0.0, %v5516
          %5518 = vmatmul.f32.gmra.mxu0 %v5027
          %v5519 = vpop.f32.mrf.mxu0
          %v5520 = vadd.f32 0.0, %v5519
          %5521 = vmatmul.f32.gmra.mxu0 %v5029
          %v5522 = vpop.f32.mrf.mxu0
          %v5523 = vadd.f32 0.0, %v5522
          %5524 = vmatmul.f32.gmra.mxu0 %v5031
          %v5525 = vpop.f32.mrf.mxu0
          %v5526 = vadd.f32 0.0, %v5525
          %5527 = vmatmul.f32.gmra.mxu0 %v5033
          %v5528 = vpop.f32.mrf.mxu0
          %v5529 = vadd.f32 0.0, %v5528
          %5530 = vmatmul.f32.gmra.mxu0 %v5035
          %v5531 = vpop.f32.mrf.mxu0
          %v5532 = vadd.f32 0.0, %v5531
          %5533 = vmatmul.f32.gmra.mxu0 %v5037
          %v5534 = vpop.f32.mrf.mxu0
          %v5535 = vadd.f32 0.0, %v5534
          %5536 = vmatmul.f32.gmra.mxu0 %v5039
          %v5537 = vpop.f32.mrf.mxu0
          %v5538 = vadd.f32 0.0, %v5537
          %5539 = vmatmul.f32.gmra.mxu0 %v5041
          %v5540 = vpop.f32.mrf.mxu0
          %v5541 = vadd.f32 0.0, %v5540
          %5542 = vmatmul.f32.gmra.mxu0 %v5043
          %v5543 = vpop.f32.mrf.mxu0
          %v5544 = vadd.f32 0.0, %v5543
          %5545 = vmatmul.f32.gmra.mxu0 %v5045
          %v5546 = vpop.f32.mrf.mxu0
          %v5547 = vadd.f32 0.0, %v5546
          %5548 = vmatmul.f32.gmra.mxu0 %v5047
          %v5549 = vpop.f32.mrf.mxu0
          %v5550 = vadd.f32 0.0, %v5549
          %5551 = vmatmul.f32.gmra.mxu0 %v5049
          %v5552 = vpop.f32.mrf.mxu0
          %v5553 = vadd.f32 0.0, %v5552
          %5554 = vmatmul.f32.gmra.mxu0 %v5051
          %v5555 = vpop.f32.mrf.mxu0
          %v5556 = vadd.f32 0.0, %v5555
          %5557 = vmatmul.f32.gmra.mxu0 %v5053
          %v5558 = vpop.f32.mrf.mxu0
          %v5559 = vadd.f32 0.0, %v5558
          %5560 = vmatmul.f32.gmra.mxu0 %v5055
          %v5561 = vpop.f32.mrf.mxu0
          %v5562 = vadd.f32 0.0, %v5561
          %5563 = vmatmul.f32.gmra.mxu0 %v5057
          %v5564 = vpop.f32.mrf.mxu0
          %v5565 = vadd.f32 0.0, %v5564
          %5566 = vmatmul.f32.gmra.mxu0 %v5059
          %v5567 = vpop.f32.mrf.mxu0
          %v5568 = vadd.f32 0.0, %v5567
          %5569 = vdwg.mxu0
          %5570 = vmatpush.msra.mxu0 0.0
          %5571 = vmatpush.msra.mxu0 0.0
          %5572 = vmatpush.msra.mxu0 0.0
          %5573 = vmatpush.msra.mxu0 0.0
          %5574 = vmatpush.msra.mxu0 0.0
          %5575 = vmatpush.msra.mxu0 0.0
          %5576 = vmatpush.msra.mxu0 0.0
          %5577 = vmatpush.msra.mxu0 0.0
          %5578 = vmatpush.msra.mxu0 %v5456
          %5579 = vmatpush.msra.mxu0 %v5455
          %5580 = vmatpush.msra.mxu0 %v5454
          %5581 = vmatpush.msra.mxu0 %v5453
          %5582 = vmatpush.msra.mxu0 %v5452
          %5583 = vmatpush.msra.mxu0 %v5451
          %5584 = vmatpush.msra.mxu0 %v5450
          %5585 = vmatpush.msra.mxu0 %v5449
          %5586 = vmatmul.f32.gmra.mxu0 %v5086
          %v5587 = vpop.f32.mrf.mxu0
          %v5588 = vadd.f32 %v5475, %v5587
          %5589 = vmatmul.f32.gmra.mxu0 %v5089
          %v5590 = vpop.f32.mrf.mxu0
          %v5591 = vadd.f32 %v5478, %v5590
          %5592 = vmatmul.f32.gmra.mxu0 %v5092
          %v5593 = vpop.f32.mrf.mxu0
          %v5594 = vadd.f32 %v5481, %v5593
          %5595 = vmatmul.f32.gmra.mxu0 %v5095
          %v5596 = vpop.f32.mrf.mxu0
          %v5597 = vadd.f32 %v5484, %v5596
          %5598 = vmatmul.f32.gmra.mxu0 %v5098
          %v5599 = vpop.f32.mrf.mxu0
          %v5600 = vadd.f32 %v5487, %v5599
          %5601 = vmatmul.f32.gmra.mxu0 %v5101
          %v5602 = vpop.f32.mrf.mxu0
          %v5603 = vadd.f32 %v5490, %v5602
          %5604 = vmatmul.f32.gmra.mxu0 %v5104
          %v5605 = vpop.f32.mrf.mxu0
          %v5606 = vadd.f32 %v5493, %v5605
          %5607 = vmatmul.f32.gmra.mxu0 %v5107
          %v5608 = vpop.f32.mrf.mxu0
          %v5609 = vadd.f32 %v5496, %v5608
          %5610 = vmatmul.f32.gmra.mxu0 %v5110
          %v5611 = vpop.f32.mrf.mxu0
          %v5612 = vadd.f32 %v5499, %v5611
          %5613 = vmatmul.f32.gmra.mxu0 %v5113
          %v5614 = vpop.f32.mrf.mxu0
          %v5615 = vadd.f32 %v5502, %v5614
          %5616 = vmatmul.f32.gmra.mxu0 %v5116
          %v5617 = vpop.f32.mrf.mxu0
          %v5618 = vadd.f32 %v5505, %v5617
          %5619 = vmatmul.f32.gmra.mxu0 %v5119
          %v5620 = vpop.f32.mrf.mxu0
          %v5621 = vadd.f32 %v5508, %v5620
          %5622 = vmatmul.f32.gmra.mxu0 %v5122
          %v5623 = vpop.f32.mrf.mxu0
          %v5624 = vadd.f32 %v5511, %v5623
          %5625 = vmatmul.f32.gmra.mxu0 %v5125
          %v5626 = vpop.f32.mrf.mxu0
          %v5627 = vadd.f32 %v5514, %v5626
          %5628 = vmatmul.f32.gmra.mxu0 %v5128
          %v5629 = vpop.f32.mrf.mxu0
          %v5630 = vadd.f32 %v5517, %v5629
          %5631 = vmatmul.f32.gmra.mxu0 %v5131
          %v5632 = vpop.f32.mrf.mxu0
          %v5633 = vadd.f32 %v5520, %v5632
          %5634 = vmatmul.f32.gmra.mxu0 %v5134
          %v5635 = vpop.f32.mrf.mxu0
          %v5636 = vadd.f32 %v5523, %v5635
          %5637 = vmatmul.f32.gmra.mxu0 %v5137
          %v5638 = vpop.f32.mrf.mxu0
          %v5639 = vadd.f32 %v5526, %v5638
          %5640 = vmatmul.f32.gmra.mxu0 %v5140
          %v5641 = vpop.f32.mrf.mxu0
          %v5642 = vadd.f32 %v5529, %v5641
          %5643 = vmatmul.f32.gmra.mxu0 %v5143
          %v5644 = vpop.f32.mrf.mxu0
          %v5645 = vadd.f32 %v5532, %v5644
          %5646 = vmatmul.f32.gmra.mxu0 %v5146
          %v5647 = vpop.f32.mrf.mxu0
          %v5648 = vadd.f32 %v5535, %v5647
          %5649 = vmatmul.f32.gmra.mxu0 %v5149
          %v5650 = vpop.f32.mrf.mxu0
          %v5651 = vadd.f32 %v5538, %v5650
          %5652 = vmatmul.f32.gmra.mxu0 %v5152
          %v5653 = vpop.f32.mrf.mxu0
          %v5654 = vadd.f32 %v5541, %v5653
          %5655 = vmatmul.f32.gmra.mxu0 %v5155
          %v5656 = vpop.f32.mrf.mxu0
          %v5657 = vadd.f32 %v5544, %v5656
          %5658 = vmatmul.f32.gmra.mxu0 %v5158
          %v5659 = vpop.f32.mrf.mxu0
          %v5660 = vadd.f32 %v5547, %v5659
          %5661 = vmatmul.f32.gmra.mxu0 %v5161
          %v5662 = vpop.f32.mrf.mxu0
          %v5663 = vadd.f32 %v5550, %v5662
          %5664 = vmatmul.f32.gmra.mxu0 %v5164
          %v5665 = vpop.f32.mrf.mxu0
          %v5666 = vadd.f32 %v5553, %v5665
          %5667 = vmatmul.f32.gmra.mxu0 %v5167
          %v5668 = vpop.f32.mrf.mxu0
          %v5669 = vadd.f32 %v5556, %v5668
          %5670 = vmatmul.f32.gmra.mxu0 %v5170
          %v5671 = vpop.f32.mrf.mxu0
          %v5672 = vadd.f32 %v5559, %v5671
          %5673 = vmatmul.f32.gmra.mxu0 %v5173
          %v5674 = vpop.f32.mrf.mxu0
          %v5675 = vadd.f32 %v5562, %v5674
          %5676 = vmatmul.f32.gmra.mxu0 %v5176
          %v5677 = vpop.f32.mrf.mxu0
          %v5678 = vadd.f32 %v5565, %v5677
          %5679 = vmatmul.f32.gmra.mxu0 %v5179
          %v5680 = vpop.f32.mrf.mxu0
          %v5681 = vadd.f32 %v5568, %v5680
          %5682 = vdwg.mxu0
          %vm5716 = vcmask 1040384
          %v5717 = vrot.slane 0.0, 7
          %v5718 = vrot.slane %v5312, 7
          %v5719 = vsel %vm5716, %v5717, %v5718
          %v5720 = vrot.slane %v5315, 7
          %v5721 = vsel %vm5716, %v5718, %v5720
          %v5722 = vrot.slane %v5318, 7
          %v5723 = vsel %vm5716, %v5720, %v5722
          %v5724 = vrot.slane %v5321, 7
          %v5725 = vsel %vm5716, %v5722, %v5724
          %v5726 = vrot.slane %v5324, 7
          %v5727 = vsel %vm5716, %v5724, %v5726
          %v5728 = vrot.slane %v5327, 7
          %v5729 = vsel %vm5716, %v5726, %v5728
          %v5730 = vrot.slane %v5330, 7
          %v5731 = vsel %vm5716, %v5728, %v5730
          %v5732 = vrot.slane %v5333, 7
          %v5733 = vsel %vm5716, %v5730, %v5732
          %v5734 = vrot.slane %v5336, 7
          %v5735 = vsel %vm5716, %v5732, %v5734
          %v5736 = vrot.slane %v5339, 7
          %v5737 = vsel %vm5716, %v5734, %v5736
          %v5738 = vrot.slane %v5342, 7
          %v5739 = vsel %vm5716, %v5736, %v5738
          %v5740 = vrot.slane %v5345, 7
          %v5741 = vsel %vm5716, %v5738, %v5740
          %v5742 = vrot.slane %v5348, 7
          %v5743 = vsel %vm5716, %v5740, %v5742
          %v5744 = vrot.slane %v5351, 7
          %v5745 = vsel %vm5716, %v5742, %v5744
          %v5746 = vrot.slane %v5354, 7
          %v5747 = vsel %vm5716, %v5744, %v5746
          %v5748 = vrot.slane %v5357, 7
          %v5749 = vsel %vm5716, %v5746, %v5748
          %v5750 = vrot.slane %v5360, 7
          %v5751 = vsel %vm5716, %v5748, %v5750
          %v5752 = vrot.slane %v5363, 7
          %v5753 = vsel %vm5716, %v5750, %v5752
          %v5754 = vrot.slane %v5366, 7
          %v5755 = vsel %vm5716, %v5752, %v5754
          %v5756 = vrot.slane %v5369, 7
          %v5757 = vsel %vm5716, %v5754, %v5756
          %v5758 = vrot.slane %v5372, 7
          %v5759 = vsel %vm5716, %v5756, %v5758
          %v5760 = vrot.slane %v5375, 7
          %v5761 = vsel %vm5716, %v5758, %v5760
          %v5762 = vrot.slane %v5378, 7
          %v5763 = vsel %vm5716, %v5760, %v5762
          %v5764 = vrot.slane %v5381, 7
          %v5765 = vsel %vm5716, %v5762, %v5764
          %v5766 = vrot.slane %v5384, 7
          %v5767 = vsel %vm5716, %v5764, %v5766
          %v5768 = vrot.slane %v5387, 7
          %v5769 = vsel %vm5716, %v5766, %v5768
          %v5770 = vrot.slane %v5390, 7
          %v5771 = vsel %vm5716, %v5768, %v5770
          %v5772 = vrot.slane %v5393, 7
          %v5773 = vsel %vm5716, %v5770, %v5772
          %v5774 = vrot.slane %v5396, 7
          %v5775 = vsel %vm5716, %v5772, %v5774
          %v5776 = vrot.slane %v5399, 7
          %v5777 = vsel %vm5716, %v5774, %v5776
          %v5778 = vrot.slane %v5402, 7
          %v5779 = vsel %vm5716, %v5776, %v5778
          %v5780 = vrot.slane %v5405, 7
          %v5781 = vsel %vm5716, %v5778, %v5780
          %v5814 = vmul.f32 %v957, %v5719
          %v5815 = vmul.f32 %v958, %v5721
          %v5816 = vmul.f32 %v959, %v5723
          %v5817 = vmul.f32 %v960, %v5725
          %v5818 = vmul.f32 %v961, %v5727
          %v5819 = vmul.f32 %v962, %v5729
          %v5820 = vmul.f32 %v963, %v5731
          %v5821 = vmul.f32 %v964, %v5733
          %v5822 = vmul.f32 %v965, %v5735
          %v5823 = vmul.f32 %v966, %v5737
          %v5824 = vmul.f32 %v967, %v5739
          %v5825 = vmul.f32 %v968, %v5741
          %v5826 = vmul.f32 %v969, %v5743
          %v5827 = vmul.f32 %v970, %v5745
          %v5828 = vmul.f32 %v971, %v5747
          %v5829 = vmul.f32 %v972, %v5749
          %v5830 = vmul.f32 %v973, %v5751
          %v5831 = vmul.f32 %v974, %v5753
          %v5832 = vmul.f32 %v975, %v5755
          %v5833 = vmul.f32 %v976, %v5757
          %v5834 = vmul.f32 %v977, %v5759
          %v5835 = vmul.f32 %v978, %v5761
          %v5836 = vmul.f32 %v979, %v5763
          %v5837 = vmul.f32 %v980, %v5765
          %v5838 = vmul.f32 %v981, %v5767
          %v5839 = vmul.f32 %v982, %v5769
          %v5840 = vmul.f32 %v983, %v5771
          %v5841 = vmul.f32 %v984, %v5773
          %v5842 = vmul.f32 %v985, %v5775
          %v5843 = vmul.f32 %v986, %v5777
          %v5844 = vmul.f32 %v987, %v5779
          %v5845 = vmul.f32 %v988, %v5781
          %5846 = vmatpush.msra.mxu0 %v5423
          %5847 = vmatpush.msra.mxu0 %v5422
          %5848 = vmatpush.msra.mxu0 %v5421
          %5849 = vmatpush.msra.mxu0 %v5420
          %5850 = vmatpush.msra.mxu0 %v5419
          %5851 = vmatpush.msra.mxu0 %v5418
          %5852 = vmatpush.msra.mxu0 %v5417
          %5853 = vmatpush.msra.mxu0 %v5416
          %5854 = vmatpush.msra.mxu0 %v5415
          %5855 = vmatpush.msra.mxu0 %v5414
          %5856 = vmatpush.msra.mxu0 %v5413
          %5857 = vmatpush.msra.mxu0 %v5412
          %5858 = vmatpush.msra.mxu0 %v5411
          %5859 = vmatpush.msra.mxu0 %v5410
          %5860 = vmatpush.msra.mxu0 %v5409
          %5861 = vmatpush.msra.mxu0 %v5408
          %5862 = vmatmul.f32.gmra.mxu0 %v4997
          %v5863 = vpop.f32.mrf.mxu0
          %v5864 = vadd.f32 %v5814, %v5863
          %5865 = vmatmul.f32.gmra.mxu0 %v4999
          %v5866 = vpop.f32.mrf.mxu0
          %v5867 = vadd.f32 %v5815, %v5866
          %5868 = vmatmul.f32.gmra.mxu0 %v5001
          %v5869 = vpop.f32.mrf.mxu0
          %v5870 = vadd.f32 %v5816, %v5869
          %5871 = vmatmul.f32.gmra.mxu0 %v5003
          %v5872 = vpop.f32.mrf.mxu0
          %v5873 = vadd.f32 %v5817, %v5872
          %5874 = vmatmul.f32.gmra.mxu0 %v5005
          %v5875 = vpop.f32.mrf.mxu0
          %v5876 = vadd.f32 %v5818, %v5875
          %5877 = vmatmul.f32.gmra.mxu0 %v5007
          %v5878 = vpop.f32.mrf.mxu0
          %v5879 = vadd.f32 %v5819, %v5878
          %5880 = vmatmul.f32.gmra.mxu0 %v5009
          %v5881 = vpop.f32.mrf.mxu0
          %v5882 = vadd.f32 %v5820, %v5881
          %5883 = vmatmul.f32.gmra.mxu0 %v5011
          %v5884 = vpop.f32.mrf.mxu0
          %v5885 = vadd.f32 %v5821, %v5884
          %5886 = vmatmul.f32.gmra.mxu0 %v5013
          %v5887 = vpop.f32.mrf.mxu0
          %v5888 = vadd.f32 %v5822, %v5887
          %5889 = vmatmul.f32.gmra.mxu0 %v5015
          %v5890 = vpop.f32.mrf.mxu0
          %v5891 = vadd.f32 %v5823, %v5890
          %5892 = vmatmul.f32.gmra.mxu0 %v5017
          %v5893 = vpop.f32.mrf.mxu0
          %v5894 = vadd.f32 %v5824, %v5893
          %5895 = vmatmul.f32.gmra.mxu0 %v5019
          %v5896 = vpop.f32.mrf.mxu0
          %v5897 = vadd.f32 %v5825, %v5896
          %5898 = vmatmul.f32.gmra.mxu0 %v5021
          %v5899 = vpop.f32.mrf.mxu0
          %v5900 = vadd.f32 %v5826, %v5899
          %5901 = vmatmul.f32.gmra.mxu0 %v5023
          %v5902 = vpop.f32.mrf.mxu0
          %v5903 = vadd.f32 %v5827, %v5902
          %5904 = vmatmul.f32.gmra.mxu0 %v5025
          %v5905 = vpop.f32.mrf.mxu0
          %v5906 = vadd.f32 %v5828, %v5905
          %5907 = vmatmul.f32.gmra.mxu0 %v5027
          %v5908 = vpop.f32.mrf.mxu0
          %v5909 = vadd.f32 %v5829, %v5908
          %5910 = vmatmul.f32.gmra.mxu0 %v5029
          %v5911 = vpop.f32.mrf.mxu0
          %v5912 = vadd.f32 %v5830, %v5911
          %5913 = vmatmul.f32.gmra.mxu0 %v5031
          %v5914 = vpop.f32.mrf.mxu0
          %v5915 = vadd.f32 %v5831, %v5914
          %5916 = vmatmul.f32.gmra.mxu0 %v5033
          %v5917 = vpop.f32.mrf.mxu0
          %v5918 = vadd.f32 %v5832, %v5917
          %5919 = vmatmul.f32.gmra.mxu0 %v5035
          %v5920 = vpop.f32.mrf.mxu0
          %v5921 = vadd.f32 %v5833, %v5920
          %5922 = vmatmul.f32.gmra.mxu0 %v5037
          %v5923 = vpop.f32.mrf.mxu0
          %v5924 = vadd.f32 %v5834, %v5923
          %5925 = vmatmul.f32.gmra.mxu0 %v5039
          %v5926 = vpop.f32.mrf.mxu0
          %v5927 = vadd.f32 %v5835, %v5926
          %5928 = vmatmul.f32.gmra.mxu0 %v5041
          %v5929 = vpop.f32.mrf.mxu0
          %v5930 = vadd.f32 %v5836, %v5929
          %5931 = vmatmul.f32.gmra.mxu0 %v5043
          %v5932 = vpop.f32.mrf.mxu0
          %v5933 = vadd.f32 %v5837, %v5932
          %5934 = vmatmul.f32.gmra.mxu0 %v5045
          %v5935 = vpop.f32.mrf.mxu0
          %v5936 = vadd.f32 %v5838, %v5935
          %5937 = vmatmul.f32.gmra.mxu0 %v5047
          %v5938 = vpop.f32.mrf.mxu0
          %v5939 = vadd.f32 %v5839, %v5938
          %5940 = vmatmul.f32.gmra.mxu0 %v5049
          %v5941 = vpop.f32.mrf.mxu0
          %v5942 = vadd.f32 %v5840, %v5941
          %5943 = vmatmul.f32.gmra.mxu0 %v5051
          %v5944 = vpop.f32.mrf.mxu0
          %v5945 = vadd.f32 %v5841, %v5944
          %5946 = vmatmul.f32.gmra.mxu0 %v5053
          %v5947 = vpop.f32.mrf.mxu0
          %v5948 = vadd.f32 %v5842, %v5947
          %5949 = vmatmul.f32.gmra.mxu0 %v5055
          %v5950 = vpop.f32.mrf.mxu0
          %v5951 = vadd.f32 %v5843, %v5950
          %5952 = vmatmul.f32.gmra.mxu0 %v5057
          %v5953 = vpop.f32.mrf.mxu0
          %v5954 = vadd.f32 %v5844, %v5953
          %5955 = vmatmul.f32.gmra.mxu0 %v5059
          %v5956 = vpop.f32.mrf.mxu0
          %v5957 = vadd.f32 %v5845, %v5956
          %5958 = vdwg.mxu0
          %5959 = vmatpush.msra.mxu0 0.0
          %5960 = vmatpush.msra.mxu0 0.0
          %5961 = vmatpush.msra.mxu0 0.0
          %5962 = vmatpush.msra.mxu0 0.0
          %5963 = vmatpush.msra.mxu0 0.0
          %5964 = vmatpush.msra.mxu0 0.0
          %5965 = vmatpush.msra.mxu0 0.0
          %5966 = vmatpush.msra.mxu0 0.0
          %5967 = vmatpush.msra.mxu0 %v5431
          %5968 = vmatpush.msra.mxu0 %v5430
          %5969 = vmatpush.msra.mxu0 %v5429
          %5970 = vmatpush.msra.mxu0 %v5428
          %5971 = vmatpush.msra.mxu0 %v5427
          %5972 = vmatpush.msra.mxu0 %v5426
          %5973 = vmatpush.msra.mxu0 %v5425
          %5974 = vmatpush.msra.mxu0 %v5424
          %5975 = vmatmul.f32.gmra.mxu0 %v5086
          %v5976 = vpop.f32.mrf.mxu0
          %v5977 = vadd.f32 %v5864, %v5976
          %5978 = vmatmul.f32.gmra.mxu0 %v5089
          %v5979 = vpop.f32.mrf.mxu0
          %v5980 = vadd.f32 %v5867, %v5979
          %5981 = vmatmul.f32.gmra.mxu0 %v5092
          %v5982 = vpop.f32.mrf.mxu0
          %v5983 = vadd.f32 %v5870, %v5982
          %5984 = vmatmul.f32.gmra.mxu0 %v5095
          %v5985 = vpop.f32.mrf.mxu0
          %v5986 = vadd.f32 %v5873, %v5985
          %5987 = vmatmul.f32.gmra.mxu0 %v5098
          %v5988 = vpop.f32.mrf.mxu0
          %v5989 = vadd.f32 %v5876, %v5988
          %5990 = vmatmul.f32.gmra.mxu0 %v5101
          %v5991 = vpop.f32.mrf.mxu0
          %v5992 = vadd.f32 %v5879, %v5991
          %5993 = vmatmul.f32.gmra.mxu0 %v5104
          %v5994 = vpop.f32.mrf.mxu0
          %v5995 = vadd.f32 %v5882, %v5994
          %5996 = vmatmul.f32.gmra.mxu0 %v5107
          %v5997 = vpop.f32.mrf.mxu0
          %v5998 = vadd.f32 %v5885, %v5997
          %5999 = vmatmul.f32.gmra.mxu0 %v5110
          %v6000 = vpop.f32.mrf.mxu0
          %v6001 = vadd.f32 %v5888, %v6000
          %6002 = vmatmul.f32.gmra.mxu0 %v5113
          %v6003 = vpop.f32.mrf.mxu0
          %v6004 = vadd.f32 %v5891, %v6003
          %6005 = vmatmul.f32.gmra.mxu0 %v5116
          %v6006 = vpop.f32.mrf.mxu0
          %v6007 = vadd.f32 %v5894, %v6006
          %6008 = vmatmul.f32.gmra.mxu0 %v5119
          %v6009 = vpop.f32.mrf.mxu0
          %v6010 = vadd.f32 %v5897, %v6009
          %6011 = vmatmul.f32.gmra.mxu0 %v5122
          %v6012 = vpop.f32.mrf.mxu0
          %v6013 = vadd.f32 %v5900, %v6012
          %6014 = vmatmul.f32.gmra.mxu0 %v5125
          %v6015 = vpop.f32.mrf.mxu0
          %v6016 = vadd.f32 %v5903, %v6015
          %6017 = vmatmul.f32.gmra.mxu0 %v5128
          %v6018 = vpop.f32.mrf.mxu0
          %v6019 = vadd.f32 %v5906, %v6018
          %6020 = vmatmul.f32.gmra.mxu0 %v5131
          %v6021 = vpop.f32.mrf.mxu0
          %v6022 = vadd.f32 %v5909, %v6021
          %6023 = vmatmul.f32.gmra.mxu0 %v5134
          %v6024 = vpop.f32.mrf.mxu0
          %v6025 = vadd.f32 %v5912, %v6024
          %6026 = vmatmul.f32.gmra.mxu0 %v5137
          %v6027 = vpop.f32.mrf.mxu0
          %v6028 = vadd.f32 %v5915, %v6027
          %6029 = vmatmul.f32.gmra.mxu0 %v5140
          %v6030 = vpop.f32.mrf.mxu0
          %v6031 = vadd.f32 %v5918, %v6030
          %6032 = vmatmul.f32.gmra.mxu0 %v5143
          %v6033 = vpop.f32.mrf.mxu0
          %v6034 = vadd.f32 %v5921, %v6033
          %6035 = vmatmul.f32.gmra.mxu0 %v5146
          %v6036 = vpop.f32.mrf.mxu0
          %v6037 = vadd.f32 %v5924, %v6036
          %6038 = vmatmul.f32.gmra.mxu0 %v5149
          %v6039 = vpop.f32.mrf.mxu0
          %v6040 = vadd.f32 %v5927, %v6039
          %6041 = vmatmul.f32.gmra.mxu0 %v5152
          %v6042 = vpop.f32.mrf.mxu0
          %v6043 = vadd.f32 %v5930, %v6042
          %6044 = vmatmul.f32.gmra.mxu0 %v5155
          %v6045 = vpop.f32.mrf.mxu0
          %v6046 = vadd.f32 %v5933, %v6045
          %6047 = vmatmul.f32.gmra.mxu0 %v5158
          %v6048 = vpop.f32.mrf.mxu0
          %v6049 = vadd.f32 %v5936, %v6048
          %6050 = vmatmul.f32.gmra.mxu0 %v5161
          %v6051 = vpop.f32.mrf.mxu0
          %v6052 = vadd.f32 %v5939, %v6051
          %6053 = vmatmul.f32.gmra.mxu0 %v5164
          %v6054 = vpop.f32.mrf.mxu0
          %v6055 = vadd.f32 %v5942, %v6054
          %6056 = vmatmul.f32.gmra.mxu0 %v5167
          %v6057 = vpop.f32.mrf.mxu0
          %v6058 = vadd.f32 %v5945, %v6057
          %6059 = vmatmul.f32.gmra.mxu0 %v5170
          %v6060 = vpop.f32.mrf.mxu0
          %v6061 = vadd.f32 %v5948, %v6060
          %6062 = vmatmul.f32.gmra.mxu0 %v5173
          %v6063 = vpop.f32.mrf.mxu0
          %v6064 = vadd.f32 %v5951, %v6063
          %6065 = vmatmul.f32.gmra.mxu0 %v5176
          %v6066 = vpop.f32.mrf.mxu0
          %v6067 = vadd.f32 %v5954, %v6066
          %6068 = vmatmul.f32.gmra.mxu0 %v5179
          %v6069 = vpop.f32.mrf.mxu0
          %v6070 = vadd.f32 %v5957, %v6069
          %6071 = vdwg.mxu0
          %vm6104 = vcmask 1046528
          %v6105 = vrot.slane %v5588, 1
          %v6106 = vrot.slane %v5591, 1
          %v6107 = vsel %vm6104, %v6105, %v6106
          %v6108 = vrot.slane %v5594, 1
          %v6109 = vsel %vm6104, %v6106, %v6108
          %v6110 = vrot.slane %v5597, 1
          %v6111 = vsel %vm6104, %v6108, %v6110
          %v6112 = vrot.slane %v5600, 1
          %v6113 = vsel %vm6104, %v6110, %v6112
          %v6114 = vrot.slane %v5603, 1
          %v6115 = vsel %vm6104, %v6112, %v6114
          %v6116 = vrot.slane %v5606, 1
          %v6117 = vsel %vm6104, %v6114, %v6116
          %v6118 = vrot.slane %v5609, 1
          %v6119 = vsel %vm6104, %v6116, %v6118
          %v6120 = vrot.slane %v5612, 1
          %v6121 = vsel %vm6104, %v6118, %v6120
          %v6122 = vrot.slane %v5615, 1
          %v6123 = vsel %vm6104, %v6120, %v6122
          %v6124 = vrot.slane %v5618, 1
          %v6125 = vsel %vm6104, %v6122, %v6124
          %v6126 = vrot.slane %v5621, 1
          %v6127 = vsel %vm6104, %v6124, %v6126
          %v6128 = vrot.slane %v5624, 1
          %v6129 = vsel %vm6104, %v6126, %v6128
          %v6130 = vrot.slane %v5627, 1
          %v6131 = vsel %vm6104, %v6128, %v6130
          %v6132 = vrot.slane %v5630, 1
          %v6133 = vsel %vm6104, %v6130, %v6132
          %v6134 = vrot.slane %v5633, 1
          %v6135 = vsel %vm6104, %v6132, %v6134
          %v6136 = vrot.slane %v5636, 1
          %v6137 = vsel %vm6104, %v6134, %v6136
          %v6138 = vrot.slane %v5639, 1
          %v6139 = vsel %vm6104, %v6136, %v6138
          %v6140 = vrot.slane %v5642, 1
          %v6141 = vsel %vm6104, %v6138, %v6140
          %v6142 = vrot.slane %v5645, 1
          %v6143 = vsel %vm6104, %v6140, %v6142
          %v6144 = vrot.slane %v5648, 1
          %v6145 = vsel %vm6104, %v6142, %v6144
          %v6146 = vrot.slane %v5651, 1
          %v6147 = vsel %vm6104, %v6144, %v6146
          %v6148 = vrot.slane %v5654, 1
          %v6149 = vsel %vm6104, %v6146, %v6148
          %v6150 = vrot.slane %v5657, 1
          %v6151 = vsel %vm6104, %v6148, %v6150
          %v6152 = vrot.slane %v5660, 1
          %v6153 = vsel %vm6104, %v6150, %v6152
          %v6154 = vrot.slane %v5663, 1
          %v6155 = vsel %vm6104, %v6152, %v6154
          %v6156 = vrot.slane %v5666, 1
          %v6157 = vsel %vm6104, %v6154, %v6156
          %v6158 = vrot.slane %v5669, 1
          %v6159 = vsel %vm6104, %v6156, %v6158
          %v6160 = vrot.slane %v5672, 1
          %v6161 = vsel %vm6104, %v6158, %v6160
          %v6162 = vrot.slane %v5675, 1
          %v6163 = vsel %vm6104, %v6160, %v6162
          %v6164 = vrot.slane %v5678, 1
          %v6165 = vsel %vm6104, %v6162, %v6164
          %v6166 = vrot.slane %v5681, 1
          %v6167 = vsel %vm6104, %v6164, %v6166
          %v6168 = vrot.slane 0.0, 1
          %v6169 = vsel %vm6104, %v6166, %v6168
          %v6202 = vmul.f32 %v1053, %v6107
          %v6203 = vmul.f32 %v1054, %v6109
          %v6204 = vmul.f32 %v1055, %v6111
          %v6205 = vmul.f32 %v1056, %v6113
          %v6206 = vmul.f32 %v1057, %v6115
          %v6207 = vmul.f32 %v1058, %v6117
          %v6208 = vmul.f32 %v1059, %v6119
          %v6209 = vmul.f32 %v1060, %v6121
          %v6210 = vmul.f32 %v1061, %v6123
          %v6211 = vmul.f32 %v1062, %v6125
          %v6212 = vmul.f32 %v1063, %v6127
          %v6213 = vmul.f32 %v1064, %v6129
          %v6214 = vmul.f32 %v1065, %v6131
          %v6215 = vmul.f32 %v1066, %v6133
          %v6216 = vmul.f32 %v1067, %v6135
          %v6217 = vmul.f32 %v1068, %v6137
          %v6218 = vmul.f32 %v1069, %v6139
          %v6219 = vmul.f32 %v1070, %v6141
          %v6220 = vmul.f32 %v1071, %v6143
          %v6221 = vmul.f32 %v1072, %v6145
          %v6222 = vmul.f32 %v1073, %v6147
          %v6223 = vmul.f32 %v1074, %v6149
          %v6224 = vmul.f32 %v1075, %v6151
          %v6225 = vmul.f32 %v1076, %v6153
          %v6226 = vmul.f32 %v1077, %v6155
          %v6227 = vmul.f32 %v1078, %v6157
          %v6228 = vmul.f32 %v1079, %v6159
          %v6229 = vmul.f32 %v1080, %v6161
          %v6230 = vmul.f32 %v1081, %v6163
          %v6231 = vmul.f32 %v1082, %v6165
          %v6232 = vmul.f32 %v1083, %v6167
          %v6233 = vmul.f32 %v1084, %v6169
          %v6234 = vadd.f32 %v5977, %v6202
          %v6235 = vadd.f32 %v5980, %v6203
          %v6236 = vadd.f32 %v5983, %v6204
          %v6237 = vadd.f32 %v5986, %v6205
          %v6238 = vadd.f32 %v5989, %v6206
          %v6239 = vadd.f32 %v5992, %v6207
          %v6240 = vadd.f32 %v5995, %v6208
          %v6241 = vadd.f32 %v5998, %v6209
          %v6242 = vadd.f32 %v6001, %v6210
          %v6243 = vadd.f32 %v6004, %v6211
          %v6244 = vadd.f32 %v6007, %v6212
          %v6245 = vadd.f32 %v6010, %v6213
          %v6246 = vadd.f32 %v6013, %v6214
          %v6247 = vadd.f32 %v6016, %v6215
          %v6248 = vadd.f32 %v6019, %v6216
          %v6249 = vadd.f32 %v6022, %v6217
          %v6250 = vadd.f32 %v6025, %v6218
          %v6251 = vadd.f32 %v6028, %v6219
          %v6252 = vadd.f32 %v6031, %v6220
          %v6253 = vadd.f32 %v6034, %v6221
          %v6254 = vadd.f32 %v6037, %v6222
          %v6255 = vadd.f32 %v6040, %v6223
          %v6256 = vadd.f32 %v6043, %v6224
          %v6257 = vadd.f32 %v6046, %v6225
          %v6258 = vadd.f32 %v6049, %v6226
          %v6259 = vadd.f32 %v6052, %v6227
          %v6260 = vadd.f32 %v6055, %v6228
          %v6261 = vadd.f32 %v6058, %v6229
          %v6262 = vadd.f32 %v6061, %v6230
          %v6263 = vadd.f32 %v6064, %v6231
          %v6264 = vadd.f32 %v6067, %v6232
          %v6265 = vadd.f32 %v6070, %v6233
          %v6266 = vld [vmem:[%s452] sm:$0x1]
          %v6268 = vperm.slane %v6266, 0
          %v6270 = vadd.f32 %v6234, %v6268
          %v6271 = vadd.f32 %v6235, %v6268
          %v6272 = vadd.f32 %v6236, %v6268
          %v6273 = vadd.f32 %v6237, %v6268
          %v6274 = vadd.f32 %v6238, %v6268
          %v6275 = vadd.f32 %v6239, %v6268
          %v6276 = vadd.f32 %v6240, %v6268
          %v6277 = vadd.f32 %v6241, %v6268
          %v6278 = vadd.f32 %v6242, %v6268
          %v6279 = vadd.f32 %v6243, %v6268
          %v6280 = vadd.f32 %v6244, %v6268
          %v6281 = vadd.f32 %v6245, %v6268
          %v6282 = vadd.f32 %v6246, %v6268
          %v6283 = vadd.f32 %v6247, %v6268
          %v6284 = vadd.f32 %v6248, %v6268
          %v6285 = vadd.f32 %v6249, %v6268
          %v6286 = vadd.f32 %v6250, %v6268
          %v6287 = vadd.f32 %v6251, %v6268
          %v6288 = vadd.f32 %v6252, %v6268
          %v6289 = vadd.f32 %v6253, %v6268
          %v6290 = vadd.f32 %v6254, %v6268
          %v6291 = vadd.f32 %v6255, %v6268
          %v6292 = vadd.f32 %v6256, %v6268
          %v6293 = vadd.f32 %v6257, %v6268
          %v6294 = vadd.f32 %v6258, %v6268
          %v6295 = vadd.f32 %v6259, %v6268
          %v6296 = vadd.f32 %v6260, %v6268
          %v6297 = vadd.f32 %v6261, %v6268
          %v6298 = vadd.f32 %v6262, %v6268
          %v6299 = vadd.f32 %v6263, %v6268
          %v6300 = vadd.f32 %v6264, %v6268
          %v6301 = vadd.f32 %v6265, %v6268
          %v6302 = vld [vmem:[%s444] sm:$0xff]
          %v6303 = vld [vmem:[%s444 + $0x8] sm:$0xff]
          %v6304 = vld [vmem:[%s444 + $0x10] sm:$0xff]
          %v6305 = vld [vmem:[%s444 + $0x18] sm:$0xff]
          %v6306 = vld [vmem:[%s444 + $0x20] sm:$0xff]
          %v6307 = vld [vmem:[%s444 + $0x28] sm:$0xff]
          %v6308 = vld [vmem:[%s444 + $0x30] sm:$0xff]
          %v6309 = vld [vmem:[%s444 + $0x38] sm:$0xff]
          %v6310 = vld [vmem:[%s444 + $0x40] sm:$0xff]
          %v6311 = vld [vmem:[%s444 + $0x48] sm:$0xff]
          %v6312 = vld [vmem:[%s444 + $0x50] sm:$0xff]
          %v6313 = vld [vmem:[%s444 + $0x58] sm:$0xff]
          %v6314 = vld [vmem:[%s444 + $0x60] sm:$0xff]
          %v6315 = vld [vmem:[%s444 + $0x68] sm:$0xff]
          %v6316 = vld [vmem:[%s444 + $0x70] sm:$0xff]
          %v6317 = vld [vmem:[%s444 + $0x78] sm:$0xff]
          %v6318 = vld [vmem:[%s444 + $0x80] sm:$0xff]
          %v6319 = vld [vmem:[%s444 + $0x88] sm:$0xff]
          %v6320 = vld [vmem:[%s444 + $0x90] sm:$0xff]
          %v6321 = vld [vmem:[%s444 + $0x98] sm:$0xff]
          %v6322 = vld [vmem:[%s444 + $0xa0] sm:$0xff]
          %v6323 = vld [vmem:[%s444 + $0xa8] sm:$0xff]
          %v6324 = vld [vmem:[%s444 + $0xb0] sm:$0xff]
          %v6325 = vld [vmem:[%s444 + $0xb8] sm:$0xff]
          %v6326 = vld [vmem:[%s444 + $0xc0] sm:$0xff]
          %v6327 = vld [vmem:[%s444 + $0xc8] sm:$0xff]
          %v6328 = vld [vmem:[%s444 + $0xd0] sm:$0xff]
          %v6329 = vld [vmem:[%s444 + $0xd8] sm:$0xff]
          %v6330 = vld [vmem:[%s444 + $0xe0] sm:$0xff]
          %v6331 = vld [vmem:[%s444 + $0xe8] sm:$0xff]
          %v6332 = vld [vmem:[%s444 + $0xf0] sm:$0xff]
          %v6333 = vld [vmem:[%s444 + $0xf8] sm:$0xff]
          %v6334 = vadd.f32 %v6270, %v6302
          %v6335 = vadd.f32 %v6271, %v6303
          %v6336 = vadd.f32 %v6272, %v6304
          %v6337 = vadd.f32 %v6273, %v6305
          %v6338 = vadd.f32 %v6274, %v6306
          %v6339 = vadd.f32 %v6275, %v6307
          %v6340 = vadd.f32 %v6276, %v6308
          %v6341 = vadd.f32 %v6277, %v6309
          %v6342 = vadd.f32 %v6278, %v6310
          %v6343 = vadd.f32 %v6279, %v6311
          %v6344 = vadd.f32 %v6280, %v6312
          %v6345 = vadd.f32 %v6281, %v6313
          %v6346 = vadd.f32 %v6282, %v6314
          %v6347 = vadd.f32 %v6283, %v6315
          %v6348 = vadd.f32 %v6284, %v6316
          %v6349 = vadd.f32 %v6285, %v6317
          %v6350 = vadd.f32 %v6286, %v6318
          %v6351 = vadd.f32 %v6287, %v6319
          %v6352 = vadd.f32 %v6288, %v6320
          %v6353 = vadd.f32 %v6289, %v6321
          %v6354 = vadd.f32 %v6290, %v6322
          %v6355 = vadd.f32 %v6291, %v6323
          %v6356 = vadd.f32 %v6292, %v6324
          %v6357 = vadd.f32 %v6293, %v6325
          %v6358 = vadd.f32 %v6294, %v6326
          %v6359 = vadd.f32 %v6295, %v6327
          %v6360 = vadd.f32 %v6296, %v6328
          %v6361 = vadd.f32 %v6297, %v6329
          %v6362 = vadd.f32 %v6298, %v6330
          %v6363 = vadd.f32 %v6299, %v6331
          %v6364 = vadd.f32 %v6300, %v6332
          %v6365 = vadd.f32 %v6301, %v6333
          %6366 = vst.msk [vmem:[%s439] sm:$0xff] %vm4771, %v6334
          %6367 = vst.msk [vmem:[%s439 + $0x8] sm:$0xff] %vm4771, %v6335
          %6368 = vst.msk [vmem:[%s439 + $0x10] sm:$0xff] %vm4771, %v6336
          %6369 = vst.msk [vmem:[%s439 + $0x18] sm:$0xff] %vm4771, %v6337
          %6370 = vst.msk [vmem:[%s439 + $0x20] sm:$0xff] %vm4771, %v6338
          %6371 = vst.msk [vmem:[%s439 + $0x28] sm:$0xff] %vm4771, %v6339
          %6372 = vst.msk [vmem:[%s439 + $0x30] sm:$0xff] %vm4771, %v6340
          %6373 = vst.msk [vmem:[%s439 + $0x38] sm:$0xff] %vm4771, %v6341
          %6374 = vst.msk [vmem:[%s439 + $0x40] sm:$0xff] %vm4771, %v6342
          %6375 = vst.msk [vmem:[%s439 + $0x48] sm:$0xff] %vm4771, %v6343
          %6376 = vst.msk [vmem:[%s439 + $0x50] sm:$0xff] %vm4771, %v6344
          %6377 = vst.msk [vmem:[%s439 + $0x58] sm:$0xff] %vm4771, %v6345
          %6378 = vst.msk [vmem:[%s439 + $0x60] sm:$0xff] %vm4771, %v6346
          %6379 = vst.msk [vmem:[%s439 + $0x68] sm:$0xff] %vm4771, %v6347
          %6380 = vst.msk [vmem:[%s439 + $0x70] sm:$0xff] %vm4771, %v6348
          %6381 = vst.msk [vmem:[%s439 + $0x78] sm:$0xff] %vm4771, %v6349
          %6382 = vst.msk [vmem:[%s439 + $0x80] sm:$0xff] %vm4771, %v6350
          %6383 = vst.msk [vmem:[%s439 + $0x88] sm:$0xff] %vm4771, %v6351
          %6384 = vst.msk [vmem:[%s439 + $0x90] sm:$0xff] %vm4771, %v6352
          %6385 = vst.msk [vmem:[%s439 + $0x98] sm:$0xff] %vm4771, %v6353
          %6386 = vst.msk [vmem:[%s439 + $0xa0] sm:$0xff] %vm4771, %v6354
          %6387 = vst.msk [vmem:[%s439 + $0xa8] sm:$0xff] %vm4771, %v6355
          %6388 = vst.msk [vmem:[%s439 + $0xb0] sm:$0xff] %vm4771, %v6356
          %6389 = vst.msk [vmem:[%s439 + $0xb8] sm:$0xff] %vm4771, %v6357
          %6390 = vst.msk [vmem:[%s439 + $0xc0] sm:$0xff] %vm4771, %v6358
          %6391 = vst.msk [vmem:[%s439 + $0xc8] sm:$0xff] %vm4771, %v6359
          %6392 = vst.msk [vmem:[%s439 + $0xd0] sm:$0xff] %vm4771, %v6360
          %6393 = vst.msk [vmem:[%s439 + $0xd8] sm:$0xff] %vm4771, %v6361
          %6394 = vst.msk [vmem:[%s439 + $0xe0] sm:$0xff] %vm4771, %v6362
          %6395 = vst.msk [vmem:[%s439 + $0xe8] sm:$0xff] %vm4771, %v6363
          %6396 = vst.msk [vmem:[%s439 + $0xf0] sm:$0xff] %vm4771, %v6364
          %6397 = vst.msk [vmem:[%s439 + $0xf8] sm:$0xff] %vm4771, %v6365
        $region72: #{rir1_pallas.1} parent=55 // pred_fallthru
          _
        %s6398 = sand.u32 %s277, 1
        %s6399 = scalar_lea.sflag [#allocation6], %s6398
        %s6400 = sand.u32 %s277, 1
        %s6401 = smul.addr %s6400, 256
        %s6402 = scalar_lea.vmem [#allocation5], %s6401
        // Predicated region
        $region73: #{rir1_pallas.1} parent=55 // pred_check
          %p6403 = pneg %p287
        $region74: #{rir1_pallas.1} parent=55 // pred_check_branch
          %6405 = sbr.rel (%p6403) target = $region76
        $region75: #{rir1_pallas.1} parent=55 // pred_region
          %6407 = vsyncadd %s6399, 0
          %s6408 = smul.addr %s27, 32
          %s6409 = smul.addr %s6408, 8
          %s6410 = scalar_lea.hbm %s9, %s6409
          %s6411 = sshll.u32 %s6402, 4
          %s6412 = int_to_ptr.vmem [resolvable:$true] %s6411
          %s6413 = sshll.u32 %s6410, 4
          %s6414 = int_to_ptr.hbm [resolvable:$true] %s6413
          %6419 = dma.vmem_to_hbm [thread:$0]  %s6412, 4096, %s6414, %s6399, 128, 128, 8
        $region76: #{rir1_pallas.1} parent=55 // pred_fallthru
          _
      $region56: #{rir1_pallas.1} parent=5 // pred_fallthru
        _
      %p6420 = scmp.le.s32.totalorder 2, %s18
      // Predicated region
      $region77: #{rir1_pallas.1} parent=5 // pred_check
        %p6421 = pneg %p6420
      $region78: #{rir1_pallas.1} parent=5 // pred_check_branch
        %6423 = sbr.rel (%p6421) target = $region80
      $region79: #{rir1_pallas.1} parent=5 // pred_region
        %s6424 = ssub.s32 %s18, 2
        // Predicated region
        $region81: #{rir1_pallas.1} parent=79 // pred_check
          %p6425 = pneg %p293
        $region82: #{rir1_pallas.1} parent=79 // pred_check_branch
          %6427 = sbr.rel (%p6425) target = $region84
        $region83: #{rir1_pallas.1} parent=79 // pred_region
          %s6428 = sand.u32 %s278, 1
          %s6429 = scalar_lea.sflag [#allocation6], %s6428
          %s6430 = sand.u32 %s278, 1
          %s6431 = smul.addr %s6430, 256
          %s6432 = scalar_lea.vmem [#allocation5], %s6431
          %6434 = dma.done %s6429, 4096
        $region84: #{rir1_pallas.1} parent=79 // pred_fallthru
          _
      $region80: #{rir1_pallas.1} parent=5 // pred_fallthru
        _
    $region6: #{rir1_pallas.1} parent=1 // loop_footer
      %s22 = sadd.s32 1, %s18
    $region7: #{rir1_pallas.1} parent=1 // loop_footer_branch
      %17 = sbr.rel target = $region3
    $region8: #{rir1_pallas.1} parent=1 // loop_exit
      _
    %6435 = vsyncpa [#allocation6], 1
    %s6436 = scalar_lea.sflag [#allocation6], 1
    %6437 = vsyncpa %s6436, 1

</llo_original>
